<compile_context>
chip_gen: v7x
topology: tpu7x:2x2x1
jax: 0.10.0
libtpu: 0.0.40
codegen_flags: <defaults>
</compile_context>

<pallas_src>
import math
from functools import partial

import jax
import jax.numpy as jnp
from jax.experimental import pallas as pl
from jax.experimental.pallas import tpu as pltpu

EPS = 1e-5  # PyTorch LayerNorm default

# packed-parameter row layouts (shared by pack_params and the kernel)
CV_BIAS, CV_LNG, CV_LNB = range(3)                       # conv_vec rows
V_BO, V_B2, V_LN1G, V_LN1B, V_LN2G, V_LN2B = range(6)    # vec6 rows (per layer)
VEC6_ORDER = ('bo', 'b2', 'ln1_g', 'ln1_b', 'ln2_g', 'ln2_b')


def _gelu(x):
    # exact GELU (matches nn.GELU() / fairseq 'gelu')
    return 0.5 * x * (1.0 + jax.lax.erf(x * (1.0 / math.sqrt(2.0))))


def _ln(x, g, b, eps=EPS):
    mu = jnp.mean(x, axis=-1, keepdims=True)
    var = jnp.mean((x - mu) ** 2, axis=-1, keepdims=True)
    return (x - mu) * jax.lax.rsqrt(var + eps) * g + b


# ---------------------------------------------------------------------------
# Single fused kernel: pos-conv block + L transformer layers
# ---------------------------------------------------------------------------
def encoder_kernel(xcol_ref, wconv_ref, convvec_ref, wqkv_ref, bqkv_ref,
                   wo_ref, w1_ref, b1_ref, w2_ref, vec_ref, o_ref,
                   *, B, T, C, H, K, L):
    d = C // H
    pad = K // 2
    scale = 1.0 / math.sqrt(d)
    N = B * T

    xcol = xcol_ref[...]                                  # (N, K*C) im2col'd padded input
    resid = xcol[:, pad * C:(pad + 1) * C]                # centre tap == original x

    # positional grouped conv as ONE (N, K*C) @ (K*C, C) matmul (256-deep contraction)
    conv = jnp.dot(xcol, wconv_ref[...], preferred_element_type=jnp.float32)
    conv = _gelu(conv + convvec_ref[CV_BIAS])
    x = _ln(resid + conv, convvec_ref[CV_LNG], convvec_ref[CV_LNB])

    for l in range(L):                                    # layers statically unrolled
        # ------- multi-head self attention (post-LN) -------
        def head_major(s, x=x, l=l):
            """Stack per-head projections into (H*B, T, d); n = h*B + b."""
            blocks = []
            for h in range(H):
                idx = (l * 3 + s) * H + h
                ph = jnp.dot(x, wqkv_ref[idx],
                             preferred_element_type=jnp.float32) + bqkv_ref[idx]
                for b in range(B):
                    blocks.append(ph[b * T:(b + 1) * T, :])
            return jnp.stack(blocks)

        q3 = head_major(0)                                # (H*B, T, d)
        k3 = head_major(1)
        v3 = head_major(2)

        s_ = jnp.einsum('ntd,nsd->nts', q3, k3,
                        preferred_element_type=jnp.float32) * scale
        m = jnp.max(s_, axis=-1, keepdims=True)
        p = jnp.exp(s_ - m)
        p = p * pl.reciprocal(jnp.sum(p, axis=-1, keepdims=True), approx=True)
        ctx = jnp.einsum('nts,nsd->ntd', p, v3,
                         preferred_element_type=jnp.float32)   # (H*B, T, d)

        attn = jnp.zeros((N, C), jnp.float32)
        for h in range(H):
            ctx_h = ctx[h * B:(h + 1) * B].reshape(N, d)   # rows back to (b*T + t) order
            attn = attn + jnp.dot(ctx_h, wo_ref[l * H + h],
                                  preferred_element_type=jnp.float32)
        attn = attn + vec_ref[l * 6 + V_BO]
        x = _ln(x + attn, vec_ref[l * 6 + V_LN1G], vec_ref[l * 6 + V_LN1B])

        # ------- FFN -------
        h1 = _gelu(jnp.dot(x, w1_ref[l], preferred_element_type=jnp.float32)
                   + b1_ref[l])
        ff = jnp.dot(h1, w2_ref[l], preferred_element_type=jnp.float32) \
            + vec_ref[l * 6 + V_B2]
        x = _ln(x + ff, vec_ref[l * 6 + V_LN2G], vec_ref[l * 6 + V_LN2B])

    o_ref[...] = x


# ---------------------------------------------------------------------------
# Host-side parameter packing (layout plumbing only, no compute hoisted)
# ---------------------------------------------------------------------------
def pack_params(params, *, C, H, K, L):
    d = C // H
    w_conv = params['w_taps'].reshape(K * C, C)           # stacked tap matrix
    conv_vec = jnp.stack([params['conv_bias'],
                          params['enc_ln_g'],
                          params['enc_ln_b']])[:, None, :]            # (3, 1, C)

    wqkv, bqkv, wo, w1, b1, w2, vec6 = [], [], [], [], [], [], []
    for lp in params['layers']:
        for wn, bn in (('wq', 'bq'), ('wk', 'bk'), ('wv', 'bv')):
            wqkv.append(lp[wn].reshape(C, H, d).transpose(1, 0, 2))   # (H, C, d)
            bqkv.append(lp[bn].reshape(H, 1, d))                      # (H, 1, d)
        wo.append(lp['wo'].reshape(H, d, C))                          # (H, d, C)
        w1.append(lp['w1'])
        b1.append(lp['b1'][None, :])
        w2.append(lp['w2'])
        vec6.append(jnp.stack([lp[n] for n in VEC6_ORDER])[:, None, :])  # (6, 1, C)

    return dict(
        w_conv=w_conv,                                   # (K*C, C)
        conv_vec=conv_vec,                               # (3, 1, C)
        wqkv=jnp.concatenate(wqkv, axis=0),              # (L*3*H, C, d)
        bqkv=jnp.concatenate(bqkv, axis=0),              # (L*3*H, 1, d)
        wo=jnp.concatenate(wo, axis=0),                  # (L*H, d, C)
        w1=jnp.stack(w1),                                # (L, C, FF)
        b1=jnp.stack(b1),                                # (L, 1, FF)
        w2=jnp.stack(w2),                                # (L, FF, C)
        vec6=jnp.concatenate(vec6, axis=0))              # (L*6, 1, C)


# ---------------------------------------------------------------------------
# Full encoder forward (wrapper)
# ---------------------------------------------------------------------------
def encoder_forward(x, params, *, H, K):
    B, T, C = x.shape
    L = len(params['layers'])
    pad = K // 2
    pk = pack_params(params, C=C, H=H, K=K, L=L)

    # im2col unfold of the zero-padded input: xcol[., t, k*C + c] = xpad[., t+k, c]
    xpad = jnp.pad(x, ((0, 0), (pad, pad), (0, 0)))
    xcol = jnp.concatenate([xpad[:, k:k + T, :] for k in range(K)], axis=-1)
    xcol = xcol.reshape(B * T, K * C)

    kernel = partial(encoder_kernel, B=B, T=T, C=C, H=H, K=K, L=L)
    vmem = pl.BlockSpec(memory_space=pltpu.MemorySpace.VMEM)   # whole array resident in VMEM
    out = pl.pallas_call(
        kernel,
        out_shape=jax.ShapeDtypeStruct((B * T, C), jnp.float32),
        in_specs=[vmem] * 10,
        out_specs=vmem,
    )(xcol, pk['w_conv'], pk['conv_vec'], pk['wqkv'], pk['bqkv'],
      pk['wo'], pk['w1'], pk['b1'], pk['w2'], pk['vec6'])

    # layer_results is [] when tgt_layer is None (matches the PyTorch module)
    return out.reshape(B, T, C), []


# ---------------------------------------------------------------------------
# Deterministic synthetic parameters.
# NOTE: the PyTorch module initializes biases to 0 and LN affines to (1, 0); small
# random values are used here so the correctness check exercises every parameter
# path — the forward math is unchanged.
# ---------------------------------------------------------------------------
def make_params(key, C, FF, H, K, G, L):
    kit = iter(jax.random.split(key, 64))
    nk = lambda: next(kit)

    # weight-normed grouped Conv1d (weight_norm dim=2 at init => w_eff == v)
    std = math.sqrt(4.0 / (K * C))
    v = jax.random.normal(nk(), (C, C // G, K), jnp.float32) * std
    norm = jnp.sqrt(jnp.sum(v * v, axis=(0, 1), keepdims=True))    # (1, 1, K)
    w_eff = norm * (v / norm)                                      # == v

    # dense (tap, c_in, c_out) matrices, block-diagonal over the G groups
    cpg = C // G
    w_taps = jnp.zeros((K, C, C), jnp.float32)
    for gi in range(G):
        blk = w_eff[gi * cpg:(gi + 1) * cpg]                       # (out=cpg, in=cpg, K)
        w_taps = w_taps.at[:, gi * cpg:(gi + 1) * cpg,
                           gi * cpg:(gi + 1) * cpg].set(jnp.transpose(blk, (2, 1, 0)))

    def vec(k, n, scale=0.1):
        return jax.random.normal(k, (n,), jnp.float32) * scale

    def lin(k, din, dout):   # init_bert_params-style std=0.02, (in, out) layout
        return jax.random.normal(k, (din, dout), jnp.float32) * 0.02

    params = dict(
        w_taps=w_taps,
        conv_bias=vec(nk(), C),
        enc_ln_g=1.0 + vec(nk(), C),
        enc_ln_b=vec(nk(), C),
        layers=[])
    for _ in range(L):
        params['layers'].append(dict(
            wq=lin(nk(), C, C), bq=vec(nk(), C),
            wk=lin(nk(), C, C), bk=vec(nk(), C),
            wv=lin(nk(), C, C), bv=vec(nk(), C),
            wo=lin(nk(), C, C), bo=vec(nk(), C),
            ln1_g=1.0 + vec(nk(), C), ln1_b=vec(nk(), C),
            w1=lin(nk(), C, FF), b1=vec(nk(), FF),
            w2=lin(nk(), FF, C), b2=vec(nk(), C),
            ln2_g=1.0 + vec(nk(), C), ln2_b=vec(nk(), C)))
    return params


# ---------------------------------------------------------------------------
# Pure-JAX reference (same math, no Pallas) for the correctness check
# ---------------------------------------------------------------------------
def ref_forward(x, params, *, H, K):
    B, T, C = x.shape
    pad = K // 2
    xpad = jnp.pad(x, ((0, 0), (pad, pad), (0, 0)))
    acc = jnp.zeros_like(x)
    for k in range(K):
        acc = acc + jnp.einsum('btc,cd->btd', xpad[:, k:k + T, :], params['w_taps'][k])
    x = _ln(x + _gelu(acc + params['conv_bias']), params['enc_ln_g'], params['enc_ln_b'])
    for p in params['layers']:
        d = C // H
        scale = 1.0 / math.sqrt(d)
        q = (x @ p['wq'] + p['bq']).reshape(B, T, H, d)
        k_ = (x @ p['wk'] + p['bk']).reshape(B, T, H, d)
        v = (x @ p['wv'] + p['bv']).reshape(B, T, H, d)
        s = jnp.einsum('bthd,bshd->bhts', q, k_) * scale
        a = jax.nn.softmax(s, axis=-1)
        ctx = jnp.einsum('bhts,bshd->bthd', a, v).reshape(B, T, C)
        x = _ln(x + ctx @ p['wo'] + p['bo'], p['ln1_g'], p['ln1_b'])
        ff = _gelu(x @ p['w1'] + p['b1']) @ p['w2'] + p['b2']
        x = _ln(x + ff, p['ln2_g'], p['ln2_b'])
    return x


if __name__ == "__main__":
    # encoder_embed_dim=32, ffn=64, heads=4, conv_pos=8, conv_pos_groups=4, layers=2
    B, T, C, FF, H, K, G, L = 2, 16, 32, 64, 4, 8, 4, 2
    key = jax.random.PRNGKey(0)
    kx, kp = jax.random.split(key)
    x = jax.random.normal(kx, (B, T, C), jnp.float32)
    params = make_params(kp, C, FF, H, K, G, L)

    fwd = jax.jit(partial(encoder_forward, H=H, K=K))
    out, layer_results = fwd(x, params)
    out = jax.block_until_ready(out)

    ref = ref_forward(x, params, H=H, K=K)
    assert out.shape == (B, T, C)
    assert layer_results == []
    err = float(jnp.max(jnp.abs(out - ref)))
    # 2e-4 tolerance: approx EUP reciprocal in the softmax + f32 accumulation-order
    # differences from the fused conv/attention matmuls.
    assert jnp.allclose(out, ref, atol=2e-4, rtol=2e-4), err
    print("KERNEL_OK")
</pallas_src>

<mosaic_0001>
module attributes {stable_mosaic.version = 11 : i64} {
  func.func @encoder_kernel(%arg0: memref<32x256xf32, #tpu.memory_space<vmem>>, %arg1: memref<256x32xf32, #tpu.memory_space<vmem>>, %arg2: memref<3x1x32xf32, #tpu.memory_space<vmem>>, %arg3: memref<24x32x8xf32, #tpu.memory_space<vmem>>, %arg4: memref<24x1x8xf32, #tpu.memory_space<vmem>>, %arg5: memref<8x8x32xf32, #tpu.memory_space<vmem>>, %arg6: memref<2x32x64xf32, #tpu.memory_space<vmem>>, %arg7: memref<2x1x64xf32, #tpu.memory_space<vmem>>, %arg8: memref<2x64x32xf32, #tpu.memory_space<vmem>>, %arg9: memref<12x1x32xf32, #tpu.memory_space<vmem>>, %arg10: memref<32x32xf32, #tpu.memory_space<vmem>>) attributes {dimension_semantics = [], scalar_prefetch = 0 : i64, scratch_operands = 0 : i64, tpu.core_type = #tpu.core_type<tc>} {
    %c0 = arith.constant 0 : index
    %c0_0 = arith.constant 0 : index
    %0 = vector.load %arg0[%c0, %c0_0] : memref<32x256xf32, #tpu.memory_space<vmem>>, vector<32x256xf32>
    %1 = vector.extract_strided_slice %0 {offsets = [0, 128], sizes = [32, 32], strides = [1, 1]} : vector<32x256xf32> to vector<32x32xf32>
    %c0_1 = arith.constant 0 : index
    %c0_2 = arith.constant 0 : index
    %2 = vector.load %arg1[%c0_1, %c0_2] : memref<256x32xf32, #tpu.memory_space<vmem>>, vector<256x32xf32>
    %cst = arith.constant dense<0.000000e+00> : vector<32x32xf32>
    %3 = tpu.matmul %0, %2, %cst {dimension_numbers = #tpu.dot_dimension_numbers<[1], [0], [0], [1], [0, 0, 1, 1], [], []>} : vector<32x256xf32>, vector<256x32xf32>, vector<32x32xf32> -> vector<32x32xf32>
    %c0_3 = arith.constant 0 : index
    %c0_4 = arith.constant 0 : index
    %c0_5 = arith.constant 0 : index
    %4 = vector.load %arg2[%c0_3, %c0_4, %c0_5] : memref<3x1x32xf32, #tpu.memory_space<vmem>>, vector<1x1x32xf32>
    %5 = vector.shape_cast %4 : vector<1x1x32xf32> to vector<1x32xf32>
    %6 = vector.broadcast %5 : vector<1x32xf32> to vector<32x32xf32>
    %7 = arith.addf %3, %6 : vector<32x32xf32>
    %cst_6 = arith.constant 5.000000e-01 : f32
    %8 = vector.broadcast %cst_6 : f32 to vector<32x32xf32>
    %9 = arith.mulf %8, %7 : vector<32x32xf32>
    %cst_7 = arith.constant 0.707106769 : f32
    %10 = vector.broadcast %cst_7 : f32 to vector<32x32xf32>
    %11 = arith.mulf %7, %10 : vector<32x32xf32>
    %12 = math.erf %11 : vector<32x32xf32>
    %cst_8 = arith.constant 1.000000e+00 : f32
    %13 = vector.broadcast %cst_8 : f32 to vector<32x32xf32>
    %14 = arith.addf %13, %12 : vector<32x32xf32>
    %15 = arith.mulf %9, %14 : vector<32x32xf32>
    %16 = arith.addf %1, %15 : vector<32x32xf32>
    %c1 = arith.constant 1 : index
    %c0_9 = arith.constant 0 : index
    %c0_10 = arith.constant 0 : index
    %17 = vector.load %arg2[%c1, %c0_9, %c0_10] : memref<3x1x32xf32, #tpu.memory_space<vmem>>, vector<1x1x32xf32>
    %18 = vector.shape_cast %17 : vector<1x1x32xf32> to vector<1x32xf32>
    %c2 = arith.constant 2 : index
    %c0_11 = arith.constant 0 : index
    %c0_12 = arith.constant 0 : index
    %19 = vector.load %arg2[%c2, %c0_11, %c0_12] : memref<3x1x32xf32, #tpu.memory_space<vmem>>, vector<1x1x32xf32>
    %20 = vector.shape_cast %19 : vector<1x1x32xf32> to vector<1x32xf32>
    %cst_13 = arith.constant dense<0.000000e+00> : vector<32xf32>
    %21 = vector.multi_reduction <add>, %16, %cst_13 [1] : vector<32x32xf32> to vector<32xf32>
    %22 = vector.shape_cast %21 : vector<32xf32> to vector<32x1xf32>
    %cst_14 = arith.constant 3.200000e+01 : f32
    %23 = vector.broadcast %cst_14 : f32 to vector<32x1xf32>
    %24 = arith.divf %22, %23 : vector<32x1xf32>
    %25 = vector.broadcast %24 : vector<32x1xf32> to vector<32x32xf32>
    %26 = arith.subf %16, %25 : vector<32x32xf32>
    %27 = arith.mulf %26, %26 : vector<32x32xf32>
    %cst_15 = arith.constant dense<0.000000e+00> : vector<32xf32>
    %28 = vector.multi_reduction <add>, %27, %cst_15 [1] : vector<32x32xf32> to vector<32xf32>
    %29 = vector.shape_cast %28 : vector<32xf32> to vector<32x1xf32>
    %cst_16 = arith.constant 3.200000e+01 : f32
    %30 = vector.broadcast %cst_16 : f32 to vector<32x1xf32>
    %31 = arith.divf %29, %30 : vector<32x1xf32>
    %32 = vector.broadcast %24 : vector<32x1xf32> to vector<32x32xf32>
    %33 = arith.subf %16, %32 : vector<32x32xf32>
    %cst_17 = arith.constant 9.99999974E-6 : f32
    %34 = vector.broadcast %cst_17 : f32 to vector<32x1xf32>
    %35 = arith.addf %31, %34 : vector<32x1xf32>
    %36 = math.rsqrt %35 : vector<32x1xf32>
    %37 = vector.broadcast %36 : vector<32x1xf32> to vector<32x32xf32>
    %38 = arith.mulf %33, %37 : vector<32x32xf32>
    %39 = vector.broadcast %18 : vector<1x32xf32> to vector<32x32xf32>
    %40 = arith.mulf %38, %39 : vector<32x32xf32>
    %41 = vector.broadcast %20 : vector<1x32xf32> to vector<32x32xf32>
    %42 = arith.addf %40, %41 : vector<32x32xf32>
    %c0_18 = arith.constant 0 : index
    %c0_19 = arith.constant 0 : index
    %c0_20 = arith.constant 0 : index
    %43 = vector.load %arg3[%c0_18, %c0_19, %c0_20] : memref<24x32x8xf32, #tpu.memory_space<vmem>>, vector<1x32x8xf32>
    %44 = vector.shape_cast %43 : vector<1x32x8xf32> to vector<32x8xf32>
    %cst_21 = arith.constant dense<0.000000e+00> : vector<32x8xf32>
    %45 = tpu.matmul %42, %44, %cst_21 {dimension_numbers = #tpu.dot_dimension_numbers<[1], [0], [0], [1], [0, 0, 1, 1], [], []>} : vector<32x32xf32>, vector<32x8xf32>, vector<32x8xf32> -> vector<32x8xf32>
    %c0_22 = arith.constant 0 : index
    %c0_23 = arith.constant 0 : index
    %c0_24 = arith.constant 0 : index
    %46 = vector.load %arg4[%c0_22, %c0_23, %c0_24] : memref<24x1x8xf32, #tpu.memory_space<vmem>>, vector<1x1x8xf32>
    %47 = vector.shape_cast %46 : vector<1x1x8xf32> to vector<1x8xf32>
    %48 = vector.broadcast %47 : vector<1x8xf32> to vector<32x8xf32>
    %49 = arith.addf %45, %48 : vector<32x8xf32>
    %50 = vector.extract_strided_slice %49 {offsets = [0, 0], sizes = [16, 8], strides = [1, 1]} : vector<32x8xf32> to vector<16x8xf32>
    %51 = vector.extract_strided_slice %49 {offsets = [16, 0], sizes = [16, 8], strides = [1, 1]} : vector<32x8xf32> to vector<16x8xf32>
    %c1_25 = arith.constant 1 : index
    %c0_26 = arith.constant 0 : index
    %c0_27 = arith.constant 0 : index
    %52 = vector.load %arg3[%c1_25, %c0_26, %c0_27] : memref<24x32x8xf32, #tpu.memory_space<vmem>>, vector<1x32x8xf32>
    %53 = vector.shape_cast %52 : vector<1x32x8xf32> to vector<32x8xf32>
    %cst_28 = arith.constant dense<0.000000e+00> : vector<32x8xf32>
    %54 = tpu.matmul %42, %53, %cst_28 {dimension_numbers = #tpu.dot_dimension_numbers<[1], [0], [0], [1], [0, 0, 1, 1], [], []>} : vector<32x32xf32>, vector<32x8xf32>, vector<32x8xf32> -> vector<32x8xf32>
    %c1_29 = arith.constant 1 : index
    %c0_30 = arith.constant 0 : index
    %c0_31 = arith.constant 0 : index
    %55 = vector.load %arg4[%c1_29, %c0_30, %c0_31] : memref<24x1x8xf32, #tpu.memory_space<vmem>>, vector<1x1x8xf32>
    %56 = vector.shape_cast %55 : vector<1x1x8xf32> to vector<1x8xf32>
    %57 = vector.broadcast %56 : vector<1x8xf32> to vector<32x8xf32>
    %58 = arith.addf %54, %57 : vector<32x8xf32>
    %59 = vector.extract_strided_slice %58 {offsets = [0, 0], sizes = [16, 8], strides = [1, 1]} : vector<32x8xf32> to vector<16x8xf32>
    %60 = vector.extract_strided_slice %58 {offsets = [16, 0], sizes = [16, 8], strides = [1, 1]} : vector<32x8xf32> to vector<16x8xf32>
    %c2_32 = arith.constant 2 : index
    %c0_33 = arith.constant 0 : index
    %c0_34 = arith.constant 0 : index
    %61 = vector.load %arg3[%c2_32, %c0_33, %c0_34] : memref<24x32x8xf32, #tpu.memory_space<vmem>>, vector<1x32x8xf32>
    %62 = vector.shape_cast %61 : vector<1x32x8xf32> to vector<32x8xf32>
    %cst_35 = arith.constant dense<0.000000e+00> : vector<32x8xf32>
    %63 = tpu.matmul %42, %62, %cst_35 {dimension_numbers = #tpu.dot_dimension_numbers<[1], [0], [0], [1], [0, 0, 1, 1], [], []>} : vector<32x32xf32>, vector<32x8xf32>, vector<32x8xf32> -> vector<32x8xf32>
    %c2_36 = arith.constant 2 : index
    %c0_37 = arith.constant 0 : index
    %c0_38 = arith.constant 0 : index
    %64 = vector.load %arg4[%c2_36, %c0_37, %c0_38] : memref<24x1x8xf32, #tpu.memory_space<vmem>>, vector<1x1x8xf32>
    %65 = vector.shape_cast %64 : vector<1x1x8xf32> to vector<1x8xf32>
    %66 = vector.broadcast %65 : vector<1x8xf32> to vector<32x8xf32>
    %67 = arith.addf %63, %66 : vector<32x8xf32>
    %68 = vector.extract_strided_slice %67 {offsets = [0, 0], sizes = [16, 8], strides = [1, 1]} : vector<32x8xf32> to vector<16x8xf32>
    %69 = vector.extract_strided_slice %67 {offsets = [16, 0], sizes = [16, 8], strides = [1, 1]} : vector<32x8xf32> to vector<16x8xf32>
    %c3 = arith.constant 3 : index
    %c0_39 = arith.constant 0 : index
    %c0_40 = arith.constant 0 : index
    %70 = vector.load %arg3[%c3, %c0_39, %c0_40] : memref<24x32x8xf32, #tpu.memory_space<vmem>>, vector<1x32x8xf32>
    %71 = vector.shape_cast %70 : vector<1x32x8xf32> to vector<32x8xf32>
    %cst_41 = arith.constant dense<0.000000e+00> : vector<32x8xf32>
    %72 = tpu.matmul %42, %71, %cst_41 {dimension_numbers = #tpu.dot_dimension_numbers<[1], [0], [0], [1], [0, 0, 1, 1], [], []>} : vector<32x32xf32>, vector<32x8xf32>, vector<32x8xf32> -> vector<32x8xf32>
    %c3_42 = arith.constant 3 : index
    %c0_43 = arith.constant 0 : index
    %c0_44 = arith.constant 0 : index
    %73 = vector.load %arg4[%c3_42, %c0_43, %c0_44] : memref<24x1x8xf32, #tpu.memory_space<vmem>>, vector<1x1x8xf32>
    %74 = vector.shape_cast %73 : vector<1x1x8xf32> to vector<1x8xf32>
    %75 = vector.broadcast %74 : vector<1x8xf32> to vector<32x8xf32>
    %76 = arith.addf %72, %75 : vector<32x8xf32>
    %77 = vector.extract_strided_slice %76 {offsets = [0, 0], sizes = [16, 8], strides = [1, 1]} : vector<32x8xf32> to vector<16x8xf32>
    %78 = vector.extract_strided_slice %76 {offsets = [16, 0], sizes = [16, 8], strides = [1, 1]} : vector<32x8xf32> to vector<16x8xf32>
    %79 = vector.shape_cast %50 : vector<16x8xf32> to vector<1x16x8xf32>
    %80 = vector.shape_cast %51 : vector<16x8xf32> to vector<1x16x8xf32>
    %81 = vector.shape_cast %59 : vector<16x8xf32> to vector<1x16x8xf32>
    %82 = vector.shape_cast %60 : vector<16x8xf32> to vector<1x16x8xf32>
    %83 = vector.shape_cast %68 : vector<16x8xf32> to vector<1x16x8xf32>
    %84 = vector.shape_cast %69 : vector<16x8xf32> to vector<1x16x8xf32>
    %85 = vector.shape_cast %77 : vector<16x8xf32> to vector<1x16x8xf32>
    %86 = vector.shape_cast %78 : vector<16x8xf32> to vector<1x16x8xf32>
    %87 = tpu.concatenate %79, %80, %81, %82, %83, %84, %85, %86 in 0 : vector<1x16x8xf32>, vector<1x16x8xf32>, vector<1x16x8xf32>, vector<1x16x8xf32>, vector<1x16x8xf32>, vector<1x16x8xf32>, vector<1x16x8xf32>, vector<1x16x8xf32> -> vector<8x16x8xf32>
    %c4 = arith.constant 4 : index
    %c0_45 = arith.constant 0 : index
    %c0_46 = arith.constant 0 : index
    %88 = vector.load %arg3[%c4, %c0_45, %c0_46] : memref<24x32x8xf32, #tpu.memory_space<vmem>>, vector<1x32x8xf32>
    %89 = vector.shape_cast %88 : vector<1x32x8xf32> to vector<32x8xf32>
    %cst_47 = arith.constant dense<0.000000e+00> : vector<32x8xf32>
    %90 = tpu.matmul %42, %89, %cst_47 {dimension_numbers = #tpu.dot_dimension_numbers<[1], [0], [0], [1], [0, 0, 1, 1], [], []>} : vector<32x32xf32>, vector<32x8xf32>, vector<32x8xf32> -> vector<32x8xf32>
    %c4_48 = arith.constant 4 : index
    %c0_49 = arith.constant 0 : index
    %c0_50 = arith.constant 0 : index
    %91 = vector.load %arg4[%c4_48, %c0_49, %c0_50] : memref<24x1x8xf32, #tpu.memory_space<vmem>>, vector<1x1x8xf32>
    %92 = vector.shape_cast %91 : vector<1x1x8xf32> to vector<1x8xf32>
    %93 = vector.broadcast %92 : vector<1x8xf32> to vector<32x8xf32>
    %94 = arith.addf %90, %93 : vector<32x8xf32>
    %95 = vector.extract_strided_slice %94 {offsets = [0, 0], sizes = [16, 8], strides = [1, 1]} : vector<32x8xf32> to vector<16x8xf32>
    %96 = vector.extract_strided_slice %94 {offsets = [16, 0], sizes = [16, 8], strides = [1, 1]} : vector<32x8xf32> to vector<16x8xf32>
    %c5 = arith.constant 5 : index
    %c0_51 = arith.constant 0 : index
    %c0_52 = arith.constant 0 : index
    %97 = vector.load %arg3[%c5, %c0_51, %c0_52] : memref<24x32x8xf32, #tpu.memory_space<vmem>>, vector<1x32x8xf32>
    %98 = vector.shape_cast %97 : vector<1x32x8xf32> to vector<32x8xf32>
    %cst_53 = arith.constant dense<0.000000e+00> : vector<32x8xf32>
    %99 = tpu.matmul %42, %98, %cst_53 {dimension_numbers = #tpu.dot_dimension_numbers<[1], [0], [0], [1], [0, 0, 1, 1], [], []>} : vector<32x32xf32>, vector<32x8xf32>, vector<32x8xf32> -> vector<32x8xf32>
    %c5_54 = arith.constant 5 : index
    %c0_55 = arith.constant 0 : index
    %c0_56 = arith.constant 0 : index
    %100 = vector.load %arg4[%c5_54, %c0_55, %c0_56] : memref<24x1x8xf32, #tpu.memory_space<vmem>>, vector<1x1x8xf32>
    %101 = vector.shape_cast %100 : vector<1x1x8xf32> to vector<1x8xf32>
    %102 = vector.broadcast %101 : vector<1x8xf32> to vector<32x8xf32>
    %103 = arith.addf %99, %102 : vector<32x8xf32>
    %104 = vector.extract_strided_slice %103 {offsets = [0, 0], sizes = [16, 8], strides = [1, 1]} : vector<32x8xf32> to vector<16x8xf32>
    %105 = vector.extract_strided_slice %103 {offsets = [16, 0], sizes = [16, 8], strides = [1, 1]} : vector<32x8xf32> to vector<16x8xf32>
    %c6 = arith.constant 6 : index
    %c0_57 = arith.constant 0 : index
    %c0_58 = arith.constant 0 : index
    %106 = vector.load %arg3[%c6, %c0_57, %c0_58] : memref<24x32x8xf32, #tpu.memory_space<vmem>>, vector<1x32x8xf32>
    %107 = vector.shape_cast %106 : vector<1x32x8xf32> to vector<32x8xf32>
    %cst_59 = arith.constant dense<0.000000e+00> : vector<32x8xf32>
    %108 = tpu.matmul %42, %107, %cst_59 {dimension_numbers = #tpu.dot_dimension_numbers<[1], [0], [0], [1], [0, 0, 1, 1], [], []>} : vector<32x32xf32>, vector<32x8xf32>, vector<32x8xf32> -> vector<32x8xf32>
    %c6_60 = arith.constant 6 : index
    %c0_61 = arith.constant 0 : index
    %c0_62 = arith.constant 0 : index
    %109 = vector.load %arg4[%c6_60, %c0_61, %c0_62] : memref<24x1x8xf32, #tpu.memory_space<vmem>>, vector<1x1x8xf32>
    %110 = vector.shape_cast %109 : vector<1x1x8xf32> to vector<1x8xf32>
    %111 = vector.broadcast %110 : vector<1x8xf32> to vector<32x8xf32>
    %112 = arith.addf %108, %111 : vector<32x8xf32>
    %113 = vector.extract_strided_slice %112 {offsets = [0, 0], sizes = [16, 8], strides = [1, 1]} : vector<32x8xf32> to vector<16x8xf32>
    %114 = vector.extract_strided_slice %112 {offsets = [16, 0], sizes = [16, 8], strides = [1, 1]} : vector<32x8xf32> to vector<16x8xf32>
    %c7 = arith.constant 7 : index
    %c0_63 = arith.constant 0 : index
    %c0_64 = arith.constant 0 : index
    %115 = vector.load %arg3[%c7, %c0_63, %c0_64] : memref<24x32x8xf32, #tpu.memory_space<vmem>>, vector<1x32x8xf32>
    %116 = vector.shape_cast %115 : vector<1x32x8xf32> to vector<32x8xf32>
    %cst_65 = arith.constant dense<0.000000e+00> : vector<32x8xf32>
    %117 = tpu.matmul %42, %116, %cst_65 {dimension_numbers = #tpu.dot_dimension_numbers<[1], [0], [0], [1], [0, 0, 1, 1], [], []>} : vector<32x32xf32>, vector<32x8xf32>, vector<32x8xf32> -> vector<32x8xf32>
    %c7_66 = arith.constant 7 : index
    %c0_67 = arith.constant 0 : index
    %c0_68 = arith.constant 0 : index
    %118 = vector.load %arg4[%c7_66, %c0_67, %c0_68] : memref<24x1x8xf32, #tpu.memory_space<vmem>>, vector<1x1x8xf32>
    %119 = vector.shape_cast %118 : vector<1x1x8xf32> to vector<1x8xf32>
    %120 = vector.broadcast %119 : vector<1x8xf32> to vector<32x8xf32>
    %121 = arith.addf %117, %120 : vector<32x8xf32>
    %122 = vector.extract_strided_slice %121 {offsets = [0, 0], sizes = [16, 8], strides = [1, 1]} : vector<32x8xf32> to vector<16x8xf32>
    %123 = vector.extract_strided_slice %121 {offsets = [16, 0], sizes = [16, 8], strides = [1, 1]} : vector<32x8xf32> to vector<16x8xf32>
    %124 = vector.shape_cast %95 : vector<16x8xf32> to vector<1x16x8xf32>
    %125 = vector.shape_cast %96 : vector<16x8xf32> to vector<1x16x8xf32>
    %126 = vector.shape_cast %104 : vector<16x8xf32> to vector<1x16x8xf32>
    %127 = vector.shape_cast %105 : vector<16x8xf32> to vector<1x16x8xf32>
    %128 = vector.shape_cast %113 : vector<16x8xf32> to vector<1x16x8xf32>
    %129 = vector.shape_cast %114 : vector<16x8xf32> to vector<1x16x8xf32>
    %130 = vector.shape_cast %122 : vector<16x8xf32> to vector<1x16x8xf32>
    %131 = vector.shape_cast %123 : vector<16x8xf32> to vector<1x16x8xf32>
    %132 = tpu.concatenate %124, %125, %126, %127, %128, %129, %130, %131 in 0 : vector<1x16x8xf32>, vector<1x16x8xf32>, vector<1x16x8xf32>, vector<1x16x8xf32>, vector<1x16x8xf32>, vector<1x16x8xf32>, vector<1x16x8xf32>, vector<1x16x8xf32> -> vector<8x16x8xf32>
    %c8 = arith.constant 8 : index
    %c0_69 = arith.constant 0 : index
    %c0_70 = arith.constant 0 : index
    %133 = vector.load %arg3[%c8, %c0_69, %c0_70] : memref<24x32x8xf32, #tpu.memory_space<vmem>>, vector<1x32x8xf32>
    %134 = vector.shape_cast %133 : vector<1x32x8xf32> to vector<32x8xf32>
    %cst_71 = arith.constant dense<0.000000e+00> : vector<32x8xf32>
    %135 = tpu.matmul %42, %134, %cst_71 {dimension_numbers = #tpu.dot_dimension_numbers<[1], [0], [0], [1], [0, 0, 1, 1], [], []>} : vector<32x32xf32>, vector<32x8xf32>, vector<32x8xf32> -> vector<32x8xf32>
    %c8_72 = arith.constant 8 : index
    %c0_73 = arith.constant 0 : index
    %c0_74 = arith.constant 0 : index
    %136 = vector.load %arg4[%c8_72, %c0_73, %c0_74] : memref<24x1x8xf32, #tpu.memory_space<vmem>>, vector<1x1x8xf32>
    %137 = vector.shape_cast %136 : vector<1x1x8xf32> to vector<1x8xf32>
    %138 = vector.broadcast %137 : vector<1x8xf32> to vector<32x8xf32>
    %139 = arith.addf %135, %138 : vector<32x8xf32>
    %140 = vector.extract_strided_slice %139 {offsets = [0, 0], sizes = [16, 8], strides = [1, 1]} : vector<32x8xf32> to vector<16x8xf32>
    %141 = vector.extract_strided_slice %139 {offsets = [16, 0], sizes = [16, 8], strides = [1, 1]} : vector<32x8xf32> to vector<16x8xf32>
    %c9 = arith.constant 9 : index
    %c0_75 = arith.constant 0 : index
    %c0_76 = arith.constant 0 : index
    %142 = vector.load %arg3[%c9, %c0_75, %c0_76] : memref<24x32x8xf32, #tpu.memory_space<vmem>>, vector<1x32x8xf32>
    %143 = vector.shape_cast %142 : vector<1x32x8xf32> to vector<32x8xf32>
    %cst_77 = arith.constant dense<0.000000e+00> : vector<32x8xf32>
    %144 = tpu.matmul %42, %143, %cst_77 {dimension_numbers = #tpu.dot_dimension_numbers<[1], [0], [0], [1], [0, 0, 1, 1], [], []>} : vector<32x32xf32>, vector<32x8xf32>, vector<32x8xf32> -> vector<32x8xf32>
    %c9_78 = arith.constant 9 : index
    %c0_79 = arith.constant 0 : index
    %c0_80 = arith.constant 0 : index
    %145 = vector.load %arg4[%c9_78, %c0_79, %c0_80] : memref<24x1x8xf32, #tpu.memory_space<vmem>>, vector<1x1x8xf32>
    %146 = vector.shape_cast %145 : vector<1x1x8xf32> to vector<1x8xf32>
    %147 = vector.broadcast %146 : vector<1x8xf32> to vector<32x8xf32>
    %148 = arith.addf %144, %147 : vector<32x8xf32>
    %149 = vector.extract_strided_slice %148 {offsets = [0, 0], sizes = [16, 8], strides = [1, 1]} : vector<32x8xf32> to vector<16x8xf32>
    %150 = vector.extract_strided_slice %148 {offsets = [16, 0], sizes = [16, 8], strides = [1, 1]} : vector<32x8xf32> to vector<16x8xf32>
    %c10 = arith.constant 10 : index
    %c0_81 = arith.constant 0 : index
    %c0_82 = arith.constant 0 : index
    %151 = vector.load %arg3[%c10, %c0_81, %c0_82] : memref<24x32x8xf32, #tpu.memory_space<vmem>>, vector<1x32x8xf32>
    %152 = vector.shape_cast %151 : vector<1x32x8xf32> to vector<32x8xf32>
    %cst_83 = arith.constant dense<0.000000e+00> : vector<32x8xf32>
    %153 = tpu.matmul %42, %152, %cst_83 {dimension_numbers = #tpu.dot_dimension_numbers<[1], [0], [0], [1], [0, 0, 1, 1], [], []>} : vector<32x32xf32>, vector<32x8xf32>, vector<32x8xf32> -> vector<32x8xf32>
    %c10_84 = arith.constant 10 : index
    %c0_85 = arith.constant 0 : index
    %c0_86 = arith.constant 0 : index
    %154 = vector.load %arg4[%c10_84, %c0_85, %c0_86] : memref<24x1x8xf32, #tpu.memory_space<vmem>>, vector<1x1x8xf32>
    %155 = vector.shape_cast %154 : vector<1x1x8xf32> to vector<1x8xf32>
    %156 = vector.broadcast %155 : vector<1x8xf32> to vector<32x8xf32>
    %157 = arith.addf %153, %156 : vector<32x8xf32>
    %158 = vector.extract_strided_slice %157 {offsets = [0, 0], sizes = [16, 8], strides = [1, 1]} : vector<32x8xf32> to vector<16x8xf32>
    %159 = vector.extract_strided_slice %157 {offsets = [16, 0], sizes = [16, 8], strides = [1, 1]} : vector<32x8xf32> to vector<16x8xf32>
    %c11 = arith.constant 11 : index
    %c0_87 = arith.constant 0 : index
    %c0_88 = arith.constant 0 : index
    %160 = vector.load %arg3[%c11, %c0_87, %c0_88] : memref<24x32x8xf32, #tpu.memory_space<vmem>>, vector<1x32x8xf32>
    %161 = vector.shape_cast %160 : vector<1x32x8xf32> to vector<32x8xf32>
    %cst_89 = arith.constant dense<0.000000e+00> : vector<32x8xf32>
    %162 = tpu.matmul %42, %161, %cst_89 {dimension_numbers = #tpu.dot_dimension_numbers<[1], [0], [0], [1], [0, 0, 1, 1], [], []>} : vector<32x32xf32>, vector<32x8xf32>, vector<32x8xf32> -> vector<32x8xf32>
    %c11_90 = arith.constant 11 : index
    %c0_91 = arith.constant 0 : index
    %c0_92 = arith.constant 0 : index
    %163 = vector.load %arg4[%c11_90, %c0_91, %c0_92] : memref<24x1x8xf32, #tpu.memory_space<vmem>>, vector<1x1x8xf32>
    %164 = vector.shape_cast %163 : vector<1x1x8xf32> to vector<1x8xf32>
    %165 = vector.broadcast %164 : vector<1x8xf32> to vector<32x8xf32>
    %166 = arith.addf %162, %165 : vector<32x8xf32>
    %167 = vector.extract_strided_slice %166 {offsets = [0, 0], sizes = [16, 8], strides = [1, 1]} : vector<32x8xf32> to vector<16x8xf32>
    %168 = vector.extract_strided_slice %166 {offsets = [16, 0], sizes = [16, 8], strides = [1, 1]} : vector<32x8xf32> to vector<16x8xf32>
    %169 = vector.shape_cast %140 : vector<16x8xf32> to vector<1x16x8xf32>
    %170 = vector.shape_cast %141 : vector<16x8xf32> to vector<1x16x8xf32>
    %171 = vector.shape_cast %149 : vector<16x8xf32> to vector<1x16x8xf32>
    %172 = vector.shape_cast %150 : vector<16x8xf32> to vector<1x16x8xf32>
    %173 = vector.shape_cast %158 : vector<16x8xf32> to vector<1x16x8xf32>
    %174 = vector.shape_cast %159 : vector<16x8xf32> to vector<1x16x8xf32>
    %175 = vector.shape_cast %167 : vector<16x8xf32> to vector<1x16x8xf32>
    %176 = vector.shape_cast %168 : vector<16x8xf32> to vector<1x16x8xf32>
    %177 = tpu.concatenate %169, %170, %171, %172, %173, %174, %175, %176 in 0 : vector<1x16x8xf32>, vector<1x16x8xf32>, vector<1x16x8xf32>, vector<1x16x8xf32>, vector<1x16x8xf32>, vector<1x16x8xf32>, vector<1x16x8xf32>, vector<1x16x8xf32> -> vector<8x16x8xf32>
    "tpu.trace_start"() <{level = 10 : i32, message = "ntd,nsd->nts"}> : () -> ()
    %cst_93 = arith.constant dense<0.000000e+00> : vector<8x16x16xf32>
    %178 = tpu.matmul %87, %132, %cst_93 {dimension_numbers = #tpu.dot_dimension_numbers<[2], [2], [1], [1], [0, 0, 0, 1, 1, 1], [0], [0]>} : vector<8x16x8xf32>, vector<8x16x8xf32>, vector<8x16x16xf32> -> vector<8x16x16xf32>
    "tpu.trace_stop"() : () -> ()
    %cst_94 = arith.constant 0.353553385 : f32
    %179 = vector.broadcast %cst_94 : f32 to vector<8x16x16xf32>
    %180 = arith.mulf %178, %179 : vector<8x16x16xf32>
    %cst_95 = arith.constant dense<0xFF800000> : vector<8x16xf32>
    %181 = vector.multi_reduction <maximumf>, %180, %cst_95 [2] : vector<8x16x16xf32> to vector<8x16xf32>
    %182 = vector.shape_cast %181 : vector<8x16xf32> to vector<8x16x1xf32>
    %183 = vector.broadcast %182 : vector<8x16x1xf32> to vector<8x16x16xf32>
    %184 = arith.subf %180, %183 : vector<8x16x16xf32>
    %185 = math.exp %184 : vector<8x16x16xf32>
    %cst_96 = arith.constant dense<0.000000e+00> : vector<8x16xf32>
    %186 = vector.multi_reduction <add>, %185, %cst_96 [2] : vector<8x16x16xf32> to vector<8x16xf32>
    %187 = vector.shape_cast %186 : vector<8x16xf32> to vector<8x16x1xf32>
    %188 = tpu.reciprocal %187 {approx = true} : vector<8x16x1xf32> -> vector<8x16x1xf32>
    %189 = vector.broadcast %188 : vector<8x16x1xf32> to vector<8x16x16xf32>
    %190 = arith.mulf %185, %189 : vector<8x16x16xf32>
    "tpu.trace_start"() <{level = 10 : i32, message = "nts,nsd->ntd"}> : () -> ()
    %cst_97 = arith.constant dense<0.000000e+00> : vector<8x16x8xf32>
    %191 = tpu.matmul %190, %177, %cst_97 {dimension_numbers = #tpu.dot_dimension_numbers<[2], [1], [1], [2], [0, 0, 0, 1, 1, 2], [0], [0]>} : vector<8x16x16xf32>, vector<8x16x8xf32>, vector<8x16x8xf32> -> vector<8x16x8xf32>
    %cst_98 = arith.constant 0.000000e+00 : f32
    "tpu.trace_stop"() : () -> ()
    %192 = vector.broadcast %cst_98 : f32 to vector<32x32xf32>
    %193 = vector.extract_strided_slice %191 {offsets = [0, 0, 0], sizes = [2, 16, 8], strides = [1, 1, 1]} : vector<8x16x8xf32> to vector<2x16x8xf32>
    %194 = vector.shape_cast %193 : vector<2x16x8xf32> to vector<32x8xf32>
    %c0_99 = arith.constant 0 : index
    %c0_100 = arith.constant 0 : index
    %c0_101 = arith.constant 0 : index
    %195 = vector.load %arg5[%c0_99, %c0_100, %c0_101] : memref<8x8x32xf32, #tpu.memory_space<vmem>>, vector<1x8x32xf32>
    %196 = vector.shape_cast %195 : vector<1x8x32xf32> to vector<8x32xf32>
    %cst_102 = arith.constant dense<0.000000e+00> : vector<32x32xf32>
    %197 = tpu.matmul %194, %196, %cst_102 {dimension_numbers = #tpu.dot_dimension_numbers<[1], [0], [0], [1], [0, 0, 1, 1], [], []>} : vector<32x8xf32>, vector<8x32xf32>, vector<32x32xf32> -> vector<32x32xf32>
    %198 = arith.addf %192, %197 : vector<32x32xf32>
    %199 = vector.extract_strided_slice %191 {offsets = [2, 0, 0], sizes = [2, 16, 8], strides = [1, 1, 1]} : vector<8x16x8xf32> to vector<2x16x8xf32>
    %200 = vector.shape_cast %199 : vector<2x16x8xf32> to vector<32x8xf32>
    %c1_103 = arith.constant 1 : index
    %c0_104 = arith.constant 0 : index
    %c0_105 = arith.constant 0 : index
    %201 = vector.load %arg5[%c1_103, %c0_104, %c0_105] : memref<8x8x32xf32, #tpu.memory_space<vmem>>, vector<1x8x32xf32>
    %202 = vector.shape_cast %201 : vector<1x8x32xf32> to vector<8x32xf32>
    %cst_106 = arith.constant dense<0.000000e+00> : vector<32x32xf32>
    %203 = tpu.matmul %200, %202, %cst_106 {dimension_numbers = #tpu.dot_dimension_numbers<[1], [0], [0], [1], [0, 0, 1, 1], [], []>} : vector<32x8xf32>, vector<8x32xf32>, vector<32x32xf32> -> vector<32x32xf32>
    %204 = arith.addf %198, %203 : vector<32x32xf32>
    %205 = vector.extract_strided_slice %191 {offsets = [4, 0, 0], sizes = [2, 16, 8], strides = [1, 1, 1]} : vector<8x16x8xf32> to vector<2x16x8xf32>
    %206 = vector.shape_cast %205 : vector<2x16x8xf32> to vector<32x8xf32>
    %c2_107 = arith.constant 2 : index
    %c0_108 = arith.constant 0 : index
    %c0_109 = arith.constant 0 : index
    %207 = vector.load %arg5[%c2_107, %c0_108, %c0_109] : memref<8x8x32xf32, #tpu.memory_space<vmem>>, vector<1x8x32xf32>
    %208 = vector.shape_cast %207 : vector<1x8x32xf32> to vector<8x32xf32>
    %cst_110 = arith.constant dense<0.000000e+00> : vector<32x32xf32>
    %209 = tpu.matmul %206, %208, %cst_110 {dimension_numbers = #tpu.dot_dimension_numbers<[1], [0], [0], [1], [0, 0, 1, 1], [], []>} : vector<32x8xf32>, vector<8x32xf32>, vector<32x32xf32> -> vector<32x32xf32>
    %210 = arith.addf %204, %209 : vector<32x32xf32>
    %211 = vector.extract_strided_slice %191 {offsets = [6, 0, 0], sizes = [2, 16, 8], strides = [1, 1, 1]} : vector<8x16x8xf32> to vector<2x16x8xf32>
    %212 = vector.shape_cast %211 : vector<2x16x8xf32> to vector<32x8xf32>
    %c3_111 = arith.constant 3 : index
    %c0_112 = arith.constant 0 : index
    %c0_113 = arith.constant 0 : index
    %213 = vector.load %arg5[%c3_111, %c0_112, %c0_113] : memref<8x8x32xf32, #tpu.memory_space<vmem>>, vector<1x8x32xf32>
    %214 = vector.shape_cast %213 : vector<1x8x32xf32> to vector<8x32xf32>
    %cst_114 = arith.constant dense<0.000000e+00> : vector<32x32xf32>
    %215 = tpu.matmul %212, %214, %cst_114 {dimension_numbers = #tpu.dot_dimension_numbers<[1], [0], [0], [1], [0, 0, 1, 1], [], []>} : vector<32x8xf32>, vector<8x32xf32>, vector<32x32xf32> -> vector<32x32xf32>
    %216 = arith.addf %210, %215 : vector<32x32xf32>
    %c0_115 = arith.constant 0 : index
    %c0_116 = arith.constant 0 : index
    %c0_117 = arith.constant 0 : index
    %217 = vector.load %arg9[%c0_115, %c0_116, %c0_117] : memref<12x1x32xf32, #tpu.memory_space<vmem>>, vector<1x1x32xf32>
    %218 = vector.shape_cast %217 : vector<1x1x32xf32> to vector<1x32xf32>
    %219 = vector.broadcast %218 : vector<1x32xf32> to vector<32x32xf32>
    %220 = arith.addf %216, %219 : vector<32x32xf32>
    %221 = arith.addf %42, %220 : vector<32x32xf32>
    %c2_118 = arith.constant 2 : index
    %c0_119 = arith.constant 0 : index
    %c0_120 = arith.constant 0 : index
    %222 = vector.load %arg9[%c2_118, %c0_119, %c0_120] : memref<12x1x32xf32, #tpu.memory_space<vmem>>, vector<1x1x32xf32>
    %223 = vector.shape_cast %222 : vector<1x1x32xf32> to vector<1x32xf32>
    %c3_121 = arith.constant 3 : index
    %c0_122 = arith.constant 0 : index
    %c0_123 = arith.constant 0 : index
    %224 = vector.load %arg9[%c3_121, %c0_122, %c0_123] : memref<12x1x32xf32, #tpu.memory_space<vmem>>, vector<1x1x32xf32>
    %225 = vector.shape_cast %224 : vector<1x1x32xf32> to vector<1x32xf32>
    %cst_124 = arith.constant dense<0.000000e+00> : vector<32xf32>
    %226 = vector.multi_reduction <add>, %221, %cst_124 [1] : vector<32x32xf32> to vector<32xf32>
    %227 = vector.shape_cast %226 : vector<32xf32> to vector<32x1xf32>
    %cst_125 = arith.constant 3.200000e+01 : f32
    %228 = vector.broadcast %cst_125 : f32 to vector<32x1xf32>
    %229 = arith.divf %227, %228 : vector<32x1xf32>
    %230 = vector.broadcast %229 : vector<32x1xf32> to vector<32x32xf32>
    %231 = arith.subf %221, %230 : vector<32x32xf32>
    %232 = arith.mulf %231, %231 : vector<32x32xf32>
    %cst_126 = arith.constant dense<0.000000e+00> : vector<32xf32>
    %233 = vector.multi_reduction <add>, %232, %cst_126 [1] : vector<32x32xf32> to vector<32xf32>
    %234 = vector.shape_cast %233 : vector<32xf32> to vector<32x1xf32>
    %cst_127 = arith.constant 3.200000e+01 : f32
    %235 = vector.broadcast %cst_127 : f32 to vector<32x1xf32>
    %236 = arith.divf %234, %235 : vector<32x1xf32>
    %237 = vector.broadcast %229 : vector<32x1xf32> to vector<32x32xf32>
    %238 = arith.subf %221, %237 : vector<32x32xf32>
    %cst_128 = arith.constant 9.99999974E-6 : f32
    %239 = vector.broadcast %cst_128 : f32 to vector<32x1xf32>
    %240 = arith.addf %236, %239 : vector<32x1xf32>
    %241 = math.rsqrt %240 : vector<32x1xf32>
    %242 = vector.broadcast %241 : vector<32x1xf32> to vector<32x32xf32>
    %243 = arith.mulf %238, %242 : vector<32x32xf32>
    %244 = vector.broadcast %223 : vector<1x32xf32> to vector<32x32xf32>
    %245 = arith.mulf %243, %244 : vector<32x32xf32>
    %246 = vector.broadcast %225 : vector<1x32xf32> to vector<32x32xf32>
    %247 = arith.addf %245, %246 : vector<32x32xf32>
    %c0_129 = arith.constant 0 : index
    %c0_130 = arith.constant 0 : index
    %c0_131 = arith.constant 0 : index
    %248 = vector.load %arg6[%c0_129, %c0_130, %c0_131] : memref<2x32x64xf32, #tpu.memory_space<vmem>>, vector<1x32x64xf32>
    %249 = vector.shape_cast %248 : vector<1x32x64xf32> to vector<32x64xf32>
    %cst_132 = arith.constant dense<0.000000e+00> : vector<32x64xf32>
    %250 = tpu.matmul %247, %249, %cst_132 {dimension_numbers = #tpu.dot_dimension_numbers<[1], [0], [0], [1], [0, 0, 1, 1], [], []>} : vector<32x32xf32>, vector<32x64xf32>, vector<32x64xf32> -> vector<32x64xf32>
    %c0_133 = arith.constant 0 : index
    %c0_134 = arith.constant 0 : index
    %c0_135 = arith.constant 0 : index
    %251 = vector.load %arg7[%c0_133, %c0_134, %c0_135] : memref<2x1x64xf32, #tpu.memory_space<vmem>>, vector<1x1x64xf32>
    %252 = vector.shape_cast %251 : vector<1x1x64xf32> to vector<1x64xf32>
    %253 = vector.broadcast %252 : vector<1x64xf32> to vector<32x64xf32>
    %254 = arith.addf %250, %253 : vector<32x64xf32>
    %cst_136 = arith.constant 5.000000e-01 : f32
    %255 = vector.broadcast %cst_136 : f32 to vector<32x64xf32>
    %256 = arith.mulf %255, %254 : vector<32x64xf32>
    %cst_137 = arith.constant 0.707106769 : f32
    %257 = vector.broadcast %cst_137 : f32 to vector<32x64xf32>
    %258 = arith.mulf %254, %257 : vector<32x64xf32>
    %259 = math.erf %258 : vector<32x64xf32>
    %cst_138 = arith.constant 1.000000e+00 : f32
    %260 = vector.broadcast %cst_138 : f32 to vector<32x64xf32>
    %261 = arith.addf %260, %259 : vector<32x64xf32>
    %262 = arith.mulf %256, %261 : vector<32x64xf32>
    %c0_139 = arith.constant 0 : index
    %c0_140 = arith.constant 0 : index
    %c0_141 = arith.constant 0 : index
    %263 = vector.load %arg8[%c0_139, %c0_140, %c0_141] : memref<2x64x32xf32, #tpu.memory_space<vmem>>, vector<1x64x32xf32>
    %264 = vector.shape_cast %263 : vector<1x64x32xf32> to vector<64x32xf32>
    %cst_142 = arith.constant dense<0.000000e+00> : vector<32x32xf32>
    %265 = tpu.matmul %262, %264, %cst_142 {dimension_numbers = #tpu.dot_dimension_numbers<[1], [0], [0], [1], [0, 0, 1, 1], [], []>} : vector<32x64xf32>, vector<64x32xf32>, vector<32x32xf32> -> vector<32x32xf32>
    %c1_143 = arith.constant 1 : index
    %c0_144 = arith.constant 0 : index
    %c0_145 = arith.constant 0 : index
    %266 = vector.load %arg9[%c1_143, %c0_144, %c0_145] : memref<12x1x32xf32, #tpu.memory_space<vmem>>, vector<1x1x32xf32>
    %267 = vector.shape_cast %266 : vector<1x1x32xf32> to vector<1x32xf32>
    %268 = vector.broadcast %267 : vector<1x32xf32> to vector<32x32xf32>
    %269 = arith.addf %265, %268 : vector<32x32xf32>
    %270 = arith.addf %247, %269 : vector<32x32xf32>
    %c4_146 = arith.constant 4 : index
    %c0_147 = arith.constant 0 : index
    %c0_148 = arith.constant 0 : index
    %271 = vector.load %arg9[%c4_146, %c0_147, %c0_148] : memref<12x1x32xf32, #tpu.memory_space<vmem>>, vector<1x1x32xf32>
    %272 = vector.shape_cast %271 : vector<1x1x32xf32> to vector<1x32xf32>
    %c5_149 = arith.constant 5 : index
    %c0_150 = arith.constant 0 : index
    %c0_151 = arith.constant 0 : index
    %273 = vector.load %arg9[%c5_149, %c0_150, %c0_151] : memref<12x1x32xf32, #tpu.memory_space<vmem>>, vector<1x1x32xf32>
    %274 = vector.shape_cast %273 : vector<1x1x32xf32> to vector<1x32xf32>
    %cst_152 = arith.constant dense<0.000000e+00> : vector<32xf32>
    %275 = vector.multi_reduction <add>, %270, %cst_152 [1] : vector<32x32xf32> to vector<32xf32>
    %276 = vector.shape_cast %275 : vector<32xf32> to vector<32x1xf32>
    %cst_153 = arith.constant 3.200000e+01 : f32
    %277 = vector.broadcast %cst_153 : f32 to vector<32x1xf32>
    %278 = arith.divf %276, %277 : vector<32x1xf32>
    %279 = vector.broadcast %278 : vector<32x1xf32> to vector<32x32xf32>
    %280 = arith.subf %270, %279 : vector<32x32xf32>
    %281 = arith.mulf %280, %280 : vector<32x32xf32>
    %cst_154 = arith.constant dense<0.000000e+00> : vector<32xf32>
    %282 = vector.multi_reduction <add>, %281, %cst_154 [1] : vector<32x32xf32> to vector<32xf32>
    %283 = vector.shape_cast %282 : vector<32xf32> to vector<32x1xf32>
    %cst_155 = arith.constant 3.200000e+01 : f32
    %284 = vector.broadcast %cst_155 : f32 to vector<32x1xf32>
    %285 = arith.divf %283, %284 : vector<32x1xf32>
    %286 = vector.broadcast %278 : vector<32x1xf32> to vector<32x32xf32>
    %287 = arith.subf %270, %286 : vector<32x32xf32>
    %cst_156 = arith.constant 9.99999974E-6 : f32
    %288 = vector.broadcast %cst_156 : f32 to vector<32x1xf32>
    %289 = arith.addf %285, %288 : vector<32x1xf32>
    %290 = math.rsqrt %289 : vector<32x1xf32>
    %291 = vector.broadcast %290 : vector<32x1xf32> to vector<32x32xf32>
    %292 = arith.mulf %287, %291 : vector<32x32xf32>
    %293 = vector.broadcast %272 : vector<1x32xf32> to vector<32x32xf32>
    %294 = arith.mulf %292, %293 : vector<32x32xf32>
    %295 = vector.broadcast %274 : vector<1x32xf32> to vector<32x32xf32>
    %296 = arith.addf %294, %295 : vector<32x32xf32>
    %c12 = arith.constant 12 : index
    %c0_157 = arith.constant 0 : index
    %c0_158 = arith.constant 0 : index
    %297 = vector.load %arg3[%c12, %c0_157, %c0_158] : memref<24x32x8xf32, #tpu.memory_space<vmem>>, vector<1x32x8xf32>
    %298 = vector.shape_cast %297 : vector<1x32x8xf32> to vector<32x8xf32>
    %cst_159 = arith.constant dense<0.000000e+00> : vector<32x8xf32>
    %299 = tpu.matmul %296, %298, %cst_159 {dimension_numbers = #tpu.dot_dimension_numbers<[1], [0], [0], [1], [0, 0, 1, 1], [], []>} : vector<32x32xf32>, vector<32x8xf32>, vector<32x8xf32> -> vector<32x8xf32>
    %c12_160 = arith.constant 12 : index
    %c0_161 = arith.constant 0 : index
    %c0_162 = arith.constant 0 : index
    %300 = vector.load %arg4[%c12_160, %c0_161, %c0_162] : memref<24x1x8xf32, #tpu.memory_space<vmem>>, vector<1x1x8xf32>
    %301 = vector.shape_cast %300 : vector<1x1x8xf32> to vector<1x8xf32>
    %302 = vector.broadcast %301 : vector<1x8xf32> to vector<32x8xf32>
    %303 = arith.addf %299, %302 : vector<32x8xf32>
    %304 = vector.extract_strided_slice %303 {offsets = [0, 0], sizes = [16, 8], strides = [1, 1]} : vector<32x8xf32> to vector<16x8xf32>
    %305 = vector.extract_strided_slice %303 {offsets = [16, 0], sizes = [16, 8], strides = [1, 1]} : vector<32x8xf32> to vector<16x8xf32>
    %c13 = arith.constant 13 : index
    %c0_163 = arith.constant 0 : index
    %c0_164 = arith.constant 0 : index
    %306 = vector.load %arg3[%c13, %c0_163, %c0_164] : memref<24x32x8xf32, #tpu.memory_space<vmem>>, vector<1x32x8xf32>
    %307 = vector.shape_cast %306 : vector<1x32x8xf32> to vector<32x8xf32>
    %cst_165 = arith.constant dense<0.000000e+00> : vector<32x8xf32>
    %308 = tpu.matmul %296, %307, %cst_165 {dimension_numbers = #tpu.dot_dimension_numbers<[1], [0], [0], [1], [0, 0, 1, 1], [], []>} : vector<32x32xf32>, vector<32x8xf32>, vector<32x8xf32> -> vector<32x8xf32>
    %c13_166 = arith.constant 13 : index
    %c0_167 = arith.constant 0 : index
    %c0_168 = arith.constant 0 : index
    %309 = vector.load %arg4[%c13_166, %c0_167, %c0_168] : memref<24x1x8xf32, #tpu.memory_space<vmem>>, vector<1x1x8xf32>
    %310 = vector.shape_cast %309 : vector<1x1x8xf32> to vector<1x8xf32>
    %311 = vector.broadcast %310 : vector<1x8xf32> to vector<32x8xf32>
    %312 = arith.addf %308, %311 : vector<32x8xf32>
    %313 = vector.extract_strided_slice %312 {offsets = [0, 0], sizes = [16, 8], strides = [1, 1]} : vector<32x8xf32> to vector<16x8xf32>
    %314 = vector.extract_strided_slice %312 {offsets = [16, 0], sizes = [16, 8], strides = [1, 1]} : vector<32x8xf32> to vector<16x8xf32>
    %c14 = arith.constant 14 : index
    %c0_169 = arith.constant 0 : index
    %c0_170 = arith.constant 0 : index
    %315 = vector.load %arg3[%c14, %c0_169, %c0_170] : memref<24x32x8xf32, #tpu.memory_space<vmem>>, vector<1x32x8xf32>
    %316 = vector.shape_cast %315 : vector<1x32x8xf32> to vector<32x8xf32>
    %cst_171 = arith.constant dense<0.000000e+00> : vector<32x8xf32>
    %317 = tpu.matmul %296, %316, %cst_171 {dimension_numbers = #tpu.dot_dimension_numbers<[1], [0], [0], [1], [0, 0, 1, 1], [], []>} : vector<32x32xf32>, vector<32x8xf32>, vector<32x8xf32> -> vector<32x8xf32>
    %c14_172 = arith.constant 14 : index
    %c0_173 = arith.constant 0 : index
    %c0_174 = arith.constant 0 : index
    %318 = vector.load %arg4[%c14_172, %c0_173, %c0_174] : memref<24x1x8xf32, #tpu.memory_space<vmem>>, vector<1x1x8xf32>
    %319 = vector.shape_cast %318 : vector<1x1x8xf32> to vector<1x8xf32>
    %320 = vector.broadcast %319 : vector<1x8xf32> to vector<32x8xf32>
    %321 = arith.addf %317, %320 : vector<32x8xf32>
    %322 = vector.extract_strided_slice %321 {offsets = [0, 0], sizes = [16, 8], strides = [1, 1]} : vector<32x8xf32> to vector<16x8xf32>
    %323 = vector.extract_strided_slice %321 {offsets = [16, 0], sizes = [16, 8], strides = [1, 1]} : vector<32x8xf32> to vector<16x8xf32>
    %c15 = arith.constant 15 : index
    %c0_175 = arith.constant 0 : index
    %c0_176 = arith.constant 0 : index
    %324 = vector.load %arg3[%c15, %c0_175, %c0_176] : memref<24x32x8xf32, #tpu.memory_space<vmem>>, vector<1x32x8xf32>
    %325 = vector.shape_cast %324 : vector<1x32x8xf32> to vector<32x8xf32>
    %cst_177 = arith.constant dense<0.000000e+00> : vector<32x8xf32>
    %326 = tpu.matmul %296, %325, %cst_177 {dimension_numbers = #tpu.dot_dimension_numbers<[1], [0], [0], [1], [0, 0, 1, 1], [], []>} : vector<32x32xf32>, vector<32x8xf32>, vector<32x8xf32> -> vector<32x8xf32>
    %c15_178 = arith.constant 15 : index
    %c0_179 = arith.constant 0 : index
    %c0_180 = arith.constant 0 : index
    %327 = vector.load %arg4[%c15_178, %c0_179, %c0_180] : memref<24x1x8xf32, #tpu.memory_space<vmem>>, vector<1x1x8xf32>
    %328 = vector.shape_cast %327 : vector<1x1x8xf32> to vector<1x8xf32>
    %329 = vector.broadcast %328 : vector<1x8xf32> to vector<32x8xf32>
    %330 = arith.addf %326, %329 : vector<32x8xf32>
    %331 = vector.extract_strided_slice %330 {offsets = [0, 0], sizes = [16, 8], strides = [1, 1]} : vector<32x8xf32> to vector<16x8xf32>
    %332 = vector.extract_strided_slice %330 {offsets = [16, 0], sizes = [16, 8], strides = [1, 1]} : vector<32x8xf32> to vector<16x8xf32>
    %333 = vector.shape_cast %304 : vector<16x8xf32> to vector<1x16x8xf32>
    %334 = vector.shape_cast %305 : vector<16x8xf32> to vector<1x16x8xf32>
    %335 = vector.shape_cast %313 : vector<16x8xf32> to vector<1x16x8xf32>
    %336 = vector.shape_cast %314 : vector<16x8xf32> to vector<1x16x8xf32>
    %337 = vector.shape_cast %322 : vector<16x8xf32> to vector<1x16x8xf32>
    %338 = vector.shape_cast %323 : vector<16x8xf32> to vector<1x16x8xf32>
    %339 = vector.shape_cast %331 : vector<16x8xf32> to vector<1x16x8xf32>
    %340 = vector.shape_cast %332 : vector<16x8xf32> to vector<1x16x8xf32>
    %341 = tpu.concatenate %333, %334, %335, %336, %337, %338, %339, %340 in 0 : vector<1x16x8xf32>, vector<1x16x8xf32>, vector<1x16x8xf32>, vector<1x16x8xf32>, vector<1x16x8xf32>, vector<1x16x8xf32>, vector<1x16x8xf32>, vector<1x16x8xf32> -> vector<8x16x8xf32>
    %c16 = arith.constant 16 : index
    %c0_181 = arith.constant 0 : index
    %c0_182 = arith.constant 0 : index
    %342 = vector.load %arg3[%c16, %c0_181, %c0_182] : memref<24x32x8xf32, #tpu.memory_space<vmem>>, vector<1x32x8xf32>
    %343 = vector.shape_cast %342 : vector<1x32x8xf32> to vector<32x8xf32>
    %cst_183 = arith.constant dense<0.000000e+00> : vector<32x8xf32>
    %344 = tpu.matmul %296, %343, %cst_183 {dimension_numbers = #tpu.dot_dimension_numbers<[1], [0], [0], [1], [0, 0, 1, 1], [], []>} : vector<32x32xf32>, vector<32x8xf32>, vector<32x8xf32> -> vector<32x8xf32>
    %c16_184 = arith.constant 16 : index
    %c0_185 = arith.constant 0 : index
    %c0_186 = arith.constant 0 : index
    %345 = vector.load %arg4[%c16_184, %c0_185, %c0_186] : memref<24x1x8xf32, #tpu.memory_space<vmem>>, vector<1x1x8xf32>
    %346 = vector.shape_cast %345 : vector<1x1x8xf32> to vector<1x8xf32>
    %347 = vector.broadcast %346 : vector<1x8xf32> to vector<32x8xf32>
    %348 = arith.addf %344, %347 : vector<32x8xf32>
    %349 = vector.extract_strided_slice %348 {offsets = [0, 0], sizes = [16, 8], strides = [1, 1]} : vector<32x8xf32> to vector<16x8xf32>
    %350 = vector.extract_strided_slice %348 {offsets = [16, 0], sizes = [16, 8], strides = [1, 1]} : vector<32x8xf32> to vector<16x8xf32>
    %c17 = arith.constant 17 : index
    %c0_187 = arith.constant 0 : index
    %c0_188 = arith.constant 0 : index
    %351 = vector.load %arg3[%c17, %c0_187, %c0_188] : memref<24x32x8xf32, #tpu.memory_space<vmem>>, vector<1x32x8xf32>
    %352 = vector.shape_cast %351 : vector<1x32x8xf32> to vector<32x8xf32>
    %cst_189 = arith.constant dense<0.000000e+00> : vector<32x8xf32>
    %353 = tpu.matmul %296, %352, %cst_189 {dimension_numbers = #tpu.dot_dimension_numbers<[1], [0], [0], [1], [0, 0, 1, 1], [], []>} : vector<32x32xf32>, vector<32x8xf32>, vector<32x8xf32> -> vector<32x8xf32>
    %c17_190 = arith.constant 17 : index
    %c0_191 = arith.constant 0 : index
    %c0_192 = arith.constant 0 : index
    %354 = vector.load %arg4[%c17_190, %c0_191, %c0_192] : memref<24x1x8xf32, #tpu.memory_space<vmem>>, vector<1x1x8xf32>
    %355 = vector.shape_cast %354 : vector<1x1x8xf32> to vector<1x8xf32>
    %356 = vector.broadcast %355 : vector<1x8xf32> to vector<32x8xf32>
    %357 = arith.addf %353, %356 : vector<32x8xf32>
    %358 = vector.extract_strided_slice %357 {offsets = [0, 0], sizes = [16, 8], strides = [1, 1]} : vector<32x8xf32> to vector<16x8xf32>
    %359 = vector.extract_strided_slice %357 {offsets = [16, 0], sizes = [16, 8], strides = [1, 1]} : vector<32x8xf32> to vector<16x8xf32>
    %c18 = arith.constant 18 : index
    %c0_193 = arith.constant 0 : index
    %c0_194 = arith.constant 0 : index
    %360 = vector.load %arg3[%c18, %c0_193, %c0_194] : memref<24x32x8xf32, #tpu.memory_space<vmem>>, vector<1x32x8xf32>
    %361 = vector.shape_cast %360 : vector<1x32x8xf32> to vector<32x8xf32>
    %cst_195 = arith.constant dense<0.000000e+00> : vector<32x8xf32>
    %362 = tpu.matmul %296, %361, %cst_195 {dimension_numbers = #tpu.dot_dimension_numbers<[1], [0], [0], [1], [0, 0, 1, 1], [], []>} : vector<32x32xf32>, vector<32x8xf32>, vector<32x8xf32> -> vector<32x8xf32>
    %c18_196 = arith.constant 18 : index
    %c0_197 = arith.constant 0 : index
    %c0_198 = arith.constant 0 : index
    %363 = vector.load %arg4[%c18_196, %c0_197, %c0_198] : memref<24x1x8xf32, #tpu.memory_space<vmem>>, vector<1x1x8xf32>
    %364 = vector.shape_cast %363 : vector<1x1x8xf32> to vector<1x8xf32>
    %365 = vector.broadcast %364 : vector<1x8xf32> to vector<32x8xf32>
    %366 = arith.addf %362, %365 : vector<32x8xf32>
    %367 = vector.extract_strided_slice %366 {offsets = [0, 0], sizes = [16, 8], strides = [1, 1]} : vector<32x8xf32> to vector<16x8xf32>
    %368 = vector.extract_strided_slice %366 {offsets = [16, 0], sizes = [16, 8], strides = [1, 1]} : vector<32x8xf32> to vector<16x8xf32>
    %c19 = arith.constant 19 : index
    %c0_199 = arith.constant 0 : index
    %c0_200 = arith.constant 0 : index
    %369 = vector.load %arg3[%c19, %c0_199, %c0_200] : memref<24x32x8xf32, #tpu.memory_space<vmem>>, vector<1x32x8xf32>
    %370 = vector.shape_cast %369 : vector<1x32x8xf32> to vector<32x8xf32>
    %cst_201 = arith.constant dense<0.000000e+00> : vector<32x8xf32>
    %371 = tpu.matmul %296, %370, %cst_201 {dimension_numbers = #tpu.dot_dimension_numbers<[1], [0], [0], [1], [0, 0, 1, 1], [], []>} : vector<32x32xf32>, vector<32x8xf32>, vector<32x8xf32> -> vector<32x8xf32>
    %c19_202 = arith.constant 19 : index
    %c0_203 = arith.constant 0 : index
    %c0_204 = arith.constant 0 : index
    %372 = vector.load %arg4[%c19_202, %c0_203, %c0_204] : memref<24x1x8xf32, #tpu.memory_space<vmem>>, vector<1x1x8xf32>
    %373 = vector.shape_cast %372 : vector<1x1x8xf32> to vector<1x8xf32>
    %374 = vector.broadcast %373 : vector<1x8xf32> to vector<32x8xf32>
    %375 = arith.addf %371, %374 : vector<32x8xf32>
    %376 = vector.extract_strided_slice %375 {offsets = [0, 0], sizes = [16, 8], strides = [1, 1]} : vector<32x8xf32> to vector<16x8xf32>
    %377 = vector.extract_strided_slice %375 {offsets = [16, 0], sizes = [16, 8], strides = [1, 1]} : vector<32x8xf32> to vector<16x8xf32>
    %378 = vector.shape_cast %349 : vector<16x8xf32> to vector<1x16x8xf32>
    %379 = vector.shape_cast %350 : vector<16x8xf32> to vector<1x16x8xf32>
    %380 = vector.shape_cast %358 : vector<16x8xf32> to vector<1x16x8xf32>
    %381 = vector.shape_cast %359 : vector<16x8xf32> to vector<1x16x8xf32>
    %382 = vector.shape_cast %367 : vector<16x8xf32> to vector<1x16x8xf32>
    %383 = vector.shape_cast %368 : vector<16x8xf32> to vector<1x16x8xf32>
    %384 = vector.shape_cast %376 : vector<16x8xf32> to vector<1x16x8xf32>
    %385 = vector.shape_cast %377 : vector<16x8xf32> to vector<1x16x8xf32>
    %386 = tpu.concatenate %378, %379, %380, %381, %382, %383, %384, %385 in 0 : vector<1x16x8xf32>, vector<1x16x8xf32>, vector<1x16x8xf32>, vector<1x16x8xf32>, vector<1x16x8xf32>, vector<1x16x8xf32>, vector<1x16x8xf32>, vector<1x16x8xf32> -> vector<8x16x8xf32>
    %c20 = arith.constant 20 : index
    %c0_205 = arith.constant 0 : index
    %c0_206 = arith.constant 0 : index
    %387 = vector.load %arg3[%c20, %c0_205, %c0_206] : memref<24x32x8xf32, #tpu.memory_space<vmem>>, vector<1x32x8xf32>
    %388 = vector.shape_cast %387 : vector<1x32x8xf32> to vector<32x8xf32>
    %cst_207 = arith.constant dense<0.000000e+00> : vector<32x8xf32>
    %389 = tpu.matmul %296, %388, %cst_207 {dimension_numbers = #tpu.dot_dimension_numbers<[1], [0], [0], [1], [0, 0, 1, 1], [], []>} : vector<32x32xf32>, vector<32x8xf32>, vector<32x8xf32> -> vector<32x8xf32>
    %c20_208 = arith.constant 20 : index
    %c0_209 = arith.constant 0 : index
    %c0_210 = arith.constant 0 : index
    %390 = vector.load %arg4[%c20_208, %c0_209, %c0_210] : memref<24x1x8xf32, #tpu.memory_space<vmem>>, vector<1x1x8xf32>
    %391 = vector.shape_cast %390 : vector<1x1x8xf32> to vector<1x8xf32>
    %392 = vector.broadcast %391 : vector<1x8xf32> to vector<32x8xf32>
    %393 = arith.addf %389, %392 : vector<32x8xf32>
    %394 = vector.extract_strided_slice %393 {offsets = [0, 0], sizes = [16, 8], strides = [1, 1]} : vector<32x8xf32> to vector<16x8xf32>
    %395 = vector.extract_strided_slice %393 {offsets = [16, 0], sizes = [16, 8], strides = [1, 1]} : vector<32x8xf32> to vector<16x8xf32>
    %c21 = arith.constant 21 : index
    %c0_211 = arith.constant 0 : index
    %c0_212 = arith.constant 0 : index
    %396 = vector.load %arg3[%c21, %c0_211, %c0_212] : memref<24x32x8xf32, #tpu.memory_space<vmem>>, vector<1x32x8xf32>
    %397 = vector.shape_cast %396 : vector<1x32x8xf32> to vector<32x8xf32>
    %cst_213 = arith.constant dense<0.000000e+00> : vector<32x8xf32>
    %398 = tpu.matmul %296, %397, %cst_213 {dimension_numbers = #tpu.dot_dimension_numbers<[1], [0], [0], [1], [0, 0, 1, 1], [], []>} : vector<32x32xf32>, vector<32x8xf32>, vector<32x8xf32> -> vector<32x8xf32>
    %c21_214 = arith.constant 21 : index
    %c0_215 = arith.constant 0 : index
    %c0_216 = arith.constant 0 : index
    %399 = vector.load %arg4[%c21_214, %c0_215, %c0_216] : memref<24x1x8xf32, #tpu.memory_space<vmem>>, vector<1x1x8xf32>
    %400 = vector.shape_cast %399 : vector<1x1x8xf32> to vector<1x8xf32>
    %401 = vector.broadcast %400 : vector<1x8xf32> to vector<32x8xf32>
    %402 = arith.addf %398, %401 : vector<32x8xf32>
    %403 = vector.extract_strided_slice %402 {offsets = [0, 0], sizes = [16, 8], strides = [1, 1]} : vector<32x8xf32> to vector<16x8xf32>
    %404 = vector.extract_strided_slice %402 {offsets = [16, 0], sizes = [16, 8], strides = [1, 1]} : vector<32x8xf32> to vector<16x8xf32>
    %c22 = arith.constant 22 : index
    %c0_217 = arith.constant 0 : index
    %c0_218 = arith.constant 0 : index
    %405 = vector.load %arg3[%c22, %c0_217, %c0_218] : memref<24x32x8xf32, #tpu.memory_space<vmem>>, vector<1x32x8xf32>
    %406 = vector.shape_cast %405 : vector<1x32x8xf32> to vector<32x8xf32>
    %cst_219 = arith.constant dense<0.000000e+00> : vector<32x8xf32>
    %407 = tpu.matmul %296, %406, %cst_219 {dimension_numbers = #tpu.dot_dimension_numbers<[1], [0], [0], [1], [0, 0, 1, 1], [], []>} : vector<32x32xf32>, vector<32x8xf32>, vector<32x8xf32> -> vector<32x8xf32>
    %c22_220 = arith.constant 22 : index
    %c0_221 = arith.constant 0 : index
    %c0_222 = arith.constant 0 : index
    %408 = vector.load %arg4[%c22_220, %c0_221, %c0_222] : memref<24x1x8xf32, #tpu.memory_space<vmem>>, vector<1x1x8xf32>
    %409 = vector.shape_cast %408 : vector<1x1x8xf32> to vector<1x8xf32>
    %410 = vector.broadcast %409 : vector<1x8xf32> to vector<32x8xf32>
    %411 = arith.addf %407, %410 : vector<32x8xf32>
    %412 = vector.extract_strided_slice %411 {offsets = [0, 0], sizes = [16, 8], strides = [1, 1]} : vector<32x8xf32> to vector<16x8xf32>
    %413 = vector.extract_strided_slice %411 {offsets = [16, 0], sizes = [16, 8], strides = [1, 1]} : vector<32x8xf32> to vector<16x8xf32>
    %c23 = arith.constant 23 : index
    %c0_223 = arith.constant 0 : index
    %c0_224 = arith.constant 0 : index
    %414 = vector.load %arg3[%c23, %c0_223, %c0_224] : memref<24x32x8xf32, #tpu.memory_space<vmem>>, vector<1x32x8xf32>
    %415 = vector.shape_cast %414 : vector<1x32x8xf32> to vector<32x8xf32>
    %cst_225 = arith.constant dense<0.000000e+00> : vector<32x8xf32>
    %416 = tpu.matmul %296, %415, %cst_225 {dimension_numbers = #tpu.dot_dimension_numbers<[1], [0], [0], [1], [0, 0, 1, 1], [], []>} : vector<32x32xf32>, vector<32x8xf32>, vector<32x8xf32> -> vector<32x8xf32>
    %c23_226 = arith.constant 23 : index
    %c0_227 = arith.constant 0 : index
    %c0_228 = arith.constant 0 : index
    %417 = vector.load %arg4[%c23_226, %c0_227, %c0_228] : memref<24x1x8xf32, #tpu.memory_space<vmem>>, vector<1x1x8xf32>
    %418 = vector.shape_cast %417 : vector<1x1x8xf32> to vector<1x8xf32>
    %419 = vector.broadcast %418 : vector<1x8xf32> to vector<32x8xf32>
    %420 = arith.addf %416, %419 : vector<32x8xf32>
    %421 = vector.extract_strided_slice %420 {offsets = [0, 0], sizes = [16, 8], strides = [1, 1]} : vector<32x8xf32> to vector<16x8xf32>
    %422 = vector.extract_strided_slice %420 {offsets = [16, 0], sizes = [16, 8], strides = [1, 1]} : vector<32x8xf32> to vector<16x8xf32>
    %423 = vector.shape_cast %394 : vector<16x8xf32> to vector<1x16x8xf32>
    %424 = vector.shape_cast %395 : vector<16x8xf32> to vector<1x16x8xf32>
    %425 = vector.shape_cast %403 : vector<16x8xf32> to vector<1x16x8xf32>
    %426 = vector.shape_cast %404 : vector<16x8xf32> to vector<1x16x8xf32>
    %427 = vector.shape_cast %412 : vector<16x8xf32> to vector<1x16x8xf32>
    %428 = vector.shape_cast %413 : vector<16x8xf32> to vector<1x16x8xf32>
    %429 = vector.shape_cast %421 : vector<16x8xf32> to vector<1x16x8xf32>
    %430 = vector.shape_cast %422 : vector<16x8xf32> to vector<1x16x8xf32>
    %431 = tpu.concatenate %423, %424, %425, %426, %427, %428, %429, %430 in 0 : vector<1x16x8xf32>, vector<1x16x8xf32>, vector<1x16x8xf32>, vector<1x16x8xf32>, vector<1x16x8xf32>, vector<1x16x8xf32>, vector<1x16x8xf32>, vector<1x16x8xf32> -> vector<8x16x8xf32>
    "tpu.trace_start"() <{level = 10 : i32, message = "ntd,nsd->nts"}> : () -> ()
    %cst_229 = arith.constant dense<0.000000e+00> : vector<8x16x16xf32>
    %432 = tpu.matmul %341, %386, %cst_229 {dimension_numbers = #tpu.dot_dimension_numbers<[2], [2], [1], [1], [0, 0, 0, 1, 1, 1], [0], [0]>} : vector<8x16x8xf32>, vector<8x16x8xf32>, vector<8x16x16xf32> -> vector<8x16x16xf32>
    "tpu.trace_stop"() : () -> ()
    %cst_230 = arith.constant 0.353553385 : f32
    %433 = vector.broadcast %cst_230 : f32 to vector<8x16x16xf32>
    %434 = arith.mulf %432, %433 : vector<8x16x16xf32>
    %cst_231 = arith.constant dense<0xFF800000> : vector<8x16xf32>
    %435 = vector.multi_reduction <maximumf>, %434, %cst_231 [2] : vector<8x16x16xf32> to vector<8x16xf32>
    %436 = vector.shape_cast %435 : vector<8x16xf32> to vector<8x16x1xf32>
    %437 = vector.broadcast %436 : vector<8x16x1xf32> to vector<8x16x16xf32>
    %438 = arith.subf %434, %437 : vector<8x16x16xf32>
    %439 = math.exp %438 : vector<8x16x16xf32>
    %cst_232 = arith.constant dense<0.000000e+00> : vector<8x16xf32>
    %440 = vector.multi_reduction <add>, %439, %cst_232 [2] : vector<8x16x16xf32> to vector<8x16xf32>
    %441 = vector.shape_cast %440 : vector<8x16xf32> to vector<8x16x1xf32>
    %442 = tpu.reciprocal %441 {approx = true} : vector<8x16x1xf32> -> vector<8x16x1xf32>
    %443 = vector.broadcast %442 : vector<8x16x1xf32> to vector<8x16x16xf32>
    %444 = arith.mulf %439, %443 : vector<8x16x16xf32>
    "tpu.trace_start"() <{level = 10 : i32, message = "nts,nsd->ntd"}> : () -> ()
    %cst_233 = arith.constant dense<0.000000e+00> : vector<8x16x8xf32>
    %445 = tpu.matmul %444, %431, %cst_233 {dimension_numbers = #tpu.dot_dimension_numbers<[2], [1], [1], [2], [0, 0, 0, 1, 1, 2], [0], [0]>} : vector<8x16x16xf32>, vector<8x16x8xf32>, vector<8x16x8xf32> -> vector<8x16x8xf32>
    %cst_234 = arith.constant 0.000000e+00 : f32
    "tpu.trace_stop"() : () -> ()
    %446 = vector.broadcast %cst_234 : f32 to vector<32x32xf32>
    %447 = vector.extract_strided_slice %445 {offsets = [0, 0, 0], sizes = [2, 16, 8], strides = [1, 1, 1]} : vector<8x16x8xf32> to vector<2x16x8xf32>
    %448 = vector.shape_cast %447 : vector<2x16x8xf32> to vector<32x8xf32>
    %c4_235 = arith.constant 4 : index
    %c0_236 = arith.constant 0 : index
    %c0_237 = arith.constant 0 : index
    %449 = vector.load %arg5[%c4_235, %c0_236, %c0_237] : memref<8x8x32xf32, #tpu.memory_space<vmem>>, vector<1x8x32xf32>
    %450 = vector.shape_cast %449 : vector<1x8x32xf32> to vector<8x32xf32>
    %cst_238 = arith.constant dense<0.000000e+00> : vector<32x32xf32>
    %451 = tpu.matmul %448, %450, %cst_238 {dimension_numbers = #tpu.dot_dimension_numbers<[1], [0], [0], [1], [0, 0, 1, 1], [], []>} : vector<32x8xf32>, vector<8x32xf32>, vector<32x32xf32> -> vector<32x32xf32>
    %452 = arith.addf %446, %451 : vector<32x32xf32>
    %453 = vector.extract_strided_slice %445 {offsets = [2, 0, 0], sizes = [2, 16, 8], strides = [1, 1, 1]} : vector<8x16x8xf32> to vector<2x16x8xf32>
    %454 = vector.shape_cast %453 : vector<2x16x8xf32> to vector<32x8xf32>
    %c5_239 = arith.constant 5 : index
    %c0_240 = arith.constant 0 : index
    %c0_241 = arith.constant 0 : index
    %455 = vector.load %arg5[%c5_239, %c0_240, %c0_241] : memref<8x8x32xf32, #tpu.memory_space<vmem>>, vector<1x8x32xf32>
    %456 = vector.shape_cast %455 : vector<1x8x32xf32> to vector<8x32xf32>
    %cst_242 = arith.constant dense<0.000000e+00> : vector<32x32xf32>
    %457 = tpu.matmul %454, %456, %cst_242 {dimension_numbers = #tpu.dot_dimension_numbers<[1], [0], [0], [1], [0, 0, 1, 1], [], []>} : vector<32x8xf32>, vector<8x32xf32>, vector<32x32xf32> -> vector<32x32xf32>
    %458 = arith.addf %452, %457 : vector<32x32xf32>
    %459 = vector.extract_strided_slice %445 {offsets = [4, 0, 0], sizes = [2, 16, 8], strides = [1, 1, 1]} : vector<8x16x8xf32> to vector<2x16x8xf32>
    %460 = vector.shape_cast %459 : vector<2x16x8xf32> to vector<32x8xf32>
    %c6_243 = arith.constant 6 : index
    %c0_244 = arith.constant 0 : index
    %c0_245 = arith.constant 0 : index
    %461 = vector.load %arg5[%c6_243, %c0_244, %c0_245] : memref<8x8x32xf32, #tpu.memory_space<vmem>>, vector<1x8x32xf32>
    %462 = vector.shape_cast %461 : vector<1x8x32xf32> to vector<8x32xf32>
    %cst_246 = arith.constant dense<0.000000e+00> : vector<32x32xf32>
    %463 = tpu.matmul %460, %462, %cst_246 {dimension_numbers = #tpu.dot_dimension_numbers<[1], [0], [0], [1], [0, 0, 1, 1], [], []>} : vector<32x8xf32>, vector<8x32xf32>, vector<32x32xf32> -> vector<32x32xf32>
    %464 = arith.addf %458, %463 : vector<32x32xf32>
    %465 = vector.extract_strided_slice %445 {offsets = [6, 0, 0], sizes = [2, 16, 8], strides = [1, 1, 1]} : vector<8x16x8xf32> to vector<2x16x8xf32>
    %466 = vector.shape_cast %465 : vector<2x16x8xf32> to vector<32x8xf32>
    %c7_247 = arith.constant 7 : index
    %c0_248 = arith.constant 0 : index
    %c0_249 = arith.constant 0 : index
    %467 = vector.load %arg5[%c7_247, %c0_248, %c0_249] : memref<8x8x32xf32, #tpu.memory_space<vmem>>, vector<1x8x32xf32>
    %468 = vector.shape_cast %467 : vector<1x8x32xf32> to vector<8x32xf32>
    %cst_250 = arith.constant dense<0.000000e+00> : vector<32x32xf32>
    %469 = tpu.matmul %466, %468, %cst_250 {dimension_numbers = #tpu.dot_dimension_numbers<[1], [0], [0], [1], [0, 0, 1, 1], [], []>} : vector<32x8xf32>, vector<8x32xf32>, vector<32x32xf32> -> vector<32x32xf32>
    %470 = arith.addf %464, %469 : vector<32x32xf32>
    %c6_251 = arith.constant 6 : index
    %c0_252 = arith.constant 0 : index
    %c0_253 = arith.constant 0 : index
    %471 = vector.load %arg9[%c6_251, %c0_252, %c0_253] : memref<12x1x32xf32, #tpu.memory_space<vmem>>, vector<1x1x32xf32>
    %472 = vector.shape_cast %471 : vector<1x1x32xf32> to vector<1x32xf32>
    %473 = vector.broadcast %472 : vector<1x32xf32> to vector<32x32xf32>
    %474 = arith.addf %470, %473 : vector<32x32xf32>
    %475 = arith.addf %296, %474 : vector<32x32xf32>
    %c8_254 = arith.constant 8 : index
    %c0_255 = arith.constant 0 : index
    %c0_256 = arith.constant 0 : index
    %476 = vector.load %arg9[%c8_254, %c0_255, %c0_256] : memref<12x1x32xf32, #tpu.memory_space<vmem>>, vector<1x1x32xf32>
    %477 = vector.shape_cast %476 : vector<1x1x32xf32> to vector<1x32xf32>
    %c9_257 = arith.constant 9 : index
    %c0_258 = arith.constant 0 : index
    %c0_259 = arith.constant 0 : index
    %478 = vector.load %arg9[%c9_257, %c0_258, %c0_259] : memref<12x1x32xf32, #tpu.memory_space<vmem>>, vector<1x1x32xf32>
    %479 = vector.shape_cast %478 : vector<1x1x32xf32> to vector<1x32xf32>
    %cst_260 = arith.constant dense<0.000000e+00> : vector<32xf32>
    %480 = vector.multi_reduction <add>, %475, %cst_260 [1] : vector<32x32xf32> to vector<32xf32>
    %481 = vector.shape_cast %480 : vector<32xf32> to vector<32x1xf32>
    %cst_261 = arith.constant 3.200000e+01 : f32
    %482 = vector.broadcast %cst_261 : f32 to vector<32x1xf32>
    %483 = arith.divf %481, %482 : vector<32x1xf32>
    %484 = vector.broadcast %483 : vector<32x1xf32> to vector<32x32xf32>
    %485 = arith.subf %475, %484 : vector<32x32xf32>
    %486 = arith.mulf %485, %485 : vector<32x32xf32>
    %cst_262 = arith.constant dense<0.000000e+00> : vector<32xf32>
    %487 = vector.multi_reduction <add>, %486, %cst_262 [1] : vector<32x32xf32> to vector<32xf32>
    %488 = vector.shape_cast %487 : vector<32xf32> to vector<32x1xf32>
    %cst_263 = arith.constant 3.200000e+01 : f32
    %489 = vector.broadcast %cst_263 : f32 to vector<32x1xf32>
    %490 = arith.divf %488, %489 : vector<32x1xf32>
    %491 = vector.broadcast %483 : vector<32x1xf32> to vector<32x32xf32>
    %492 = arith.subf %475, %491 : vector<32x32xf32>
    %cst_264 = arith.constant 9.99999974E-6 : f32
    %493 = vector.broadcast %cst_264 : f32 to vector<32x1xf32>
    %494 = arith.addf %490, %493 : vector<32x1xf32>
    %495 = math.rsqrt %494 : vector<32x1xf32>
    %496 = vector.broadcast %495 : vector<32x1xf32> to vector<32x32xf32>
    %497 = arith.mulf %492, %496 : vector<32x32xf32>
    %498 = vector.broadcast %477 : vector<1x32xf32> to vector<32x32xf32>
    %499 = arith.mulf %497, %498 : vector<32x32xf32>
    %500 = vector.broadcast %479 : vector<1x32xf32> to vector<32x32xf32>
    %501 = arith.addf %499, %500 : vector<32x32xf32>
    %c1_265 = arith.constant 1 : index
    %c0_266 = arith.constant 0 : index
    %c0_267 = arith.constant 0 : index
    %502 = vector.load %arg6[%c1_265, %c0_266, %c0_267] : memref<2x32x64xf32, #tpu.memory_space<vmem>>, vector<1x32x64xf32>
    %503 = vector.shape_cast %502 : vector<1x32x64xf32> to vector<32x64xf32>
    %cst_268 = arith.constant dense<0.000000e+00> : vector<32x64xf32>
    %504 = tpu.matmul %501, %503, %cst_268 {dimension_numbers = #tpu.dot_dimension_numbers<[1], [0], [0], [1], [0, 0, 1, 1], [], []>} : vector<32x32xf32>, vector<32x64xf32>, vector<32x64xf32> -> vector<32x64xf32>
    %c1_269 = arith.constant 1 : index
    %c0_270 = arith.constant 0 : index
    %c0_271 = arith.constant 0 : index
    %505 = vector.load %arg7[%c1_269, %c0_270, %c0_271] : memref<2x1x64xf32, #tpu.memory_space<vmem>>, vector<1x1x64xf32>
    %506 = vector.shape_cast %505 : vector<1x1x64xf32> to vector<1x64xf32>
    %507 = vector.broadcast %506 : vector<1x64xf32> to vector<32x64xf32>
    %508 = arith.addf %504, %507 : vector<32x64xf32>
    %cst_272 = arith.constant 5.000000e-01 : f32
    %509 = vector.broadcast %cst_272 : f32 to vector<32x64xf32>
    %510 = arith.mulf %509, %508 : vector<32x64xf32>
    %cst_273 = arith.constant 0.707106769 : f32
    %511 = vector.broadcast %cst_273 : f32 to vector<32x64xf32>
    %512 = arith.mulf %508, %511 : vector<32x64xf32>
    %513 = math.erf %512 : vector<32x64xf32>
    %cst_274 = arith.constant 1.000000e+00 : f32
    %514 = vector.broadcast %cst_274 : f32 to vector<32x64xf32>
    %515 = arith.addf %514, %513 : vector<32x64xf32>
    %516 = arith.mulf %510, %515 : vector<32x64xf32>
    %c1_275 = arith.constant 1 : index
    %c0_276 = arith.constant 0 : index
    %c0_277 = arith.constant 0 : index
    %517 = vector.load %arg8[%c1_275, %c0_276, %c0_277] : memref<2x64x32xf32, #tpu.memory_space<vmem>>, vector<1x64x32xf32>
    %518 = vector.shape_cast %517 : vector<1x64x32xf32> to vector<64x32xf32>
    %cst_278 = arith.constant dense<0.000000e+00> : vector<32x32xf32>
    %519 = tpu.matmul %516, %518, %cst_278 {dimension_numbers = #tpu.dot_dimension_numbers<[1], [0], [0], [1], [0, 0, 1, 1], [], []>} : vector<32x64xf32>, vector<64x32xf32>, vector<32x32xf32> -> vector<32x32xf32>
    %c7_279 = arith.constant 7 : index
    %c0_280 = arith.constant 0 : index
    %c0_281 = arith.constant 0 : index
    %520 = vector.load %arg9[%c7_279, %c0_280, %c0_281] : memref<12x1x32xf32, #tpu.memory_space<vmem>>, vector<1x1x32xf32>
    %521 = vector.shape_cast %520 : vector<1x1x32xf32> to vector<1x32xf32>
    %522 = vector.broadcast %521 : vector<1x32xf32> to vector<32x32xf32>
    %523 = arith.addf %519, %522 : vector<32x32xf32>
    %524 = arith.addf %501, %523 : vector<32x32xf32>
    %c10_282 = arith.constant 10 : index
    %c0_283 = arith.constant 0 : index
    %c0_284 = arith.constant 0 : index
    %525 = vector.load %arg9[%c10_282, %c0_283, %c0_284] : memref<12x1x32xf32, #tpu.memory_space<vmem>>, vector<1x1x32xf32>
    %526 = vector.shape_cast %525 : vector<1x1x32xf32> to vector<1x32xf32>
    %c11_285 = arith.constant 11 : index
    %c0_286 = arith.constant 0 : index
    %c0_287 = arith.constant 0 : index
    %527 = vector.load %arg9[%c11_285, %c0_286, %c0_287] : memref<12x1x32xf32, #tpu.memory_space<vmem>>, vector<1x1x32xf32>
    %528 = vector.shape_cast %527 : vector<1x1x32xf32> to vector<1x32xf32>
    %cst_288 = arith.constant dense<0.000000e+00> : vector<32xf32>
    %529 = vector.multi_reduction <add>, %524, %cst_288 [1] : vector<32x32xf32> to vector<32xf32>
    %530 = vector.shape_cast %529 : vector<32xf32> to vector<32x1xf32>
    %cst_289 = arith.constant 3.200000e+01 : f32
    %531 = vector.broadcast %cst_289 : f32 to vector<32x1xf32>
    %532 = arith.divf %530, %531 : vector<32x1xf32>
    %533 = vector.broadcast %532 : vector<32x1xf32> to vector<32x32xf32>
    %534 = arith.subf %524, %533 : vector<32x32xf32>
    %535 = arith.mulf %534, %534 : vector<32x32xf32>
    %cst_290 = arith.constant dense<0.000000e+00> : vector<32xf32>
    %536 = vector.multi_reduction <add>, %535, %cst_290 [1] : vector<32x32xf32> to vector<32xf32>
    %537 = vector.shape_cast %536 : vector<32xf32> to vector<32x1xf32>
    %cst_291 = arith.constant 3.200000e+01 : f32
    %538 = vector.broadcast %cst_291 : f32 to vector<32x1xf32>
    %539 = arith.divf %537, %538 : vector<32x1xf32>
    %540 = vector.broadcast %532 : vector<32x1xf32> to vector<32x32xf32>
    %541 = arith.subf %524, %540 : vector<32x32xf32>
    %cst_292 = arith.constant 9.99999974E-6 : f32
    %542 = vector.broadcast %cst_292 : f32 to vector<32x1xf32>
    %543 = arith.addf %539, %542 : vector<32x1xf32>
    %544 = math.rsqrt %543 : vector<32x1xf32>
    %545 = vector.broadcast %544 : vector<32x1xf32> to vector<32x32xf32>
    %546 = arith.mulf %541, %545 : vector<32x32xf32>
    %547 = vector.broadcast %526 : vector<1x32xf32> to vector<32x32xf32>
    %548 = arith.mulf %546, %547 : vector<32x32xf32>
    %549 = vector.broadcast %528 : vector<1x32xf32> to vector<32x32xf32>
    %550 = arith.addf %548, %549 : vector<32x32xf32>
    %c0_293 = arith.constant 0 : index
    %c0_294 = arith.constant 0 : index
    %551 = vector.load %arg10[%c0_293, %c0_294] : memref<32x32xf32, #tpu.memory_space<vmem>>, vector<32x32xf32>
    tpu.vector_store %arg10[%c0_293, %c0_294], %550 {strides = array<i32>} : memref<32x32xf32, #tpu.memory_space<vmem>>, vector<32x32xf32>,
    return
  }
}

</mosaic_0001>

<llo_original>
// kernel: encoder_forward.1
$region0: #{encoder_forward.1}
  #allocation0 [shape = 'u32[]', space=smem, size = 0x4, offset = 0x4, fixed_abs, tag = 'smem constant byte address 0x4 - core index']
  #allocation1 [shape = 'u32[144,128]{1,0:T(1,128)}', space=vmem, size = 0x12000, scoped, tag = 'internal scratch']
  %s0 = inlined_call_operand.vmem [shape: f32[32,256], index: 0, kind: input, shape index: {}]
  %s1 = inlined_call_operand.vmem [shape: f32[256,32], index: 1, kind: input, shape index: {}]
  %s2 = inlined_call_operand.vmem [shape: f32[3,1,32], index: 2, kind: input, shape index: {}]
  %s3 = inlined_call_operand.vmem [shape: f32[24,32,8], index: 3, kind: input, shape index: {}]
  %s4 = inlined_call_operand.vmem [shape: f32[24,1,8], index: 4, kind: input, shape index: {}]
  %s5 = inlined_call_operand.vmem [shape: f32[8,8,32], index: 5, kind: input, shape index: {}]
  %s6 = inlined_call_operand.vmem [shape: f32[2,32,64], index: 6, kind: input, shape index: {}]
  %s7 = inlined_call_operand.vmem [shape: f32[2,1,64], index: 7, kind: input, shape index: {}]
  %s8 = inlined_call_operand.vmem [shape: f32[2,64,32], index: 8, kind: input, shape index: {}]
  %s9 = inlined_call_operand.vmem [shape: f32[12,1,32], index: 9, kind: input, shape index: {}]
  %s10 = inlined_call_operand.hbm [shape: f32[32,32], index: 10, kind: output, shape index: {}]
  %s11 = sld [smem:[#allocation0]]
  $region50: #{encoder_forward.1} parent=0
    _
  %s13 = ssub.s32 1, %s11
  %s14 = scalar_select 0, %s13, %s11
  $region1: #{encoder_forward.1} parent=0
    #allocation2 [shape = 'u8[16384]{0}', space=vmem, size = 0x4000, scoped, tag = 'output window, operand 0, single buffered']
    #allocation3 [shape = 's32[1]{0}', space=sflag, size = 0x4, scoped, tag = 'scoped memory for encoder_forward.1']
    %15 = vsyncpa [#allocation3], 0
    // Predicated region
    $region2: #{encoder_forward.1} parent=1 // pred_check
      _
    $region3: #{encoder_forward.1} parent=1 // pred_check_branch
      %17 = sbr.rel (0) target = $region5
    $region4: #{encoder_forward.1} parent=1 // pred_region
      _
    $region5: #{encoder_forward.1} parent=1 // pred_fallthru
      _
    // Predicated region
    $region6: #{encoder_forward.1} parent=1 // pred_check
      _
    $region7: #{encoder_forward.1} parent=1 // pred_check_branch
      %19 = sbr.rel (0) target = $region9
    $region8: #{encoder_forward.1} parent=1 // pred_region
      _
    $region9: #{encoder_forward.1} parent=1 // pred_fallthru
      _
    // Predicated region
    $region10: #{encoder_forward.1} parent=1 // pred_check
      _
    $region11: #{encoder_forward.1} parent=1 // pred_check_branch
      %21 = sbr.rel (0) target = $region13
    $region12: #{encoder_forward.1} parent=1 // pred_region
      _
    $region13: #{encoder_forward.1} parent=1 // pred_fallthru
      _
    // Predicated region
    $region14: #{encoder_forward.1} parent=1 // pred_check
      _
    $region15: #{encoder_forward.1} parent=1 // pred_check_branch
      %23 = sbr.rel (0) target = $region17
    $region16: #{encoder_forward.1} parent=1 // pred_region
      _
    $region17: #{encoder_forward.1} parent=1 // pred_fallthru
      _
    // Predicated region
    $region18: #{encoder_forward.1} parent=1 // pred_check
      _
    $region19: #{encoder_forward.1} parent=1 // pred_check_branch
      %25 = sbr.rel (0) target = $region21
    $region20: #{encoder_forward.1} parent=1 // pred_region
      _
    $region21: #{encoder_forward.1} parent=1 // pred_fallthru
      _
    // Predicated region
    $region22: #{encoder_forward.1} parent=1 // pred_check
      _
    $region23: #{encoder_forward.1} parent=1 // pred_check_branch
      %27 = sbr.rel (0) target = $region25
    $region24: #{encoder_forward.1} parent=1 // pred_region
      _
    $region25: #{encoder_forward.1} parent=1 // pred_fallthru
      _
    // Predicated region
    $region26: #{encoder_forward.1} parent=1 // pred_check
      _
    $region27: #{encoder_forward.1} parent=1 // pred_check_branch
      %29 = sbr.rel (0) target = $region29
    $region28: #{encoder_forward.1} parent=1 // pred_region
      _
    $region29: #{encoder_forward.1} parent=1 // pred_fallthru
      _
    // Predicated region
    $region30: #{encoder_forward.1} parent=1 // pred_check
      _
    $region31: #{encoder_forward.1} parent=1 // pred_check_branch
      %31 = sbr.rel (0) target = $region33
    $region32: #{encoder_forward.1} parent=1 // pred_region
      _
    $region33: #{encoder_forward.1} parent=1 // pred_fallthru
      _
    // Predicated region
    $region34: #{encoder_forward.1} parent=1 // pred_check
      _
    $region35: #{encoder_forward.1} parent=1 // pred_check_branch
      %33 = sbr.rel (0) target = $region37
    $region36: #{encoder_forward.1} parent=1 // pred_region
      _
    $region37: #{encoder_forward.1} parent=1 // pred_fallthru
      _
    // Predicated region
    $region38: #{encoder_forward.1} parent=1 // pred_check
      _
    $region39: #{encoder_forward.1} parent=1 // pred_check_branch
      %35 = sbr.rel (0) target = $region41
    $region40: #{encoder_forward.1} parent=1 // pred_region
      _
    $region41: #{encoder_forward.1} parent=1 // pred_fallthru
      _
    %v36 = vld [vmem:[%s0] sm:$0xff]
    %v37 = vld [vmem:[%s0 + $0x8] sm:$0xff]
    %v38 = vld [vmem:[%s0 + $0x10] sm:$0xff]
    %v39 = vld [vmem:[%s0 + $0x18] sm:$0xff]
    %v40 = vld [vmem:[%s0 + $0x20] sm:$0xff]
    %v41 = vld [vmem:[%s0 + $0x28] sm:$0xff]
    %v42 = vld [vmem:[%s0 + $0x30] sm:$0xff]
    %v43 = vld [vmem:[%s0 + $0x38] sm:$0xff]
    %v44 = vld [vmem:[%s1] sm:$0xff]
    %v45 = vld [vmem:[%s1 + $0x8] sm:$0xff]
    %v46 = vld [vmem:[%s1 + $0x10] sm:$0xff]
    %v47 = vld [vmem:[%s1 + $0x18] sm:$0xff]
    %v48 = vld [vmem:[%s1 + $0x20] sm:$0xff]
    %v49 = vld [vmem:[%s1 + $0x28] sm:$0xff]
    %v50 = vld [vmem:[%s1 + $0x30] sm:$0xff]
    %v51 = vld [vmem:[%s1 + $0x38] sm:$0xff]
    %v52 = vld [vmem:[%s1 + $0x40] sm:$0xff]
    %v53 = vld [vmem:[%s1 + $0x48] sm:$0xff]
    %v54 = vld [vmem:[%s1 + $0x50] sm:$0xff]
    %v55 = vld [vmem:[%s1 + $0x58] sm:$0xff]
    %v56 = vld [vmem:[%s1 + $0x60] sm:$0xff]
    %v57 = vld [vmem:[%s1 + $0x68] sm:$0xff]
    %v58 = vld [vmem:[%s1 + $0x70] sm:$0xff]
    %v59 = vld [vmem:[%s1 + $0x78] sm:$0xff]
    %v60 = vld [vmem:[%s1 + $0x80] sm:$0xff]
    %v61 = vld [vmem:[%s1 + $0x88] sm:$0xff]
    %v62 = vld [vmem:[%s1 + $0x90] sm:$0xff]
    %v63 = vld [vmem:[%s1 + $0x98] sm:$0xff]
    %v64 = vld [vmem:[%s1 + $0xa0] sm:$0xff]
    %v65 = vld [vmem:[%s1 + $0xa8] sm:$0xff]
    %v66 = vld [vmem:[%s1 + $0xb0] sm:$0xff]
    %v67 = vld [vmem:[%s1 + $0xb8] sm:$0xff]
    %v68 = vld [vmem:[%s1 + $0xc0] sm:$0xff]
    %v69 = vld [vmem:[%s1 + $0xc8] sm:$0xff]
    %v70 = vld [vmem:[%s1 + $0xd0] sm:$0xff]
    %v71 = vld [vmem:[%s1 + $0xd8] sm:$0xff]
    %v72 = vld [vmem:[%s1 + $0xe0] sm:$0xff]
    %v73 = vld [vmem:[%s1 + $0xe8] sm:$0xff]
    %v74 = vld [vmem:[%s1 + $0xf0] sm:$0xff]
    %v75 = vld [vmem:[%s1 + $0xf8] sm:$0xff]
    %v76 = vld [vmem:[%s2] sm:$0x1]
    %v78 = vlaneseq
    %v79 = vshrl.u32 %v78, 7
    %v80 = vsub.s32 0, %v79
    %v81 = vrot.slane %v76, %v80
    %83 = vmatprep.subr.mxu0 0.0
    %84 = vmatpush1.msra.mxu0 %v44
    %85 = vmatprep.subr.mxu0 0.0
    %86 = vmatpush1.msra.mxu0 %v45
    %87 = vmatprep.subr.mxu0 0.0
    %88 = vmatpush1.msra.mxu0 %v46
    %89 = vmatprep.subr.mxu0 0.0
    %90 = vmatpush1.msra.mxu0 %v47
    %91 = vmatprep.subr.mxu0 0.0
    %92 = vmatpush1.msra.mxu0 %v48
    %93 = vmatprep.subr.mxu0 0.0
    %94 = vmatpush1.msra.mxu0 %v49
    %95 = vmatprep.subr.mxu0 0.0
    %96 = vmatpush1.msra.mxu0 %v50
    %97 = vmatprep.subr.mxu0 0.0
    %98 = vmatpush1.msra.mxu0 %v51
    %99 = vmatprep.subr.mxu0 0.0
    %100 = vmatpush1.msra.mxu0 %v52
    %101 = vmatprep.subr.mxu0 0.0
    %102 = vmatpush1.msra.mxu0 %v53
    %103 = vmatprep.subr.mxu0 0.0
    %104 = vmatpush1.msra.mxu0 %v54
    %105 = vmatprep.subr.mxu0 0.0
    %106 = vmatpush1.msra.mxu0 %v55
    %107 = vmatprep.subr.mxu0 0.0
    %108 = vmatpush1.msra.mxu0 %v56
    %109 = vmatprep.subr.mxu0 0.0
    %110 = vmatpush1.msra.mxu0 %v57
    %111 = vmatprep.subr.mxu0 0.0
    %112 = vmatpush1.msra.mxu0 %v58
    %113 = vmatprep.subr.mxu0 0.0
    %114 = vmatpush1.msra.mxu0 %v59
    %115 = vmatprep.subr.mxu0 0.0
    %116 = vmatpush1.msra.mxu0 %v60
    %117 = vmatprep.subr.mxu0 0.0
    %118 = vmatpush1.msra.mxu0 %v61
    %119 = vmatprep.subr.mxu0 0.0
    %120 = vmatpush1.msra.mxu0 %v62
    %121 = vmatprep.subr.mxu0 0.0
    %122 = vmatpush1.msra.mxu0 %v63
    %123 = vmatprep.subr.mxu0 0.0
    %124 = vmatpush1.msra.mxu0 %v64
    %125 = vmatprep.subr.mxu0 0.0
    %126 = vmatpush1.msra.mxu0 %v65
    %127 = vmatprep.subr.mxu0 0.0
    %128 = vmatpush1.msra.mxu0 %v66
    %129 = vmatprep.subr.mxu0 0.0
    %130 = vmatpush1.msra.mxu0 %v67
    %131 = vmatprep.subr.mxu0 0.0
    %132 = vmatpush1.msra.mxu0 %v68
    %133 = vmatprep.subr.mxu0 0.0
    %134 = vmatpush1.msra.mxu0 %v69
    %135 = vmatprep.subr.mxu0 0.0
    %136 = vmatpush1.msra.mxu0 %v70
    %137 = vmatprep.subr.mxu0 0.0
    %138 = vmatpush1.msra.mxu0 %v71
    %139 = vmatprep.subr.mxu0 0.0
    %140 = vmatpush1.msra.mxu0 %v72
    %141 = vmatprep.subr.mxu0 0.0
    %142 = vmatpush1.msra.mxu0 %v73
    %143 = vmatprep.subr.mxu0 0.0
    %144 = vmatpush1.msra.mxu0 %v74
    %145 = vmatprep.subr.mxu0 0.0
    %146 = vmatpush1.msra.mxu0 %v75
    %147 = vmatprep.mubr.f32.mxu0 %v37
    %148 = vmatmul.mubr.f32.gmra.mrb[0].mxu0 %v36
    %v149 = vpop.f32.mrb[0].mxu0
    %v150 = vadd.f32 %v81, %v149
    %v151 = vpop.f32.mrb[0].mxu0
    %152 = vmatprep.mubr.f32.mxu0 %v39
    %153 = vmatmul.mubr.f32.gmra.mrb[0].mxu0 %v38
    %v154 = vpop.f32.mrb[0].mxu0
    %v155 = vadd.f32 %v81, %v154
    %v156 = vpop.f32.mrb[0].mxu0
    %157 = vmatprep.mubr.f32.mxu0 %v41
    %158 = vmatmul.mubr.f32.gmra.mrb[0].mxu0 %v40
    %v159 = vpop.f32.mrb[0].mxu0
    %v160 = vadd.f32 %v81, %v159
    %v161 = vpop.f32.mrb[0].mxu0
    %162 = vmatprep.mubr.f32.mxu0 %v43
    %163 = vmatmul.mubr.f32.gmra.mrb[0].mxu0 %v42
    %v164 = vpop.f32.mrb[0].mxu0
    %v165 = vadd.f32 %v81, %v164
    %v166 = vpop.f32.mrb[0].mxu0
    %167 = vdwg.mxu0
    %v168 = vmul.f32 %v150, 0.5
    %v169 = vmul.f32 %v155, 0.5
    %v170 = vmul.f32 %v160, 0.5
    %v171 = vmul.f32 %v165, 0.5
    %v172 = vmul.f32 %v150, 0.70710677
    %v173 = vmul.f32 %v155, 0.70710677
    %v174 = vmul.f32 %v160, 0.70710677
    %v175 = vmul.f32 %v165, 0.70710677
    %v176 = verf.f32.pop %v172
    %v177 = verf.f32.pop %v173
    %v178 = verf.f32.pop %v174
    %v179 = verf.f32.pop %v175
    %v180 = vadd.f32 %v176, 1.0
    %v181 = vadd.f32 %v177, 1.0
    %v182 = vadd.f32 %v178, 1.0
    %v183 = vadd.f32 %v179, 1.0
    %v184 = vmul.f32 %v168, %v180
    %v185 = vmul.f32 %v169, %v181
    %v186 = vmul.f32 %v170, %v182
    %v187 = vmul.f32 %v171, %v183
    %v188 = vadd.f32 %v37, %v184
    %v189 = vadd.f32 %v39, %v185
    %v190 = vadd.f32 %v41, %v186
    %v191 = vadd.f32 %v43, %v187
    %s192 = scalar_lea.vmem %s2, 1
    %v193 = vld [vmem:[%s192] sm:$0x1]
    %s194 = scalar_lea.vmem %s2, 2
    %v195 = vld [vmem:[%s194] sm:$0x1]
    %vm196 = vcmask 261120
    %v197 = vsel %vm196, %v188, 0.0
    %198 = vadd.xlane.f32.xlu0 %v197
    %v199 = vpop.xlane.xlu0 %198
    %v200 = vsel %vm196, %v189, 0.0
    %201 = vadd.xlane.f32.xlu0 %v200
    %v202 = vpop.xlane.xlu0 %201
    %v203 = vsel %vm196, %v190, 0.0
    %204 = vadd.xlane.f32.xlu0 %v203
    %v205 = vpop.xlane.xlu0 %204
    %v206 = vsel %vm196, %v191, 0.0
    %207 = vadd.xlane.f32.xlu0 %v206
    %v208 = vpop.xlane.xlu0 %207
    %v209 = vrcp.pop 32.0
    %v210 = vmul.f32 %v199, %v209
    %v211 = vmul.f32 %v202, %v209
    %v212 = vmul.f32 %v205, %v209
    %v213 = vmul.f32 %v208, %v209
    %v214 = vsub.f32 %v188, %v210
    %v215 = vsub.f32 %v189, %v211
    %v216 = vsub.f32 %v190, %v212
    %v217 = vsub.f32 %v191, %v213
    %v218 = vmul.f32 %v214, %v214
    %v219 = vmul.f32 %v215, %v215
    %v220 = vmul.f32 %v216, %v216
    %v221 = vmul.f32 %v217, %v217
    %v222 = vsel %vm196, %v218, 0.0
    %223 = vadd.xlane.f32.xlu0 %v222
    %v224 = vpop.xlane.xlu0 %223
    %v225 = vsel %vm196, %v219, 0.0
    %226 = vadd.xlane.f32.xlu0 %v225
    %v227 = vpop.xlane.xlu0 %226
    %v228 = vsel %vm196, %v220, 0.0
    %229 = vadd.xlane.f32.xlu0 %v228
    %v230 = vpop.xlane.xlu0 %229
    %v231 = vsel %vm196, %v221, 0.0
    %232 = vadd.xlane.f32.xlu0 %v231
    %v233 = vpop.xlane.xlu0 %232
    %v234 = vmul.f32 %v224, %v209
    %v235 = vmul.f32 %v227, %v209
    %v236 = vmul.f32 %v230, %v209
    %v237 = vmul.f32 %v233, %v209
    %v238 = vadd.f32 %v234, 1e-05
    %v239 = vadd.f32 %v235, 1e-05
    %v240 = vadd.f32 %v236, 1e-05
    %v241 = vadd.f32 %v237, 1e-05
    %v242 = vrsqrt.pop %v238
    %v243 = vrsqrt.pop %v239
    %v244 = vrsqrt.pop %v240
    %v245 = vrsqrt.pop %v241
    %v246 = vmul.f32 %v214, %v242
    %v247 = vmul.f32 %v215, %v243
    %v248 = vmul.f32 %v216, %v244
    %v249 = vmul.f32 %v217, %v245
    %v251 = vlaneseq
    %v252 = vshrl.u32 %v251, 7
    %v253 = vsub.s32 0, %v252
    %v254 = vrot.slane %v193, %v253
    %v256 = vmul.f32 %v246, %v254
    %v257 = vmul.f32 %v247, %v254
    %v258 = vmul.f32 %v248, %v254
    %v259 = vmul.f32 %v249, %v254
    %v261 = vlaneseq
    %v262 = vshrl.u32 %v261, 7
    %v263 = vsub.s32 0, %v262
    %v264 = vrot.slane %v195, %v263
    %v266 = vadd.f32 %v256, %v264
    %v267 = vadd.f32 %v257, %v264
    %v268 = vadd.f32 %v258, %v264
    %v269 = vadd.f32 %v259, %v264
    %v270 = vld [vmem:[%s3] sm:$0xff]
    %v271 = vld [vmem:[%s3 + $0x8] sm:$0xff]
    %v272 = vld [vmem:[%s3 + $0x10] sm:$0xff]
    %v273 = vld [vmem:[%s3 + $0x18] sm:$0xff]
    %v274 = vld [vmem:[%s4] sm:$0x1]
    %v276 = vlaneseq
    %v277 = vshrl.u32 %v276, 7
    %v278 = vsub.s32 0, %v277
    %v279 = vrot.slane %v274, %v278
    %v282 = vsel %vm196, %v266, 0
    %v285 = vsel %vm196, %v267, 0
    %v288 = vsel %vm196, %v268, 0
    %v291 = vsel %vm196, %v269, 0
    %293 = vmatprep.subr.mxu0 0.0
    %294 = vmatpush1.msra.mxu0 %v270
    %295 = vmatprep.subr.mxu0 0.0
    %296 = vmatpush1.msra.mxu0 %v271
    %297 = vmatprep.subr.mxu0 0.0
    %298 = vmatpush1.msra.mxu0 %v272
    %299 = vmatprep.subr.mxu0 0.0
    %300 = vmatpush1.msra.mxu0 %v273
    %301 = vmatprep.subr.mxu0 0.0
    %302 = vmatpush1.msra.mxu0 0.0
    %303 = vmatprep.subr.mxu0 0.0
    %304 = vmatpush1.msra.mxu0 0.0
    %305 = vmatprep.subr.mxu0 0.0
    %306 = vmatpush1.msra.mxu0 0.0
    %307 = vmatprep.subr.mxu0 0.0
    %308 = vmatpush1.msra.mxu0 0.0
    %309 = vmatprep.subr.mxu0 0.0
    %310 = vmatpush1.msra.mxu0 0.0
    %311 = vmatprep.subr.mxu0 0.0
    %312 = vmatpush1.msra.mxu0 0.0
    %313 = vmatprep.subr.mxu0 0.0
    %314 = vmatpush1.msra.mxu0 0.0
    %315 = vmatprep.subr.mxu0 0.0
    %316 = vmatpush1.msra.mxu0 0.0
    %317 = vmatprep.subr.mxu0 0.0
    %318 = vmatpush1.msra.mxu0 0.0
    %319 = vmatprep.subr.mxu0 0.0
    %320 = vmatpush1.msra.mxu0 0.0
    %321 = vmatprep.subr.mxu0 0.0
    %322 = vmatpush1.msra.mxu0 0.0
    %323 = vmatprep.subr.mxu0 0.0
    %324 = vmatpush1.msra.mxu0 0.0
    %325 = vmatprep.subr.mxu0 0.0
    %326 = vmatpush1.msra.mxu0 0.0
    %327 = vmatprep.subr.mxu0 0.0
    %328 = vmatpush1.msra.mxu0 0.0
    %329 = vmatprep.subr.mxu0 0.0
    %330 = vmatpush1.msra.mxu0 0.0
    %331 = vmatprep.subr.mxu0 0.0
    %332 = vmatpush1.msra.mxu0 0.0
    %333 = vmatprep.subr.mxu0 0.0
    %334 = vmatpush1.msra.mxu0 0.0
    %335 = vmatprep.subr.mxu0 0.0
    %336 = vmatpush1.msra.mxu0 0.0
    %337 = vmatprep.subr.mxu0 0.0
    %338 = vmatpush1.msra.mxu0 0.0
    %339 = vmatprep.subr.mxu0 0.0
    %340 = vmatpush1.msra.mxu0 0.0
    %341 = vmatprep.subr.mxu0 0.0
    %342 = vmatpush1.msra.mxu0 0.0
    %343 = vmatprep.subr.mxu0 0.0
    %344 = vmatpush1.msra.mxu0 0.0
    %345 = vmatprep.subr.mxu0 0.0
    %346 = vmatpush1.msra.mxu0 0.0
    %347 = vmatprep.subr.mxu0 0.0
    %348 = vmatpush1.msra.mxu0 0.0
    %349 = vmatprep.subr.mxu0 0.0
    %350 = vmatpush1.msra.mxu0 0.0
    %351 = vmatprep.subr.mxu0 0.0
    %352 = vmatpush1.msra.mxu0 0.0
    %353 = vmatprep.subr.mxu0 0.0
    %354 = vmatpush1.msra.mxu0 0.0
    %355 = vmatprep.subr.mxu0 0.0
    %356 = vmatpush1.msra.mxu0 0.0
    %357 = vmatprep.mubr.f32.mxu0 0.0
    %358 = vmatmul.mubr.f32.gmra.mrb[0].mxu0 %v282
    %v359 = vpop.f32.mrb[0].mxu0
    %v360 = vadd.f32 %v279, %v359
    %v361 = vpop.f32.mrb[0].mxu0
    %362 = vmatprep.mubr.f32.mxu0 0.0
    %363 = vmatmul.mubr.f32.gmra.mrb[0].mxu0 %v285
    %v364 = vpop.f32.mrb[0].mxu0
    %v365 = vadd.f32 %v279, %v364
    %v366 = vpop.f32.mrb[0].mxu0
    %367 = vmatprep.mubr.f32.mxu0 0.0
    %368 = vmatmul.mubr.f32.gmra.mrb[0].mxu0 %v288
    %v369 = vpop.f32.mrb[0].mxu0
    %v370 = vadd.f32 %v279, %v369
    %v371 = vpop.f32.mrb[0].mxu0
    %372 = vmatprep.mubr.f32.mxu0 0.0
    %373 = vmatmul.mubr.f32.gmra.mrb[0].mxu0 %v291
    %v374 = vpop.f32.mrb[0].mxu0
    %v375 = vadd.f32 %v279, %v374
    %v376 = vpop.f32.mrb[0].mxu0
    %377 = vdwg.mxu0
    %s378 = scalar_lea.vmem %s3, 32
    %v379 = vld [vmem:[%s378] sm:$0xff]
    %v380 = vld [vmem:[%s378 + $0x8] sm:$0xff]
    %v381 = vld [vmem:[%s378 + $0x10] sm:$0xff]
    %v382 = vld [vmem:[%s378 + $0x18] sm:$0xff]
    %s383 = scalar_lea.vmem %s4, 1
    %v384 = vld [vmem:[%s383] sm:$0x1]
    %v386 = vlaneseq
    %v387 = vshrl.u32 %v386, 7
    %v388 = vsub.s32 0, %v387
    %v389 = vrot.slane %v384, %v388
    %391 = vmatprep.subr.mxu0 0.0
    %392 = vmatpush1.msra.mxu0 %v379
    %393 = vmatprep.subr.mxu0 0.0
    %394 = vmatpush1.msra.mxu0 %v380
    %395 = vmatprep.subr.mxu0 0.0
    %396 = vmatpush1.msra.mxu0 %v381
    %397 = vmatprep.subr.mxu0 0.0
    %398 = vmatpush1.msra.mxu0 %v382
    %399 = vmatprep.subr.mxu0 0.0
    %400 = vmatpush1.msra.mxu0 0.0
    %401 = vmatprep.subr.mxu0 0.0
    %402 = vmatpush1.msra.mxu0 0.0
    %403 = vmatprep.subr.mxu0 0.0
    %404 = vmatpush1.msra.mxu0 0.0
    %405 = vmatprep.subr.mxu0 0.0
    %406 = vmatpush1.msra.mxu0 0.0
    %407 = vmatprep.subr.mxu0 0.0
    %408 = vmatpush1.msra.mxu0 0.0
    %409 = vmatprep.subr.mxu0 0.0
    %410 = vmatpush1.msra.mxu0 0.0
    %411 = vmatprep.subr.mxu0 0.0
    %412 = vmatpush1.msra.mxu0 0.0
    %413 = vmatprep.subr.mxu0 0.0
    %414 = vmatpush1.msra.mxu0 0.0
    %415 = vmatprep.subr.mxu0 0.0
    %416 = vmatpush1.msra.mxu0 0.0
    %417 = vmatprep.subr.mxu0 0.0
    %418 = vmatpush1.msra.mxu0 0.0
    %419 = vmatprep.subr.mxu0 0.0
    %420 = vmatpush1.msra.mxu0 0.0
    %421 = vmatprep.subr.mxu0 0.0
    %422 = vmatpush1.msra.mxu0 0.0
    %423 = vmatprep.subr.mxu0 0.0
    %424 = vmatpush1.msra.mxu0 0.0
    %425 = vmatprep.subr.mxu0 0.0
    %426 = vmatpush1.msra.mxu0 0.0
    %427 = vmatprep.subr.mxu0 0.0
    %428 = vmatpush1.msra.mxu0 0.0
    %429 = vmatprep.subr.mxu0 0.0
    %430 = vmatpush1.msra.mxu0 0.0
    %431 = vmatprep.subr.mxu0 0.0
    %432 = vmatpush1.msra.mxu0 0.0
    %433 = vmatprep.subr.mxu0 0.0
    %434 = vmatpush1.msra.mxu0 0.0
    %435 = vmatprep.subr.mxu0 0.0
    %436 = vmatpush1.msra.mxu0 0.0
    %437 = vmatprep.subr.mxu0 0.0
    %438 = vmatpush1.msra.mxu0 0.0
    %439 = vmatprep.subr.mxu0 0.0
    %440 = vmatpush1.msra.mxu0 0.0
    %441 = vmatprep.subr.mxu0 0.0
    %442 = vmatpush1.msra.mxu0 0.0
    %443 = vmatprep.subr.mxu0 0.0
    %444 = vmatpush1.msra.mxu0 0.0
    %445 = vmatprep.subr.mxu0 0.0
    %446 = vmatpush1.msra.mxu0 0.0
    %447 = vmatprep.subr.mxu0 0.0
    %448 = vmatpush1.msra.mxu0 0.0
    %449 = vmatprep.subr.mxu0 0.0
    %450 = vmatpush1.msra.mxu0 0.0
    %451 = vmatprep.subr.mxu0 0.0
    %452 = vmatpush1.msra.mxu0 0.0
    %453 = vmatprep.subr.mxu0 0.0
    %454 = vmatpush1.msra.mxu0 0.0
    %455 = vmatprep.mubr.f32.mxu0 0.0
    %456 = vmatmul.mubr.f32.gmra.mrb[0].mxu0 %v282
    %v457 = vpop.f32.mrb[0].mxu0
    %v458 = vadd.f32 %v389, %v457
    %v459 = vpop.f32.mrb[0].mxu0
    %460 = vmatprep.mubr.f32.mxu0 0.0
    %461 = vmatmul.mubr.f32.gmra.mrb[0].mxu0 %v285
    %v462 = vpop.f32.mrb[0].mxu0
    %v463 = vadd.f32 %v389, %v462
    %v464 = vpop.f32.mrb[0].mxu0
    %465 = vmatprep.mubr.f32.mxu0 0.0
    %466 = vmatmul.mubr.f32.gmra.mrb[0].mxu0 %v288
    %v467 = vpop.f32.mrb[0].mxu0
    %v468 = vadd.f32 %v389, %v467
    %v469 = vpop.f32.mrb[0].mxu0
    %470 = vmatprep.mubr.f32.mxu0 0.0
    %471 = vmatmul.mubr.f32.gmra.mrb[0].mxu0 %v291
    %v472 = vpop.f32.mrb[0].mxu0
    %v473 = vadd.f32 %v389, %v472
    %v474 = vpop.f32.mrb[0].mxu0
    %475 = vdwg.mxu0
    %s476 = scalar_lea.vmem %s3, 64
    %v477 = vld [vmem:[%s476] sm:$0xff]
    %v478 = vld [vmem:[%s476 + $0x8] sm:$0xff]
    %v479 = vld [vmem:[%s476 + $0x10] sm:$0xff]
    %v480 = vld [vmem:[%s476 + $0x18] sm:$0xff]
    %s481 = scalar_lea.vmem %s4, 2
    %v482 = vld [vmem:[%s481] sm:$0x1]
    %v484 = vlaneseq
    %v485 = vshrl.u32 %v484, 7
    %v486 = vsub.s32 0, %v485
    %v487 = vrot.slane %v482, %v486
    %489 = vmatprep.subr.mxu0 0.0
    %490 = vmatpush1.msra.mxu0 %v477
    %491 = vmatprep.subr.mxu0 0.0
    %492 = vmatpush1.msra.mxu0 %v478
    %493 = vmatprep.subr.mxu0 0.0
    %494 = vmatpush1.msra.mxu0 %v479
    %495 = vmatprep.subr.mxu0 0.0
    %496 = vmatpush1.msra.mxu0 %v480
    %497 = vmatprep.subr.mxu0 0.0
    %498 = vmatpush1.msra.mxu0 0.0
    %499 = vmatprep.subr.mxu0 0.0
    %500 = vmatpush1.msra.mxu0 0.0
    %501 = vmatprep.subr.mxu0 0.0
    %502 = vmatpush1.msra.mxu0 0.0
    %503 = vmatprep.subr.mxu0 0.0
    %504 = vmatpush1.msra.mxu0 0.0
    %505 = vmatprep.subr.mxu0 0.0
    %506 = vmatpush1.msra.mxu0 0.0
    %507 = vmatprep.subr.mxu0 0.0
    %508 = vmatpush1.msra.mxu0 0.0
    %509 = vmatprep.subr.mxu0 0.0
    %510 = vmatpush1.msra.mxu0 0.0
    %511 = vmatprep.subr.mxu0 0.0
    %512 = vmatpush1.msra.mxu0 0.0
    %513 = vmatprep.subr.mxu0 0.0
    %514 = vmatpush1.msra.mxu0 0.0
    %515 = vmatprep.subr.mxu0 0.0
    %516 = vmatpush1.msra.mxu0 0.0
    %517 = vmatprep.subr.mxu0 0.0
    %518 = vmatpush1.msra.mxu0 0.0
    %519 = vmatprep.subr.mxu0 0.0
    %520 = vmatpush1.msra.mxu0 0.0
    %521 = vmatprep.subr.mxu0 0.0
    %522 = vmatpush1.msra.mxu0 0.0
    %523 = vmatprep.subr.mxu0 0.0
    %524 = vmatpush1.msra.mxu0 0.0
    %525 = vmatprep.subr.mxu0 0.0
    %526 = vmatpush1.msra.mxu0 0.0
    %527 = vmatprep.subr.mxu0 0.0
    %528 = vmatpush1.msra.mxu0 0.0
    %529 = vmatprep.subr.mxu0 0.0
    %530 = vmatpush1.msra.mxu0 0.0
    %531 = vmatprep.subr.mxu0 0.0
    %532 = vmatpush1.msra.mxu0 0.0
    %533 = vmatprep.subr.mxu0 0.0
    %534 = vmatpush1.msra.mxu0 0.0
    %535 = vmatprep.subr.mxu0 0.0
    %536 = vmatpush1.msra.mxu0 0.0
    %537 = vmatprep.subr.mxu0 0.0
    %538 = vmatpush1.msra.mxu0 0.0
    %539 = vmatprep.subr.mxu0 0.0
    %540 = vmatpush1.msra.mxu0 0.0
    %541 = vmatprep.subr.mxu0 0.0
    %542 = vmatpush1.msra.mxu0 0.0
    %543 = vmatprep.subr.mxu0 0.0
    %544 = vmatpush1.msra.mxu0 0.0
    %545 = vmatprep.subr.mxu0 0.0
    %546 = vmatpush1.msra.mxu0 0.0
    %547 = vmatprep.subr.mxu0 0.0
    %548 = vmatpush1.msra.mxu0 0.0
    %549 = vmatprep.subr.mxu0 0.0
    %550 = vmatpush1.msra.mxu0 0.0
    %551 = vmatprep.subr.mxu0 0.0
    %552 = vmatpush1.msra.mxu0 0.0
    %553 = vmatprep.mubr.f32.mxu0 0.0
    %554 = vmatmul.mubr.f32.gmra.mrb[0].mxu0 %v282
    %v555 = vpop.f32.mrb[0].mxu0
    %v556 = vadd.f32 %v487, %v555
    %v557 = vpop.f32.mrb[0].mxu0
    %558 = vmatprep.mubr.f32.mxu0 0.0
    %559 = vmatmul.mubr.f32.gmra.mrb[0].mxu0 %v285
    %v560 = vpop.f32.mrb[0].mxu0
    %v561 = vadd.f32 %v487, %v560
    %v562 = vpop.f32.mrb[0].mxu0
    %563 = vmatprep.mubr.f32.mxu0 0.0
    %564 = vmatmul.mubr.f32.gmra.mrb[0].mxu0 %v288
    %v565 = vpop.f32.mrb[0].mxu0
    %v566 = vadd.f32 %v487, %v565
    %v567 = vpop.f32.mrb[0].mxu0
    %568 = vmatprep.mubr.f32.mxu0 0.0
    %569 = vmatmul.mubr.f32.gmra.mrb[0].mxu0 %v291
    %v570 = vpop.f32.mrb[0].mxu0
    %v571 = vadd.f32 %v487, %v570
    %v572 = vpop.f32.mrb[0].mxu0
    %573 = vdwg.mxu0
    %s574 = scalar_lea.vmem %s3, 96
    %v575 = vld [vmem:[%s574] sm:$0xff]
    %v576 = vld [vmem:[%s574 + $0x8] sm:$0xff]
    %v577 = vld [vmem:[%s574 + $0x10] sm:$0xff]
    %v578 = vld [vmem:[%s574 + $0x18] sm:$0xff]
    %s579 = scalar_lea.vmem %s4, 3
    %v580 = vld [vmem:[%s579] sm:$0x1]
    %v582 = vlaneseq
    %v583 = vshrl.u32 %v582, 7
    %v584 = vsub.s32 0, %v583
    %v585 = vrot.slane %v580, %v584
    %587 = vmatprep.subr.mxu0 0.0
    %588 = vmatpush1.msra.mxu0 %v575
    %589 = vmatprep.subr.mxu0 0.0
    %590 = vmatpush1.msra.mxu0 %v576
    %591 = vmatprep.subr.mxu0 0.0
    %592 = vmatpush1.msra.mxu0 %v577
    %593 = vmatprep.subr.mxu0 0.0
    %594 = vmatpush1.msra.mxu0 %v578
    %595 = vmatprep.subr.mxu0 0.0
    %596 = vmatpush1.msra.mxu0 0.0
    %597 = vmatprep.subr.mxu0 0.0
    %598 = vmatpush1.msra.mxu0 0.0
    %599 = vmatprep.subr.mxu0 0.0
    %600 = vmatpush1.msra.mxu0 0.0
    %601 = vmatprep.subr.mxu0 0.0
    %602 = vmatpush1.msra.mxu0 0.0
    %603 = vmatprep.subr.mxu0 0.0
    %604 = vmatpush1.msra.mxu0 0.0
    %605 = vmatprep.subr.mxu0 0.0
    %606 = vmatpush1.msra.mxu0 0.0
    %607 = vmatprep.subr.mxu0 0.0
    %608 = vmatpush1.msra.mxu0 0.0
    %609 = vmatprep.subr.mxu0 0.0
    %610 = vmatpush1.msra.mxu0 0.0
    %611 = vmatprep.subr.mxu0 0.0
    %612 = vmatpush1.msra.mxu0 0.0
    %613 = vmatprep.subr.mxu0 0.0
    %614 = vmatpush1.msra.mxu0 0.0
    %615 = vmatprep.subr.mxu0 0.0
    %616 = vmatpush1.msra.mxu0 0.0
    %617 = vmatprep.subr.mxu0 0.0
    %618 = vmatpush1.msra.mxu0 0.0
    %619 = vmatprep.subr.mxu0 0.0
    %620 = vmatpush1.msra.mxu0 0.0
    %621 = vmatprep.subr.mxu0 0.0
    %622 = vmatpush1.msra.mxu0 0.0
    %623 = vmatprep.subr.mxu0 0.0
    %624 = vmatpush1.msra.mxu0 0.0
    %625 = vmatprep.subr.mxu0 0.0
    %626 = vmatpush1.msra.mxu0 0.0
    %627 = vmatprep.subr.mxu0 0.0
    %628 = vmatpush1.msra.mxu0 0.0
    %629 = vmatprep.subr.mxu0 0.0
    %630 = vmatpush1.msra.mxu0 0.0
    %631 = vmatprep.subr.mxu0 0.0
    %632 = vmatpush1.msra.mxu0 0.0
    %633 = vmatprep.subr.mxu0 0.0
    %634 = vmatpush1.msra.mxu0 0.0
    %635 = vmatprep.subr.mxu0 0.0
    %636 = vmatpush1.msra.mxu0 0.0
    %637 = vmatprep.subr.mxu0 0.0
    %638 = vmatpush1.msra.mxu0 0.0
    %639 = vmatprep.subr.mxu0 0.0
    %640 = vmatpush1.msra.mxu0 0.0
    %641 = vmatprep.subr.mxu0 0.0
    %642 = vmatpush1.msra.mxu0 0.0
    %643 = vmatprep.subr.mxu0 0.0
    %644 = vmatpush1.msra.mxu0 0.0
    %645 = vmatprep.subr.mxu0 0.0
    %646 = vmatpush1.msra.mxu0 0.0
    %647 = vmatprep.subr.mxu0 0.0
    %648 = vmatpush1.msra.mxu0 0.0
    %649 = vmatprep.subr.mxu0 0.0
    %650 = vmatpush1.msra.mxu0 0.0
    %651 = vmatprep.mubr.f32.mxu0 0.0
    %652 = vmatmul.mubr.f32.gmra.mrb[0].mxu0 %v282
    %v653 = vpop.f32.mrb[0].mxu0
    %v654 = vadd.f32 %v585, %v653
    %v655 = vpop.f32.mrb[0].mxu0
    %656 = vmatprep.mubr.f32.mxu0 0.0
    %657 = vmatmul.mubr.f32.gmra.mrb[0].mxu0 %v285
    %v658 = vpop.f32.mrb[0].mxu0
    %v659 = vadd.f32 %v585, %v658
    %v660 = vpop.f32.mrb[0].mxu0
    %661 = vmatprep.mubr.f32.mxu0 0.0
    %662 = vmatmul.mubr.f32.gmra.mrb[0].mxu0 %v288
    %v663 = vpop.f32.mrb[0].mxu0
    %v664 = vadd.f32 %v585, %v663
    %v665 = vpop.f32.mrb[0].mxu0
    %666 = vmatprep.mubr.f32.mxu0 0.0
    %667 = vmatmul.mubr.f32.gmra.mrb[0].mxu0 %v291
    %v668 = vpop.f32.mrb[0].mxu0
    %v669 = vadd.f32 %v585, %v668
    %v670 = vpop.f32.mrb[0].mxu0
    %671 = vdwg.mxu0
    %s672 = scalar_lea.vmem %s3, 128
    %v673 = vld [vmem:[%s672] sm:$0xff]
    %v674 = vld [vmem:[%s672 + $0x8] sm:$0xff]
    %v675 = vld [vmem:[%s672 + $0x10] sm:$0xff]
    %v676 = vld [vmem:[%s672 + $0x18] sm:$0xff]
    %s677 = scalar_lea.vmem %s4, 4
    %v678 = vld [vmem:[%s677] sm:$0x1]
    %v680 = vlaneseq
    %v681 = vshrl.u32 %v680, 7
    %v682 = vsub.s32 0, %v681
    %v683 = vrot.slane %v678, %v682
    %685 = vmatprep.subr.mxu0 0.0
    %686 = vmatpush1.msra.mxu0 %v673
    %687 = vmatprep.subr.mxu0 0.0
    %688 = vmatpush1.msra.mxu0 %v674
    %689 = vmatprep.subr.mxu0 0.0
    %690 = vmatpush1.msra.mxu0 %v675
    %691 = vmatprep.subr.mxu0 0.0
    %692 = vmatpush1.msra.mxu0 %v676
    %693 = vmatprep.subr.mxu0 0.0
    %694 = vmatpush1.msra.mxu0 0.0
    %695 = vmatprep.subr.mxu0 0.0
    %696 = vmatpush1.msra.mxu0 0.0
    %697 = vmatprep.subr.mxu0 0.0
    %698 = vmatpush1.msra.mxu0 0.0
    %699 = vmatprep.subr.mxu0 0.0
    %700 = vmatpush1.msra.mxu0 0.0
    %701 = vmatprep.subr.mxu0 0.0
    %702 = vmatpush1.msra.mxu0 0.0
    %703 = vmatprep.subr.mxu0 0.0
    %704 = vmatpush1.msra.mxu0 0.0
    %705 = vmatprep.subr.mxu0 0.0
    %706 = vmatpush1.msra.mxu0 0.0
    %707 = vmatprep.subr.mxu0 0.0
    %708 = vmatpush1.msra.mxu0 0.0
    %709 = vmatprep.subr.mxu0 0.0
    %710 = vmatpush1.msra.mxu0 0.0
    %711 = vmatprep.subr.mxu0 0.0
    %712 = vmatpush1.msra.mxu0 0.0
    %713 = vmatprep.subr.mxu0 0.0
    %714 = vmatpush1.msra.mxu0 0.0
    %715 = vmatprep.subr.mxu0 0.0
    %716 = vmatpush1.msra.mxu0 0.0
    %717 = vmatprep.subr.mxu0 0.0
    %718 = vmatpush1.msra.mxu0 0.0
    %719 = vmatprep.subr.mxu0 0.0
    %720 = vmatpush1.msra.mxu0 0.0
    %721 = vmatprep.subr.mxu0 0.0
    %722 = vmatpush1.msra.mxu0 0.0
    %723 = vmatprep.subr.mxu0 0.0
    %724 = vmatpush1.msra.mxu0 0.0
    %725 = vmatprep.subr.mxu0 0.0
    %726 = vmatpush1.msra.mxu0 0.0
    %727 = vmatprep.subr.mxu0 0.0
    %728 = vmatpush1.msra.mxu0 0.0
    %729 = vmatprep.subr.mxu0 0.0
    %730 = vmatpush1.msra.mxu0 0.0
    %731 = vmatprep.subr.mxu0 0.0
    %732 = vmatpush1.msra.mxu0 0.0
    %733 = vmatprep.subr.mxu0 0.0
    %734 = vmatpush1.msra.mxu0 0.0
    %735 = vmatprep.subr.mxu0 0.0
    %736 = vmatpush1.msra.mxu0 0.0
    %737 = vmatprep.subr.mxu0 0.0
    %738 = vmatpush1.msra.mxu0 0.0
    %739 = vmatprep.subr.mxu0 0.0
    %740 = vmatpush1.msra.mxu0 0.0
    %741 = vmatprep.subr.mxu0 0.0
    %742 = vmatpush1.msra.mxu0 0.0
    %743 = vmatprep.subr.mxu0 0.0
    %744 = vmatpush1.msra.mxu0 0.0
    %745 = vmatprep.subr.mxu0 0.0
    %746 = vmatpush1.msra.mxu0 0.0
    %747 = vmatprep.subr.mxu0 0.0
    %748 = vmatpush1.msra.mxu0 0.0
    %749 = vmatprep.mubr.f32.mxu0 0.0
    %750 = vmatmul.mubr.f32.gmra.mrb[0].mxu0 %v282
    %v751 = vpop.f32.mrb[0].mxu0
    %v752 = vadd.f32 %v683, %v751
    %v753 = vpop.f32.mrb[0].mxu0
    %754 = vmatprep.mubr.f32.mxu0 0.0
    %755 = vmatmul.mubr.f32.gmra.mrb[0].mxu0 %v285
    %v756 = vpop.f32.mrb[0].mxu0
    %v757 = vadd.f32 %v683, %v756
    %v758 = vpop.f32.mrb[0].mxu0
    %759 = vmatprep.mubr.f32.mxu0 0.0
    %760 = vmatmul.mubr.f32.gmra.mrb[0].mxu0 %v288
    %v761 = vpop.f32.mrb[0].mxu0
    %v762 = vadd.f32 %v683, %v761
    %v763 = vpop.f32.mrb[0].mxu0
    %764 = vmatprep.mubr.f32.mxu0 0.0
    %765 = vmatmul.mubr.f32.gmra.mrb[0].mxu0 %v291
    %v766 = vpop.f32.mrb[0].mxu0
    %v767 = vadd.f32 %v683, %v766
    %v768 = vpop.f32.mrb[0].mxu0
    %769 = vdwg.mxu0
    %s770 = scalar_lea.vmem %s3, 160
    %v771 = vld [vmem:[%s770] sm:$0xff]
    %v772 = vld [vmem:[%s770 + $0x8] sm:$0xff]
    %v773 = vld [vmem:[%s770 + $0x10] sm:$0xff]
    %v774 = vld [vmem:[%s770 + $0x18] sm:$0xff]
    %s775 = scalar_lea.vmem %s4, 5
    %v776 = vld [vmem:[%s775] sm:$0x1]
    %v778 = vlaneseq
    %v779 = vshrl.u32 %v778, 7
    %v780 = vsub.s32 0, %v779
    %v781 = vrot.slane %v776, %v780
    %783 = vmatprep.subr.mxu0 0.0
    %784 = vmatpush1.msra.mxu0 %v771
    %785 = vmatprep.subr.mxu0 0.0
    %786 = vmatpush1.msra.mxu0 %v772
    %787 = vmatprep.subr.mxu0 0.0
    %788 = vmatpush1.msra.mxu0 %v773
    %789 = vmatprep.subr.mxu0 0.0
    %790 = vmatpush1.msra.mxu0 %v774
    %791 = vmatprep.subr.mxu0 0.0
    %792 = vmatpush1.msra.mxu0 0.0
    %793 = vmatprep.subr.mxu0 0.0
    %794 = vmatpush1.msra.mxu0 0.0
    %795 = vmatprep.subr.mxu0 0.0
    %796 = vmatpush1.msra.mxu0 0.0
    %797 = vmatprep.subr.mxu0 0.0
    %798 = vmatpush1.msra.mxu0 0.0
    %799 = vmatprep.subr.mxu0 0.0
    %800 = vmatpush1.msra.mxu0 0.0
    %801 = vmatprep.subr.mxu0 0.0
    %802 = vmatpush1.msra.mxu0 0.0
    %803 = vmatprep.subr.mxu0 0.0
    %804 = vmatpush1.msra.mxu0 0.0
    %805 = vmatprep.subr.mxu0 0.0
    %806 = vmatpush1.msra.mxu0 0.0
    %807 = vmatprep.subr.mxu0 0.0
    %808 = vmatpush1.msra.mxu0 0.0
    %809 = vmatprep.subr.mxu0 0.0
    %810 = vmatpush1.msra.mxu0 0.0
    %811 = vmatprep.subr.mxu0 0.0
    %812 = vmatpush1.msra.mxu0 0.0
    %813 = vmatprep.subr.mxu0 0.0
    %814 = vmatpush1.msra.mxu0 0.0
    %815 = vmatprep.subr.mxu0 0.0
    %816 = vmatpush1.msra.mxu0 0.0
    %817 = vmatprep.subr.mxu0 0.0
    %818 = vmatpush1.msra.mxu0 0.0
    %819 = vmatprep.subr.mxu0 0.0
    %820 = vmatpush1.msra.mxu0 0.0
    %821 = vmatprep.subr.mxu0 0.0
    %822 = vmatpush1.msra.mxu0 0.0
    %823 = vmatprep.subr.mxu0 0.0
    %824 = vmatpush1.msra.mxu0 0.0
    %825 = vmatprep.subr.mxu0 0.0
    %826 = vmatpush1.msra.mxu0 0.0
    %827 = vmatprep.subr.mxu0 0.0
    %828 = vmatpush1.msra.mxu0 0.0
    %829 = vmatprep.subr.mxu0 0.0
    %830 = vmatpush1.msra.mxu0 0.0
    %831 = vmatprep.subr.mxu0 0.0
    %832 = vmatpush1.msra.mxu0 0.0
    %833 = vmatprep.subr.mxu0 0.0
    %834 = vmatpush1.msra.mxu0 0.0
    %835 = vmatprep.subr.mxu0 0.0
    %836 = vmatpush1.msra.mxu0 0.0
    %837 = vmatprep.subr.mxu0 0.0
    %838 = vmatpush1.msra.mxu0 0.0
    %839 = vmatprep.subr.mxu0 0.0
    %840 = vmatpush1.msra.mxu0 0.0
    %841 = vmatprep.subr.mxu0 0.0
    %842 = vmatpush1.msra.mxu0 0.0
    %843 = vmatprep.subr.mxu0 0.0
    %844 = vmatpush1.msra.mxu0 0.0
    %845 = vmatprep.subr.mxu0 0.0
    %846 = vmatpush1.msra.mxu0 0.0
    %847 = vmatprep.mubr.f32.mxu0 0.0
    %848 = vmatmul.mubr.f32.gmra.mrb[0].mxu0 %v282
    %v849 = vpop.f32.mrb[0].mxu0
    %v850 = vadd.f32 %v781, %v849
    %v851 = vpop.f32.mrb[0].mxu0
    %852 = vmatprep.mubr.f32.mxu0 0.0
    %853 = vmatmul.mubr.f32.gmra.mrb[0].mxu0 %v285
    %v854 = vpop.f32.mrb[0].mxu0
    %v855 = vadd.f32 %v781, %v854
    %v856 = vpop.f32.mrb[0].mxu0
    %857 = vmatprep.mubr.f32.mxu0 0.0
    %858 = vmatmul.mubr.f32.gmra.mrb[0].mxu0 %v288
    %v859 = vpop.f32.mrb[0].mxu0
    %v860 = vadd.f32 %v781, %v859
    %v861 = vpop.f32.mrb[0].mxu0
    %862 = vmatprep.mubr.f32.mxu0 0.0
    %863 = vmatmul.mubr.f32.gmra.mrb[0].mxu0 %v291
    %v864 = vpop.f32.mrb[0].mxu0
    %v865 = vadd.f32 %v781, %v864
    %v866 = vpop.f32.mrb[0].mxu0
    %867 = vdwg.mxu0
    %s868 = scalar_lea.vmem %s3, 192
    %v869 = vld [vmem:[%s868] sm:$0xff]
    %v870 = vld [vmem:[%s868 + $0x8] sm:$0xff]
    %v871 = vld [vmem:[%s868 + $0x10] sm:$0xff]
    %v872 = vld [vmem:[%s868 + $0x18] sm:$0xff]
    %s873 = scalar_lea.vmem %s4, 6
    %v874 = vld [vmem:[%s873] sm:$0x1]
    %v876 = vlaneseq
    %v877 = vshrl.u32 %v876, 7
    %v878 = vsub.s32 0, %v877
    %v879 = vrot.slane %v874, %v878
    %881 = vmatprep.subr.mxu0 0.0
    %882 = vmatpush1.msra.mxu0 %v869
    %883 = vmatprep.subr.mxu0 0.0
    %884 = vmatpush1.msra.mxu0 %v870
    %885 = vmatprep.subr.mxu0 0.0
    %886 = vmatpush1.msra.mxu0 %v871
    %887 = vmatprep.subr.mxu0 0.0
    %888 = vmatpush1.msra.mxu0 %v872
    %889 = vmatprep.subr.mxu0 0.0
    %890 = vmatpush1.msra.mxu0 0.0
    %891 = vmatprep.subr.mxu0 0.0
    %892 = vmatpush1.msra.mxu0 0.0
    %893 = vmatprep.subr.mxu0 0.0
    %894 = vmatpush1.msra.mxu0 0.0
    %895 = vmatprep.subr.mxu0 0.0
    %896 = vmatpush1.msra.mxu0 0.0
    %897 = vmatprep.subr.mxu0 0.0
    %898 = vmatpush1.msra.mxu0 0.0
    %899 = vmatprep.subr.mxu0 0.0
    %900 = vmatpush1.msra.mxu0 0.0
    %901 = vmatprep.subr.mxu0 0.0
    %902 = vmatpush1.msra.mxu0 0.0
    %903 = vmatprep.subr.mxu0 0.0
    %904 = vmatpush1.msra.mxu0 0.0
    %905 = vmatprep.subr.mxu0 0.0
    %906 = vmatpush1.msra.mxu0 0.0
    %907 = vmatprep.subr.mxu0 0.0
    %908 = vmatpush1.msra.mxu0 0.0
    %909 = vmatprep.subr.mxu0 0.0
    %910 = vmatpush1.msra.mxu0 0.0
    %911 = vmatprep.subr.mxu0 0.0
    %912 = vmatpush1.msra.mxu0 0.0
    %913 = vmatprep.subr.mxu0 0.0
    %914 = vmatpush1.msra.mxu0 0.0
    %915 = vmatprep.subr.mxu0 0.0
    %916 = vmatpush1.msra.mxu0 0.0
    %917 = vmatprep.subr.mxu0 0.0
    %918 = vmatpush1.msra.mxu0 0.0
    %919 = vmatprep.subr.mxu0 0.0
    %920 = vmatpush1.msra.mxu0 0.0
    %921 = vmatprep.subr.mxu0 0.0
    %922 = vmatpush1.msra.mxu0 0.0
    %923 = vmatprep.subr.mxu0 0.0
    %924 = vmatpush1.msra.mxu0 0.0
    %925 = vmatprep.subr.mxu0 0.0
    %926 = vmatpush1.msra.mxu0 0.0
    %927 = vmatprep.subr.mxu0 0.0
    %928 = vmatpush1.msra.mxu0 0.0
    %929 = vmatprep.subr.mxu0 0.0
    %930 = vmatpush1.msra.mxu0 0.0
    %931 = vmatprep.subr.mxu0 0.0
    %932 = vmatpush1.msra.mxu0 0.0
    %933 = vmatprep.subr.mxu0 0.0
    %934 = vmatpush1.msra.mxu0 0.0
    %935 = vmatprep.subr.mxu0 0.0
    %936 = vmatpush1.msra.mxu0 0.0
    %937 = vmatprep.subr.mxu0 0.0
    %938 = vmatpush1.msra.mxu0 0.0
    %939 = vmatprep.subr.mxu0 0.0
    %940 = vmatpush1.msra.mxu0 0.0
    %941 = vmatprep.subr.mxu0 0.0
    %942 = vmatpush1.msra.mxu0 0.0
    %943 = vmatprep.subr.mxu0 0.0
    %944 = vmatpush1.msra.mxu0 0.0
    %945 = vmatprep.mubr.f32.mxu0 0.0
    %946 = vmatmul.mubr.f32.gmra.mrb[0].mxu0 %v282
    %v947 = vpop.f32.mrb[0].mxu0
    %v948 = vadd.f32 %v879, %v947
    %v949 = vpop.f32.mrb[0].mxu0
    %950 = vmatprep.mubr.f32.mxu0 0.0
    %951 = vmatmul.mubr.f32.gmra.mrb[0].mxu0 %v285
    %v952 = vpop.f32.mrb[0].mxu0
    %v953 = vadd.f32 %v879, %v952
    %v954 = vpop.f32.mrb[0].mxu0
    %955 = vmatprep.mubr.f32.mxu0 0.0
    %956 = vmatmul.mubr.f32.gmra.mrb[0].mxu0 %v288
    %v957 = vpop.f32.mrb[0].mxu0
    %v958 = vadd.f32 %v879, %v957
    %v959 = vpop.f32.mrb[0].mxu0
    %960 = vmatprep.mubr.f32.mxu0 0.0
    %961 = vmatmul.mubr.f32.gmra.mrb[0].mxu0 %v291
    %v962 = vpop.f32.mrb[0].mxu0
    %v963 = vadd.f32 %v879, %v962
    %v964 = vpop.f32.mrb[0].mxu0
    %965 = vdwg.mxu0
    %s966 = scalar_lea.vmem %s3, 224
    %v967 = vld [vmem:[%s966] sm:$0xff]
    %v968 = vld [vmem:[%s966 + $0x8] sm:$0xff]
    %v969 = vld [vmem:[%s966 + $0x10] sm:$0xff]
    %v970 = vld [vmem:[%s966 + $0x18] sm:$0xff]
    %s971 = scalar_lea.vmem %s4, 7
    %v972 = vld [vmem:[%s971] sm:$0x1]
    %v974 = vlaneseq
    %v975 = vshrl.u32 %v974, 7
    %v976 = vsub.s32 0, %v975
    %v977 = vrot.slane %v972, %v976
    %979 = vmatprep.subr.mxu0 0.0
    %980 = vmatpush1.msra.mxu0 %v967
    %981 = vmatprep.subr.mxu0 0.0
    %982 = vmatpush1.msra.mxu0 %v968
    %983 = vmatprep.subr.mxu0 0.0
    %984 = vmatpush1.msra.mxu0 %v969
    %985 = vmatprep.subr.mxu0 0.0
    %986 = vmatpush1.msra.mxu0 %v970
    %987 = vmatprep.subr.mxu0 0.0
    %988 = vmatpush1.msra.mxu0 0.0
    %989 = vmatprep.subr.mxu0 0.0
    %990 = vmatpush1.msra.mxu0 0.0
    %991 = vmatprep.subr.mxu0 0.0
    %992 = vmatpush1.msra.mxu0 0.0
    %993 = vmatprep.subr.mxu0 0.0
    %994 = vmatpush1.msra.mxu0 0.0
    %995 = vmatprep.subr.mxu0 0.0
    %996 = vmatpush1.msra.mxu0 0.0
    %997 = vmatprep.subr.mxu0 0.0
    %998 = vmatpush1.msra.mxu0 0.0
    %999 = vmatprep.subr.mxu0 0.0
    %1000 = vmatpush1.msra.mxu0 0.0
    %1001 = vmatprep.subr.mxu0 0.0
    %1002 = vmatpush1.msra.mxu0 0.0
    %1003 = vmatprep.subr.mxu0 0.0
    %1004 = vmatpush1.msra.mxu0 0.0
    %1005 = vmatprep.subr.mxu0 0.0
    %1006 = vmatpush1.msra.mxu0 0.0
    %1007 = vmatprep.subr.mxu0 0.0
    %1008 = vmatpush1.msra.mxu0 0.0
    %1009 = vmatprep.subr.mxu0 0.0
    %1010 = vmatpush1.msra.mxu0 0.0
    %1011 = vmatprep.subr.mxu0 0.0
    %1012 = vmatpush1.msra.mxu0 0.0
    %1013 = vmatprep.subr.mxu0 0.0
    %1014 = vmatpush1.msra.mxu0 0.0
    %1015 = vmatprep.subr.mxu0 0.0
    %1016 = vmatpush1.msra.mxu0 0.0
    %1017 = vmatprep.subr.mxu0 0.0
    %1018 = vmatpush1.msra.mxu0 0.0
    %1019 = vmatprep.subr.mxu0 0.0
    %1020 = vmatpush1.msra.mxu0 0.0
    %1021 = vmatprep.subr.mxu0 0.0
    %1022 = vmatpush1.msra.mxu0 0.0
    %1023 = vmatprep.subr.mxu0 0.0
    %1024 = vmatpush1.msra.mxu0 0.0
    %1025 = vmatprep.subr.mxu0 0.0
    %1026 = vmatpush1.msra.mxu0 0.0
    %1027 = vmatprep.subr.mxu0 0.0
    %1028 = vmatpush1.msra.mxu0 0.0
    %1029 = vmatprep.subr.mxu0 0.0
    %1030 = vmatpush1.msra.mxu0 0.0
    %1031 = vmatprep.subr.mxu0 0.0
    %1032 = vmatpush1.msra.mxu0 0.0
    %1033 = vmatprep.subr.mxu0 0.0
    %1034 = vmatpush1.msra.mxu0 0.0
    %1035 = vmatprep.subr.mxu0 0.0
    %1036 = vmatpush1.msra.mxu0 0.0
    %1037 = vmatprep.subr.mxu0 0.0
    %1038 = vmatpush1.msra.mxu0 0.0
    %1039 = vmatprep.subr.mxu0 0.0
    %1040 = vmatpush1.msra.mxu0 0.0
    %1041 = vmatprep.subr.mxu0 0.0
    %1042 = vmatpush1.msra.mxu0 0.0
    %1043 = vmatprep.mubr.f32.mxu0 0.0
    %1044 = vmatmul.mubr.f32.gmra.mrb[0].mxu0 %v282
    %v1045 = vpop.f32.mrb[0].mxu0
    %v1046 = vadd.f32 %v977, %v1045
    %v1047 = vpop.f32.mrb[0].mxu0
    %1048 = vmatprep.mubr.f32.mxu0 0.0
    %1049 = vmatmul.mubr.f32.gmra.mrb[0].mxu0 %v285
    %v1050 = vpop.f32.mrb[0].mxu0
    %v1051 = vadd.f32 %v977, %v1050
    %v1052 = vpop.f32.mrb[0].mxu0
    %1053 = vmatprep.mubr.f32.mxu0 0.0
    %1054 = vmatmul.mubr.f32.gmra.mrb[0].mxu0 %v288
    %v1055 = vpop.f32.mrb[0].mxu0
    %v1056 = vadd.f32 %v977, %v1055
    %v1057 = vpop.f32.mrb[0].mxu0
    %1058 = vmatprep.mubr.f32.mxu0 0.0
    %1059 = vmatmul.mubr.f32.gmra.mrb[0].mxu0 %v291
    %v1060 = vpop.f32.mrb[0].mxu0
    %v1061 = vadd.f32 %v977, %v1060
    %v1062 = vpop.f32.mrb[0].mxu0
    %1063 = vdwg.mxu0
    %s1064 = scalar_lea.vmem %s3, 256
    %v1065 = vld [vmem:[%s1064] sm:$0xff]
    %v1066 = vld [vmem:[%s1064 + $0x8] sm:$0xff]
    %v1067 = vld [vmem:[%s1064 + $0x10] sm:$0xff]
    %v1068 = vld [vmem:[%s1064 + $0x18] sm:$0xff]
    %s1069 = scalar_lea.vmem %s4, 8
    %v1070 = vld [vmem:[%s1069] sm:$0x1]
    %v1072 = vlaneseq
    %v1073 = vshrl.u32 %v1072, 7
    %v1074 = vsub.s32 0, %v1073
    %v1075 = vrot.slane %v1070, %v1074
    %1077 = vmatprep.subr.mxu0 0.0
    %1078 = vmatpush1.msra.mxu0 %v1065
    %1079 = vmatprep.subr.mxu0 0.0
    %1080 = vmatpush1.msra.mxu0 %v1066
    %1081 = vmatprep.subr.mxu0 0.0
    %1082 = vmatpush1.msra.mxu0 %v1067
    %1083 = vmatprep.subr.mxu0 0.0
    %1084 = vmatpush1.msra.mxu0 %v1068
    %1085 = vmatprep.subr.mxu0 0.0
    %1086 = vmatpush1.msra.mxu0 0.0
    %1087 = vmatprep.subr.mxu0 0.0
    %1088 = vmatpush1.msra.mxu0 0.0
    %1089 = vmatprep.subr.mxu0 0.0
    %1090 = vmatpush1.msra.mxu0 0.0
    %1091 = vmatprep.subr.mxu0 0.0
    %1092 = vmatpush1.msra.mxu0 0.0
    %1093 = vmatprep.subr.mxu0 0.0
    %1094 = vmatpush1.msra.mxu0 0.0
    %1095 = vmatprep.subr.mxu0 0.0
    %1096 = vmatpush1.msra.mxu0 0.0
    %1097 = vmatprep.subr.mxu0 0.0
    %1098 = vmatpush1.msra.mxu0 0.0
    %1099 = vmatprep.subr.mxu0 0.0
    %1100 = vmatpush1.msra.mxu0 0.0
    %1101 = vmatprep.subr.mxu0 0.0
    %1102 = vmatpush1.msra.mxu0 0.0
    %1103 = vmatprep.subr.mxu0 0.0
    %1104 = vmatpush1.msra.mxu0 0.0
    %1105 = vmatprep.subr.mxu0 0.0
    %1106 = vmatpush1.msra.mxu0 0.0
    %1107 = vmatprep.subr.mxu0 0.0
    %1108 = vmatpush1.msra.mxu0 0.0
    %1109 = vmatprep.subr.mxu0 0.0
    %1110 = vmatpush1.msra.mxu0 0.0
    %1111 = vmatprep.subr.mxu0 0.0
    %1112 = vmatpush1.msra.mxu0 0.0
    %1113 = vmatprep.subr.mxu0 0.0
    %1114 = vmatpush1.msra.mxu0 0.0
    %1115 = vmatprep.subr.mxu0 0.0
    %1116 = vmatpush1.msra.mxu0 0.0
    %1117 = vmatprep.subr.mxu0 0.0
    %1118 = vmatpush1.msra.mxu0 0.0
    %1119 = vmatprep.subr.mxu0 0.0
    %1120 = vmatpush1.msra.mxu0 0.0
    %1121 = vmatprep.subr.mxu0 0.0
    %1122 = vmatpush1.msra.mxu0 0.0
    %1123 = vmatprep.subr.mxu0 0.0
    %1124 = vmatpush1.msra.mxu0 0.0
    %1125 = vmatprep.subr.mxu0 0.0
    %1126 = vmatpush1.msra.mxu0 0.0
    %1127 = vmatprep.subr.mxu0 0.0
    %1128 = vmatpush1.msra.mxu0 0.0
    %1129 = vmatprep.subr.mxu0 0.0
    %1130 = vmatpush1.msra.mxu0 0.0
    %1131 = vmatprep.subr.mxu0 0.0
    %1132 = vmatpush1.msra.mxu0 0.0
    %1133 = vmatprep.subr.mxu0 0.0
    %1134 = vmatpush1.msra.mxu0 0.0
    %1135 = vmatprep.subr.mxu0 0.0
    %1136 = vmatpush1.msra.mxu0 0.0
    %1137 = vmatprep.subr.mxu0 0.0
    %1138 = vmatpush1.msra.mxu0 0.0
    %1139 = vmatprep.subr.mxu0 0.0
    %1140 = vmatpush1.msra.mxu0 0.0
    %1141 = vmatprep.mubr.f32.mxu0 0.0
    %1142 = vmatmul.mubr.f32.gmra.mrb[0].mxu0 %v282
    %v1143 = vpop.f32.mrb[0].mxu0
    %v1144 = vadd.f32 %v1075, %v1143
    %v1145 = vpop.f32.mrb[0].mxu0
    %1146 = vmatprep.mubr.f32.mxu0 0.0
    %1147 = vmatmul.mubr.f32.gmra.mrb[0].mxu0 %v285
    %v1148 = vpop.f32.mrb[0].mxu0
    %v1149 = vadd.f32 %v1075, %v1148
    %v1150 = vpop.f32.mrb[0].mxu0
    %1151 = vmatprep.mubr.f32.mxu0 0.0
    %1152 = vmatmul.mubr.f32.gmra.mrb[0].mxu0 %v288
    %v1153 = vpop.f32.mrb[0].mxu0
    %v1154 = vadd.f32 %v1075, %v1153
    %v1155 = vpop.f32.mrb[0].mxu0
    %1156 = vmatprep.mubr.f32.mxu0 0.0
    %1157 = vmatmul.mubr.f32.gmra.mrb[0].mxu0 %v291
    %v1158 = vpop.f32.mrb[0].mxu0
    %v1159 = vadd.f32 %v1075, %v1158
    %v1160 = vpop.f32.mrb[0].mxu0
    %1161 = vdwg.mxu0
    %s1162 = scalar_lea.vmem %s3, 288
    %v1163 = vld [vmem:[%s1162] sm:$0xff]
    %v1164 = vld [vmem:[%s1162 + $0x8] sm:$0xff]
    %v1165 = vld [vmem:[%s1162 + $0x10] sm:$0xff]
    %v1166 = vld [vmem:[%s1162 + $0x18] sm:$0xff]
    %s1167 = scalar_lea.vmem %s4, 9
    %v1168 = vld [vmem:[%s1167] sm:$0x1]
    %v1170 = vlaneseq
    %v1171 = vshrl.u32 %v1170, 7
    %v1172 = vsub.s32 0, %v1171
    %v1173 = vrot.slane %v1168, %v1172
    %1175 = vmatprep.subr.mxu0 0.0
    %1176 = vmatpush1.msra.mxu0 %v1163
    %1177 = vmatprep.subr.mxu0 0.0
    %1178 = vmatpush1.msra.mxu0 %v1164
    %1179 = vmatprep.subr.mxu0 0.0
    %1180 = vmatpush1.msra.mxu0 %v1165
    %1181 = vmatprep.subr.mxu0 0.0
    %1182 = vmatpush1.msra.mxu0 %v1166
    %1183 = vmatprep.subr.mxu0 0.0
    %1184 = vmatpush1.msra.mxu0 0.0
    %1185 = vmatprep.subr.mxu0 0.0
    %1186 = vmatpush1.msra.mxu0 0.0
    %1187 = vmatprep.subr.mxu0 0.0
    %1188 = vmatpush1.msra.mxu0 0.0
    %1189 = vmatprep.subr.mxu0 0.0
    %1190 = vmatpush1.msra.mxu0 0.0
    %1191 = vmatprep.subr.mxu0 0.0
    %1192 = vmatpush1.msra.mxu0 0.0
    %1193 = vmatprep.subr.mxu0 0.0
    %1194 = vmatpush1.msra.mxu0 0.0
    %1195 = vmatprep.subr.mxu0 0.0
    %1196 = vmatpush1.msra.mxu0 0.0
    %1197 = vmatprep.subr.mxu0 0.0
    %1198 = vmatpush1.msra.mxu0 0.0
    %1199 = vmatprep.subr.mxu0 0.0
    %1200 = vmatpush1.msra.mxu0 0.0
    %1201 = vmatprep.subr.mxu0 0.0
    %1202 = vmatpush1.msra.mxu0 0.0
    %1203 = vmatprep.subr.mxu0 0.0
    %1204 = vmatpush1.msra.mxu0 0.0
    %1205 = vmatprep.subr.mxu0 0.0
    %1206 = vmatpush1.msra.mxu0 0.0
    %1207 = vmatprep.subr.mxu0 0.0
    %1208 = vmatpush1.msra.mxu0 0.0
    %1209 = vmatprep.subr.mxu0 0.0
    %1210 = vmatpush1.msra.mxu0 0.0
    %1211 = vmatprep.subr.mxu0 0.0
    %1212 = vmatpush1.msra.mxu0 0.0
    %1213 = vmatprep.subr.mxu0 0.0
    %1214 = vmatpush1.msra.mxu0 0.0
    %1215 = vmatprep.subr.mxu0 0.0
    %1216 = vmatpush1.msra.mxu0 0.0
    %1217 = vmatprep.subr.mxu0 0.0
    %1218 = vmatpush1.msra.mxu0 0.0
    %1219 = vmatprep.subr.mxu0 0.0
    %1220 = vmatpush1.msra.mxu0 0.0
    %1221 = vmatprep.subr.mxu0 0.0
    %1222 = vmatpush1.msra.mxu0 0.0
    %1223 = vmatprep.subr.mxu0 0.0
    %1224 = vmatpush1.msra.mxu0 0.0
    %1225 = vmatprep.subr.mxu0 0.0
    %1226 = vmatpush1.msra.mxu0 0.0
    %1227 = vmatprep.subr.mxu0 0.0
    %1228 = vmatpush1.msra.mxu0 0.0
    %1229 = vmatprep.subr.mxu0 0.0
    %1230 = vmatpush1.msra.mxu0 0.0
    %1231 = vmatprep.subr.mxu0 0.0
    %1232 = vmatpush1.msra.mxu0 0.0
    %1233 = vmatprep.subr.mxu0 0.0
    %1234 = vmatpush1.msra.mxu0 0.0
    %1235 = vmatprep.subr.mxu0 0.0
    %1236 = vmatpush1.msra.mxu0 0.0
    %1237 = vmatprep.subr.mxu0 0.0
    %1238 = vmatpush1.msra.mxu0 0.0
    %1239 = vmatprep.mubr.f32.mxu0 0.0
    %1240 = vmatmul.mubr.f32.gmra.mrb[0].mxu0 %v282
    %v1241 = vpop.f32.mrb[0].mxu0
    %v1242 = vadd.f32 %v1173, %v1241
    %v1243 = vpop.f32.mrb[0].mxu0
    %1244 = vmatprep.mubr.f32.mxu0 0.0
    %1245 = vmatmul.mubr.f32.gmra.mrb[0].mxu0 %v285
    %v1246 = vpop.f32.mrb[0].mxu0
    %v1247 = vadd.f32 %v1173, %v1246
    %v1248 = vpop.f32.mrb[0].mxu0
    %1249 = vmatprep.mubr.f32.mxu0 0.0
    %1250 = vmatmul.mubr.f32.gmra.mrb[0].mxu0 %v288
    %v1251 = vpop.f32.mrb[0].mxu0
    %v1252 = vadd.f32 %v1173, %v1251
    %v1253 = vpop.f32.mrb[0].mxu0
    %1254 = vmatprep.mubr.f32.mxu0 0.0
    %1255 = vmatmul.mubr.f32.gmra.mrb[0].mxu0 %v291
    %v1256 = vpop.f32.mrb[0].mxu0
    %v1257 = vadd.f32 %v1173, %v1256
    %v1258 = vpop.f32.mrb[0].mxu0
    %1259 = vdwg.mxu0
    %s1260 = scalar_lea.vmem %s3, 320
    %v1261 = vld [vmem:[%s1260] sm:$0xff]
    %v1262 = vld [vmem:[%s1260 + $0x8] sm:$0xff]
    %v1263 = vld [vmem:[%s1260 + $0x10] sm:$0xff]
    %v1264 = vld [vmem:[%s1260 + $0x18] sm:$0xff]
    %s1265 = scalar_lea.vmem %s4, 10
    %v1266 = vld [vmem:[%s1265] sm:$0x1]
    %v1268 = vlaneseq
    %v1269 = vshrl.u32 %v1268, 7
    %v1270 = vsub.s32 0, %v1269
    %v1271 = vrot.slane %v1266, %v1270
    %1273 = vmatprep.subr.mxu0 0.0
    %1274 = vmatpush1.msra.mxu0 %v1261
    %1275 = vmatprep.subr.mxu0 0.0
    %1276 = vmatpush1.msra.mxu0 %v1262
    %1277 = vmatprep.subr.mxu0 0.0
    %1278 = vmatpush1.msra.mxu0 %v1263
    %1279 = vmatprep.subr.mxu0 0.0
    %1280 = vmatpush1.msra.mxu0 %v1264
    %1281 = vmatprep.subr.mxu0 0.0
    %1282 = vmatpush1.msra.mxu0 0.0
    %1283 = vmatprep.subr.mxu0 0.0
    %1284 = vmatpush1.msra.mxu0 0.0
    %1285 = vmatprep.subr.mxu0 0.0
    %1286 = vmatpush1.msra.mxu0 0.0
    %1287 = vmatprep.subr.mxu0 0.0
    %1288 = vmatpush1.msra.mxu0 0.0
    %1289 = vmatprep.subr.mxu0 0.0
    %1290 = vmatpush1.msra.mxu0 0.0
    %1291 = vmatprep.subr.mxu0 0.0
    %1292 = vmatpush1.msra.mxu0 0.0
    %1293 = vmatprep.subr.mxu0 0.0
    %1294 = vmatpush1.msra.mxu0 0.0
    %1295 = vmatprep.subr.mxu0 0.0
    %1296 = vmatpush1.msra.mxu0 0.0
    %1297 = vmatprep.subr.mxu0 0.0
    %1298 = vmatpush1.msra.mxu0 0.0
    %1299 = vmatprep.subr.mxu0 0.0
    %1300 = vmatpush1.msra.mxu0 0.0
    %1301 = vmatprep.subr.mxu0 0.0
    %1302 = vmatpush1.msra.mxu0 0.0
    %1303 = vmatprep.subr.mxu0 0.0
    %1304 = vmatpush1.msra.mxu0 0.0
    %1305 = vmatprep.subr.mxu0 0.0
    %1306 = vmatpush1.msra.mxu0 0.0
    %1307 = vmatprep.subr.mxu0 0.0
    %1308 = vmatpush1.msra.mxu0 0.0
    %1309 = vmatprep.subr.mxu0 0.0
    %1310 = vmatpush1.msra.mxu0 0.0
    %1311 = vmatprep.subr.mxu0 0.0
    %1312 = vmatpush1.msra.mxu0 0.0
    %1313 = vmatprep.subr.mxu0 0.0
    %1314 = vmatpush1.msra.mxu0 0.0
    %1315 = vmatprep.subr.mxu0 0.0
    %1316 = vmatpush1.msra.mxu0 0.0
    %1317 = vmatprep.subr.mxu0 0.0
    %1318 = vmatpush1.msra.mxu0 0.0
    %1319 = vmatprep.subr.mxu0 0.0
    %1320 = vmatpush1.msra.mxu0 0.0
    %1321 = vmatprep.subr.mxu0 0.0
    %1322 = vmatpush1.msra.mxu0 0.0
    %1323 = vmatprep.subr.mxu0 0.0
    %1324 = vmatpush1.msra.mxu0 0.0
    %1325 = vmatprep.subr.mxu0 0.0
    %1326 = vmatpush1.msra.mxu0 0.0
    %1327 = vmatprep.subr.mxu0 0.0
    %1328 = vmatpush1.msra.mxu0 0.0
    %1329 = vmatprep.subr.mxu0 0.0
    %1330 = vmatpush1.msra.mxu0 0.0
    %1331 = vmatprep.subr.mxu0 0.0
    %1332 = vmatpush1.msra.mxu0 0.0
    %1333 = vmatprep.subr.mxu0 0.0
    %1334 = vmatpush1.msra.mxu0 0.0
    %1335 = vmatprep.subr.mxu0 0.0
    %1336 = vmatpush1.msra.mxu0 0.0
    %1337 = vmatprep.mubr.f32.mxu0 0.0
    %1338 = vmatmul.mubr.f32.gmra.mrb[0].mxu0 %v282
    %v1339 = vpop.f32.mrb[0].mxu0
    %v1340 = vadd.f32 %v1271, %v1339
    %v1341 = vpop.f32.mrb[0].mxu0
    %1342 = vmatprep.mubr.f32.mxu0 0.0
    %1343 = vmatmul.mubr.f32.gmra.mrb[0].mxu0 %v285
    %v1344 = vpop.f32.mrb[0].mxu0
    %v1345 = vadd.f32 %v1271, %v1344
    %v1346 = vpop.f32.mrb[0].mxu0
    %1347 = vmatprep.mubr.f32.mxu0 0.0
    %1348 = vmatmul.mubr.f32.gmra.mrb[0].mxu0 %v288
    %v1349 = vpop.f32.mrb[0].mxu0
    %v1350 = vadd.f32 %v1271, %v1349
    %v1351 = vpop.f32.mrb[0].mxu0
    %1352 = vmatprep.mubr.f32.mxu0 0.0
    %1353 = vmatmul.mubr.f32.gmra.mrb[0].mxu0 %v291
    %v1354 = vpop.f32.mrb[0].mxu0
    %v1355 = vadd.f32 %v1271, %v1354
    %v1356 = vpop.f32.mrb[0].mxu0
    %1357 = vdwg.mxu0
    %s1358 = scalar_lea.vmem %s3, 352
    %v1359 = vld [vmem:[%s1358] sm:$0xff]
    %v1360 = vld [vmem:[%s1358 + $0x8] sm:$0xff]
    %v1361 = vld [vmem:[%s1358 + $0x10] sm:$0xff]
    %v1362 = vld [vmem:[%s1358 + $0x18] sm:$0xff]
    %s1363 = scalar_lea.vmem %s4, 11
    %v1364 = vld [vmem:[%s1363] sm:$0x1]
    %v1366 = vlaneseq
    %v1367 = vshrl.u32 %v1366, 7
    %v1368 = vsub.s32 0, %v1367
    %v1369 = vrot.slane %v1364, %v1368
    %1371 = vmatprep.subr.mxu0 0.0
    %1372 = vmatpush1.msra.mxu0 %v1359
    %1373 = vmatprep.subr.mxu0 0.0
    %1374 = vmatpush1.msra.mxu0 %v1360
    %1375 = vmatprep.subr.mxu0 0.0
    %1376 = vmatpush1.msra.mxu0 %v1361
    %1377 = vmatprep.subr.mxu0 0.0
    %1378 = vmatpush1.msra.mxu0 %v1362
    %1379 = vmatprep.subr.mxu0 0.0
    %1380 = vmatpush1.msra.mxu0 0.0
    %1381 = vmatprep.subr.mxu0 0.0
    %1382 = vmatpush1.msra.mxu0 0.0
    %1383 = vmatprep.subr.mxu0 0.0
    %1384 = vmatpush1.msra.mxu0 0.0
    %1385 = vmatprep.subr.mxu0 0.0
    %1386 = vmatpush1.msra.mxu0 0.0
    %1387 = vmatprep.subr.mxu0 0.0
    %1388 = vmatpush1.msra.mxu0 0.0
    %1389 = vmatprep.subr.mxu0 0.0
    %1390 = vmatpush1.msra.mxu0 0.0
    %1391 = vmatprep.subr.mxu0 0.0
    %1392 = vmatpush1.msra.mxu0 0.0
    %1393 = vmatprep.subr.mxu0 0.0
    %1394 = vmatpush1.msra.mxu0 0.0
    %1395 = vmatprep.subr.mxu0 0.0
    %1396 = vmatpush1.msra.mxu0 0.0
    %1397 = vmatprep.subr.mxu0 0.0
    %1398 = vmatpush1.msra.mxu0 0.0
    %1399 = vmatprep.subr.mxu0 0.0
    %1400 = vmatpush1.msra.mxu0 0.0
    %1401 = vmatprep.subr.mxu0 0.0
    %1402 = vmatpush1.msra.mxu0 0.0
    %1403 = vmatprep.subr.mxu0 0.0
    %1404 = vmatpush1.msra.mxu0 0.0
    %1405 = vmatprep.subr.mxu0 0.0
    %1406 = vmatpush1.msra.mxu0 0.0
    %1407 = vmatprep.subr.mxu0 0.0
    %1408 = vmatpush1.msra.mxu0 0.0
    %1409 = vmatprep.subr.mxu0 0.0
    %1410 = vmatpush1.msra.mxu0 0.0
    %1411 = vmatprep.subr.mxu0 0.0
    %1412 = vmatpush1.msra.mxu0 0.0
    %1413 = vmatprep.subr.mxu0 0.0
    %1414 = vmatpush1.msra.mxu0 0.0
    %1415 = vmatprep.subr.mxu0 0.0
    %1416 = vmatpush1.msra.mxu0 0.0
    %1417 = vmatprep.subr.mxu0 0.0
    %1418 = vmatpush1.msra.mxu0 0.0
    %1419 = vmatprep.subr.mxu0 0.0
    %1420 = vmatpush1.msra.mxu0 0.0
    %1421 = vmatprep.subr.mxu0 0.0
    %1422 = vmatpush1.msra.mxu0 0.0
    %1423 = vmatprep.subr.mxu0 0.0
    %1424 = vmatpush1.msra.mxu0 0.0
    %1425 = vmatprep.subr.mxu0 0.0
    %1426 = vmatpush1.msra.mxu0 0.0
    %1427 = vmatprep.subr.mxu0 0.0
    %1428 = vmatpush1.msra.mxu0 0.0
    %1429 = vmatprep.subr.mxu0 0.0
    %1430 = vmatpush1.msra.mxu0 0.0
    %1431 = vmatprep.subr.mxu0 0.0
    %1432 = vmatpush1.msra.mxu0 0.0
    %1433 = vmatprep.subr.mxu0 0.0
    %1434 = vmatpush1.msra.mxu0 0.0
    %1435 = vmatprep.mubr.f32.mxu0 0.0
    %1436 = vmatmul.mubr.f32.gmra.mrb[0].mxu0 %v282
    %v1437 = vpop.f32.mrb[0].mxu0
    %v1438 = vadd.f32 %v1369, %v1437
    %v1439 = vpop.f32.mrb[0].mxu0
    %1440 = vmatprep.mubr.f32.mxu0 0.0
    %1441 = vmatmul.mubr.f32.gmra.mrb[0].mxu0 %v285
    %v1442 = vpop.f32.mrb[0].mxu0
    %v1443 = vadd.f32 %v1369, %v1442
    %v1444 = vpop.f32.mrb[0].mxu0
    %1445 = vmatprep.mubr.f32.mxu0 0.0
    %1446 = vmatmul.mubr.f32.gmra.mrb[0].mxu0 %v288
    %v1447 = vpop.f32.mrb[0].mxu0
    %v1448 = vadd.f32 %v1369, %v1447
    %v1449 = vpop.f32.mrb[0].mxu0
    %1450 = vmatprep.mubr.f32.mxu0 0.0
    %1451 = vmatmul.mubr.f32.gmra.mrb[0].mxu0 %v291
    %v1452 = vpop.f32.mrb[0].mxu0
    %v1453 = vadd.f32 %v1369, %v1452
    %v1454 = vpop.f32.mrb[0].mxu0
    %1455 = vdwg.mxu0
    %vm1456 = vcmask 64512
    %v1458 = vsel %vm1456, %v360, 0
    %v1461 = vsel %vm1456, %v365, 0
    %v1464 = vsel %vm1456, %v752, 0
    %v1467 = vsel %vm1456, %v757, 0
    %1469 = vmatprep.subr.mxu0 0.0
    %1470 = vmatpush1.xpose.msra.mxu0 %v1464
    %1471 = vmatprep.subr.mxu0 0.0
    %1472 = vmatpush1.xpose.msra.mxu0 %v1467
    %1473 = vmatprep.subr.mxu0 0.0
    %1474 = vmatpush1.xpose.msra.mxu0 0.0
    %1475 = vmatprep.subr.mxu0 0.0
    %1476 = vmatpush1.xpose.msra.mxu0 0.0
    %1477 = vmatprep.subr.mxu0 0.0
    %1478 = vmatpush1.xpose.msra.mxu0 0.0
    %1479 = vmatprep.subr.mxu0 0.0
    %1480 = vmatpush1.xpose.msra.mxu0 0.0
    %1481 = vmatprep.subr.mxu0 0.0
    %1482 = vmatpush1.xpose.msra.mxu0 0.0
    %1483 = vmatprep.subr.mxu0 0.0
    %1484 = vmatpush1.xpose.msra.mxu0 0.0
    %1485 = vmatprep.subr.mxu0 0.0
    %1486 = vmatpush1.xpose.msra.mxu0 0.0
    %1487 = vmatprep.subr.mxu0 0.0
    %1488 = vmatpush1.xpose.msra.mxu0 0.0
    %1489 = vmatprep.subr.mxu0 0.0
    %1490 = vmatpush1.xpose.msra.mxu0 0.0
    %1491 = vmatprep.subr.mxu0 0.0
    %1492 = vmatpush1.xpose.msra.mxu0 0.0
    %1493 = vmatprep.subr.mxu0 0.0
    %1494 = vmatpush1.xpose.msra.mxu0 0.0
    %1495 = vmatprep.subr.mxu0 0.0
    %1496 = vmatpush1.xpose.msra.mxu0 0.0
    %1497 = vmatprep.subr.mxu0 0.0
    %1498 = vmatpush1.xpose.msra.mxu0 0.0
    %1499 = vmatprep.subr.mxu0 0.0
    %1500 = vmatpush1.xpose.msra.mxu0 0.0
    %1501 = vmatprep.subr.mxu0 0.0
    %1502 = vmatpush1.xpose.msra.mxu0 0.0
    %1503 = vmatprep.subr.mxu0 0.0
    %1504 = vmatpush1.xpose.msra.mxu0 0.0
    %1505 = vmatprep.subr.mxu0 0.0
    %1506 = vmatpush1.xpose.msra.mxu0 0.0
    %1507 = vmatprep.subr.mxu0 0.0
    %1508 = vmatpush1.xpose.msra.mxu0 0.0
    %1509 = vmatprep.subr.mxu0 0.0
    %1510 = vmatpush1.xpose.msra.mxu0 0.0
    %1511 = vmatprep.subr.mxu0 0.0
    %1512 = vmatpush1.xpose.msra.mxu0 0.0
    %1513 = vmatprep.subr.mxu0 0.0
    %1514 = vmatpush1.xpose.msra.mxu0 0.0
    %1515 = vmatprep.subr.mxu0 0.0
    %1516 = vmatpush1.xpose.msra.mxu0 0.0
    %1517 = vmatprep.subr.mxu0 0.0
    %1518 = vmatpush1.xpose.msra.mxu0 0.0
    %1519 = vmatprep.subr.mxu0 0.0
    %1520 = vmatpush1.xpose.msra.mxu0 0.0
    %1521 = vmatprep.subr.mxu0 0.0
    %1522 = vmatpush1.xpose.msra.mxu0 0.0
    %1523 = vmatprep.subr.mxu0 0.0
    %1524 = vmatpush1.xpose.msra.mxu0 0.0
    %1525 = vmatprep.subr.mxu0 0.0
    %1526 = vmatpush1.xpose.msra.mxu0 0.0
    %1527 = vmatprep.subr.mxu0 0.0
    %1528 = vmatpush1.xpose.msra.mxu0 0.0
    %1529 = vmatprep.subr.mxu0 0.0
    %1530 = vmatpush1.xpose.msra.mxu0 0.0
    %1531 = vmatprep.subr.mxu0 0.0
    %1532 = vmatpush1.xpose.msra.mxu0 0.0
    %1533 = vmatprep.mubr.f32.mxu0 0.0
    %1534 = vmatmul.mubr.f32.gmra.mrb[0].mxu0 %v1458
    %v1535 = vpop.f32.mrb[0].mxu0
    %v1536 = vadd.f32 0.0, %v1535
    %v1537 = vpop.f32.mrb[0].mxu0
    %1538 = vmatprep.mubr.f32.mxu0 0.0
    %1539 = vmatmul.mubr.f32.gmra.mrb[0].mxu0 %v1461
    %v1540 = vpop.f32.mrb[0].mxu0
    %v1541 = vadd.f32 0.0, %v1540
    %v1542 = vpop.f32.mrb[0].mxu0
    %1543 = vdwg.mxu0
    %v1545 = vsel %vm1456, %v370, 0
    %v1548 = vsel %vm1456, %v375, 0
    %v1551 = vsel %vm1456, %v762, 0
    %v1554 = vsel %vm1456, %v767, 0
    %1556 = vmatprep.subr.mxu0 0.0
    %1557 = vmatpush1.xpose.msra.mxu0 %v1551
    %1558 = vmatprep.subr.mxu0 0.0
    %1559 = vmatpush1.xpose.msra.mxu0 %v1554
    %1560 = vmatprep.subr.mxu0 0.0
    %1561 = vmatpush1.xpose.msra.mxu0 0.0
    %1562 = vmatprep.subr.mxu0 0.0
    %1563 = vmatpush1.xpose.msra.mxu0 0.0
    %1564 = vmatprep.subr.mxu0 0.0
    %1565 = vmatpush1.xpose.msra.mxu0 0.0
    %1566 = vmatprep.subr.mxu0 0.0
    %1567 = vmatpush1.xpose.msra.mxu0 0.0
    %1568 = vmatprep.subr.mxu0 0.0
    %1569 = vmatpush1.xpose.msra.mxu0 0.0
    %1570 = vmatprep.subr.mxu0 0.0
    %1571 = vmatpush1.xpose.msra.mxu0 0.0
    %1572 = vmatprep.subr.mxu0 0.0
    %1573 = vmatpush1.xpose.msra.mxu0 0.0
    %1574 = vmatprep.subr.mxu0 0.0
    %1575 = vmatpush1.xpose.msra.mxu0 0.0
    %1576 = vmatprep.subr.mxu0 0.0
    %1577 = vmatpush1.xpose.msra.mxu0 0.0
    %1578 = vmatprep.subr.mxu0 0.0
    %1579 = vmatpush1.xpose.msra.mxu0 0.0
    %1580 = vmatprep.subr.mxu0 0.0
    %1581 = vmatpush1.xpose.msra.mxu0 0.0
    %1582 = vmatprep.subr.mxu0 0.0
    %1583 = vmatpush1.xpose.msra.mxu0 0.0
    %1584 = vmatprep.subr.mxu0 0.0
    %1585 = vmatpush1.xpose.msra.mxu0 0.0
    %1586 = vmatprep.subr.mxu0 0.0
    %1587 = vmatpush1.xpose.msra.mxu0 0.0
    %1588 = vmatprep.subr.mxu0 0.0
    %1589 = vmatpush1.xpose.msra.mxu0 0.0
    %1590 = vmatprep.subr.mxu0 0.0
    %1591 = vmatpush1.xpose.msra.mxu0 0.0
    %1592 = vmatprep.subr.mxu0 0.0
    %1593 = vmatpush1.xpose.msra.mxu0 0.0
    %1594 = vmatprep.subr.mxu0 0.0
    %1595 = vmatpush1.xpose.msra.mxu0 0.0
    %1596 = vmatprep.subr.mxu0 0.0
    %1597 = vmatpush1.xpose.msra.mxu0 0.0
    %1598 = vmatprep.subr.mxu0 0.0
    %1599 = vmatpush1.xpose.msra.mxu0 0.0
    %1600 = vmatprep.subr.mxu0 0.0
    %1601 = vmatpush1.xpose.msra.mxu0 0.0
    %1602 = vmatprep.subr.mxu0 0.0
    %1603 = vmatpush1.xpose.msra.mxu0 0.0
    %1604 = vmatprep.subr.mxu0 0.0
    %1605 = vmatpush1.xpose.msra.mxu0 0.0
    %1606 = vmatprep.subr.mxu0 0.0
    %1607 = vmatpush1.xpose.msra.mxu0 0.0
    %1608 = vmatprep.subr.mxu0 0.0
    %1609 = vmatpush1.xpose.msra.mxu0 0.0
    %1610 = vmatprep.subr.mxu0 0.0
    %1611 = vmatpush1.xpose.msra.mxu0 0.0
    %1612 = vmatprep.subr.mxu0 0.0
    %1613 = vmatpush1.xpose.msra.mxu0 0.0
    %1614 = vmatprep.subr.mxu0 0.0
    %1615 = vmatpush1.xpose.msra.mxu0 0.0
    %1616 = vmatprep.subr.mxu0 0.0
    %1617 = vmatpush1.xpose.msra.mxu0 0.0
    %1618 = vmatprep.subr.mxu0 0.0
    %1619 = vmatpush1.xpose.msra.mxu0 0.0
    %1620 = vmatprep.mubr.f32.mxu0 0.0
    %1621 = vmatmul.mubr.f32.gmra.mrb[0].mxu0 %v1545
    %v1622 = vpop.f32.mrb[0].mxu0
    %v1623 = vadd.f32 0.0, %v1622
    %v1624 = vpop.f32.mrb[0].mxu0
    %1625 = vmatprep.mubr.f32.mxu0 0.0
    %1626 = vmatmul.mubr.f32.gmra.mrb[0].mxu0 %v1548
    %v1627 = vpop.f32.mrb[0].mxu0
    %v1628 = vadd.f32 0.0, %v1627
    %v1629 = vpop.f32.mrb[0].mxu0
    %1630 = vdwg.mxu0
    %v1632 = vsel %vm1456, %v458, 0
    %v1635 = vsel %vm1456, %v463, 0
    %v1638 = vsel %vm1456, %v850, 0
    %v1641 = vsel %vm1456, %v855, 0
    %1643 = vmatprep.subr.mxu0 0.0
    %1644 = vmatpush1.xpose.msra.mxu0 %v1638
    %1645 = vmatprep.subr.mxu0 0.0
    %1646 = vmatpush1.xpose.msra.mxu0 %v1641
    %1647 = vmatprep.subr.mxu0 0.0
    %1648 = vmatpush1.xpose.msra.mxu0 0.0
    %1649 = vmatprep.subr.mxu0 0.0
    %1650 = vmatpush1.xpose.msra.mxu0 0.0
    %1651 = vmatprep.subr.mxu0 0.0
    %1652 = vmatpush1.xpose.msra.mxu0 0.0
    %1653 = vmatprep.subr.mxu0 0.0
    %1654 = vmatpush1.xpose.msra.mxu0 0.0
    %1655 = vmatprep.subr.mxu0 0.0
    %1656 = vmatpush1.xpose.msra.mxu0 0.0
    %1657 = vmatprep.subr.mxu0 0.0
    %1658 = vmatpush1.xpose.msra.mxu0 0.0
    %1659 = vmatprep.subr.mxu0 0.0
    %1660 = vmatpush1.xpose.msra.mxu0 0.0
    %1661 = vmatprep.subr.mxu0 0.0
    %1662 = vmatpush1.xpose.msra.mxu0 0.0
    %1663 = vmatprep.subr.mxu0 0.0
    %1664 = vmatpush1.xpose.msra.mxu0 0.0
    %1665 = vmatprep.subr.mxu0 0.0
    %1666 = vmatpush1.xpose.msra.mxu0 0.0
    %1667 = vmatprep.subr.mxu0 0.0
    %1668 = vmatpush1.xpose.msra.mxu0 0.0
    %1669 = vmatprep.subr.mxu0 0.0
    %1670 = vmatpush1.xpose.msra.mxu0 0.0
    %1671 = vmatprep.subr.mxu0 0.0
    %1672 = vmatpush1.xpose.msra.mxu0 0.0
    %1673 = vmatprep.subr.mxu0 0.0
    %1674 = vmatpush1.xpose.msra.mxu0 0.0
    %1675 = vmatprep.subr.mxu0 0.0
    %1676 = vmatpush1.xpose.msra.mxu0 0.0
    %1677 = vmatprep.subr.mxu0 0.0
    %1678 = vmatpush1.xpose.msra.mxu0 0.0
    %1679 = vmatprep.subr.mxu0 0.0
    %1680 = vmatpush1.xpose.msra.mxu0 0.0
    %1681 = vmatprep.subr.mxu0 0.0
    %1682 = vmatpush1.xpose.msra.mxu0 0.0
    %1683 = vmatprep.subr.mxu0 0.0
    %1684 = vmatpush1.xpose.msra.mxu0 0.0
    %1685 = vmatprep.subr.mxu0 0.0
    %1686 = vmatpush1.xpose.msra.mxu0 0.0
    %1687 = vmatprep.subr.mxu0 0.0
    %1688 = vmatpush1.xpose.msra.mxu0 0.0
    %1689 = vmatprep.subr.mxu0 0.0
    %1690 = vmatpush1.xpose.msra.mxu0 0.0
    %1691 = vmatprep.subr.mxu0 0.0
    %1692 = vmatpush1.xpose.msra.mxu0 0.0
    %1693 = vmatprep.subr.mxu0 0.0
    %1694 = vmatpush1.xpose.msra.mxu0 0.0
    %1695 = vmatprep.subr.mxu0 0.0
    %1696 = vmatpush1.xpose.msra.mxu0 0.0
    %1697 = vmatprep.subr.mxu0 0.0
    %1698 = vmatpush1.xpose.msra.mxu0 0.0
    %1699 = vmatprep.subr.mxu0 0.0
    %1700 = vmatpush1.xpose.msra.mxu0 0.0
    %1701 = vmatprep.subr.mxu0 0.0
    %1702 = vmatpush1.xpose.msra.mxu0 0.0
    %1703 = vmatprep.subr.mxu0 0.0
    %1704 = vmatpush1.xpose.msra.mxu0 0.0
    %1705 = vmatprep.subr.mxu0 0.0
    %1706 = vmatpush1.xpose.msra.mxu0 0.0
    %1707 = vmatprep.mubr.f32.mxu0 0.0
    %1708 = vmatmul.mubr.f32.gmra.mrb[0].mxu0 %v1632
    %v1709 = vpop.f32.mrb[0].mxu0
    %v1710 = vadd.f32 0.0, %v1709
    %v1711 = vpop.f32.mrb[0].mxu0
    %1712 = vmatprep.mubr.f32.mxu0 0.0
    %1713 = vmatmul.mubr.f32.gmra.mrb[0].mxu0 %v1635
    %v1714 = vpop.f32.mrb[0].mxu0
    %v1715 = vadd.f32 0.0, %v1714
    %v1716 = vpop.f32.mrb[0].mxu0
    %1717 = vdwg.mxu0
    %v1719 = vsel %vm1456, %v468, 0
    %v1722 = vsel %vm1456, %v473, 0
    %v1725 = vsel %vm1456, %v860, 0
    %v1728 = vsel %vm1456, %v865, 0
    %1730 = vmatprep.subr.mxu0 0.0
    %1731 = vmatpush1.xpose.msra.mxu0 %v1725
    %1732 = vmatprep.subr.mxu0 0.0
    %1733 = vmatpush1.xpose.msra.mxu0 %v1728
    %1734 = vmatprep.subr.mxu0 0.0
    %1735 = vmatpush1.xpose.msra.mxu0 0.0
    %1736 = vmatprep.subr.mxu0 0.0
    %1737 = vmatpush1.xpose.msra.mxu0 0.0
    %1738 = vmatprep.subr.mxu0 0.0
    %1739 = vmatpush1.xpose.msra.mxu0 0.0
    %1740 = vmatprep.subr.mxu0 0.0
    %1741 = vmatpush1.xpose.msra.mxu0 0.0
    %1742 = vmatprep.subr.mxu0 0.0
    %1743 = vmatpush1.xpose.msra.mxu0 0.0
    %1744 = vmatprep.subr.mxu0 0.0
    %1745 = vmatpush1.xpose.msra.mxu0 0.0
    %1746 = vmatprep.subr.mxu0 0.0
    %1747 = vmatpush1.xpose.msra.mxu0 0.0
    %1748 = vmatprep.subr.mxu0 0.0
    %1749 = vmatpush1.xpose.msra.mxu0 0.0
    %1750 = vmatprep.subr.mxu0 0.0
    %1751 = vmatpush1.xpose.msra.mxu0 0.0
    %1752 = vmatprep.subr.mxu0 0.0
    %1753 = vmatpush1.xpose.msra.mxu0 0.0
    %1754 = vmatprep.subr.mxu0 0.0
    %1755 = vmatpush1.xpose.msra.mxu0 0.0
    %1756 = vmatprep.subr.mxu0 0.0
    %1757 = vmatpush1.xpose.msra.mxu0 0.0
    %1758 = vmatprep.subr.mxu0 0.0
    %1759 = vmatpush1.xpose.msra.mxu0 0.0
    %1760 = vmatprep.subr.mxu0 0.0
    %1761 = vmatpush1.xpose.msra.mxu0 0.0
    %1762 = vmatprep.subr.mxu0 0.0
    %1763 = vmatpush1.xpose.msra.mxu0 0.0
    %1764 = vmatprep.subr.mxu0 0.0
    %1765 = vmatpush1.xpose.msra.mxu0 0.0
    %1766 = vmatprep.subr.mxu0 0.0
    %1767 = vmatpush1.xpose.msra.mxu0 0.0
    %1768 = vmatprep.subr.mxu0 0.0
    %1769 = vmatpush1.xpose.msra.mxu0 0.0
    %1770 = vmatprep.subr.mxu0 0.0
    %1771 = vmatpush1.xpose.msra.mxu0 0.0
    %1772 = vmatprep.subr.mxu0 0.0
    %1773 = vmatpush1.xpose.msra.mxu0 0.0
    %1774 = vmatprep.subr.mxu0 0.0
    %1775 = vmatpush1.xpose.msra.mxu0 0.0
    %1776 = vmatprep.subr.mxu0 0.0
    %1777 = vmatpush1.xpose.msra.mxu0 0.0
    %1778 = vmatprep.subr.mxu0 0.0
    %1779 = vmatpush1.xpose.msra.mxu0 0.0
    %1780 = vmatprep.subr.mxu0 0.0
    %1781 = vmatpush1.xpose.msra.mxu0 0.0
    %1782 = vmatprep.subr.mxu0 0.0
    %1783 = vmatpush1.xpose.msra.mxu0 0.0
    %1784 = vmatprep.subr.mxu0 0.0
    %1785 = vmatpush1.xpose.msra.mxu0 0.0
    %1786 = vmatprep.subr.mxu0 0.0
    %1787 = vmatpush1.xpose.msra.mxu0 0.0
    %1788 = vmatprep.subr.mxu0 0.0
    %1789 = vmatpush1.xpose.msra.mxu0 0.0
    %1790 = vmatprep.subr.mxu0 0.0
    %1791 = vmatpush1.xpose.msra.mxu0 0.0
    %1792 = vmatprep.subr.mxu0 0.0
    %1793 = vmatpush1.xpose.msra.mxu0 0.0
    %1794 = vmatprep.mubr.f32.mxu0 0.0
    %1795 = vmatmul.mubr.f32.gmra.mrb[0].mxu0 %v1719
    %v1796 = vpop.f32.mrb[0].mxu0
    %v1797 = vadd.f32 0.0, %v1796
    %v1798 = vpop.f32.mrb[0].mxu0
    %1799 = vmatprep.mubr.f32.mxu0 0.0
    %1800 = vmatmul.mubr.f32.gmra.mrb[0].mxu0 %v1722
    %v1801 = vpop.f32.mrb[0].mxu0
    %v1802 = vadd.f32 0.0, %v1801
    %v1803 = vpop.f32.mrb[0].mxu0
    %1804 = vdwg.mxu0
    %v1806 = vsel %vm1456, %v556, 0
    %v1809 = vsel %vm1456, %v561, 0
    %v1812 = vsel %vm1456, %v948, 0
    %v1815 = vsel %vm1456, %v953, 0
    %1817 = vmatprep.subr.mxu0 0.0
    %1818 = vmatpush1.xpose.msra.mxu0 %v1812
    %1819 = vmatprep.subr.mxu0 0.0
    %1820 = vmatpush1.xpose.msra.mxu0 %v1815
    %1821 = vmatprep.subr.mxu0 0.0
    %1822 = vmatpush1.xpose.msra.mxu0 0.0
    %1823 = vmatprep.subr.mxu0 0.0
    %1824 = vmatpush1.xpose.msra.mxu0 0.0
    %1825 = vmatprep.subr.mxu0 0.0
    %1826 = vmatpush1.xpose.msra.mxu0 0.0
    %1827 = vmatprep.subr.mxu0 0.0
    %1828 = vmatpush1.xpose.msra.mxu0 0.0
    %1829 = vmatprep.subr.mxu0 0.0
    %1830 = vmatpush1.xpose.msra.mxu0 0.0
    %1831 = vmatprep.subr.mxu0 0.0
    %1832 = vmatpush1.xpose.msra.mxu0 0.0
    %1833 = vmatprep.subr.mxu0 0.0
    %1834 = vmatpush1.xpose.msra.mxu0 0.0
    %1835 = vmatprep.subr.mxu0 0.0
    %1836 = vmatpush1.xpose.msra.mxu0 0.0
    %1837 = vmatprep.subr.mxu0 0.0
    %1838 = vmatpush1.xpose.msra.mxu0 0.0
    %1839 = vmatprep.subr.mxu0 0.0
    %1840 = vmatpush1.xpose.msra.mxu0 0.0
    %1841 = vmatprep.subr.mxu0 0.0
    %1842 = vmatpush1.xpose.msra.mxu0 0.0
    %1843 = vmatprep.subr.mxu0 0.0
    %1844 = vmatpush1.xpose.msra.mxu0 0.0
    %1845 = vmatprep.subr.mxu0 0.0
    %1846 = vmatpush1.xpose.msra.mxu0 0.0
    %1847 = vmatprep.subr.mxu0 0.0
    %1848 = vmatpush1.xpose.msra.mxu0 0.0
    %1849 = vmatprep.subr.mxu0 0.0
    %1850 = vmatpush1.xpose.msra.mxu0 0.0
    %1851 = vmatprep.subr.mxu0 0.0
    %1852 = vmatpush1.xpose.msra.mxu0 0.0
    %1853 = vmatprep.subr.mxu0 0.0
    %1854 = vmatpush1.xpose.msra.mxu0 0.0
    %1855 = vmatprep.subr.mxu0 0.0
    %1856 = vmatpush1.xpose.msra.mxu0 0.0
    %1857 = vmatprep.subr.mxu0 0.0
    %1858 = vmatpush1.xpose.msra.mxu0 0.0
    %1859 = vmatprep.subr.mxu0 0.0
    %1860 = vmatpush1.xpose.msra.mxu0 0.0
    %1861 = vmatprep.subr.mxu0 0.0
    %1862 = vmatpush1.xpose.msra.mxu0 0.0
    %1863 = vmatprep.subr.mxu0 0.0
    %1864 = vmatpush1.xpose.msra.mxu0 0.0
    %1865 = vmatprep.subr.mxu0 0.0
    %1866 = vmatpush1.xpose.msra.mxu0 0.0
    %1867 = vmatprep.subr.mxu0 0.0
    %1868 = vmatpush1.xpose.msra.mxu0 0.0
    %1869 = vmatprep.subr.mxu0 0.0
    %1870 = vmatpush1.xpose.msra.mxu0 0.0
    %1871 = vmatprep.subr.mxu0 0.0
    %1872 = vmatpush1.xpose.msra.mxu0 0.0
    %1873 = vmatprep.subr.mxu0 0.0
    %1874 = vmatpush1.xpose.msra.mxu0 0.0
    %1875 = vmatprep.subr.mxu0 0.0
    %1876 = vmatpush1.xpose.msra.mxu0 0.0
    %1877 = vmatprep.subr.mxu0 0.0
    %1878 = vmatpush1.xpose.msra.mxu0 0.0
    %1879 = vmatprep.subr.mxu0 0.0
    %1880 = vmatpush1.xpose.msra.mxu0 0.0
    %1881 = vmatprep.mubr.f32.mxu0 0.0
    %1882 = vmatmul.mubr.f32.gmra.mrb[0].mxu0 %v1806
    %v1883 = vpop.f32.mrb[0].mxu0
    %v1884 = vadd.f32 0.0, %v1883
    %v1885 = vpop.f32.mrb[0].mxu0
    %1886 = vmatprep.mubr.f32.mxu0 0.0
    %1887 = vmatmul.mubr.f32.gmra.mrb[0].mxu0 %v1809
    %v1888 = vpop.f32.mrb[0].mxu0
    %v1889 = vadd.f32 0.0, %v1888
    %v1890 = vpop.f32.mrb[0].mxu0
    %1891 = vdwg.mxu0
    %v1893 = vsel %vm1456, %v566, 0
    %v1896 = vsel %vm1456, %v571, 0
    %v1899 = vsel %vm1456, %v958, 0
    %v1902 = vsel %vm1456, %v963, 0
    %1904 = vmatprep.subr.mxu0 0.0
    %1905 = vmatpush1.xpose.msra.mxu0 %v1899
    %1906 = vmatprep.subr.mxu0 0.0
    %1907 = vmatpush1.xpose.msra.mxu0 %v1902
    %1908 = vmatprep.subr.mxu0 0.0
    %1909 = vmatpush1.xpose.msra.mxu0 0.0
    %1910 = vmatprep.subr.mxu0 0.0
    %1911 = vmatpush1.xpose.msra.mxu0 0.0
    %1912 = vmatprep.subr.mxu0 0.0
    %1913 = vmatpush1.xpose.msra.mxu0 0.0
    %1914 = vmatprep.subr.mxu0 0.0
    %1915 = vmatpush1.xpose.msra.mxu0 0.0
    %1916 = vmatprep.subr.mxu0 0.0
    %1917 = vmatpush1.xpose.msra.mxu0 0.0
    %1918 = vmatprep.subr.mxu0 0.0
    %1919 = vmatpush1.xpose.msra.mxu0 0.0
    %1920 = vmatprep.subr.mxu0 0.0
    %1921 = vmatpush1.xpose.msra.mxu0 0.0
    %1922 = vmatprep.subr.mxu0 0.0
    %1923 = vmatpush1.xpose.msra.mxu0 0.0
    %1924 = vmatprep.subr.mxu0 0.0
    %1925 = vmatpush1.xpose.msra.mxu0 0.0
    %1926 = vmatprep.subr.mxu0 0.0
    %1927 = vmatpush1.xpose.msra.mxu0 0.0
    %1928 = vmatprep.subr.mxu0 0.0
    %1929 = vmatpush1.xpose.msra.mxu0 0.0
    %1930 = vmatprep.subr.mxu0 0.0
    %1931 = vmatpush1.xpose.msra.mxu0 0.0
    %1932 = vmatprep.subr.mxu0 0.0
    %1933 = vmatpush1.xpose.msra.mxu0 0.0
    %1934 = vmatprep.subr.mxu0 0.0
    %1935 = vmatpush1.xpose.msra.mxu0 0.0
    %1936 = vmatprep.subr.mxu0 0.0
    %1937 = vmatpush1.xpose.msra.mxu0 0.0
    %1938 = vmatprep.subr.mxu0 0.0
    %1939 = vmatpush1.xpose.msra.mxu0 0.0
    %1940 = vmatprep.subr.mxu0 0.0
    %1941 = vmatpush1.xpose.msra.mxu0 0.0
    %1942 = vmatprep.subr.mxu0 0.0
    %1943 = vmatpush1.xpose.msra.mxu0 0.0
    %1944 = vmatprep.subr.mxu0 0.0
    %1945 = vmatpush1.xpose.msra.mxu0 0.0
    %1946 = vmatprep.subr.mxu0 0.0
    %1947 = vmatpush1.xpose.msra.mxu0 0.0
    %1948 = vmatprep.subr.mxu0 0.0
    %1949 = vmatpush1.xpose.msra.mxu0 0.0
    %1950 = vmatprep.subr.mxu0 0.0
    %1951 = vmatpush1.xpose.msra.mxu0 0.0
    %1952 = vmatprep.subr.mxu0 0.0
    %1953 = vmatpush1.xpose.msra.mxu0 0.0
    %1954 = vmatprep.subr.mxu0 0.0
    %1955 = vmatpush1.xpose.msra.mxu0 0.0
    %1956 = vmatprep.subr.mxu0 0.0
    %1957 = vmatpush1.xpose.msra.mxu0 0.0
    %1958 = vmatprep.subr.mxu0 0.0
    %1959 = vmatpush1.xpose.msra.mxu0 0.0
    %1960 = vmatprep.subr.mxu0 0.0
    %1961 = vmatpush1.xpose.msra.mxu0 0.0
    %1962 = vmatprep.subr.mxu0 0.0
    %1963 = vmatpush1.xpose.msra.mxu0 0.0
    %1964 = vmatprep.subr.mxu0 0.0
    %1965 = vmatpush1.xpose.msra.mxu0 0.0
    %1966 = vmatprep.subr.mxu0 0.0
    %1967 = vmatpush1.xpose.msra.mxu0 0.0
    %1968 = vmatprep.mubr.f32.mxu0 0.0
    %1969 = vmatmul.mubr.f32.gmra.mrb[0].mxu0 %v1893
    %v1970 = vpop.f32.mrb[0].mxu0
    %v1971 = vadd.f32 0.0, %v1970
    %v1972 = vpop.f32.mrb[0].mxu0
    %1973 = vmatprep.mubr.f32.mxu0 0.0
    %1974 = vmatmul.mubr.f32.gmra.mrb[0].mxu0 %v1896
    %v1975 = vpop.f32.mrb[0].mxu0
    %v1976 = vadd.f32 0.0, %v1975
    %v1977 = vpop.f32.mrb[0].mxu0
    %1978 = vdwg.mxu0
    %v1980 = vsel %vm1456, %v654, 0
    %v1983 = vsel %vm1456, %v659, 0
    %v1986 = vsel %vm1456, %v1046, 0
    %v1989 = vsel %vm1456, %v1051, 0
    %1991 = vmatprep.subr.mxu0 0.0
    %1992 = vmatpush1.xpose.msra.mxu0 %v1986
    %1993 = vmatprep.subr.mxu0 0.0
    %1994 = vmatpush1.xpose.msra.mxu0 %v1989
    %1995 = vmatprep.subr.mxu0 0.0
    %1996 = vmatpush1.xpose.msra.mxu0 0.0
    %1997 = vmatprep.subr.mxu0 0.0
    %1998 = vmatpush1.xpose.msra.mxu0 0.0
    %1999 = vmatprep.subr.mxu0 0.0
    %2000 = vmatpush1.xpose.msra.mxu0 0.0
    %2001 = vmatprep.subr.mxu0 0.0
    %2002 = vmatpush1.xpose.msra.mxu0 0.0
    %2003 = vmatprep.subr.mxu0 0.0
    %2004 = vmatpush1.xpose.msra.mxu0 0.0
    %2005 = vmatprep.subr.mxu0 0.0
    %2006 = vmatpush1.xpose.msra.mxu0 0.0
    %2007 = vmatprep.subr.mxu0 0.0
    %2008 = vmatpush1.xpose.msra.mxu0 0.0
    %2009 = vmatprep.subr.mxu0 0.0
    %2010 = vmatpush1.xpose.msra.mxu0 0.0
    %2011 = vmatprep.subr.mxu0 0.0
    %2012 = vmatpush1.xpose.msra.mxu0 0.0
    %2013 = vmatprep.subr.mxu0 0.0
    %2014 = vmatpush1.xpose.msra.mxu0 0.0
    %2015 = vmatprep.subr.mxu0 0.0
    %2016 = vmatpush1.xpose.msra.mxu0 0.0
    %2017 = vmatprep.subr.mxu0 0.0
    %2018 = vmatpush1.xpose.msra.mxu0 0.0
    %2019 = vmatprep.subr.mxu0 0.0
    %2020 = vmatpush1.xpose.msra.mxu0 0.0
    %2021 = vmatprep.subr.mxu0 0.0
    %2022 = vmatpush1.xpose.msra.mxu0 0.0
    %2023 = vmatprep.subr.mxu0 0.0
    %2024 = vmatpush1.xpose.msra.mxu0 0.0
    %2025 = vmatprep.subr.mxu0 0.0
    %2026 = vmatpush1.xpose.msra.mxu0 0.0
    %2027 = vmatprep.subr.mxu0 0.0
    %2028 = vmatpush1.xpose.msra.mxu0 0.0
    %2029 = vmatprep.subr.mxu0 0.0
    %2030 = vmatpush1.xpose.msra.mxu0 0.0
    %2031 = vmatprep.subr.mxu0 0.0
    %2032 = vmatpush1.xpose.msra.mxu0 0.0
    %2033 = vmatprep.subr.mxu0 0.0
    %2034 = vmatpush1.xpose.msra.mxu0 0.0
    %2035 = vmatprep.subr.mxu0 0.0
    %2036 = vmatpush1.xpose.msra.mxu0 0.0
    %2037 = vmatprep.subr.mxu0 0.0
    %2038 = vmatpush1.xpose.msra.mxu0 0.0
    %2039 = vmatprep.subr.mxu0 0.0
    %2040 = vmatpush1.xpose.msra.mxu0 0.0
    %2041 = vmatprep.subr.mxu0 0.0
    %2042 = vmatpush1.xpose.msra.mxu0 0.0
    %2043 = vmatprep.subr.mxu0 0.0
    %2044 = vmatpush1.xpose.msra.mxu0 0.0
    %2045 = vmatprep.subr.mxu0 0.0
    %2046 = vmatpush1.xpose.msra.mxu0 0.0
    %2047 = vmatprep.subr.mxu0 0.0
    %2048 = vmatpush1.xpose.msra.mxu0 0.0
    %2049 = vmatprep.subr.mxu0 0.0
    %2050 = vmatpush1.xpose.msra.mxu0 0.0
    %2051 = vmatprep.subr.mxu0 0.0
    %2052 = vmatpush1.xpose.msra.mxu0 0.0
    %2053 = vmatprep.subr.mxu0 0.0
    %2054 = vmatpush1.xpose.msra.mxu0 0.0
    %2055 = vmatprep.mubr.f32.mxu0 0.0
    %2056 = vmatmul.mubr.f32.gmra.mrb[0].mxu0 %v1980
    %v2057 = vpop.f32.mrb[0].mxu0
    %v2058 = vadd.f32 0.0, %v2057
    %v2059 = vpop.f32.mrb[0].mxu0
    %2060 = vmatprep.mubr.f32.mxu0 0.0
    %2061 = vmatmul.mubr.f32.gmra.mrb[0].mxu0 %v1983
    %v2062 = vpop.f32.mrb[0].mxu0
    %v2063 = vadd.f32 0.0, %v2062
    %v2064 = vpop.f32.mrb[0].mxu0
    %2065 = vdwg.mxu0
    %v2067 = vsel %vm1456, %v664, 0
    %v2070 = vsel %vm1456, %v669, 0
    %v2073 = vsel %vm1456, %v1056, 0
    %v2076 = vsel %vm1456, %v1061, 0
    %2078 = vmatprep.subr.mxu0 0.0
    %2079 = vmatpush1.xpose.msra.mxu0 %v2073
    %2080 = vmatprep.subr.mxu0 0.0
    %2081 = vmatpush1.xpose.msra.mxu0 %v2076
    %2082 = vmatprep.subr.mxu0 0.0
    %2083 = vmatpush1.xpose.msra.mxu0 0.0
    %2084 = vmatprep.subr.mxu0 0.0
    %2085 = vmatpush1.xpose.msra.mxu0 0.0
    %2086 = vmatprep.subr.mxu0 0.0
    %2087 = vmatpush1.xpose.msra.mxu0 0.0
    %2088 = vmatprep.subr.mxu0 0.0
    %2089 = vmatpush1.xpose.msra.mxu0 0.0
    %2090 = vmatprep.subr.mxu0 0.0
    %2091 = vmatpush1.xpose.msra.mxu0 0.0
    %2092 = vmatprep.subr.mxu0 0.0
    %2093 = vmatpush1.xpose.msra.mxu0 0.0
    %2094 = vmatprep.subr.mxu0 0.0
    %2095 = vmatpush1.xpose.msra.mxu0 0.0
    %2096 = vmatprep.subr.mxu0 0.0
    %2097 = vmatpush1.xpose.msra.mxu0 0.0
    %2098 = vmatprep.subr.mxu0 0.0
    %2099 = vmatpush1.xpose.msra.mxu0 0.0
    %2100 = vmatprep.subr.mxu0 0.0
    %2101 = vmatpush1.xpose.msra.mxu0 0.0
    %2102 = vmatprep.subr.mxu0 0.0
    %2103 = vmatpush1.xpose.msra.mxu0 0.0
    %2104 = vmatprep.subr.mxu0 0.0
    %2105 = vmatpush1.xpose.msra.mxu0 0.0
    %2106 = vmatprep.subr.mxu0 0.0
    %2107 = vmatpush1.xpose.msra.mxu0 0.0
    %2108 = vmatprep.subr.mxu0 0.0
    %2109 = vmatpush1.xpose.msra.mxu0 0.0
    %2110 = vmatprep.subr.mxu0 0.0
    %2111 = vmatpush1.xpose.msra.mxu0 0.0
    %2112 = vmatprep.subr.mxu0 0.0
    %2113 = vmatpush1.xpose.msra.mxu0 0.0
    %2114 = vmatprep.subr.mxu0 0.0
    %2115 = vmatpush1.xpose.msra.mxu0 0.0
    %2116 = vmatprep.subr.mxu0 0.0
    %2117 = vmatpush1.xpose.msra.mxu0 0.0
    %2118 = vmatprep.subr.mxu0 0.0
    %2119 = vmatpush1.xpose.msra.mxu0 0.0
    %2120 = vmatprep.subr.mxu0 0.0
    %2121 = vmatpush1.xpose.msra.mxu0 0.0
    %2122 = vmatprep.subr.mxu0 0.0
    %2123 = vmatpush1.xpose.msra.mxu0 0.0
    %2124 = vmatprep.subr.mxu0 0.0
    %2125 = vmatpush1.xpose.msra.mxu0 0.0
    %2126 = vmatprep.subr.mxu0 0.0
    %2127 = vmatpush1.xpose.msra.mxu0 0.0
    %2128 = vmatprep.subr.mxu0 0.0
    %2129 = vmatpush1.xpose.msra.mxu0 0.0
    %2130 = vmatprep.subr.mxu0 0.0
    %2131 = vmatpush1.xpose.msra.mxu0 0.0
    %2132 = vmatprep.subr.mxu0 0.0
    %2133 = vmatpush1.xpose.msra.mxu0 0.0
    %2134 = vmatprep.subr.mxu0 0.0
    %2135 = vmatpush1.xpose.msra.mxu0 0.0
    %2136 = vmatprep.subr.mxu0 0.0
    %2137 = vmatpush1.xpose.msra.mxu0 0.0
    %2138 = vmatprep.subr.mxu0 0.0
    %2139 = vmatpush1.xpose.msra.mxu0 0.0
    %2140 = vmatprep.subr.mxu0 0.0
    %2141 = vmatpush1.xpose.msra.mxu0 0.0
    %2142 = vmatprep.mubr.f32.mxu0 0.0
    %2143 = vmatmul.mubr.f32.gmra.mrb[0].mxu0 %v2067
    %v2144 = vpop.f32.mrb[0].mxu0
    %v2145 = vadd.f32 0.0, %v2144
    %v2146 = vpop.f32.mrb[0].mxu0
    %2147 = vmatprep.mubr.f32.mxu0 0.0
    %2148 = vmatmul.mubr.f32.gmra.mrb[0].mxu0 %v2070
    %v2149 = vpop.f32.mrb[0].mxu0
    %v2150 = vadd.f32 0.0, %v2149
    %v2151 = vpop.f32.mrb[0].mxu0
    %2152 = vdwg.mxu0
    %v2153 = vmul.f32 %v1536, 0.35355338
    %v2154 = vmul.f32 %v1541, 0.35355338
    %v2155 = vmul.f32 %v1623, 0.35355338
    %v2156 = vmul.f32 %v1628, 0.35355338
    %v2157 = vmul.f32 %v1710, 0.35355338
    %v2158 = vmul.f32 %v1715, 0.35355338
    %v2159 = vmul.f32 %v1797, 0.35355338
    %v2160 = vmul.f32 %v1802, 0.35355338
    %v2161 = vmul.f32 %v1884, 0.35355338
    %v2162 = vmul.f32 %v1889, 0.35355338
    %v2163 = vmul.f32 %v1971, 0.35355338
    %v2164 = vmul.f32 %v1976, 0.35355338
    %v2165 = vmul.f32 %v2058, 0.35355338
    %v2166 = vmul.f32 %v2063, 0.35355338
    %v2167 = vmul.f32 %v2145, 0.35355338
    %v2168 = vmul.f32 %v2150, 0.35355338
    %vm2169 = vcmask 130048
    %v2170 = vsel %vm2169, %v2153, -inf
    %2171 = vmax.xlane.f32.xlu0 %v2170
    %v2172 = vpop.xlane.xlu0 %2171
    %v2173 = vsel %vm2169, %v2154, -inf
    %2174 = vmax.xlane.f32.xlu0 %v2173
    %v2175 = vpop.xlane.xlu0 %2174
    %v2176 = vsel %vm2169, %v2155, -inf
    %2177 = vmax.xlane.f32.xlu0 %v2176
    %v2178 = vpop.xlane.xlu0 %2177
    %v2179 = vsel %vm2169, %v2156, -inf
    %2180 = vmax.xlane.f32.xlu0 %v2179
    %v2181 = vpop.xlane.xlu0 %2180
    %v2182 = vsel %vm2169, %v2157, -inf
    %2183 = vmax.xlane.f32.xlu0 %v2182
    %v2184 = vpop.xlane.xlu0 %2183
    %v2185 = vsel %vm2169, %v2158, -inf
    %2186 = vmax.xlane.f32.xlu0 %v2185
    %v2187 = vpop.xlane.xlu0 %2186
    %v2188 = vsel %vm2169, %v2159, -inf
    %2189 = vmax.xlane.f32.xlu0 %v2188
    %v2190 = vpop.xlane.xlu0 %2189
    %v2191 = vsel %vm2169, %v2160, -inf
    %2192 = vmax.xlane.f32.xlu0 %v2191
    %v2193 = vpop.xlane.xlu0 %2192
    %v2194 = vsel %vm2169, %v2161, -inf
    %2195 = vmax.xlane.f32.xlu0 %v2194
    %v2196 = vpop.xlane.xlu0 %2195
    %v2197 = vsel %vm2169, %v2162, -inf
    %2198 = vmax.xlane.f32.xlu0 %v2197
    %v2199 = vpop.xlane.xlu0 %2198
    %v2200 = vsel %vm2169, %v2163, -inf
    %2201 = vmax.xlane.f32.xlu0 %v2200
    %v2202 = vpop.xlane.xlu0 %2201
    %v2203 = vsel %vm2169, %v2164, -inf
    %2204 = vmax.xlane.f32.xlu0 %v2203
    %v2205 = vpop.xlane.xlu0 %2204
    %v2206 = vsel %vm2169, %v2165, -inf
    %2207 = vmax.xlane.f32.xlu0 %v2206
    %v2208 = vpop.xlane.xlu0 %2207
    %v2209 = vsel %vm2169, %v2166, -inf
    %2210 = vmax.xlane.f32.xlu0 %v2209
    %v2211 = vpop.xlane.xlu0 %2210
    %v2212 = vsel %vm2169, %v2167, -inf
    %2213 = vmax.xlane.f32.xlu0 %v2212
    %v2214 = vpop.xlane.xlu0 %2213
    %v2215 = vsel %vm2169, %v2168, -inf
    %2216 = vmax.xlane.f32.xlu0 %v2215
    %v2217 = vpop.xlane.xlu0 %2216
    %v2218 = vsub.f32 %v2153, %v2172
    %v2219 = vsub.f32 %v2154, %v2175
    %v2220 = vsub.f32 %v2155, %v2178
    %v2221 = vsub.f32 %v2156, %v2181
    %v2222 = vsub.f32 %v2157, %v2184
    %v2223 = vsub.f32 %v2158, %v2187
    %v2224 = vsub.f32 %v2159, %v2190
    %v2225 = vsub.f32 %v2160, %v2193
    %v2226 = vsub.f32 %v2161, %v2196
    %v2227 = vsub.f32 %v2162, %v2199
    %v2228 = vsub.f32 %v2163, %v2202
    %v2229 = vsub.f32 %v2164, %v2205
    %v2230 = vsub.f32 %v2165, %v2208
    %v2231 = vsub.f32 %v2166, %v2211
    %v2232 = vsub.f32 %v2167, %v2214
    %v2233 = vsub.f32 %v2168, %v2217
    %v2234 = vmul.f32 %v2218, 1.442695
    %v2235 = vpow.pop %v2234
    %v2236 = vmul.f32 %v2219, 1.442695
    %v2237 = vpow.pop %v2236
    %v2238 = vmul.f32 %v2220, 1.442695
    %v2239 = vpow.pop %v2238
    %v2240 = vmul.f32 %v2221, 1.442695
    %v2241 = vpow.pop %v2240
    %v2242 = vmul.f32 %v2222, 1.442695
    %v2243 = vpow.pop %v2242
    %v2244 = vmul.f32 %v2223, 1.442695
    %v2245 = vpow.pop %v2244
    %v2246 = vmul.f32 %v2224, 1.442695
    %v2247 = vpow.pop %v2246
    %v2248 = vmul.f32 %v2225, 1.442695
    %v2249 = vpow.pop %v2248
    %v2250 = vmul.f32 %v2226, 1.442695
    %v2251 = vpow.pop %v2250
    %v2252 = vmul.f32 %v2227, 1.442695
    %v2253 = vpow.pop %v2252
    %v2254 = vmul.f32 %v2228, 1.442695
    %v2255 = vpow.pop %v2254
    %v2256 = vmul.f32 %v2229, 1.442695
    %v2257 = vpow.pop %v2256
    %v2258 = vmul.f32 %v2230, 1.442695
    %v2259 = vpow.pop %v2258
    %v2260 = vmul.f32 %v2231, 1.442695
    %v2261 = vpow.pop %v2260
    %v2262 = vmul.f32 %v2232, 1.442695
    %v2263 = vpow.pop %v2262
    %v2264 = vmul.f32 %v2233, 1.442695
    %v2265 = vpow.pop %v2264
    %v2266 = vsel %vm2169, %v2235, 0.0
    %2267 = vadd.xlane.f32.xlu0 %v2266
    %v2268 = vpop.xlane.xlu0 %2267
    %v2269 = vsel %vm2169, %v2237, 0.0
    %2270 = vadd.xlane.f32.xlu0 %v2269
    %v2271 = vpop.xlane.xlu0 %2270
    %v2272 = vsel %vm2169, %v2239, 0.0
    %2273 = vadd.xlane.f32.xlu0 %v2272
    %v2274 = vpop.xlane.xlu0 %2273
    %v2275 = vsel %vm2169, %v2241, 0.0
    %2276 = vadd.xlane.f32.xlu0 %v2275
    %v2277 = vpop.xlane.xlu0 %2276
    %v2278 = vsel %vm2169, %v2243, 0.0
    %2279 = vadd.xlane.f32.xlu0 %v2278
    %v2280 = vpop.xlane.xlu0 %2279
    %v2281 = vsel %vm2169, %v2245, 0.0
    %2282 = vadd.xlane.f32.xlu0 %v2281
    %v2283 = vpop.xlane.xlu0 %2282
    %v2284 = vsel %vm2169, %v2247, 0.0
    %2285 = vadd.xlane.f32.xlu0 %v2284
    %v2286 = vpop.xlane.xlu0 %2285
    %v2287 = vsel %vm2169, %v2249, 0.0
    %2288 = vadd.xlane.f32.xlu0 %v2287
    %v2289 = vpop.xlane.xlu0 %2288
    %v2290 = vsel %vm2169, %v2251, 0.0
    %2291 = vadd.xlane.f32.xlu0 %v2290
    %v2292 = vpop.xlane.xlu0 %2291
    %v2293 = vsel %vm2169, %v2253, 0.0
    %2294 = vadd.xlane.f32.xlu0 %v2293
    %v2295 = vpop.xlane.xlu0 %2294
    %v2296 = vsel %vm2169, %v2255, 0.0
    %2297 = vadd.xlane.f32.xlu0 %v2296
    %v2298 = vpop.xlane.xlu0 %2297
    %v2299 = vsel %vm2169, %v2257, 0.0
    %2300 = vadd.xlane.f32.xlu0 %v2299
    %v2301 = vpop.xlane.xlu0 %2300
    %v2302 = vsel %vm2169, %v2259, 0.0
    %2303 = vadd.xlane.f32.xlu0 %v2302
    %v2304 = vpop.xlane.xlu0 %2303
    %v2305 = vsel %vm2169, %v2261, 0.0
    %2306 = vadd.xlane.f32.xlu0 %v2305
    %v2307 = vpop.xlane.xlu0 %2306
    %v2308 = vsel %vm2169, %v2263, 0.0
    %2309 = vadd.xlane.f32.xlu0 %v2308
    %v2310 = vpop.xlane.xlu0 %2309
    %v2311 = vsel %vm2169, %v2265, 0.0
    %2312 = vadd.xlane.f32.xlu0 %v2311
    %v2313 = vpop.xlane.xlu0 %2312
    %v2314 = vrcp.pop %v2268
    %v2315 = vrcp.pop %v2271
    %v2316 = vrcp.pop %v2274
    %v2317 = vrcp.pop %v2277
    %v2318 = vrcp.pop %v2280
    %v2319 = vrcp.pop %v2283
    %v2320 = vrcp.pop %v2286
    %v2321 = vrcp.pop %v2289
    %v2322 = vrcp.pop %v2292
    %v2323 = vrcp.pop %v2295
    %v2324 = vrcp.pop %v2298
    %v2325 = vrcp.pop %v2301
    %v2326 = vrcp.pop %v2304
    %v2327 = vrcp.pop %v2307
    %v2328 = vrcp.pop %v2310
    %v2329 = vrcp.pop %v2313
    %v2330 = vmul.f32 %v2235, %v2314
    %v2331 = vmul.f32 %v2237, %v2315
    %v2332 = vmul.f32 %v2239, %v2316
    %v2333 = vmul.f32 %v2241, %v2317
    %v2334 = vmul.f32 %v2243, %v2318
    %v2335 = vmul.f32 %v2245, %v2319
    %v2336 = vmul.f32 %v2247, %v2320
    %v2337 = vmul.f32 %v2249, %v2321
    %v2338 = vmul.f32 %v2251, %v2322
    %v2339 = vmul.f32 %v2253, %v2323
    %v2340 = vmul.f32 %v2255, %v2324
    %v2341 = vmul.f32 %v2257, %v2325
    %v2342 = vmul.f32 %v2259, %v2326
    %v2343 = vmul.f32 %v2261, %v2327
    %v2344 = vmul.f32 %v2263, %v2328
    %v2345 = vmul.f32 %v2265, %v2329
    %v2347 = vsel %vm2169, %v2330, 0
    %v2350 = vsel %vm2169, %v2331, 0
    %2352 = vmatprep.subr.mxu0 0.0
    %2353 = vmatpush1.msra.mxu0 %v1144
    %2354 = vmatprep.subr.mxu0 0.0
    %2355 = vmatpush1.msra.mxu0 %v1149
    %2356 = vmatprep.subr.mxu0 0.0
    %2357 = vmatpush1.msra.mxu0 0.0
    %2358 = vmatprep.subr.mxu0 0.0
    %2359 = vmatpush1.msra.mxu0 0.0
    %2360 = vmatprep.subr.mxu0 0.0
    %2361 = vmatpush1.msra.mxu0 0.0
    %2362 = vmatprep.subr.mxu0 0.0
    %2363 = vmatpush1.msra.mxu0 0.0
    %2364 = vmatprep.subr.mxu0 0.0
    %2365 = vmatpush1.msra.mxu0 0.0
    %2366 = vmatprep.subr.mxu0 0.0
    %2367 = vmatpush1.msra.mxu0 0.0
    %2368 = vmatprep.subr.mxu0 0.0
    %2369 = vmatpush1.msra.mxu0 0.0
    %2370 = vmatprep.subr.mxu0 0.0
    %2371 = vmatpush1.msra.mxu0 0.0
    %2372 = vmatprep.subr.mxu0 0.0
    %2373 = vmatpush1.msra.mxu0 0.0
    %2374 = vmatprep.subr.mxu0 0.0
    %2375 = vmatpush1.msra.mxu0 0.0
    %2376 = vmatprep.subr.mxu0 0.0
    %2377 = vmatpush1.msra.mxu0 0.0
    %2378 = vmatprep.subr.mxu0 0.0
    %2379 = vmatpush1.msra.mxu0 0.0
    %2380 = vmatprep.subr.mxu0 0.0
    %2381 = vmatpush1.msra.mxu0 0.0
    %2382 = vmatprep.subr.mxu0 0.0
    %2383 = vmatpush1.msra.mxu0 0.0
    %2384 = vmatprep.subr.mxu0 0.0
    %2385 = vmatpush1.msra.mxu0 0.0
    %2386 = vmatprep.subr.mxu0 0.0
    %2387 = vmatpush1.msra.mxu0 0.0
    %2388 = vmatprep.subr.mxu0 0.0
    %2389 = vmatpush1.msra.mxu0 0.0
    %2390 = vmatprep.subr.mxu0 0.0
    %2391 = vmatpush1.msra.mxu0 0.0
    %2392 = vmatprep.subr.mxu0 0.0
    %2393 = vmatpush1.msra.mxu0 0.0
    %2394 = vmatprep.subr.mxu0 0.0
    %2395 = vmatpush1.msra.mxu0 0.0
    %2396 = vmatprep.subr.mxu0 0.0
    %2397 = vmatpush1.msra.mxu0 0.0
    %2398 = vmatprep.subr.mxu0 0.0
    %2399 = vmatpush1.msra.mxu0 0.0
    %2400 = vmatprep.subr.mxu0 0.0
    %2401 = vmatpush1.msra.mxu0 0.0
    %2402 = vmatprep.subr.mxu0 0.0
    %2403 = vmatpush1.msra.mxu0 0.0
    %2404 = vmatprep.subr.mxu0 0.0
    %2405 = vmatpush1.msra.mxu0 0.0
    %2406 = vmatprep.subr.mxu0 0.0
    %2407 = vmatpush1.msra.mxu0 0.0
    %2408 = vmatprep.subr.mxu0 0.0
    %2409 = vmatpush1.msra.mxu0 0.0
    %2410 = vmatprep.subr.mxu0 0.0
    %2411 = vmatpush1.msra.mxu0 0.0
    %2412 = vmatprep.subr.mxu0 0.0
    %2413 = vmatpush1.msra.mxu0 0.0
    %2414 = vmatprep.subr.mxu0 0.0
    %2415 = vmatpush1.msra.mxu0 0.0
    %2416 = vmatprep.mubr.f32.mxu0 0.0
    %2417 = vmatmul.mubr.f32.gmra.mrb[0].mxu0 %v2347
    %v2418 = vpop.f32.mrb[0].mxu0
    %v2419 = vadd.f32 0.0, %v2418
    %v2420 = vpop.f32.mrb[0].mxu0
    %2421 = vmatprep.mubr.f32.mxu0 0.0
    %2422 = vmatmul.mubr.f32.gmra.mrb[0].mxu0 %v2350
    %v2423 = vpop.f32.mrb[0].mxu0
    %v2424 = vadd.f32 0.0, %v2423
    %v2425 = vpop.f32.mrb[0].mxu0
    %2426 = vdwg.mxu0
    %v2428 = vsel %vm2169, %v2332, 0
    %v2431 = vsel %vm2169, %v2333, 0
    %2433 = vmatprep.subr.mxu0 0.0
    %2434 = vmatpush1.msra.mxu0 %v1154
    %2435 = vmatprep.subr.mxu0 0.0
    %2436 = vmatpush1.msra.mxu0 %v1159
    %2437 = vmatprep.subr.mxu0 0.0
    %2438 = vmatpush1.msra.mxu0 0.0
    %2439 = vmatprep.subr.mxu0 0.0
    %2440 = vmatpush1.msra.mxu0 0.0
    %2441 = vmatprep.subr.mxu0 0.0
    %2442 = vmatpush1.msra.mxu0 0.0
    %2443 = vmatprep.subr.mxu0 0.0
    %2444 = vmatpush1.msra.mxu0 0.0
    %2445 = vmatprep.subr.mxu0 0.0
    %2446 = vmatpush1.msra.mxu0 0.0
    %2447 = vmatprep.subr.mxu0 0.0
    %2448 = vmatpush1.msra.mxu0 0.0
    %2449 = vmatprep.subr.mxu0 0.0
    %2450 = vmatpush1.msra.mxu0 0.0
    %2451 = vmatprep.subr.mxu0 0.0
    %2452 = vmatpush1.msra.mxu0 0.0
    %2453 = vmatprep.subr.mxu0 0.0
    %2454 = vmatpush1.msra.mxu0 0.0
    %2455 = vmatprep.subr.mxu0 0.0
    %2456 = vmatpush1.msra.mxu0 0.0
    %2457 = vmatprep.subr.mxu0 0.0
    %2458 = vmatpush1.msra.mxu0 0.0
    %2459 = vmatprep.subr.mxu0 0.0
    %2460 = vmatpush1.msra.mxu0 0.0
    %2461 = vmatprep.subr.mxu0 0.0
    %2462 = vmatpush1.msra.mxu0 0.0
    %2463 = vmatprep.subr.mxu0 0.0
    %2464 = vmatpush1.msra.mxu0 0.0
    %2465 = vmatprep.subr.mxu0 0.0
    %2466 = vmatpush1.msra.mxu0 0.0
    %2467 = vmatprep.subr.mxu0 0.0
    %2468 = vmatpush1.msra.mxu0 0.0
    %2469 = vmatprep.subr.mxu0 0.0
    %2470 = vmatpush1.msra.mxu0 0.0
    %2471 = vmatprep.subr.mxu0 0.0
    %2472 = vmatpush1.msra.mxu0 0.0
    %2473 = vmatprep.subr.mxu0 0.0
    %2474 = vmatpush1.msra.mxu0 0.0
    %2475 = vmatprep.subr.mxu0 0.0
    %2476 = vmatpush1.msra.mxu0 0.0
    %2477 = vmatprep.subr.mxu0 0.0
    %2478 = vmatpush1.msra.mxu0 0.0
    %2479 = vmatprep.subr.mxu0 0.0
    %2480 = vmatpush1.msra.mxu0 0.0
    %2481 = vmatprep.subr.mxu0 0.0
    %2482 = vmatpush1.msra.mxu0 0.0
    %2483 = vmatprep.subr.mxu0 0.0
    %2484 = vmatpush1.msra.mxu0 0.0
    %2485 = vmatprep.subr.mxu0 0.0
    %2486 = vmatpush1.msra.mxu0 0.0
    %2487 = vmatprep.subr.mxu0 0.0
    %2488 = vmatpush1.msra.mxu0 0.0
    %2489 = vmatprep.subr.mxu0 0.0
    %2490 = vmatpush1.msra.mxu0 0.0
    %2491 = vmatprep.subr.mxu0 0.0
    %2492 = vmatpush1.msra.mxu0 0.0
    %2493 = vmatprep.subr.mxu0 0.0
    %2494 = vmatpush1.msra.mxu0 0.0
    %2495 = vmatprep.subr.mxu0 0.0
    %2496 = vmatpush1.msra.mxu0 0.0
    %2497 = vmatprep.mubr.f32.mxu0 0.0
    %2498 = vmatmul.mubr.f32.gmra.mrb[0].mxu0 %v2428
    %v2499 = vpop.f32.mrb[0].mxu0
    %v2500 = vadd.f32 0.0, %v2499
    %v2501 = vpop.f32.mrb[0].mxu0
    %2502 = vmatprep.mubr.f32.mxu0 0.0
    %2503 = vmatmul.mubr.f32.gmra.mrb[0].mxu0 %v2431
    %v2504 = vpop.f32.mrb[0].mxu0
    %v2505 = vadd.f32 0.0, %v2504
    %v2506 = vpop.f32.mrb[0].mxu0
    %2507 = vdwg.mxu0
    %v2509 = vsel %vm2169, %v2334, 0
    %v2512 = vsel %vm2169, %v2335, 0
    %2514 = vmatprep.subr.mxu0 0.0
    %2515 = vmatpush1.msra.mxu0 %v1242
    %2516 = vmatprep.subr.mxu0 0.0
    %2517 = vmatpush1.msra.mxu0 %v1247
    %2518 = vmatprep.subr.mxu0 0.0
    %2519 = vmatpush1.msra.mxu0 0.0
    %2520 = vmatprep.subr.mxu0 0.0
    %2521 = vmatpush1.msra.mxu0 0.0
    %2522 = vmatprep.subr.mxu0 0.0
    %2523 = vmatpush1.msra.mxu0 0.0
    %2524 = vmatprep.subr.mxu0 0.0
    %2525 = vmatpush1.msra.mxu0 0.0
    %2526 = vmatprep.subr.mxu0 0.0
    %2527 = vmatpush1.msra.mxu0 0.0
    %2528 = vmatprep.subr.mxu0 0.0
    %2529 = vmatpush1.msra.mxu0 0.0
    %2530 = vmatprep.subr.mxu0 0.0
    %2531 = vmatpush1.msra.mxu0 0.0
    %2532 = vmatprep.subr.mxu0 0.0
    %2533 = vmatpush1.msra.mxu0 0.0
    %2534 = vmatprep.subr.mxu0 0.0
    %2535 = vmatpush1.msra.mxu0 0.0
    %2536 = vmatprep.subr.mxu0 0.0
    %2537 = vmatpush1.msra.mxu0 0.0
    %2538 = vmatprep.subr.mxu0 0.0
    %2539 = vmatpush1.msra.mxu0 0.0
    %2540 = vmatprep.subr.mxu0 0.0
    %2541 = vmatpush1.msra.mxu0 0.0
    %2542 = vmatprep.subr.mxu0 0.0
    %2543 = vmatpush1.msra.mxu0 0.0
    %2544 = vmatprep.subr.mxu0 0.0
    %2545 = vmatpush1.msra.mxu0 0.0
    %2546 = vmatprep.subr.mxu0 0.0
    %2547 = vmatpush1.msra.mxu0 0.0
    %2548 = vmatprep.subr.mxu0 0.0
    %2549 = vmatpush1.msra.mxu0 0.0
    %2550 = vmatprep.subr.mxu0 0.0
    %2551 = vmatpush1.msra.mxu0 0.0
    %2552 = vmatprep.subr.mxu0 0.0
    %2553 = vmatpush1.msra.mxu0 0.0
    %2554 = vmatprep.subr.mxu0 0.0
    %2555 = vmatpush1.msra.mxu0 0.0
    %2556 = vmatprep.subr.mxu0 0.0
    %2557 = vmatpush1.msra.mxu0 0.0
    %2558 = vmatprep.subr.mxu0 0.0
    %2559 = vmatpush1.msra.mxu0 0.0
    %2560 = vmatprep.subr.mxu0 0.0
    %2561 = vmatpush1.msra.mxu0 0.0
    %2562 = vmatprep.subr.mxu0 0.0
    %2563 = vmatpush1.msra.mxu0 0.0
    %2564 = vmatprep.subr.mxu0 0.0
    %2565 = vmatpush1.msra.mxu0 0.0
    %2566 = vmatprep.subr.mxu0 0.0
    %2567 = vmatpush1.msra.mxu0 0.0
    %2568 = vmatprep.subr.mxu0 0.0
    %2569 = vmatpush1.msra.mxu0 0.0
    %2570 = vmatprep.subr.mxu0 0.0
    %2571 = vmatpush1.msra.mxu0 0.0
    %2572 = vmatprep.subr.mxu0 0.0
    %2573 = vmatpush1.msra.mxu0 0.0
    %2574 = vmatprep.subr.mxu0 0.0
    %2575 = vmatpush1.msra.mxu0 0.0
    %2576 = vmatprep.subr.mxu0 0.0
    %2577 = vmatpush1.msra.mxu0 0.0
    %2578 = vmatprep.mubr.f32.mxu0 0.0
    %2579 = vmatmul.mubr.f32.gmra.mrb[0].mxu0 %v2509
    %v2580 = vpop.f32.mrb[0].mxu0
    %v2581 = vadd.f32 0.0, %v2580
    %v2582 = vpop.f32.mrb[0].mxu0
    %2583 = vmatprep.mubr.f32.mxu0 0.0
    %2584 = vmatmul.mubr.f32.gmra.mrb[0].mxu0 %v2512
    %v2585 = vpop.f32.mrb[0].mxu0
    %v2586 = vadd.f32 0.0, %v2585
    %v2587 = vpop.f32.mrb[0].mxu0
    %2588 = vdwg.mxu0
    %v2590 = vsel %vm2169, %v2336, 0
    %v2593 = vsel %vm2169, %v2337, 0
    %2595 = vmatprep.subr.mxu0 0.0
    %2596 = vmatpush1.msra.mxu0 %v1252
    %2597 = vmatprep.subr.mxu0 0.0
    %2598 = vmatpush1.msra.mxu0 %v1257
    %2599 = vmatprep.subr.mxu0 0.0
    %2600 = vmatpush1.msra.mxu0 0.0
    %2601 = vmatprep.subr.mxu0 0.0
    %2602 = vmatpush1.msra.mxu0 0.0
    %2603 = vmatprep.subr.mxu0 0.0
    %2604 = vmatpush1.msra.mxu0 0.0
    %2605 = vmatprep.subr.mxu0 0.0
    %2606 = vmatpush1.msra.mxu0 0.0
    %2607 = vmatprep.subr.mxu0 0.0
    %2608 = vmatpush1.msra.mxu0 0.0
    %2609 = vmatprep.subr.mxu0 0.0
    %2610 = vmatpush1.msra.mxu0 0.0
    %2611 = vmatprep.subr.mxu0 0.0
    %2612 = vmatpush1.msra.mxu0 0.0
    %2613 = vmatprep.subr.mxu0 0.0
    %2614 = vmatpush1.msra.mxu0 0.0
    %2615 = vmatprep.subr.mxu0 0.0
    %2616 = vmatpush1.msra.mxu0 0.0
    %2617 = vmatprep.subr.mxu0 0.0
    %2618 = vmatpush1.msra.mxu0 0.0
    %2619 = vmatprep.subr.mxu0 0.0
    %2620 = vmatpush1.msra.mxu0 0.0
    %2621 = vmatprep.subr.mxu0 0.0
    %2622 = vmatpush1.msra.mxu0 0.0
    %2623 = vmatprep.subr.mxu0 0.0
    %2624 = vmatpush1.msra.mxu0 0.0
    %2625 = vmatprep.subr.mxu0 0.0
    %2626 = vmatpush1.msra.mxu0 0.0
    %2627 = vmatprep.subr.mxu0 0.0
    %2628 = vmatpush1.msra.mxu0 0.0
    %2629 = vmatprep.subr.mxu0 0.0
    %2630 = vmatpush1.msra.mxu0 0.0
    %2631 = vmatprep.subr.mxu0 0.0
    %2632 = vmatpush1.msra.mxu0 0.0
    %2633 = vmatprep.subr.mxu0 0.0
    %2634 = vmatpush1.msra.mxu0 0.0
    %2635 = vmatprep.subr.mxu0 0.0
    %2636 = vmatpush1.msra.mxu0 0.0
    %2637 = vmatprep.subr.mxu0 0.0
    %2638 = vmatpush1.msra.mxu0 0.0
    %2639 = vmatprep.subr.mxu0 0.0
    %2640 = vmatpush1.msra.mxu0 0.0
    %2641 = vmatprep.subr.mxu0 0.0
    %2642 = vmatpush1.msra.mxu0 0.0
    %2643 = vmatprep.subr.mxu0 0.0
    %2644 = vmatpush1.msra.mxu0 0.0
    %2645 = vmatprep.subr.mxu0 0.0
    %2646 = vmatpush1.msra.mxu0 0.0
    %2647 = vmatprep.subr.mxu0 0.0
    %2648 = vmatpush1.msra.mxu0 0.0
    %2649 = vmatprep.subr.mxu0 0.0
    %2650 = vmatpush1.msra.mxu0 0.0
    %2651 = vmatprep.subr.mxu0 0.0
    %2652 = vmatpush1.msra.mxu0 0.0
    %2653 = vmatprep.subr.mxu0 0.0
    %2654 = vmatpush1.msra.mxu0 0.0
    %2655 = vmatprep.subr.mxu0 0.0
    %2656 = vmatpush1.msra.mxu0 0.0
    %2657 = vmatprep.subr.mxu0 0.0
    %2658 = vmatpush1.msra.mxu0 0.0
    %2659 = vmatprep.mubr.f32.mxu0 0.0
    %2660 = vmatmul.mubr.f32.gmra.mrb[0].mxu0 %v2590
    %v2661 = vpop.f32.mrb[0].mxu0
    %v2662 = vadd.f32 0.0, %v2661
    %v2663 = vpop.f32.mrb[0].mxu0
    %2664 = vmatprep.mubr.f32.mxu0 0.0
    %2665 = vmatmul.mubr.f32.gmra.mrb[0].mxu0 %v2593
    %v2666 = vpop.f32.mrb[0].mxu0
    %v2667 = vadd.f32 0.0, %v2666
    %v2668 = vpop.f32.mrb[0].mxu0
    %2669 = vdwg.mxu0
    %v2671 = vsel %vm2169, %v2338, 0
    %v2674 = vsel %vm2169, %v2339, 0
    %2676 = vmatprep.subr.mxu0 0.0
    %2677 = vmatpush1.msra.mxu0 %v1340
    %2678 = vmatprep.subr.mxu0 0.0
    %2679 = vmatpush1.msra.mxu0 %v1345
    %2680 = vmatprep.subr.mxu0 0.0
    %2681 = vmatpush1.msra.mxu0 0.0
    %2682 = vmatprep.subr.mxu0 0.0
    %2683 = vmatpush1.msra.mxu0 0.0
    %2684 = vmatprep.subr.mxu0 0.0
    %2685 = vmatpush1.msra.mxu0 0.0
    %2686 = vmatprep.subr.mxu0 0.0
    %2687 = vmatpush1.msra.mxu0 0.0
    %2688 = vmatprep.subr.mxu0 0.0
    %2689 = vmatpush1.msra.mxu0 0.0
    %2690 = vmatprep.subr.mxu0 0.0
    %2691 = vmatpush1.msra.mxu0 0.0
    %2692 = vmatprep.subr.mxu0 0.0
    %2693 = vmatpush1.msra.mxu0 0.0
    %2694 = vmatprep.subr.mxu0 0.0
    %2695 = vmatpush1.msra.mxu0 0.0
    %2696 = vmatprep.subr.mxu0 0.0
    %2697 = vmatpush1.msra.mxu0 0.0
    %2698 = vmatprep.subr.mxu0 0.0
    %2699 = vmatpush1.msra.mxu0 0.0
    %2700 = vmatprep.subr.mxu0 0.0
    %2701 = vmatpush1.msra.mxu0 0.0
    %2702 = vmatprep.subr.mxu0 0.0
    %2703 = vmatpush1.msra.mxu0 0.0
    %2704 = vmatprep.subr.mxu0 0.0
    %2705 = vmatpush1.msra.mxu0 0.0
    %2706 = vmatprep.subr.mxu0 0.0
    %2707 = vmatpush1.msra.mxu0 0.0
    %2708 = vmatprep.subr.mxu0 0.0
    %2709 = vmatpush1.msra.mxu0 0.0
    %2710 = vmatprep.subr.mxu0 0.0
    %2711 = vmatpush1.msra.mxu0 0.0
    %2712 = vmatprep.subr.mxu0 0.0
    %2713 = vmatpush1.msra.mxu0 0.0
    %2714 = vmatprep.subr.mxu0 0.0
    %2715 = vmatpush1.msra.mxu0 0.0
    %2716 = vmatprep.subr.mxu0 0.0
    %2717 = vmatpush1.msra.mxu0 0.0
    %2718 = vmatprep.subr.mxu0 0.0
    %2719 = vmatpush1.msra.mxu0 0.0
    %2720 = vmatprep.subr.mxu0 0.0
    %2721 = vmatpush1.msra.mxu0 0.0
    %2722 = vmatprep.subr.mxu0 0.0
    %2723 = vmatpush1.msra.mxu0 0.0
    %2724 = vmatprep.subr.mxu0 0.0
    %2725 = vmatpush1.msra.mxu0 0.0
    %2726 = vmatprep.subr.mxu0 0.0
    %2727 = vmatpush1.msra.mxu0 0.0
    %2728 = vmatprep.subr.mxu0 0.0
    %2729 = vmatpush1.msra.mxu0 0.0
    %2730 = vmatprep.subr.mxu0 0.0
    %2731 = vmatpush1.msra.mxu0 0.0
    %2732 = vmatprep.subr.mxu0 0.0
    %2733 = vmatpush1.msra.mxu0 0.0
    %2734 = vmatprep.subr.mxu0 0.0
    %2735 = vmatpush1.msra.mxu0 0.0
    %2736 = vmatprep.subr.mxu0 0.0
    %2737 = vmatpush1.msra.mxu0 0.0
    %2738 = vmatprep.subr.mxu0 0.0
    %2739 = vmatpush1.msra.mxu0 0.0
    %2740 = vmatprep.mubr.f32.mxu0 0.0
    %2741 = vmatmul.mubr.f32.gmra.mrb[0].mxu0 %v2671
    %v2742 = vpop.f32.mrb[0].mxu0
    %v2743 = vadd.f32 0.0, %v2742
    %v2744 = vpop.f32.mrb[0].mxu0
    %2745 = vmatprep.mubr.f32.mxu0 0.0
    %2746 = vmatmul.mubr.f32.gmra.mrb[0].mxu0 %v2674
    %v2747 = vpop.f32.mrb[0].mxu0
    %v2748 = vadd.f32 0.0, %v2747
    %v2749 = vpop.f32.mrb[0].mxu0
    %2750 = vdwg.mxu0
    %v2752 = vsel %vm2169, %v2340, 0
    %v2755 = vsel %vm2169, %v2341, 0
    %2757 = vmatprep.subr.mxu0 0.0
    %2758 = vmatpush1.msra.mxu0 %v1350
    %2759 = vmatprep.subr.mxu0 0.0
    %2760 = vmatpush1.msra.mxu0 %v1355
    %2761 = vmatprep.subr.mxu0 0.0
    %2762 = vmatpush1.msra.mxu0 0.0
    %2763 = vmatprep.subr.mxu0 0.0
    %2764 = vmatpush1.msra.mxu0 0.0
    %2765 = vmatprep.subr.mxu0 0.0
    %2766 = vmatpush1.msra.mxu0 0.0
    %2767 = vmatprep.subr.mxu0 0.0
    %2768 = vmatpush1.msra.mxu0 0.0
    %2769 = vmatprep.subr.mxu0 0.0
    %2770 = vmatpush1.msra.mxu0 0.0
    %2771 = vmatprep.subr.mxu0 0.0
    %2772 = vmatpush1.msra.mxu0 0.0
    %2773 = vmatprep.subr.mxu0 0.0
    %2774 = vmatpush1.msra.mxu0 0.0
    %2775 = vmatprep.subr.mxu0 0.0
    %2776 = vmatpush1.msra.mxu0 0.0
    %2777 = vmatprep.subr.mxu0 0.0
    %2778 = vmatpush1.msra.mxu0 0.0
    %2779 = vmatprep.subr.mxu0 0.0
    %2780 = vmatpush1.msra.mxu0 0.0
    %2781 = vmatprep.subr.mxu0 0.0
    %2782 = vmatpush1.msra.mxu0 0.0
    %2783 = vmatprep.subr.mxu0 0.0
    %2784 = vmatpush1.msra.mxu0 0.0
    %2785 = vmatprep.subr.mxu0 0.0
    %2786 = vmatpush1.msra.mxu0 0.0
    %2787 = vmatprep.subr.mxu0 0.0
    %2788 = vmatpush1.msra.mxu0 0.0
    %2789 = vmatprep.subr.mxu0 0.0
    %2790 = vmatpush1.msra.mxu0 0.0
    %2791 = vmatprep.subr.mxu0 0.0
    %2792 = vmatpush1.msra.mxu0 0.0
    %2793 = vmatprep.subr.mxu0 0.0
    %2794 = vmatpush1.msra.mxu0 0.0
    %2795 = vmatprep.subr.mxu0 0.0
    %2796 = vmatpush1.msra.mxu0 0.0
    %2797 = vmatprep.subr.mxu0 0.0
    %2798 = vmatpush1.msra.mxu0 0.0
    %2799 = vmatprep.subr.mxu0 0.0
    %2800 = vmatpush1.msra.mxu0 0.0
    %2801 = vmatprep.subr.mxu0 0.0
    %2802 = vmatpush1.msra.mxu0 0.0
    %2803 = vmatprep.subr.mxu0 0.0
    %2804 = vmatpush1.msra.mxu0 0.0
    %2805 = vmatprep.subr.mxu0 0.0
    %2806 = vmatpush1.msra.mxu0 0.0
    %2807 = vmatprep.subr.mxu0 0.0
    %2808 = vmatpush1.msra.mxu0 0.0
    %2809 = vmatprep.subr.mxu0 0.0
    %2810 = vmatpush1.msra.mxu0 0.0
    %2811 = vmatprep.subr.mxu0 0.0
    %2812 = vmatpush1.msra.mxu0 0.0
    %2813 = vmatprep.subr.mxu0 0.0
    %2814 = vmatpush1.msra.mxu0 0.0
    %2815 = vmatprep.subr.mxu0 0.0
    %2816 = vmatpush1.msra.mxu0 0.0
    %2817 = vmatprep.subr.mxu0 0.0
    %2818 = vmatpush1.msra.mxu0 0.0
    %2819 = vmatprep.subr.mxu0 0.0
    %2820 = vmatpush1.msra.mxu0 0.0
    %2821 = vmatprep.mubr.f32.mxu0 0.0
    %2822 = vmatmul.mubr.f32.gmra.mrb[0].mxu0 %v2752
    %v2823 = vpop.f32.mrb[0].mxu0
    %v2824 = vadd.f32 0.0, %v2823
    %v2825 = vpop.f32.mrb[0].mxu0
    %2826 = vmatprep.mubr.f32.mxu0 0.0
    %2827 = vmatmul.mubr.f32.gmra.mrb[0].mxu0 %v2755
    %v2828 = vpop.f32.mrb[0].mxu0
    %v2829 = vadd.f32 0.0, %v2828
    %v2830 = vpop.f32.mrb[0].mxu0
    %2831 = vdwg.mxu0
    %v2833 = vsel %vm2169, %v2342, 0
    %v2836 = vsel %vm2169, %v2343, 0
    %2838 = vmatprep.subr.mxu0 0.0
    %2839 = vmatpush1.msra.mxu0 %v1438
    %2840 = vmatprep.subr.mxu0 0.0
    %2841 = vmatpush1.msra.mxu0 %v1443
    %2842 = vmatprep.subr.mxu0 0.0
    %2843 = vmatpush1.msra.mxu0 0.0
    %2844 = vmatprep.subr.mxu0 0.0
    %2845 = vmatpush1.msra.mxu0 0.0
    %2846 = vmatprep.subr.mxu0 0.0
    %2847 = vmatpush1.msra.mxu0 0.0
    %2848 = vmatprep.subr.mxu0 0.0
    %2849 = vmatpush1.msra.mxu0 0.0
    %2850 = vmatprep.subr.mxu0 0.0
    %2851 = vmatpush1.msra.mxu0 0.0
    %2852 = vmatprep.subr.mxu0 0.0
    %2853 = vmatpush1.msra.mxu0 0.0
    %2854 = vmatprep.subr.mxu0 0.0
    %2855 = vmatpush1.msra.mxu0 0.0
    %2856 = vmatprep.subr.mxu0 0.0
    %2857 = vmatpush1.msra.mxu0 0.0
    %2858 = vmatprep.subr.mxu0 0.0
    %2859 = vmatpush1.msra.mxu0 0.0
    %2860 = vmatprep.subr.mxu0 0.0
    %2861 = vmatpush1.msra.mxu0 0.0
    %2862 = vmatprep.subr.mxu0 0.0
    %2863 = vmatpush1.msra.mxu0 0.0
    %2864 = vmatprep.subr.mxu0 0.0
    %2865 = vmatpush1.msra.mxu0 0.0
    %2866 = vmatprep.subr.mxu0 0.0
    %2867 = vmatpush1.msra.mxu0 0.0
    %2868 = vmatprep.subr.mxu0 0.0
    %2869 = vmatpush1.msra.mxu0 0.0
    %2870 = vmatprep.subr.mxu0 0.0
    %2871 = vmatpush1.msra.mxu0 0.0
    %2872 = vmatprep.subr.mxu0 0.0
    %2873 = vmatpush1.msra.mxu0 0.0
    %2874 = vmatprep.subr.mxu0 0.0
    %2875 = vmatpush1.msra.mxu0 0.0
    %2876 = vmatprep.subr.mxu0 0.0
    %2877 = vmatpush1.msra.mxu0 0.0
    %2878 = vmatprep.subr.mxu0 0.0
    %2879 = vmatpush1.msra.mxu0 0.0
    %2880 = vmatprep.subr.mxu0 0.0
    %2881 = vmatpush1.msra.mxu0 0.0
    %2882 = vmatprep.subr.mxu0 0.0
    %2883 = vmatpush1.msra.mxu0 0.0
    %2884 = vmatprep.subr.mxu0 0.0
    %2885 = vmatpush1.msra.mxu0 0.0
    %2886 = vmatprep.subr.mxu0 0.0
    %2887 = vmatpush1.msra.mxu0 0.0
    %2888 = vmatprep.subr.mxu0 0.0
    %2889 = vmatpush1.msra.mxu0 0.0
    %2890 = vmatprep.subr.mxu0 0.0
    %2891 = vmatpush1.msra.mxu0 0.0
    %2892 = vmatprep.subr.mxu0 0.0
    %2893 = vmatpush1.msra.mxu0 0.0
    %2894 = vmatprep.subr.mxu0 0.0
    %2895 = vmatpush1.msra.mxu0 0.0
    %2896 = vmatprep.subr.mxu0 0.0
    %2897 = vmatpush1.msra.mxu0 0.0
    %2898 = vmatprep.subr.mxu0 0.0
    %2899 = vmatpush1.msra.mxu0 0.0
    %2900 = vmatprep.subr.mxu0 0.0
    %2901 = vmatpush1.msra.mxu0 0.0
    %2902 = vmatprep.mubr.f32.mxu0 0.0
    %2903 = vmatmul.mubr.f32.gmra.mrb[0].mxu0 %v2833
    %v2904 = vpop.f32.mrb[0].mxu0
    %v2905 = vadd.f32 0.0, %v2904
    %v2906 = vpop.f32.mrb[0].mxu0
    %2907 = vmatprep.mubr.f32.mxu0 0.0
    %2908 = vmatmul.mubr.f32.gmra.mrb[0].mxu0 %v2836
    %v2909 = vpop.f32.mrb[0].mxu0
    %v2910 = vadd.f32 0.0, %v2909
    %v2911 = vpop.f32.mrb[0].mxu0
    %2912 = vdwg.mxu0
    %v2914 = vsel %vm2169, %v2344, 0
    %v2917 = vsel %vm2169, %v2345, 0
    %2919 = vmatprep.subr.mxu0 0.0
    %2920 = vmatpush1.msra.mxu0 %v1448
    %2921 = vmatprep.subr.mxu0 0.0
    %2922 = vmatpush1.msra.mxu0 %v1453
    %2923 = vmatprep.subr.mxu0 0.0
    %2924 = vmatpush1.msra.mxu0 0.0
    %2925 = vmatprep.subr.mxu0 0.0
    %2926 = vmatpush1.msra.mxu0 0.0
    %2927 = vmatprep.subr.mxu0 0.0
    %2928 = vmatpush1.msra.mxu0 0.0
    %2929 = vmatprep.subr.mxu0 0.0
    %2930 = vmatpush1.msra.mxu0 0.0
    %2931 = vmatprep.subr.mxu0 0.0
    %2932 = vmatpush1.msra.mxu0 0.0
    %2933 = vmatprep.subr.mxu0 0.0
    %2934 = vmatpush1.msra.mxu0 0.0
    %2935 = vmatprep.subr.mxu0 0.0
    %2936 = vmatpush1.msra.mxu0 0.0
    %2937 = vmatprep.subr.mxu0 0.0
    %2938 = vmatpush1.msra.mxu0 0.0
    %2939 = vmatprep.subr.mxu0 0.0
    %2940 = vmatpush1.msra.mxu0 0.0
    %2941 = vmatprep.subr.mxu0 0.0
    %2942 = vmatpush1.msra.mxu0 0.0
    %2943 = vmatprep.subr.mxu0 0.0
    %2944 = vmatpush1.msra.mxu0 0.0
    %2945 = vmatprep.subr.mxu0 0.0
    %2946 = vmatpush1.msra.mxu0 0.0
    %2947 = vmatprep.subr.mxu0 0.0
    %2948 = vmatpush1.msra.mxu0 0.0
    %2949 = vmatprep.subr.mxu0 0.0
    %2950 = vmatpush1.msra.mxu0 0.0
    %2951 = vmatprep.subr.mxu0 0.0
    %2952 = vmatpush1.msra.mxu0 0.0
    %2953 = vmatprep.subr.mxu0 0.0
    %2954 = vmatpush1.msra.mxu0 0.0
    %2955 = vmatprep.subr.mxu0 0.0
    %2956 = vmatpush1.msra.mxu0 0.0
    %2957 = vmatprep.subr.mxu0 0.0
    %2958 = vmatpush1.msra.mxu0 0.0
    %2959 = vmatprep.subr.mxu0 0.0
    %2960 = vmatpush1.msra.mxu0 0.0
    %2961 = vmatprep.subr.mxu0 0.0
    %2962 = vmatpush1.msra.mxu0 0.0
    %2963 = vmatprep.subr.mxu0 0.0
    %2964 = vmatpush1.msra.mxu0 0.0
    %2965 = vmatprep.subr.mxu0 0.0
    %2966 = vmatpush1.msra.mxu0 0.0
    %2967 = vmatprep.subr.mxu0 0.0
    %2968 = vmatpush1.msra.mxu0 0.0
    %2969 = vmatprep.subr.mxu0 0.0
    %2970 = vmatpush1.msra.mxu0 0.0
    %2971 = vmatprep.subr.mxu0 0.0
    %2972 = vmatpush1.msra.mxu0 0.0
    %2973 = vmatprep.subr.mxu0 0.0
    %2974 = vmatpush1.msra.mxu0 0.0
    %2975 = vmatprep.subr.mxu0 0.0
    %2976 = vmatpush1.msra.mxu0 0.0
    %2977 = vmatprep.subr.mxu0 0.0
    %2978 = vmatpush1.msra.mxu0 0.0
    %2979 = vmatprep.subr.mxu0 0.0
    %2980 = vmatpush1.msra.mxu0 0.0
    %2981 = vmatprep.subr.mxu0 0.0
    %2982 = vmatpush1.msra.mxu0 0.0
    %2983 = vmatprep.mubr.f32.mxu0 0.0
    %2984 = vmatmul.mubr.f32.gmra.mrb[0].mxu0 %v2914
    %v2985 = vpop.f32.mrb[0].mxu0
    %v2986 = vadd.f32 0.0, %v2985
    %v2987 = vpop.f32.mrb[0].mxu0
    %2988 = vmatprep.mubr.f32.mxu0 0.0
    %2989 = vmatmul.mubr.f32.gmra.mrb[0].mxu0 %v2917
    %v2990 = vpop.f32.mrb[0].mxu0
    %v2991 = vadd.f32 0.0, %v2990
    %v2992 = vpop.f32.mrb[0].mxu0
    %2993 = vdwg.mxu0
    %v2994 = vld [vmem:[%s5] sm:$0xff]
    %s2995 = scalar_lea.vmem %s5, 8
    %v2996 = vld [vmem:[%s2995] sm:$0xff]
    %v2998 = vsel %vm1456, %v2581, 0
    %v3001 = vsel %vm1456, %v2586, 0
    %v3004 = vsel %vm1456, %v2662, 0
    %v3007 = vsel %vm1456, %v2667, 0
    %3009 = vmatprep.subr.mxu0 0.0
    %3010 = vmatpush1.msra.mxu0 %v2996
    %3011 = vmatprep.subr.mxu0 0.0
    %3012 = vmatpush1.msra.mxu0 0.0
    %3013 = vmatprep.subr.mxu0 0.0
    %3014 = vmatpush1.msra.mxu0 0.0
    %3015 = vmatprep.subr.mxu0 0.0
    %3016 = vmatpush1.msra.mxu0 0.0
    %3017 = vmatprep.subr.mxu0 0.0
    %3018 = vmatpush1.msra.mxu0 0.0
    %3019 = vmatprep.subr.mxu0 0.0
    %3020 = vmatpush1.msra.mxu0 0.0
    %3021 = vmatprep.subr.mxu0 0.0
    %3022 = vmatpush1.msra.mxu0 0.0
    %3023 = vmatprep.subr.mxu0 0.0
    %3024 = vmatpush1.msra.mxu0 0.0
    %3025 = vmatprep.subr.mxu0 0.0
    %3026 = vmatpush1.msra.mxu0 0.0
    %3027 = vmatprep.subr.mxu0 0.0
    %3028 = vmatpush1.msra.mxu0 0.0
    %3029 = vmatprep.subr.mxu0 0.0
    %3030 = vmatpush1.msra.mxu0 0.0
    %3031 = vmatprep.subr.mxu0 0.0
    %3032 = vmatpush1.msra.mxu0 0.0
    %3033 = vmatprep.subr.mxu0 0.0
    %3034 = vmatpush1.msra.mxu0 0.0
    %3035 = vmatprep.subr.mxu0 0.0
    %3036 = vmatpush1.msra.mxu0 0.0
    %3037 = vmatprep.subr.mxu0 0.0
    %3038 = vmatpush1.msra.mxu0 0.0
    %3039 = vmatprep.subr.mxu0 0.0
    %3040 = vmatpush1.msra.mxu0 0.0
    %3041 = vmatprep.subr.mxu0 0.0
    %3042 = vmatpush1.msra.mxu0 0.0
    %3043 = vmatprep.subr.mxu0 0.0
    %3044 = vmatpush1.msra.mxu0 0.0
    %3045 = vmatprep.subr.mxu0 0.0
    %3046 = vmatpush1.msra.mxu0 0.0
    %3047 = vmatprep.subr.mxu0 0.0
    %3048 = vmatpush1.msra.mxu0 0.0
    %3049 = vmatprep.subr.mxu0 0.0
    %3050 = vmatpush1.msra.mxu0 0.0
    %3051 = vmatprep.subr.mxu0 0.0
    %3052 = vmatpush1.msra.mxu0 0.0
    %3053 = vmatprep.subr.mxu0 0.0
    %3054 = vmatpush1.msra.mxu0 0.0
    %3055 = vmatprep.subr.mxu0 0.0
    %3056 = vmatpush1.msra.mxu0 0.0
    %3057 = vmatprep.subr.mxu0 0.0
    %3058 = vmatpush1.msra.mxu0 0.0
    %3059 = vmatprep.subr.mxu0 0.0
    %3060 = vmatpush1.msra.mxu0 0.0
    %3061 = vmatprep.subr.mxu0 0.0
    %3062 = vmatpush1.msra.mxu0 0.0
    %3063 = vmatprep.subr.mxu0 0.0
    %3064 = vmatpush1.msra.mxu0 0.0
    %3065 = vmatprep.subr.mxu0 0.0
    %3066 = vmatpush1.msra.mxu0 0.0
    %3067 = vmatprep.subr.mxu0 0.0
    %3068 = vmatpush1.msra.mxu0 0.0
    %3069 = vmatprep.subr.mxu0 0.0
    %3070 = vmatpush1.msra.mxu0 0.0
    %3071 = vmatprep.subr.mxu0 0.0
    %3072 = vmatpush1.msra.mxu0 0.0
    %3073 = vmatprep.mubr.f32.mxu0 0.0
    %3074 = vmatmul.mubr.f32.gmra.mrb[0].mxu0 %v2998
    %v3075 = vpop.f32.mrb[0].mxu0
    %v3076 = vadd.f32 0.0, %v3075
    %v3077 = vpop.f32.mrb[0].mxu0
    %3078 = vmatprep.mubr.f32.mxu0 0.0
    %3079 = vmatmul.mubr.f32.gmra.mrb[0].mxu0 %v3001
    %v3080 = vpop.f32.mrb[0].mxu0
    %v3081 = vadd.f32 0.0, %v3080
    %v3082 = vpop.f32.mrb[0].mxu0
    %3083 = vmatprep.mubr.f32.mxu0 0.0
    %3084 = vmatmul.mubr.f32.gmra.mrb[0].mxu0 %v3004
    %v3085 = vpop.f32.mrb[0].mxu0
    %v3086 = vadd.f32 0.0, %v3085
    %v3087 = vpop.f32.mrb[0].mxu0
    %3088 = vmatprep.mubr.f32.mxu0 0.0
    %3089 = vmatmul.mubr.f32.gmra.mrb[0].mxu0 %v3007
    %v3090 = vpop.f32.mrb[0].mxu0
    %v3091 = vadd.f32 0.0, %v3090
    %v3092 = vpop.f32.mrb[0].mxu0
    %3093 = vdwg.mxu0
    %v3095 = vsel %vm1456, %v2419, 0
    %v3098 = vsel %vm1456, %v2424, 0
    %v3101 = vsel %vm1456, %v2500, 0
    %v3104 = vsel %vm1456, %v2505, 0
    %3106 = vmatprep.subr.mxu0 0.0
    %3107 = vmatpush1.msra.mxu0 %v2994
    %3108 = vmatprep.subr.mxu0 0.0
    %3109 = vmatpush1.msra.mxu0 0.0
    %3110 = vmatprep.subr.mxu0 0.0
    %3111 = vmatpush1.msra.mxu0 0.0
    %3112 = vmatprep.subr.mxu0 0.0
    %3113 = vmatpush1.msra.mxu0 0.0
    %3114 = vmatprep.subr.mxu0 0.0
    %3115 = vmatpush1.msra.mxu0 0.0
    %3116 = vmatprep.subr.mxu0 0.0
    %3117 = vmatpush1.msra.mxu0 0.0
    %3118 = vmatprep.subr.mxu0 0.0
    %3119 = vmatpush1.msra.mxu0 0.0
    %3120 = vmatprep.subr.mxu0 0.0
    %3121 = vmatpush1.msra.mxu0 0.0
    %3122 = vmatprep.subr.mxu0 0.0
    %3123 = vmatpush1.msra.mxu0 0.0
    %3124 = vmatprep.subr.mxu0 0.0
    %3125 = vmatpush1.msra.mxu0 0.0
    %3126 = vmatprep.subr.mxu0 0.0
    %3127 = vmatpush1.msra.mxu0 0.0
    %3128 = vmatprep.subr.mxu0 0.0
    %3129 = vmatpush1.msra.mxu0 0.0
    %3130 = vmatprep.subr.mxu0 0.0
    %3131 = vmatpush1.msra.mxu0 0.0
    %3132 = vmatprep.subr.mxu0 0.0
    %3133 = vmatpush1.msra.mxu0 0.0
    %3134 = vmatprep.subr.mxu0 0.0
    %3135 = vmatpush1.msra.mxu0 0.0
    %3136 = vmatprep.subr.mxu0 0.0
    %3137 = vmatpush1.msra.mxu0 0.0
    %3138 = vmatprep.subr.mxu0 0.0
    %3139 = vmatpush1.msra.mxu0 0.0
    %3140 = vmatprep.subr.mxu0 0.0
    %3141 = vmatpush1.msra.mxu0 0.0
    %3142 = vmatprep.subr.mxu0 0.0
    %3143 = vmatpush1.msra.mxu0 0.0
    %3144 = vmatprep.subr.mxu0 0.0
    %3145 = vmatpush1.msra.mxu0 0.0
    %3146 = vmatprep.subr.mxu0 0.0
    %3147 = vmatpush1.msra.mxu0 0.0
    %3148 = vmatprep.subr.mxu0 0.0
    %3149 = vmatpush1.msra.mxu0 0.0
    %3150 = vmatprep.subr.mxu0 0.0
    %3151 = vmatpush1.msra.mxu0 0.0
    %3152 = vmatprep.subr.mxu0 0.0
    %3153 = vmatpush1.msra.mxu0 0.0
    %3154 = vmatprep.subr.mxu0 0.0
    %3155 = vmatpush1.msra.mxu0 0.0
    %3156 = vmatprep.subr.mxu0 0.0
    %3157 = vmatpush1.msra.mxu0 0.0
    %3158 = vmatprep.subr.mxu0 0.0
    %3159 = vmatpush1.msra.mxu0 0.0
    %3160 = vmatprep.subr.mxu0 0.0
    %3161 = vmatpush1.msra.mxu0 0.0
    %3162 = vmatprep.subr.mxu0 0.0
    %3163 = vmatpush1.msra.mxu0 0.0
    %3164 = vmatprep.subr.mxu0 0.0
    %3165 = vmatpush1.msra.mxu0 0.0
    %3166 = vmatprep.subr.mxu0 0.0
    %3167 = vmatpush1.msra.mxu0 0.0
    %3168 = vmatprep.subr.mxu0 0.0
    %3169 = vmatpush1.msra.mxu0 0.0
    %3170 = vmatprep.mubr.f32.mxu0 0.0
    %3171 = vmatmul.mubr.f32.gmra.mrb[0].mxu0 %v3095
    %v3172 = vpop.f32.mrb[0].mxu0
    %v3173 = vadd.f32 %v3076, %v3172
    %v3174 = vpop.f32.mrb[0].mxu0
    %3175 = vmatprep.mubr.f32.mxu0 0.0
    %3176 = vmatmul.mubr.f32.gmra.mrb[0].mxu0 %v3098
    %v3177 = vpop.f32.mrb[0].mxu0
    %v3178 = vadd.f32 %v3081, %v3177
    %v3179 = vpop.f32.mrb[0].mxu0
    %3180 = vmatprep.mubr.f32.mxu0 0.0
    %3181 = vmatmul.mubr.f32.gmra.mrb[0].mxu0 %v3101
    %v3182 = vpop.f32.mrb[0].mxu0
    %v3183 = vadd.f32 %v3086, %v3182
    %v3184 = vpop.f32.mrb[0].mxu0
    %3185 = vmatprep.mubr.f32.mxu0 0.0
    %3186 = vmatmul.mubr.f32.gmra.mrb[0].mxu0 %v3104
    %v3187 = vpop.f32.mrb[0].mxu0
    %v3188 = vadd.f32 %v3091, %v3187
    %v3189 = vpop.f32.mrb[0].mxu0
    %3190 = vdwg.mxu0
    %s3191 = scalar_lea.vmem %s5, 16
    %v3192 = vld [vmem:[%s3191] sm:$0xff]
    %v3194 = vsel %vm1456, %v2743, 0
    %v3197 = vsel %vm1456, %v2748, 0
    %v3200 = vsel %vm1456, %v2824, 0
    %v3203 = vsel %vm1456, %v2829, 0
    %3205 = vmatprep.subr.mxu0 0.0
    %3206 = vmatpush1.msra.mxu0 %v3192
    %3207 = vmatprep.subr.mxu0 0.0
    %3208 = vmatpush1.msra.mxu0 0.0
    %3209 = vmatprep.subr.mxu0 0.0
    %3210 = vmatpush1.msra.mxu0 0.0
    %3211 = vmatprep.subr.mxu0 0.0
    %3212 = vmatpush1.msra.mxu0 0.0
    %3213 = vmatprep.subr.mxu0 0.0
    %3214 = vmatpush1.msra.mxu0 0.0
    %3215 = vmatprep.subr.mxu0 0.0
    %3216 = vmatpush1.msra.mxu0 0.0
    %3217 = vmatprep.subr.mxu0 0.0
    %3218 = vmatpush1.msra.mxu0 0.0
    %3219 = vmatprep.subr.mxu0 0.0
    %3220 = vmatpush1.msra.mxu0 0.0
    %3221 = vmatprep.subr.mxu0 0.0
    %3222 = vmatpush1.msra.mxu0 0.0
    %3223 = vmatprep.subr.mxu0 0.0
    %3224 = vmatpush1.msra.mxu0 0.0
    %3225 = vmatprep.subr.mxu0 0.0
    %3226 = vmatpush1.msra.mxu0 0.0
    %3227 = vmatprep.subr.mxu0 0.0
    %3228 = vmatpush1.msra.mxu0 0.0
    %3229 = vmatprep.subr.mxu0 0.0
    %3230 = vmatpush1.msra.mxu0 0.0
    %3231 = vmatprep.subr.mxu0 0.0
    %3232 = vmatpush1.msra.mxu0 0.0
    %3233 = vmatprep.subr.mxu0 0.0
    %3234 = vmatpush1.msra.mxu0 0.0
    %3235 = vmatprep.subr.mxu0 0.0
    %3236 = vmatpush1.msra.mxu0 0.0
    %3237 = vmatprep.subr.mxu0 0.0
    %3238 = vmatpush1.msra.mxu0 0.0
    %3239 = vmatprep.subr.mxu0 0.0
    %3240 = vmatpush1.msra.mxu0 0.0
    %3241 = vmatprep.subr.mxu0 0.0
    %3242 = vmatpush1.msra.mxu0 0.0
    %3243 = vmatprep.subr.mxu0 0.0
    %3244 = vmatpush1.msra.mxu0 0.0
    %3245 = vmatprep.subr.mxu0 0.0
    %3246 = vmatpush1.msra.mxu0 0.0
    %3247 = vmatprep.subr.mxu0 0.0
    %3248 = vmatpush1.msra.mxu0 0.0
    %3249 = vmatprep.subr.mxu0 0.0
    %3250 = vmatpush1.msra.mxu0 0.0
    %3251 = vmatprep.subr.mxu0 0.0
    %3252 = vmatpush1.msra.mxu0 0.0
    %3253 = vmatprep.subr.mxu0 0.0
    %3254 = vmatpush1.msra.mxu0 0.0
    %3255 = vmatprep.subr.mxu0 0.0
    %3256 = vmatpush1.msra.mxu0 0.0
    %3257 = vmatprep.subr.mxu0 0.0
    %3258 = vmatpush1.msra.mxu0 0.0
    %3259 = vmatprep.subr.mxu0 0.0
    %3260 = vmatpush1.msra.mxu0 0.0
    %3261 = vmatprep.subr.mxu0 0.0
    %3262 = vmatpush1.msra.mxu0 0.0
    %3263 = vmatprep.subr.mxu0 0.0
    %3264 = vmatpush1.msra.mxu0 0.0
    %3265 = vmatprep.subr.mxu0 0.0
    %3266 = vmatpush1.msra.mxu0 0.0
    %3267 = vmatprep.subr.mxu0 0.0
    %3268 = vmatpush1.msra.mxu0 0.0
    %3269 = vmatprep.mubr.f32.mxu0 0.0
    %3270 = vmatmul.mubr.f32.gmra.mrb[0].mxu0 %v3194
    %v3271 = vpop.f32.mrb[0].mxu0
    %v3272 = vadd.f32 0.0, %v3271
    %v3273 = vpop.f32.mrb[0].mxu0
    %3274 = vmatprep.mubr.f32.mxu0 0.0
    %3275 = vmatmul.mubr.f32.gmra.mrb[0].mxu0 %v3197
    %v3276 = vpop.f32.mrb[0].mxu0
    %v3277 = vadd.f32 0.0, %v3276
    %v3278 = vpop.f32.mrb[0].mxu0
    %3279 = vmatprep.mubr.f32.mxu0 0.0
    %3280 = vmatmul.mubr.f32.gmra.mrb[0].mxu0 %v3200
    %v3281 = vpop.f32.mrb[0].mxu0
    %v3282 = vadd.f32 0.0, %v3281
    %v3283 = vpop.f32.mrb[0].mxu0
    %3284 = vmatprep.mubr.f32.mxu0 0.0
    %3285 = vmatmul.mubr.f32.gmra.mrb[0].mxu0 %v3203
    %v3286 = vpop.f32.mrb[0].mxu0
    %v3287 = vadd.f32 0.0, %v3286
    %v3288 = vpop.f32.mrb[0].mxu0
    %3289 = vdwg.mxu0
    %v3290 = vadd.f32 %v3173, %v3272
    %v3291 = vadd.f32 %v3178, %v3277
    %v3292 = vadd.f32 %v3183, %v3282
    %v3293 = vadd.f32 %v3188, %v3287
    %s3294 = scalar_lea.vmem %s5, 24
    %v3295 = vld [vmem:[%s3294] sm:$0xff]
    %v3297 = vsel %vm1456, %v2905, 0
    %v3300 = vsel %vm1456, %v2910, 0
    %v3303 = vsel %vm1456, %v2986, 0
    %v3306 = vsel %vm1456, %v2991, 0
    %3308 = vmatprep.subr.mxu0 0.0
    %3309 = vmatpush1.msra.mxu0 %v3295
    %3310 = vmatprep.subr.mxu0 0.0
    %3311 = vmatpush1.msra.mxu0 0.0
    %3312 = vmatprep.subr.mxu0 0.0
    %3313 = vmatpush1.msra.mxu0 0.0
    %3314 = vmatprep.subr.mxu0 0.0
    %3315 = vmatpush1.msra.mxu0 0.0
    %3316 = vmatprep.subr.mxu0 0.0
    %3317 = vmatpush1.msra.mxu0 0.0
    %3318 = vmatprep.subr.mxu0 0.0
    %3319 = vmatpush1.msra.mxu0 0.0
    %3320 = vmatprep.subr.mxu0 0.0
    %3321 = vmatpush1.msra.mxu0 0.0
    %3322 = vmatprep.subr.mxu0 0.0
    %3323 = vmatpush1.msra.mxu0 0.0
    %3324 = vmatprep.subr.mxu0 0.0
    %3325 = vmatpush1.msra.mxu0 0.0
    %3326 = vmatprep.subr.mxu0 0.0
    %3327 = vmatpush1.msra.mxu0 0.0
    %3328 = vmatprep.subr.mxu0 0.0
    %3329 = vmatpush1.msra.mxu0 0.0
    %3330 = vmatprep.subr.mxu0 0.0
    %3331 = vmatpush1.msra.mxu0 0.0
    %3332 = vmatprep.subr.mxu0 0.0
    %3333 = vmatpush1.msra.mxu0 0.0
    %3334 = vmatprep.subr.mxu0 0.0
    %3335 = vmatpush1.msra.mxu0 0.0
    %3336 = vmatprep.subr.mxu0 0.0
    %3337 = vmatpush1.msra.mxu0 0.0
    %3338 = vmatprep.subr.mxu0 0.0
    %3339 = vmatpush1.msra.mxu0 0.0
    %3340 = vmatprep.subr.mxu0 0.0
    %3341 = vmatpush1.msra.mxu0 0.0
    %3342 = vmatprep.subr.mxu0 0.0
    %3343 = vmatpush1.msra.mxu0 0.0
    %3344 = vmatprep.subr.mxu0 0.0
    %3345 = vmatpush1.msra.mxu0 0.0
    %3346 = vmatprep.subr.mxu0 0.0
    %3347 = vmatpush1.msra.mxu0 0.0
    %3348 = vmatprep.subr.mxu0 0.0
    %3349 = vmatpush1.msra.mxu0 0.0
    %3350 = vmatprep.subr.mxu0 0.0
    %3351 = vmatpush1.msra.mxu0 0.0
    %3352 = vmatprep.subr.mxu0 0.0
    %3353 = vmatpush1.msra.mxu0 0.0
    %3354 = vmatprep.subr.mxu0 0.0
    %3355 = vmatpush1.msra.mxu0 0.0
    %3356 = vmatprep.subr.mxu0 0.0
    %3357 = vmatpush1.msra.mxu0 0.0
    %3358 = vmatprep.subr.mxu0 0.0
    %3359 = vmatpush1.msra.mxu0 0.0
    %3360 = vmatprep.subr.mxu0 0.0
    %3361 = vmatpush1.msra.mxu0 0.0
    %3362 = vmatprep.subr.mxu0 0.0
    %3363 = vmatpush1.msra.mxu0 0.0
    %3364 = vmatprep.subr.mxu0 0.0
    %3365 = vmatpush1.msra.mxu0 0.0
    %3366 = vmatprep.subr.mxu0 0.0
    %3367 = vmatpush1.msra.mxu0 0.0
    %3368 = vmatprep.subr.mxu0 0.0
    %3369 = vmatpush1.msra.mxu0 0.0
    %3370 = vmatprep.subr.mxu0 0.0
    %3371 = vmatpush1.msra.mxu0 0.0
    %3372 = vmatprep.mubr.f32.mxu0 0.0
    %3373 = vmatmul.mubr.f32.gmra.mrb[0].mxu0 %v3297
    %v3374 = vpop.f32.mrb[0].mxu0
    %v3375 = vadd.f32 0.0, %v3374
    %v3376 = vpop.f32.mrb[0].mxu0
    %3377 = vmatprep.mubr.f32.mxu0 0.0
    %3378 = vmatmul.mubr.f32.gmra.mrb[0].mxu0 %v3300
    %v3379 = vpop.f32.mrb[0].mxu0
    %v3380 = vadd.f32 0.0, %v3379
    %v3381 = vpop.f32.mrb[0].mxu0
    %3382 = vmatprep.mubr.f32.mxu0 0.0
    %3383 = vmatmul.mubr.f32.gmra.mrb[0].mxu0 %v3303
    %v3384 = vpop.f32.mrb[0].mxu0
    %v3385 = vadd.f32 0.0, %v3384
    %v3386 = vpop.f32.mrb[0].mxu0
    %3387 = vmatprep.mubr.f32.mxu0 0.0
    %3388 = vmatmul.mubr.f32.gmra.mrb[0].mxu0 %v3306
    %v3389 = vpop.f32.mrb[0].mxu0
    %v3390 = vadd.f32 0.0, %v3389
    %v3391 = vpop.f32.mrb[0].mxu0
    %3392 = vdwg.mxu0
    %v3393 = vadd.f32 %v3290, %v3375
    %v3394 = vadd.f32 %v3291, %v3380
    %v3395 = vadd.f32 %v3292, %v3385
    %v3396 = vadd.f32 %v3293, %v3390
    %v3397 = vld [vmem:[%s9] sm:$0x1]
    %v3399 = vlaneseq
    %v3400 = vshrl.u32 %v3399, 7
    %v3401 = vsub.s32 0, %v3400
    %v3402 = vrot.slane %v3397, %v3401
    %v3404 = vadd.f32 %v3393, %v3402
    %v3405 = vadd.f32 %v3394, %v3402
    %v3406 = vadd.f32 %v3395, %v3402
    %v3407 = vadd.f32 %v3396, %v3402
    %v3408 = vadd.f32 %v266, %v3404
    %v3409 = vadd.f32 %v267, %v3405
    %v3410 = vadd.f32 %v268, %v3406
    %v3411 = vadd.f32 %v269, %v3407
    %s3412 = scalar_lea.vmem %s9, 2
    %v3413 = vld [vmem:[%s3412] sm:$0x1]
    %s3414 = scalar_lea.vmem %s9, 3
    %v3415 = vld [vmem:[%s3414] sm:$0x1]
    %v3416 = vsel %vm196, %v3408, 0.0
    %3417 = vadd.xlane.f32.xlu0 %v3416
    %v3418 = vpop.xlane.xlu0 %3417
    %v3419 = vsel %vm196, %v3409, 0.0
    %3420 = vadd.xlane.f32.xlu0 %v3419
    %v3421 = vpop.xlane.xlu0 %3420
    %v3422 = vsel %vm196, %v3410, 0.0
    %3423 = vadd.xlane.f32.xlu0 %v3422
    %v3424 = vpop.xlane.xlu0 %3423
    %v3425 = vsel %vm196, %v3411, 0.0
    %3426 = vadd.xlane.f32.xlu0 %v3425
    %v3427 = vpop.xlane.xlu0 %3426
    %v3428 = vmul.f32 %v3418, %v209
    %v3429 = vmul.f32 %v3421, %v209
    %v3430 = vmul.f32 %v3424, %v209
    %v3431 = vmul.f32 %v3427, %v209
    %v3432 = vsub.f32 %v3408, %v3428
    %v3433 = vsub.f32 %v3409, %v3429
    %v3434 = vsub.f32 %v3410, %v3430
    %v3435 = vsub.f32 %v3411, %v3431
    %v3436 = vmul.f32 %v3432, %v3432
    %v3437 = vmul.f32 %v3433, %v3433
    %v3438 = vmul.f32 %v3434, %v3434
    %v3439 = vmul.f32 %v3435, %v3435
    %v3440 = vsel %vm196, %v3436, 0.0
    %3441 = vadd.xlane.f32.xlu0 %v3440
    %v3442 = vpop.xlane.xlu0 %3441
    %v3443 = vsel %vm196, %v3437, 0.0
    %3444 = vadd.xlane.f32.xlu0 %v3443
    %v3445 = vpop.xlane.xlu0 %3444
    %v3446 = vsel %vm196, %v3438, 0.0
    %3447 = vadd.xlane.f32.xlu0 %v3446
    %v3448 = vpop.xlane.xlu0 %3447
    %v3449 = vsel %vm196, %v3439, 0.0
    %3450 = vadd.xlane.f32.xlu0 %v3449
    %v3451 = vpop.xlane.xlu0 %3450
    %v3452 = vmul.f32 %v3442, %v209
    %v3453 = vmul.f32 %v3445, %v209
    %v3454 = vmul.f32 %v3448, %v209
    %v3455 = vmul.f32 %v3451, %v209
    %v3456 = vadd.f32 %v3452, 1e-05
    %v3457 = vadd.f32 %v3453, 1e-05
    %v3458 = vadd.f32 %v3454, 1e-05
    %v3459 = vadd.f32 %v3455, 1e-05
    %v3460 = vrsqrt.pop %v3456
    %v3461 = vrsqrt.pop %v3457
    %v3462 = vrsqrt.pop %v3458
    %v3463 = vrsqrt.pop %v3459
    %v3464 = vmul.f32 %v3432, %v3460
    %v3465 = vmul.f32 %v3433, %v3461
    %v3466 = vmul.f32 %v3434, %v3462
    %v3467 = vmul.f32 %v3435, %v3463
    %v3469 = vlaneseq
    %v3470 = vshrl.u32 %v3469, 7
    %v3471 = vsub.s32 0, %v3470
    %v3472 = vrot.slane %v3413, %v3471
    %v3474 = vmul.f32 %v3464, %v3472
    %v3475 = vmul.f32 %v3465, %v3472
    %v3476 = vmul.f32 %v3466, %v3472
    %v3477 = vmul.f32 %v3467, %v3472
    %v3479 = vlaneseq
    %v3480 = vshrl.u32 %v3479, 7
    %v3481 = vsub.s32 0, %v3480
    %v3482 = vrot.slane %v3415, %v3481
    %v3484 = vadd.f32 %v3474, %v3482
    %v3485 = vadd.f32 %v3475, %v3482
    %v3486 = vadd.f32 %v3476, %v3482
    %v3487 = vadd.f32 %v3477, %v3482
    %v3488 = vld [vmem:[%s6] sm:$0xff]
    %v3489 = vld [vmem:[%s6 + $0x8] sm:$0xff]
    %v3490 = vld [vmem:[%s6 + $0x10] sm:$0xff]
    %v3491 = vld [vmem:[%s6 + $0x18] sm:$0xff]
    %v3492 = vld [vmem:[%s7] sm:$0x1]
    %v3494 = vlaneseq
    %v3495 = vshrl.u32 %v3494, 7
    %v3496 = vsub.s32 0, %v3495
    %v3497 = vrot.slane %v3492, %v3496
    %v3500 = vsel %vm196, %v3484, 0
    %v3503 = vsel %vm196, %v3485, 0
    %v3506 = vsel %vm196, %v3486, 0
    %v3509 = vsel %vm196, %v3487, 0
    %3511 = vmatprep.subr.mxu0 0.0
    %3512 = vmatpush1.msra.mxu0 %v3488
    %3513 = vmatprep.subr.mxu0 0.0
    %3514 = vmatpush1.msra.mxu0 %v3489
    %3515 = vmatprep.subr.mxu0 0.0
    %3516 = vmatpush1.msra.mxu0 %v3490
    %3517 = vmatprep.subr.mxu0 0.0
    %3518 = vmatpush1.msra.mxu0 %v3491
    %3519 = vmatprep.subr.mxu0 0.0
    %3520 = vmatpush1.msra.mxu0 0.0
    %3521 = vmatprep.subr.mxu0 0.0
    %3522 = vmatpush1.msra.mxu0 0.0
    %3523 = vmatprep.subr.mxu0 0.0
    %3524 = vmatpush1.msra.mxu0 0.0
    %3525 = vmatprep.subr.mxu0 0.0
    %3526 = vmatpush1.msra.mxu0 0.0
    %3527 = vmatprep.subr.mxu0 0.0
    %3528 = vmatpush1.msra.mxu0 0.0
    %3529 = vmatprep.subr.mxu0 0.0
    %3530 = vmatpush1.msra.mxu0 0.0
    %3531 = vmatprep.subr.mxu0 0.0
    %3532 = vmatpush1.msra.mxu0 0.0
    %3533 = vmatprep.subr.mxu0 0.0
    %3534 = vmatpush1.msra.mxu0 0.0
    %3535 = vmatprep.subr.mxu0 0.0
    %3536 = vmatpush1.msra.mxu0 0.0
    %3537 = vmatprep.subr.mxu0 0.0
    %3538 = vmatpush1.msra.mxu0 0.0
    %3539 = vmatprep.subr.mxu0 0.0
    %3540 = vmatpush1.msra.mxu0 0.0
    %3541 = vmatprep.subr.mxu0 0.0
    %3542 = vmatpush1.msra.mxu0 0.0
    %3543 = vmatprep.subr.mxu0 0.0
    %3544 = vmatpush1.msra.mxu0 0.0
    %3545 = vmatprep.subr.mxu0 0.0
    %3546 = vmatpush1.msra.mxu0 0.0
    %3547 = vmatprep.subr.mxu0 0.0
    %3548 = vmatpush1.msra.mxu0 0.0
    %3549 = vmatprep.subr.mxu0 0.0
    %3550 = vmatpush1.msra.mxu0 0.0
    %3551 = vmatprep.subr.mxu0 0.0
    %3552 = vmatpush1.msra.mxu0 0.0
    %3553 = vmatprep.subr.mxu0 0.0
    %3554 = vmatpush1.msra.mxu0 0.0
    %3555 = vmatprep.subr.mxu0 0.0
    %3556 = vmatpush1.msra.mxu0 0.0
    %3557 = vmatprep.subr.mxu0 0.0
    %3558 = vmatpush1.msra.mxu0 0.0
    %3559 = vmatprep.subr.mxu0 0.0
    %3560 = vmatpush1.msra.mxu0 0.0
    %3561 = vmatprep.subr.mxu0 0.0
    %3562 = vmatpush1.msra.mxu0 0.0
    %3563 = vmatprep.subr.mxu0 0.0
    %3564 = vmatpush1.msra.mxu0 0.0
    %3565 = vmatprep.subr.mxu0 0.0
    %3566 = vmatpush1.msra.mxu0 0.0
    %3567 = vmatprep.subr.mxu0 0.0
    %3568 = vmatpush1.msra.mxu0 0.0
    %3569 = vmatprep.subr.mxu0 0.0
    %3570 = vmatpush1.msra.mxu0 0.0
    %3571 = vmatprep.subr.mxu0 0.0
    %3572 = vmatpush1.msra.mxu0 0.0
    %3573 = vmatprep.subr.mxu0 0.0
    %3574 = vmatpush1.msra.mxu0 0.0
    %3575 = vmatprep.mubr.f32.mxu0 0.0
    %3576 = vmatmul.mubr.f32.gmra.mrb[0].mxu0 %v3500
    %v3577 = vpop.f32.mrb[0].mxu0
    %v3578 = vadd.f32 %v3497, %v3577
    %v3579 = vpop.f32.mrb[0].mxu0
    %3580 = vmatprep.mubr.f32.mxu0 0.0
    %3581 = vmatmul.mubr.f32.gmra.mrb[0].mxu0 %v3503
    %v3582 = vpop.f32.mrb[0].mxu0
    %v3583 = vadd.f32 %v3497, %v3582
    %v3584 = vpop.f32.mrb[0].mxu0
    %3585 = vmatprep.mubr.f32.mxu0 0.0
    %3586 = vmatmul.mubr.f32.gmra.mrb[0].mxu0 %v3506
    %v3587 = vpop.f32.mrb[0].mxu0
    %v3588 = vadd.f32 %v3497, %v3587
    %v3589 = vpop.f32.mrb[0].mxu0
    %3590 = vmatprep.mubr.f32.mxu0 0.0
    %3591 = vmatmul.mubr.f32.gmra.mrb[0].mxu0 %v3509
    %v3592 = vpop.f32.mrb[0].mxu0
    %v3593 = vadd.f32 %v3497, %v3592
    %v3594 = vpop.f32.mrb[0].mxu0
    %3595 = vdwg.mxu0
    %v3596 = vmul.f32 %v3578, 0.5
    %v3597 = vmul.f32 %v3583, 0.5
    %v3598 = vmul.f32 %v3588, 0.5
    %v3599 = vmul.f32 %v3593, 0.5
    %v3600 = vmul.f32 %v3578, 0.70710677
    %v3601 = vmul.f32 %v3583, 0.70710677
    %v3602 = vmul.f32 %v3588, 0.70710677
    %v3603 = vmul.f32 %v3593, 0.70710677
    %v3604 = verf.f32.pop %v3600
    %v3605 = verf.f32.pop %v3601
    %v3606 = verf.f32.pop %v3602
    %v3607 = verf.f32.pop %v3603
    %v3608 = vadd.f32 %v3604, 1.0
    %v3609 = vadd.f32 %v3605, 1.0
    %v3610 = vadd.f32 %v3606, 1.0
    %v3611 = vadd.f32 %v3607, 1.0
    %v3612 = vmul.f32 %v3596, %v3608
    %v3613 = vmul.f32 %v3597, %v3609
    %v3614 = vmul.f32 %v3598, %v3610
    %v3615 = vmul.f32 %v3599, %v3611
    %v3616 = vld [vmem:[%s8] sm:$0xff]
    %v3617 = vld [vmem:[%s8 + $0x8] sm:$0xff]
    %v3618 = vld [vmem:[%s8 + $0x10] sm:$0xff]
    %v3619 = vld [vmem:[%s8 + $0x18] sm:$0xff]
    %v3620 = vld [vmem:[%s8 + $0x20] sm:$0xff]
    %v3621 = vld [vmem:[%s8 + $0x28] sm:$0xff]
    %v3622 = vld [vmem:[%s8 + $0x30] sm:$0xff]
    %v3623 = vld [vmem:[%s8 + $0x38] sm:$0xff]
    %s3624 = scalar_lea.vmem %s9, 1
    %v3625 = vld [vmem:[%s3624] sm:$0x1]
    %v3627 = vlaneseq
    %v3628 = vshrl.u32 %v3627, 7
    %v3629 = vsub.s32 0, %v3628
    %v3630 = vrot.slane %v3625, %v3629
    %vm3632 = vcmask 523264
    %v3634 = vsel %vm3632, %v3612, 0
    %v3637 = vsel %vm3632, %v3613, 0
    %v3640 = vsel %vm3632, %v3614, 0
    %v3643 = vsel %vm3632, %v3615, 0
    %3645 = vmatprep.subr.mxu0 0.0
    %3646 = vmatpush1.msra.mxu0 %v3616
    %3647 = vmatprep.subr.mxu0 0.0
    %3648 = vmatpush1.msra.mxu0 %v3617
    %3649 = vmatprep.subr.mxu0 0.0
    %3650 = vmatpush1.msra.mxu0 %v3618
    %3651 = vmatprep.subr.mxu0 0.0
    %3652 = vmatpush1.msra.mxu0 %v3619
    %3653 = vmatprep.subr.mxu0 0.0
    %3654 = vmatpush1.msra.mxu0 %v3620
    %3655 = vmatprep.subr.mxu0 0.0
    %3656 = vmatpush1.msra.mxu0 %v3621
    %3657 = vmatprep.subr.mxu0 0.0
    %3658 = vmatpush1.msra.mxu0 %v3622
    %3659 = vmatprep.subr.mxu0 0.0
    %3660 = vmatpush1.msra.mxu0 %v3623
    %3661 = vmatprep.subr.mxu0 0.0
    %3662 = vmatpush1.msra.mxu0 0.0
    %3663 = vmatprep.subr.mxu0 0.0
    %3664 = vmatpush1.msra.mxu0 0.0
    %3665 = vmatprep.subr.mxu0 0.0
    %3666 = vmatpush1.msra.mxu0 0.0
    %3667 = vmatprep.subr.mxu0 0.0
    %3668 = vmatpush1.msra.mxu0 0.0
    %3669 = vmatprep.subr.mxu0 0.0
    %3670 = vmatpush1.msra.mxu0 0.0
    %3671 = vmatprep.subr.mxu0 0.0
    %3672 = vmatpush1.msra.mxu0 0.0
    %3673 = vmatprep.subr.mxu0 0.0
    %3674 = vmatpush1.msra.mxu0 0.0
    %3675 = vmatprep.subr.mxu0 0.0
    %3676 = vmatpush1.msra.mxu0 0.0
    %3677 = vmatprep.subr.mxu0 0.0
    %3678 = vmatpush1.msra.mxu0 0.0
    %3679 = vmatprep.subr.mxu0 0.0
    %3680 = vmatpush1.msra.mxu0 0.0
    %3681 = vmatprep.subr.mxu0 0.0
    %3682 = vmatpush1.msra.mxu0 0.0
    %3683 = vmatprep.subr.mxu0 0.0
    %3684 = vmatpush1.msra.mxu0 0.0
    %3685 = vmatprep.subr.mxu0 0.0
    %3686 = vmatpush1.msra.mxu0 0.0
    %3687 = vmatprep.subr.mxu0 0.0
    %3688 = vmatpush1.msra.mxu0 0.0
    %3689 = vmatprep.subr.mxu0 0.0
    %3690 = vmatpush1.msra.mxu0 0.0
    %3691 = vmatprep.subr.mxu0 0.0
    %3692 = vmatpush1.msra.mxu0 0.0
    %3693 = vmatprep.subr.mxu0 0.0
    %3694 = vmatpush1.msra.mxu0 0.0
    %3695 = vmatprep.subr.mxu0 0.0
    %3696 = vmatpush1.msra.mxu0 0.0
    %3697 = vmatprep.subr.mxu0 0.0
    %3698 = vmatpush1.msra.mxu0 0.0
    %3699 = vmatprep.subr.mxu0 0.0
    %3700 = vmatpush1.msra.mxu0 0.0
    %3701 = vmatprep.subr.mxu0 0.0
    %3702 = vmatpush1.msra.mxu0 0.0
    %3703 = vmatprep.subr.mxu0 0.0
    %3704 = vmatpush1.msra.mxu0 0.0
    %3705 = vmatprep.subr.mxu0 0.0
    %3706 = vmatpush1.msra.mxu0 0.0
    %3707 = vmatprep.subr.mxu0 0.0
    %3708 = vmatpush1.msra.mxu0 0.0
    %3709 = vmatprep.mubr.f32.mxu0 0.0
    %3710 = vmatmul.mubr.f32.gmra.mrb[0].mxu0 %v3634
    %v3711 = vpop.f32.mrb[0].mxu0
    %v3712 = vadd.f32 %v3630, %v3711
    %v3713 = vpop.f32.mrb[0].mxu0
    %3714 = vmatprep.mubr.f32.mxu0 0.0
    %3715 = vmatmul.mubr.f32.gmra.mrb[0].mxu0 %v3637
    %v3716 = vpop.f32.mrb[0].mxu0
    %v3717 = vadd.f32 %v3630, %v3716
    %v3718 = vpop.f32.mrb[0].mxu0
    %3719 = vmatprep.mubr.f32.mxu0 0.0
    %3720 = vmatmul.mubr.f32.gmra.mrb[0].mxu0 %v3640
    %v3721 = vpop.f32.mrb[0].mxu0
    %v3722 = vadd.f32 %v3630, %v3721
    %v3723 = vpop.f32.mrb[0].mxu0
    %3724 = vmatprep.mubr.f32.mxu0 0.0
    %3725 = vmatmul.mubr.f32.gmra.mrb[0].mxu0 %v3643
    %v3726 = vpop.f32.mrb[0].mxu0
    %v3727 = vadd.f32 %v3630, %v3726
    %v3728 = vpop.f32.mrb[0].mxu0
    %3729 = vdwg.mxu0
    %v3730 = vadd.f32 %v3484, %v3712
    %v3731 = vadd.f32 %v3485, %v3717
    %v3732 = vadd.f32 %v3486, %v3722
    %v3733 = vadd.f32 %v3487, %v3727
    %s3734 = scalar_lea.vmem %s9, 4
    %v3735 = vld [vmem:[%s3734] sm:$0x1]
    %s3736 = scalar_lea.vmem %s9, 5
    %v3737 = vld [vmem:[%s3736] sm:$0x1]
    %v3738 = vsel %vm196, %v3730, 0.0
    %3739 = vadd.xlane.f32.xlu0 %v3738
    %v3740 = vpop.xlane.xlu0 %3739
    %v3741 = vsel %vm196, %v3731, 0.0
    %3742 = vadd.xlane.f32.xlu0 %v3741
    %v3743 = vpop.xlane.xlu0 %3742
    %v3744 = vsel %vm196, %v3732, 0.0
    %3745 = vadd.xlane.f32.xlu0 %v3744
    %v3746 = vpop.xlane.xlu0 %3745
    %v3747 = vsel %vm196, %v3733, 0.0
    %3748 = vadd.xlane.f32.xlu0 %v3747
    %v3749 = vpop.xlane.xlu0 %3748
    %v3750 = vmul.f32 %v3740, %v209
    %v3751 = vmul.f32 %v3743, %v209
    %v3752 = vmul.f32 %v3746, %v209
    %v3753 = vmul.f32 %v3749, %v209
    %v3754 = vsub.f32 %v3730, %v3750
    %v3755 = vsub.f32 %v3731, %v3751
    %v3756 = vsub.f32 %v3732, %v3752
    %v3757 = vsub.f32 %v3733, %v3753
    %v3758 = vmul.f32 %v3754, %v3754
    %v3759 = vmul.f32 %v3755, %v3755
    %v3760 = vmul.f32 %v3756, %v3756
    %v3761 = vmul.f32 %v3757, %v3757
    %v3762 = vsel %vm196, %v3758, 0.0
    %3763 = vadd.xlane.f32.xlu0 %v3762
    %v3764 = vpop.xlane.xlu0 %3763
    %v3765 = vsel %vm196, %v3759, 0.0
    %3766 = vadd.xlane.f32.xlu0 %v3765
    %v3767 = vpop.xlane.xlu0 %3766
    %v3768 = vsel %vm196, %v3760, 0.0
    %3769 = vadd.xlane.f32.xlu0 %v3768
    %v3770 = vpop.xlane.xlu0 %3769
    %v3771 = vsel %vm196, %v3761, 0.0
    %3772 = vadd.xlane.f32.xlu0 %v3771
    %v3773 = vpop.xlane.xlu0 %3772
    %v3774 = vmul.f32 %v3764, %v209
    %v3775 = vmul.f32 %v3767, %v209
    %v3776 = vmul.f32 %v3770, %v209
    %v3777 = vmul.f32 %v3773, %v209
    %v3778 = vadd.f32 %v3774, 1e-05
    %v3779 = vadd.f32 %v3775, 1e-05
    %v3780 = vadd.f32 %v3776, 1e-05
    %v3781 = vadd.f32 %v3777, 1e-05
    %v3782 = vrsqrt.pop %v3778
    %v3783 = vrsqrt.pop %v3779
    %v3784 = vrsqrt.pop %v3780
    %v3785 = vrsqrt.pop %v3781
    %v3786 = vmul.f32 %v3754, %v3782
    %v3787 = vmul.f32 %v3755, %v3783
    %v3788 = vmul.f32 %v3756, %v3784
    %v3789 = vmul.f32 %v3757, %v3785
    %v3791 = vlaneseq
    %v3792 = vshrl.u32 %v3791, 7
    %v3793 = vsub.s32 0, %v3792
    %v3794 = vrot.slane %v3735, %v3793
    %v3796 = vmul.f32 %v3786, %v3794
    %v3797 = vmul.f32 %v3787, %v3794
    %v3798 = vmul.f32 %v3788, %v3794
    %v3799 = vmul.f32 %v3789, %v3794
    %v3801 = vlaneseq
    %v3802 = vshrl.u32 %v3801, 7
    %v3803 = vsub.s32 0, %v3802
    %v3804 = vrot.slane %v3737, %v3803
    %v3806 = vadd.f32 %v3796, %v3804
    %v3807 = vadd.f32 %v3797, %v3804
    %v3808 = vadd.f32 %v3798, %v3804
    %v3809 = vadd.f32 %v3799, %v3804
    %s3810 = scalar_lea.vmem %s3, 384
    %v3811 = vld [vmem:[%s3810] sm:$0xff]
    %v3812 = vld [vmem:[%s3810 + $0x8] sm:$0xff]
    %v3813 = vld [vmem:[%s3810 + $0x10] sm:$0xff]
    %v3814 = vld [vmem:[%s3810 + $0x18] sm:$0xff]
    %s3815 = scalar_lea.vmem %s4, 12
    %v3816 = vld [vmem:[%s3815] sm:$0x1]
    %v3818 = vlaneseq
    %v3819 = vshrl.u32 %v3818, 7
    %v3820 = vsub.s32 0, %v3819
    %v3821 = vrot.slane %v3816, %v3820
    %v3824 = vsel %vm196, %v3806, 0
    %v3827 = vsel %vm196, %v3807, 0
    %v3830 = vsel %vm196, %v3808, 0
    %v3833 = vsel %vm196, %v3809, 0
    %3835 = vmatprep.subr.mxu0 0.0
    %3836 = vmatpush1.msra.mxu0 %v3811
    %3837 = vmatprep.subr.mxu0 0.0
    %3838 = vmatpush1.msra.mxu0 %v3812
    %3839 = vmatprep.subr.mxu0 0.0
    %3840 = vmatpush1.msra.mxu0 %v3813
    %3841 = vmatprep.subr.mxu0 0.0
    %3842 = vmatpush1.msra.mxu0 %v3814
    %3843 = vmatprep.subr.mxu0 0.0
    %3844 = vmatpush1.msra.mxu0 0.0
    %3845 = vmatprep.subr.mxu0 0.0
    %3846 = vmatpush1.msra.mxu0 0.0
    %3847 = vmatprep.subr.mxu0 0.0
    %3848 = vmatpush1.msra.mxu0 0.0
    %3849 = vmatprep.subr.mxu0 0.0
    %3850 = vmatpush1.msra.mxu0 0.0
    %3851 = vmatprep.subr.mxu0 0.0
    %3852 = vmatpush1.msra.mxu0 0.0
    %3853 = vmatprep.subr.mxu0 0.0
    %3854 = vmatpush1.msra.mxu0 0.0
    %3855 = vmatprep.subr.mxu0 0.0
    %3856 = vmatpush1.msra.mxu0 0.0
    %3857 = vmatprep.subr.mxu0 0.0
    %3858 = vmatpush1.msra.mxu0 0.0
    %3859 = vmatprep.subr.mxu0 0.0
    %3860 = vmatpush1.msra.mxu0 0.0
    %3861 = vmatprep.subr.mxu0 0.0
    %3862 = vmatpush1.msra.mxu0 0.0
    %3863 = vmatprep.subr.mxu0 0.0
    %3864 = vmatpush1.msra.mxu0 0.0
    %3865 = vmatprep.subr.mxu0 0.0
    %3866 = vmatpush1.msra.mxu0 0.0
    %3867 = vmatprep.subr.mxu0 0.0
    %3868 = vmatpush1.msra.mxu0 0.0
    %3869 = vmatprep.subr.mxu0 0.0
    %3870 = vmatpush1.msra.mxu0 0.0
    %3871 = vmatprep.subr.mxu0 0.0
    %3872 = vmatpush1.msra.mxu0 0.0
    %3873 = vmatprep.subr.mxu0 0.0
    %3874 = vmatpush1.msra.mxu0 0.0
    %3875 = vmatprep.subr.mxu0 0.0
    %3876 = vmatpush1.msra.mxu0 0.0
    %3877 = vmatprep.subr.mxu0 0.0
    %3878 = vmatpush1.msra.mxu0 0.0
    %3879 = vmatprep.subr.mxu0 0.0
    %3880 = vmatpush1.msra.mxu0 0.0
    %3881 = vmatprep.subr.mxu0 0.0
    %3882 = vmatpush1.msra.mxu0 0.0
    %3883 = vmatprep.subr.mxu0 0.0
    %3884 = vmatpush1.msra.mxu0 0.0
    %3885 = vmatprep.subr.mxu0 0.0
    %3886 = vmatpush1.msra.mxu0 0.0
    %3887 = vmatprep.subr.mxu0 0.0
    %3888 = vmatpush1.msra.mxu0 0.0
    %3889 = vmatprep.subr.mxu0 0.0
    %3890 = vmatpush1.msra.mxu0 0.0
    %3891 = vmatprep.subr.mxu0 0.0
    %3892 = vmatpush1.msra.mxu0 0.0
    %3893 = vmatprep.subr.mxu0 0.0
    %3894 = vmatpush1.msra.mxu0 0.0
    %3895 = vmatprep.subr.mxu0 0.0
    %3896 = vmatpush1.msra.mxu0 0.0
    %3897 = vmatprep.subr.mxu0 0.0
    %3898 = vmatpush1.msra.mxu0 0.0
    %3899 = vmatprep.mubr.f32.mxu0 0.0
    %3900 = vmatmul.mubr.f32.gmra.mrb[0].mxu0 %v3824
    %v3901 = vpop.f32.mrb[0].mxu0
    %v3902 = vadd.f32 %v3821, %v3901
    %v3903 = vpop.f32.mrb[0].mxu0
    %3904 = vmatprep.mubr.f32.mxu0 0.0
    %3905 = vmatmul.mubr.f32.gmra.mrb[0].mxu0 %v3827
    %v3906 = vpop.f32.mrb[0].mxu0
    %v3907 = vadd.f32 %v3821, %v3906
    %v3908 = vpop.f32.mrb[0].mxu0
    %3909 = vmatprep.mubr.f32.mxu0 0.0
    %3910 = vmatmul.mubr.f32.gmra.mrb[0].mxu0 %v3830
    %v3911 = vpop.f32.mrb[0].mxu0
    %v3912 = vadd.f32 %v3821, %v3911
    %v3913 = vpop.f32.mrb[0].mxu0
    %3914 = vmatprep.mubr.f32.mxu0 0.0
    %3915 = vmatmul.mubr.f32.gmra.mrb[0].mxu0 %v3833
    %v3916 = vpop.f32.mrb[0].mxu0
    %v3917 = vadd.f32 %v3821, %v3916
    %v3918 = vpop.f32.mrb[0].mxu0
    %3919 = vdwg.mxu0
    %s3920 = scalar_lea.vmem %s3, 416
    %v3921 = vld [vmem:[%s3920] sm:$0xff]
    %v3922 = vld [vmem:[%s3920 + $0x8] sm:$0xff]
    %v3923 = vld [vmem:[%s3920 + $0x10] sm:$0xff]
    %v3924 = vld [vmem:[%s3920 + $0x18] sm:$0xff]
    %s3925 = scalar_lea.vmem %s4, 13
    %v3926 = vld [vmem:[%s3925] sm:$0x1]
    %v3928 = vlaneseq
    %v3929 = vshrl.u32 %v3928, 7
    %v3930 = vsub.s32 0, %v3929
    %v3931 = vrot.slane %v3926, %v3930
    %3933 = vmatprep.subr.mxu0 0.0
    %3934 = vmatpush1.msra.mxu0 %v3921
    %3935 = vmatprep.subr.mxu0 0.0
    %3936 = vmatpush1.msra.mxu0 %v3922
    %3937 = vmatprep.subr.mxu0 0.0
    %3938 = vmatpush1.msra.mxu0 %v3923
    %3939 = vmatprep.subr.mxu0 0.0
    %3940 = vmatpush1.msra.mxu0 %v3924
    %3941 = vmatprep.subr.mxu0 0.0
    %3942 = vmatpush1.msra.mxu0 0.0
    %3943 = vmatprep.subr.mxu0 0.0
    %3944 = vmatpush1.msra.mxu0 0.0
    %3945 = vmatprep.subr.mxu0 0.0
    %3946 = vmatpush1.msra.mxu0 0.0
    %3947 = vmatprep.subr.mxu0 0.0
    %3948 = vmatpush1.msra.mxu0 0.0
    %3949 = vmatprep.subr.mxu0 0.0
    %3950 = vmatpush1.msra.mxu0 0.0
    %3951 = vmatprep.subr.mxu0 0.0
    %3952 = vmatpush1.msra.mxu0 0.0
    %3953 = vmatprep.subr.mxu0 0.0
    %3954 = vmatpush1.msra.mxu0 0.0
    %3955 = vmatprep.subr.mxu0 0.0
    %3956 = vmatpush1.msra.mxu0 0.0
    %3957 = vmatprep.subr.mxu0 0.0
    %3958 = vmatpush1.msra.mxu0 0.0
    %3959 = vmatprep.subr.mxu0 0.0
    %3960 = vmatpush1.msra.mxu0 0.0
    %3961 = vmatprep.subr.mxu0 0.0
    %3962 = vmatpush1.msra.mxu0 0.0
    %3963 = vmatprep.subr.mxu0 0.0
    %3964 = vmatpush1.msra.mxu0 0.0
    %3965 = vmatprep.subr.mxu0 0.0
    %3966 = vmatpush1.msra.mxu0 0.0
    %3967 = vmatprep.subr.mxu0 0.0
    %3968 = vmatpush1.msra.mxu0 0.0
    %3969 = vmatprep.subr.mxu0 0.0
    %3970 = vmatpush1.msra.mxu0 0.0
    %3971 = vmatprep.subr.mxu0 0.0
    %3972 = vmatpush1.msra.mxu0 0.0
    %3973 = vmatprep.subr.mxu0 0.0
    %3974 = vmatpush1.msra.mxu0 0.0
    %3975 = vmatprep.subr.mxu0 0.0
    %3976 = vmatpush1.msra.mxu0 0.0
    %3977 = vmatprep.subr.mxu0 0.0
    %3978 = vmatpush1.msra.mxu0 0.0
    %3979 = vmatprep.subr.mxu0 0.0
    %3980 = vmatpush1.msra.mxu0 0.0
    %3981 = vmatprep.subr.mxu0 0.0
    %3982 = vmatpush1.msra.mxu0 0.0
    %3983 = vmatprep.subr.mxu0 0.0
    %3984 = vmatpush1.msra.mxu0 0.0
    %3985 = vmatprep.subr.mxu0 0.0
    %3986 = vmatpush1.msra.mxu0 0.0
    %3987 = vmatprep.subr.mxu0 0.0
    %3988 = vmatpush1.msra.mxu0 0.0
    %3989 = vmatprep.subr.mxu0 0.0
    %3990 = vmatpush1.msra.mxu0 0.0
    %3991 = vmatprep.subr.mxu0 0.0
    %3992 = vmatpush1.msra.mxu0 0.0
    %3993 = vmatprep.subr.mxu0 0.0
    %3994 = vmatpush1.msra.mxu0 0.0
    %3995 = vmatprep.subr.mxu0 0.0
    %3996 = vmatpush1.msra.mxu0 0.0
    %3997 = vmatprep.mubr.f32.mxu0 0.0
    %3998 = vmatmul.mubr.f32.gmra.mrb[0].mxu0 %v3824
    %v3999 = vpop.f32.mrb[0].mxu0
    %v4000 = vadd.f32 %v3931, %v3999
    %v4001 = vpop.f32.mrb[0].mxu0
    %4002 = vmatprep.mubr.f32.mxu0 0.0
    %4003 = vmatmul.mubr.f32.gmra.mrb[0].mxu0 %v3827
    %v4004 = vpop.f32.mrb[0].mxu0
    %v4005 = vadd.f32 %v3931, %v4004
    %v4006 = vpop.f32.mrb[0].mxu0
    %4007 = vmatprep.mubr.f32.mxu0 0.0
    %4008 = vmatmul.mubr.f32.gmra.mrb[0].mxu0 %v3830
    %v4009 = vpop.f32.mrb[0].mxu0
    %v4010 = vadd.f32 %v3931, %v4009
    %v4011 = vpop.f32.mrb[0].mxu0
    %4012 = vmatprep.mubr.f32.mxu0 0.0
    %4013 = vmatmul.mubr.f32.gmra.mrb[0].mxu0 %v3833
    %v4014 = vpop.f32.mrb[0].mxu0
    %v4015 = vadd.f32 %v3931, %v4014
    %v4016 = vpop.f32.mrb[0].mxu0
    %4017 = vdwg.mxu0
    %s4018 = scalar_lea.vmem %s3, 448
    %v4019 = vld [vmem:[%s4018] sm:$0xff]
    %v4020 = vld [vmem:[%s4018 + $0x8] sm:$0xff]
    %v4021 = vld [vmem:[%s4018 + $0x10] sm:$0xff]
    %v4022 = vld [vmem:[%s4018 + $0x18] sm:$0xff]
    %s4023 = scalar_lea.vmem %s4, 14
    %v4024 = vld [vmem:[%s4023] sm:$0x1]
    %v4026 = vlaneseq
    %v4027 = vshrl.u32 %v4026, 7
    %v4028 = vsub.s32 0, %v4027
    %v4029 = vrot.slane %v4024, %v4028
    %4031 = vmatprep.subr.mxu0 0.0
    %4032 = vmatpush1.msra.mxu0 %v4019
    %4033 = vmatprep.subr.mxu0 0.0
    %4034 = vmatpush1.msra.mxu0 %v4020
    %4035 = vmatprep.subr.mxu0 0.0
    %4036 = vmatpush1.msra.mxu0 %v4021
    %4037 = vmatprep.subr.mxu0 0.0
    %4038 = vmatpush1.msra.mxu0 %v4022
    %4039 = vmatprep.subr.mxu0 0.0
    %4040 = vmatpush1.msra.mxu0 0.0
    %4041 = vmatprep.subr.mxu0 0.0
    %4042 = vmatpush1.msra.mxu0 0.0
    %4043 = vmatprep.subr.mxu0 0.0
    %4044 = vmatpush1.msra.mxu0 0.0
    %4045 = vmatprep.subr.mxu0 0.0
    %4046 = vmatpush1.msra.mxu0 0.0
    %4047 = vmatprep.subr.mxu0 0.0
    %4048 = vmatpush1.msra.mxu0 0.0
    %4049 = vmatprep.subr.mxu0 0.0
    %4050 = vmatpush1.msra.mxu0 0.0
    %4051 = vmatprep.subr.mxu0 0.0
    %4052 = vmatpush1.msra.mxu0 0.0
    %4053 = vmatprep.subr.mxu0 0.0
    %4054 = vmatpush1.msra.mxu0 0.0
    %4055 = vmatprep.subr.mxu0 0.0
    %4056 = vmatpush1.msra.mxu0 0.0
    %4057 = vmatprep.subr.mxu0 0.0
    %4058 = vmatpush1.msra.mxu0 0.0
    %4059 = vmatprep.subr.mxu0 0.0
    %4060 = vmatpush1.msra.mxu0 0.0
    %4061 = vmatprep.subr.mxu0 0.0
    %4062 = vmatpush1.msra.mxu0 0.0
    %4063 = vmatprep.subr.mxu0 0.0
    %4064 = vmatpush1.msra.mxu0 0.0
    %4065 = vmatprep.subr.mxu0 0.0
    %4066 = vmatpush1.msra.mxu0 0.0
    %4067 = vmatprep.subr.mxu0 0.0
    %4068 = vmatpush1.msra.mxu0 0.0
    %4069 = vmatprep.subr.mxu0 0.0
    %4070 = vmatpush1.msra.mxu0 0.0
    %4071 = vmatprep.subr.mxu0 0.0
    %4072 = vmatpush1.msra.mxu0 0.0
    %4073 = vmatprep.subr.mxu0 0.0
    %4074 = vmatpush1.msra.mxu0 0.0
    %4075 = vmatprep.subr.mxu0 0.0
    %4076 = vmatpush1.msra.mxu0 0.0
    %4077 = vmatprep.subr.mxu0 0.0
    %4078 = vmatpush1.msra.mxu0 0.0
    %4079 = vmatprep.subr.mxu0 0.0
    %4080 = vmatpush1.msra.mxu0 0.0
    %4081 = vmatprep.subr.mxu0 0.0
    %4082 = vmatpush1.msra.mxu0 0.0
    %4083 = vmatprep.subr.mxu0 0.0
    %4084 = vmatpush1.msra.mxu0 0.0
    %4085 = vmatprep.subr.mxu0 0.0
    %4086 = vmatpush1.msra.mxu0 0.0
    %4087 = vmatprep.subr.mxu0 0.0
    %4088 = vmatpush1.msra.mxu0 0.0
    %4089 = vmatprep.subr.mxu0 0.0
    %4090 = vmatpush1.msra.mxu0 0.0
    %4091 = vmatprep.subr.mxu0 0.0
    %4092 = vmatpush1.msra.mxu0 0.0
    %4093 = vmatprep.subr.mxu0 0.0
    %4094 = vmatpush1.msra.mxu0 0.0
    %4095 = vmatprep.mubr.f32.mxu0 0.0
    %4096 = vmatmul.mubr.f32.gmra.mrb[0].mxu0 %v3824
    %v4097 = vpop.f32.mrb[0].mxu0
    %v4098 = vadd.f32 %v4029, %v4097
    %v4099 = vpop.f32.mrb[0].mxu0
    %4100 = vmatprep.mubr.f32.mxu0 0.0
    %4101 = vmatmul.mubr.f32.gmra.mrb[0].mxu0 %v3827
    %v4102 = vpop.f32.mrb[0].mxu0
    %v4103 = vadd.f32 %v4029, %v4102
    %v4104 = vpop.f32.mrb[0].mxu0
    %4105 = vmatprep.mubr.f32.mxu0 0.0
    %4106 = vmatmul.mubr.f32.gmra.mrb[0].mxu0 %v3830
    %v4107 = vpop.f32.mrb[0].mxu0
    %v4108 = vadd.f32 %v4029, %v4107
    %v4109 = vpop.f32.mrb[0].mxu0
    %4110 = vmatprep.mubr.f32.mxu0 0.0
    %4111 = vmatmul.mubr.f32.gmra.mrb[0].mxu0 %v3833
    %v4112 = vpop.f32.mrb[0].mxu0
    %v4113 = vadd.f32 %v4029, %v4112
    %v4114 = vpop.f32.mrb[0].mxu0
    %4115 = vdwg.mxu0
    %s4116 = scalar_lea.vmem %s3, 480
    %v4117 = vld [vmem:[%s4116] sm:$0xff]
    %v4118 = vld [vmem:[%s4116 + $0x8] sm:$0xff]
    %v4119 = vld [vmem:[%s4116 + $0x10] sm:$0xff]
    %v4120 = vld [vmem:[%s4116 + $0x18] sm:$0xff]
    %s4121 = scalar_lea.vmem %s4, 15
    %v4122 = vld [vmem:[%s4121] sm:$0x1]
    %v4124 = vlaneseq
    %v4125 = vshrl.u32 %v4124, 7
    %v4126 = vsub.s32 0, %v4125
    %v4127 = vrot.slane %v4122, %v4126
    %4129 = vmatprep.subr.mxu0 0.0
    %4130 = vmatpush1.msra.mxu0 %v4117
    %4131 = vmatprep.subr.mxu0 0.0
    %4132 = vmatpush1.msra.mxu0 %v4118
    %4133 = vmatprep.subr.mxu0 0.0
    %4134 = vmatpush1.msra.mxu0 %v4119
    %4135 = vmatprep.subr.mxu0 0.0
    %4136 = vmatpush1.msra.mxu0 %v4120
    %4137 = vmatprep.subr.mxu0 0.0
    %4138 = vmatpush1.msra.mxu0 0.0
    %4139 = vmatprep.subr.mxu0 0.0
    %4140 = vmatpush1.msra.mxu0 0.0
    %4141 = vmatprep.subr.mxu0 0.0
    %4142 = vmatpush1.msra.mxu0 0.0
    %4143 = vmatprep.subr.mxu0 0.0
    %4144 = vmatpush1.msra.mxu0 0.0
    %4145 = vmatprep.subr.mxu0 0.0
    %4146 = vmatpush1.msra.mxu0 0.0
    %4147 = vmatprep.subr.mxu0 0.0
    %4148 = vmatpush1.msra.mxu0 0.0
    %4149 = vmatprep.subr.mxu0 0.0
    %4150 = vmatpush1.msra.mxu0 0.0
    %4151 = vmatprep.subr.mxu0 0.0
    %4152 = vmatpush1.msra.mxu0 0.0
    %4153 = vmatprep.subr.mxu0 0.0
    %4154 = vmatpush1.msra.mxu0 0.0
    %4155 = vmatprep.subr.mxu0 0.0
    %4156 = vmatpush1.msra.mxu0 0.0
    %4157 = vmatprep.subr.mxu0 0.0
    %4158 = vmatpush1.msra.mxu0 0.0
    %4159 = vmatprep.subr.mxu0 0.0
    %4160 = vmatpush1.msra.mxu0 0.0
    %4161 = vmatprep.subr.mxu0 0.0
    %4162 = vmatpush1.msra.mxu0 0.0
    %4163 = vmatprep.subr.mxu0 0.0
    %4164 = vmatpush1.msra.mxu0 0.0
    %4165 = vmatprep.subr.mxu0 0.0
    %4166 = vmatpush1.msra.mxu0 0.0
    %4167 = vmatprep.subr.mxu0 0.0
    %4168 = vmatpush1.msra.mxu0 0.0
    %4169 = vmatprep.subr.mxu0 0.0
    %4170 = vmatpush1.msra.mxu0 0.0
    %4171 = vmatprep.subr.mxu0 0.0
    %4172 = vmatpush1.msra.mxu0 0.0
    %4173 = vmatprep.subr.mxu0 0.0
    %4174 = vmatpush1.msra.mxu0 0.0
    %4175 = vmatprep.subr.mxu0 0.0
    %4176 = vmatpush1.msra.mxu0 0.0
    %4177 = vmatprep.subr.mxu0 0.0
    %4178 = vmatpush1.msra.mxu0 0.0
    %4179 = vmatprep.subr.mxu0 0.0
    %4180 = vmatpush1.msra.mxu0 0.0
    %4181 = vmatprep.subr.mxu0 0.0
    %4182 = vmatpush1.msra.mxu0 0.0
    %4183 = vmatprep.subr.mxu0 0.0
    %4184 = vmatpush1.msra.mxu0 0.0
    %4185 = vmatprep.subr.mxu0 0.0
    %4186 = vmatpush1.msra.mxu0 0.0
    %4187 = vmatprep.subr.mxu0 0.0
    %4188 = vmatpush1.msra.mxu0 0.0
    %4189 = vmatprep.subr.mxu0 0.0
    %4190 = vmatpush1.msra.mxu0 0.0
    %4191 = vmatprep.subr.mxu0 0.0
    %4192 = vmatpush1.msra.mxu0 0.0
    %4193 = vmatprep.mubr.f32.mxu0 0.0
    %4194 = vmatmul.mubr.f32.gmra.mrb[0].mxu0 %v3824
    %v4195 = vpop.f32.mrb[0].mxu0
    %v4196 = vadd.f32 %v4127, %v4195
    %v4197 = vpop.f32.mrb[0].mxu0
    %4198 = vmatprep.mubr.f32.mxu0 0.0
    %4199 = vmatmul.mubr.f32.gmra.mrb[0].mxu0 %v3827
    %v4200 = vpop.f32.mrb[0].mxu0
    %v4201 = vadd.f32 %v4127, %v4200
    %v4202 = vpop.f32.mrb[0].mxu0
    %4203 = vmatprep.mubr.f32.mxu0 0.0
    %4204 = vmatmul.mubr.f32.gmra.mrb[0].mxu0 %v3830
    %v4205 = vpop.f32.mrb[0].mxu0
    %v4206 = vadd.f32 %v4127, %v4205
    %v4207 = vpop.f32.mrb[0].mxu0
    %4208 = vmatprep.mubr.f32.mxu0 0.0
    %4209 = vmatmul.mubr.f32.gmra.mrb[0].mxu0 %v3833
    %v4210 = vpop.f32.mrb[0].mxu0
    %v4211 = vadd.f32 %v4127, %v4210
    %v4212 = vpop.f32.mrb[0].mxu0
    %4213 = vdwg.mxu0
    %s4214 = scalar_lea.vmem %s3, 512
    %v4215 = vld [vmem:[%s4214] sm:$0xff]
    %v4216 = vld [vmem:[%s4214 + $0x8] sm:$0xff]
    %v4217 = vld [vmem:[%s4214 + $0x10] sm:$0xff]
    %v4218 = vld [vmem:[%s4214 + $0x18] sm:$0xff]
    %s4219 = scalar_lea.vmem %s4, 16
    %v4220 = vld [vmem:[%s4219] sm:$0x1]
    %v4222 = vlaneseq
    %v4223 = vshrl.u32 %v4222, 7
    %v4224 = vsub.s32 0, %v4223
    %v4225 = vrot.slane %v4220, %v4224
    %4227 = vmatprep.subr.mxu0 0.0
    %4228 = vmatpush1.msra.mxu0 %v4215
    %4229 = vmatprep.subr.mxu0 0.0
    %4230 = vmatpush1.msra.mxu0 %v4216
    %4231 = vmatprep.subr.mxu0 0.0
    %4232 = vmatpush1.msra.mxu0 %v4217
    %4233 = vmatprep.subr.mxu0 0.0
    %4234 = vmatpush1.msra.mxu0 %v4218
    %4235 = vmatprep.subr.mxu0 0.0
    %4236 = vmatpush1.msra.mxu0 0.0
    %4237 = vmatprep.subr.mxu0 0.0
    %4238 = vmatpush1.msra.mxu0 0.0
    %4239 = vmatprep.subr.mxu0 0.0
    %4240 = vmatpush1.msra.mxu0 0.0
    %4241 = vmatprep.subr.mxu0 0.0
    %4242 = vmatpush1.msra.mxu0 0.0
    %4243 = vmatprep.subr.mxu0 0.0
    %4244 = vmatpush1.msra.mxu0 0.0
    %4245 = vmatprep.subr.mxu0 0.0
    %4246 = vmatpush1.msra.mxu0 0.0
    %4247 = vmatprep.subr.mxu0 0.0
    %4248 = vmatpush1.msra.mxu0 0.0
    %4249 = vmatprep.subr.mxu0 0.0
    %4250 = vmatpush1.msra.mxu0 0.0
    %4251 = vmatprep.subr.mxu0 0.0
    %4252 = vmatpush1.msra.mxu0 0.0
    %4253 = vmatprep.subr.mxu0 0.0
    %4254 = vmatpush1.msra.mxu0 0.0
    %4255 = vmatprep.subr.mxu0 0.0
    %4256 = vmatpush1.msra.mxu0 0.0
    %4257 = vmatprep.subr.mxu0 0.0
    %4258 = vmatpush1.msra.mxu0 0.0
    %4259 = vmatprep.subr.mxu0 0.0
    %4260 = vmatpush1.msra.mxu0 0.0
    %4261 = vmatprep.subr.mxu0 0.0
    %4262 = vmatpush1.msra.mxu0 0.0
    %4263 = vmatprep.subr.mxu0 0.0
    %4264 = vmatpush1.msra.mxu0 0.0
    %4265 = vmatprep.subr.mxu0 0.0
    %4266 = vmatpush1.msra.mxu0 0.0
    %4267 = vmatprep.subr.mxu0 0.0
    %4268 = vmatpush1.msra.mxu0 0.0
    %4269 = vmatprep.subr.mxu0 0.0
    %4270 = vmatpush1.msra.mxu0 0.0
    %4271 = vmatprep.subr.mxu0 0.0
    %4272 = vmatpush1.msra.mxu0 0.0
    %4273 = vmatprep.subr.mxu0 0.0
    %4274 = vmatpush1.msra.mxu0 0.0
    %4275 = vmatprep.subr.mxu0 0.0
    %4276 = vmatpush1.msra.mxu0 0.0
    %4277 = vmatprep.subr.mxu0 0.0
    %4278 = vmatpush1.msra.mxu0 0.0
    %4279 = vmatprep.subr.mxu0 0.0
    %4280 = vmatpush1.msra.mxu0 0.0
    %4281 = vmatprep.subr.mxu0 0.0
    %4282 = vmatpush1.msra.mxu0 0.0
    %4283 = vmatprep.subr.mxu0 0.0
    %4284 = vmatpush1.msra.mxu0 0.0
    %4285 = vmatprep.subr.mxu0 0.0
    %4286 = vmatpush1.msra.mxu0 0.0
    %4287 = vmatprep.subr.mxu0 0.0
    %4288 = vmatpush1.msra.mxu0 0.0
    %4289 = vmatprep.subr.mxu0 0.0
    %4290 = vmatpush1.msra.mxu0 0.0
    %4291 = vmatprep.mubr.f32.mxu0 0.0
    %4292 = vmatmul.mubr.f32.gmra.mrb[0].mxu0 %v3824
    %v4293 = vpop.f32.mrb[0].mxu0
    %v4294 = vadd.f32 %v4225, %v4293
    %v4295 = vpop.f32.mrb[0].mxu0
    %4296 = vmatprep.mubr.f32.mxu0 0.0
    %4297 = vmatmul.mubr.f32.gmra.mrb[0].mxu0 %v3827
    %v4298 = vpop.f32.mrb[0].mxu0
    %v4299 = vadd.f32 %v4225, %v4298
    %v4300 = vpop.f32.mrb[0].mxu0
    %4301 = vmatprep.mubr.f32.mxu0 0.0
    %4302 = vmatmul.mubr.f32.gmra.mrb[0].mxu0 %v3830
    %v4303 = vpop.f32.mrb[0].mxu0
    %v4304 = vadd.f32 %v4225, %v4303
    %v4305 = vpop.f32.mrb[0].mxu0
    %4306 = vmatprep.mubr.f32.mxu0 0.0
    %4307 = vmatmul.mubr.f32.gmra.mrb[0].mxu0 %v3833
    %v4308 = vpop.f32.mrb[0].mxu0
    %v4309 = vadd.f32 %v4225, %v4308
    %v4310 = vpop.f32.mrb[0].mxu0
    %4311 = vdwg.mxu0
    %s4312 = scalar_lea.vmem %s3, 544
    %v4313 = vld [vmem:[%s4312] sm:$0xff]
    %v4314 = vld [vmem:[%s4312 + $0x8] sm:$0xff]
    %v4315 = vld [vmem:[%s4312 + $0x10] sm:$0xff]
    %v4316 = vld [vmem:[%s4312 + $0x18] sm:$0xff]
    %s4317 = scalar_lea.vmem %s4, 17
    %v4318 = vld [vmem:[%s4317] sm:$0x1]
    %v4320 = vlaneseq
    %v4321 = vshrl.u32 %v4320, 7
    %v4322 = vsub.s32 0, %v4321
    %v4323 = vrot.slane %v4318, %v4322
    %4325 = vmatprep.subr.mxu0 0.0
    %4326 = vmatpush1.msra.mxu0 %v4313
    %4327 = vmatprep.subr.mxu0 0.0
    %4328 = vmatpush1.msra.mxu0 %v4314
    %4329 = vmatprep.subr.mxu0 0.0
    %4330 = vmatpush1.msra.mxu0 %v4315
    %4331 = vmatprep.subr.mxu0 0.0
    %4332 = vmatpush1.msra.mxu0 %v4316
    %4333 = vmatprep.subr.mxu0 0.0
    %4334 = vmatpush1.msra.mxu0 0.0
    %4335 = vmatprep.subr.mxu0 0.0
    %4336 = vmatpush1.msra.mxu0 0.0
    %4337 = vmatprep.subr.mxu0 0.0
    %4338 = vmatpush1.msra.mxu0 0.0
    %4339 = vmatprep.subr.mxu0 0.0
    %4340 = vmatpush1.msra.mxu0 0.0
    %4341 = vmatprep.subr.mxu0 0.0
    %4342 = vmatpush1.msra.mxu0 0.0
    %4343 = vmatprep.subr.mxu0 0.0
    %4344 = vmatpush1.msra.mxu0 0.0
    %4345 = vmatprep.subr.mxu0 0.0
    %4346 = vmatpush1.msra.mxu0 0.0
    %4347 = vmatprep.subr.mxu0 0.0
    %4348 = vmatpush1.msra.mxu0 0.0
    %4349 = vmatprep.subr.mxu0 0.0
    %4350 = vmatpush1.msra.mxu0 0.0
    %4351 = vmatprep.subr.mxu0 0.0
    %4352 = vmatpush1.msra.mxu0 0.0
    %4353 = vmatprep.subr.mxu0 0.0
    %4354 = vmatpush1.msra.mxu0 0.0
    %4355 = vmatprep.subr.mxu0 0.0
    %4356 = vmatpush1.msra.mxu0 0.0
    %4357 = vmatprep.subr.mxu0 0.0
    %4358 = vmatpush1.msra.mxu0 0.0
    %4359 = vmatprep.subr.mxu0 0.0
    %4360 = vmatpush1.msra.mxu0 0.0
    %4361 = vmatprep.subr.mxu0 0.0
    %4362 = vmatpush1.msra.mxu0 0.0
    %4363 = vmatprep.subr.mxu0 0.0
    %4364 = vmatpush1.msra.mxu0 0.0
    %4365 = vmatprep.subr.mxu0 0.0
    %4366 = vmatpush1.msra.mxu0 0.0
    %4367 = vmatprep.subr.mxu0 0.0
    %4368 = vmatpush1.msra.mxu0 0.0
    %4369 = vmatprep.subr.mxu0 0.0
    %4370 = vmatpush1.msra.mxu0 0.0
    %4371 = vmatprep.subr.mxu0 0.0
    %4372 = vmatpush1.msra.mxu0 0.0
    %4373 = vmatprep.subr.mxu0 0.0
    %4374 = vmatpush1.msra.mxu0 0.0
    %4375 = vmatprep.subr.mxu0 0.0
    %4376 = vmatpush1.msra.mxu0 0.0
    %4377 = vmatprep.subr.mxu0 0.0
    %4378 = vmatpush1.msra.mxu0 0.0
    %4379 = vmatprep.subr.mxu0 0.0
    %4380 = vmatpush1.msra.mxu0 0.0
    %4381 = vmatprep.subr.mxu0 0.0
    %4382 = vmatpush1.msra.mxu0 0.0
    %4383 = vmatprep.subr.mxu0 0.0
    %4384 = vmatpush1.msra.mxu0 0.0
    %4385 = vmatprep.subr.mxu0 0.0
    %4386 = vmatpush1.msra.mxu0 0.0
    %4387 = vmatprep.subr.mxu0 0.0
    %4388 = vmatpush1.msra.mxu0 0.0
    %4389 = vmatprep.mubr.f32.mxu0 0.0
    %4390 = vmatmul.mubr.f32.gmra.mrb[0].mxu0 %v3824
    %v4391 = vpop.f32.mrb[0].mxu0
    %v4392 = vadd.f32 %v4323, %v4391
    %v4393 = vpop.f32.mrb[0].mxu0
    %4394 = vmatprep.mubr.f32.mxu0 0.0
    %4395 = vmatmul.mubr.f32.gmra.mrb[0].mxu0 %v3827
    %v4396 = vpop.f32.mrb[0].mxu0
    %v4397 = vadd.f32 %v4323, %v4396
    %v4398 = vpop.f32.mrb[0].mxu0
    %4399 = vmatprep.mubr.f32.mxu0 0.0
    %4400 = vmatmul.mubr.f32.gmra.mrb[0].mxu0 %v3830
    %v4401 = vpop.f32.mrb[0].mxu0
    %v4402 = vadd.f32 %v4323, %v4401
    %v4403 = vpop.f32.mrb[0].mxu0
    %4404 = vmatprep.mubr.f32.mxu0 0.0
    %4405 = vmatmul.mubr.f32.gmra.mrb[0].mxu0 %v3833
    %v4406 = vpop.f32.mrb[0].mxu0
    %v4407 = vadd.f32 %v4323, %v4406
    %v4408 = vpop.f32.mrb[0].mxu0
    %4409 = vdwg.mxu0
    %s4410 = scalar_lea.vmem %s3, 576
    %v4411 = vld [vmem:[%s4410] sm:$0xff]
    %v4412 = vld [vmem:[%s4410 + $0x8] sm:$0xff]
    %v4413 = vld [vmem:[%s4410 + $0x10] sm:$0xff]
    %v4414 = vld [vmem:[%s4410 + $0x18] sm:$0xff]
    %s4415 = scalar_lea.vmem %s4, 18
    %v4416 = vld [vmem:[%s4415] sm:$0x1]
    %v4418 = vlaneseq
    %v4419 = vshrl.u32 %v4418, 7
    %v4420 = vsub.s32 0, %v4419
    %v4421 = vrot.slane %v4416, %v4420
    %4423 = vmatprep.subr.mxu0 0.0
    %4424 = vmatpush1.msra.mxu0 %v4411
    %4425 = vmatprep.subr.mxu0 0.0
    %4426 = vmatpush1.msra.mxu0 %v4412
    %4427 = vmatprep.subr.mxu0 0.0
    %4428 = vmatpush1.msra.mxu0 %v4413
    %4429 = vmatprep.subr.mxu0 0.0
    %4430 = vmatpush1.msra.mxu0 %v4414
    %4431 = vmatprep.subr.mxu0 0.0
    %4432 = vmatpush1.msra.mxu0 0.0
    %4433 = vmatprep.subr.mxu0 0.0
    %4434 = vmatpush1.msra.mxu0 0.0
    %4435 = vmatprep.subr.mxu0 0.0
    %4436 = vmatpush1.msra.mxu0 0.0
    %4437 = vmatprep.subr.mxu0 0.0
    %4438 = vmatpush1.msra.mxu0 0.0
    %4439 = vmatprep.subr.mxu0 0.0
    %4440 = vmatpush1.msra.mxu0 0.0
    %4441 = vmatprep.subr.mxu0 0.0
    %4442 = vmatpush1.msra.mxu0 0.0
    %4443 = vmatprep.subr.mxu0 0.0
    %4444 = vmatpush1.msra.mxu0 0.0
    %4445 = vmatprep.subr.mxu0 0.0
    %4446 = vmatpush1.msra.mxu0 0.0
    %4447 = vmatprep.subr.mxu0 0.0
    %4448 = vmatpush1.msra.mxu0 0.0
    %4449 = vmatprep.subr.mxu0 0.0
    %4450 = vmatpush1.msra.mxu0 0.0
    %4451 = vmatprep.subr.mxu0 0.0
    %4452 = vmatpush1.msra.mxu0 0.0
    %4453 = vmatprep.subr.mxu0 0.0
    %4454 = vmatpush1.msra.mxu0 0.0
    %4455 = vmatprep.subr.mxu0 0.0
    %4456 = vmatpush1.msra.mxu0 0.0
    %4457 = vmatprep.subr.mxu0 0.0
    %4458 = vmatpush1.msra.mxu0 0.0
    %4459 = vmatprep.subr.mxu0 0.0
    %4460 = vmatpush1.msra.mxu0 0.0
    %4461 = vmatprep.subr.mxu0 0.0
    %4462 = vmatpush1.msra.mxu0 0.0
    %4463 = vmatprep.subr.mxu0 0.0
    %4464 = vmatpush1.msra.mxu0 0.0
    %4465 = vmatprep.subr.mxu0 0.0
    %4466 = vmatpush1.msra.mxu0 0.0
    %4467 = vmatprep.subr.mxu0 0.0
    %4468 = vmatpush1.msra.mxu0 0.0
    %4469 = vmatprep.subr.mxu0 0.0
    %4470 = vmatpush1.msra.mxu0 0.0
    %4471 = vmatprep.subr.mxu0 0.0
    %4472 = vmatpush1.msra.mxu0 0.0
    %4473 = vmatprep.subr.mxu0 0.0
    %4474 = vmatpush1.msra.mxu0 0.0
    %4475 = vmatprep.subr.mxu0 0.0
    %4476 = vmatpush1.msra.mxu0 0.0
    %4477 = vmatprep.subr.mxu0 0.0
    %4478 = vmatpush1.msra.mxu0 0.0
    %4479 = vmatprep.subr.mxu0 0.0
    %4480 = vmatpush1.msra.mxu0 0.0
    %4481 = vmatprep.subr.mxu0 0.0
    %4482 = vmatpush1.msra.mxu0 0.0
    %4483 = vmatprep.subr.mxu0 0.0
    %4484 = vmatpush1.msra.mxu0 0.0
    %4485 = vmatprep.subr.mxu0 0.0
    %4486 = vmatpush1.msra.mxu0 0.0
    %4487 = vmatprep.mubr.f32.mxu0 0.0
    %4488 = vmatmul.mubr.f32.gmra.mrb[0].mxu0 %v3824
    %v4489 = vpop.f32.mrb[0].mxu0
    %v4490 = vadd.f32 %v4421, %v4489
    %v4491 = vpop.f32.mrb[0].mxu0
    %4492 = vmatprep.mubr.f32.mxu0 0.0
    %4493 = vmatmul.mubr.f32.gmra.mrb[0].mxu0 %v3827
    %v4494 = vpop.f32.mrb[0].mxu0
    %v4495 = vadd.f32 %v4421, %v4494
    %v4496 = vpop.f32.mrb[0].mxu0
    %4497 = vmatprep.mubr.f32.mxu0 0.0
    %4498 = vmatmul.mubr.f32.gmra.mrb[0].mxu0 %v3830
    %v4499 = vpop.f32.mrb[0].mxu0
    %v4500 = vadd.f32 %v4421, %v4499
    %v4501 = vpop.f32.mrb[0].mxu0
    %4502 = vmatprep.mubr.f32.mxu0 0.0
    %4503 = vmatmul.mubr.f32.gmra.mrb[0].mxu0 %v3833
    %v4504 = vpop.f32.mrb[0].mxu0
    %v4505 = vadd.f32 %v4421, %v4504
    %v4506 = vpop.f32.mrb[0].mxu0
    %4507 = vdwg.mxu0
    %s4508 = scalar_lea.vmem %s3, 608
    %v4509 = vld [vmem:[%s4508] sm:$0xff]
    %v4510 = vld [vmem:[%s4508 + $0x8] sm:$0xff]
    %v4511 = vld [vmem:[%s4508 + $0x10] sm:$0xff]
    %v4512 = vld [vmem:[%s4508 + $0x18] sm:$0xff]
    %s4513 = scalar_lea.vmem %s4, 19
    %v4514 = vld [vmem:[%s4513] sm:$0x1]
    %v4516 = vlaneseq
    %v4517 = vshrl.u32 %v4516, 7
    %v4518 = vsub.s32 0, %v4517
    %v4519 = vrot.slane %v4514, %v4518
    %4521 = vmatprep.subr.mxu0 0.0
    %4522 = vmatpush1.msra.mxu0 %v4509
    %4523 = vmatprep.subr.mxu0 0.0
    %4524 = vmatpush1.msra.mxu0 %v4510
    %4525 = vmatprep.subr.mxu0 0.0
    %4526 = vmatpush1.msra.mxu0 %v4511
    %4527 = vmatprep.subr.mxu0 0.0
    %4528 = vmatpush1.msra.mxu0 %v4512
    %4529 = vmatprep.subr.mxu0 0.0
    %4530 = vmatpush1.msra.mxu0 0.0
    %4531 = vmatprep.subr.mxu0 0.0
    %4532 = vmatpush1.msra.mxu0 0.0
    %4533 = vmatprep.subr.mxu0 0.0
    %4534 = vmatpush1.msra.mxu0 0.0
    %4535 = vmatprep.subr.mxu0 0.0
    %4536 = vmatpush1.msra.mxu0 0.0
    %4537 = vmatprep.subr.mxu0 0.0
    %4538 = vmatpush1.msra.mxu0 0.0
    %4539 = vmatprep.subr.mxu0 0.0
    %4540 = vmatpush1.msra.mxu0 0.0
    %4541 = vmatprep.subr.mxu0 0.0
    %4542 = vmatpush1.msra.mxu0 0.0
    %4543 = vmatprep.subr.mxu0 0.0
    %4544 = vmatpush1.msra.mxu0 0.0
    %4545 = vmatprep.subr.mxu0 0.0
    %4546 = vmatpush1.msra.mxu0 0.0
    %4547 = vmatprep.subr.mxu0 0.0
    %4548 = vmatpush1.msra.mxu0 0.0
    %4549 = vmatprep.subr.mxu0 0.0
    %4550 = vmatpush1.msra.mxu0 0.0
    %4551 = vmatprep.subr.mxu0 0.0
    %4552 = vmatpush1.msra.mxu0 0.0
    %4553 = vmatprep.subr.mxu0 0.0
    %4554 = vmatpush1.msra.mxu0 0.0
    %4555 = vmatprep.subr.mxu0 0.0
    %4556 = vmatpush1.msra.mxu0 0.0
    %4557 = vmatprep.subr.mxu0 0.0
    %4558 = vmatpush1.msra.mxu0 0.0
    %4559 = vmatprep.subr.mxu0 0.0
    %4560 = vmatpush1.msra.mxu0 0.0
    %4561 = vmatprep.subr.mxu0 0.0
    %4562 = vmatpush1.msra.mxu0 0.0
    %4563 = vmatprep.subr.mxu0 0.0
    %4564 = vmatpush1.msra.mxu0 0.0
    %4565 = vmatprep.subr.mxu0 0.0
    %4566 = vmatpush1.msra.mxu0 0.0
    %4567 = vmatprep.subr.mxu0 0.0
    %4568 = vmatpush1.msra.mxu0 0.0
    %4569 = vmatprep.subr.mxu0 0.0
    %4570 = vmatpush1.msra.mxu0 0.0
    %4571 = vmatprep.subr.mxu0 0.0
    %4572 = vmatpush1.msra.mxu0 0.0
    %4573 = vmatprep.subr.mxu0 0.0
    %4574 = vmatpush1.msra.mxu0 0.0
    %4575 = vmatprep.subr.mxu0 0.0
    %4576 = vmatpush1.msra.mxu0 0.0
    %4577 = vmatprep.subr.mxu0 0.0
    %4578 = vmatpush1.msra.mxu0 0.0
    %4579 = vmatprep.subr.mxu0 0.0
    %4580 = vmatpush1.msra.mxu0 0.0
    %4581 = vmatprep.subr.mxu0 0.0
    %4582 = vmatpush1.msra.mxu0 0.0
    %4583 = vmatprep.subr.mxu0 0.0
    %4584 = vmatpush1.msra.mxu0 0.0
    %4585 = vmatprep.mubr.f32.mxu0 0.0
    %4586 = vmatmul.mubr.f32.gmra.mrb[0].mxu0 %v3824
    %v4587 = vpop.f32.mrb[0].mxu0
    %v4588 = vadd.f32 %v4519, %v4587
    %v4589 = vpop.f32.mrb[0].mxu0
    %4590 = vmatprep.mubr.f32.mxu0 0.0
    %4591 = vmatmul.mubr.f32.gmra.mrb[0].mxu0 %v3827
    %v4592 = vpop.f32.mrb[0].mxu0
    %v4593 = vadd.f32 %v4519, %v4592
    %v4594 = vpop.f32.mrb[0].mxu0
    %4595 = vmatprep.mubr.f32.mxu0 0.0
    %4596 = vmatmul.mubr.f32.gmra.mrb[0].mxu0 %v3830
    %v4597 = vpop.f32.mrb[0].mxu0
    %v4598 = vadd.f32 %v4519, %v4597
    %v4599 = vpop.f32.mrb[0].mxu0
    %4600 = vmatprep.mubr.f32.mxu0 0.0
    %4601 = vmatmul.mubr.f32.gmra.mrb[0].mxu0 %v3833
    %v4602 = vpop.f32.mrb[0].mxu0
    %v4603 = vadd.f32 %v4519, %v4602
    %v4604 = vpop.f32.mrb[0].mxu0
    %4605 = vdwg.mxu0
    %s4606 = scalar_lea.vmem %s3, 640
    %v4607 = vld [vmem:[%s4606] sm:$0xff]
    %v4608 = vld [vmem:[%s4606 + $0x8] sm:$0xff]
    %v4609 = vld [vmem:[%s4606 + $0x10] sm:$0xff]
    %v4610 = vld [vmem:[%s4606 + $0x18] sm:$0xff]
    %s4611 = scalar_lea.vmem %s4, 20
    %v4612 = vld [vmem:[%s4611] sm:$0x1]
    %v4614 = vlaneseq
    %v4615 = vshrl.u32 %v4614, 7
    %v4616 = vsub.s32 0, %v4615
    %v4617 = vrot.slane %v4612, %v4616
    %4619 = vmatprep.subr.mxu0 0.0
    %4620 = vmatpush1.msra.mxu0 %v4607
    %4621 = vmatprep.subr.mxu0 0.0
    %4622 = vmatpush1.msra.mxu0 %v4608
    %4623 = vmatprep.subr.mxu0 0.0
    %4624 = vmatpush1.msra.mxu0 %v4609
    %4625 = vmatprep.subr.mxu0 0.0
    %4626 = vmatpush1.msra.mxu0 %v4610
    %4627 = vmatprep.subr.mxu0 0.0
    %4628 = vmatpush1.msra.mxu0 0.0
    %4629 = vmatprep.subr.mxu0 0.0
    %4630 = vmatpush1.msra.mxu0 0.0
    %4631 = vmatprep.subr.mxu0 0.0
    %4632 = vmatpush1.msra.mxu0 0.0
    %4633 = vmatprep.subr.mxu0 0.0
    %4634 = vmatpush1.msra.mxu0 0.0
    %4635 = vmatprep.subr.mxu0 0.0
    %4636 = vmatpush1.msra.mxu0 0.0
    %4637 = vmatprep.subr.mxu0 0.0
    %4638 = vmatpush1.msra.mxu0 0.0
    %4639 = vmatprep.subr.mxu0 0.0
    %4640 = vmatpush1.msra.mxu0 0.0
    %4641 = vmatprep.subr.mxu0 0.0
    %4642 = vmatpush1.msra.mxu0 0.0
    %4643 = vmatprep.subr.mxu0 0.0
    %4644 = vmatpush1.msra.mxu0 0.0
    %4645 = vmatprep.subr.mxu0 0.0
    %4646 = vmatpush1.msra.mxu0 0.0
    %4647 = vmatprep.subr.mxu0 0.0
    %4648 = vmatpush1.msra.mxu0 0.0
    %4649 = vmatprep.subr.mxu0 0.0
    %4650 = vmatpush1.msra.mxu0 0.0
    %4651 = vmatprep.subr.mxu0 0.0
    %4652 = vmatpush1.msra.mxu0 0.0
    %4653 = vmatprep.subr.mxu0 0.0
    %4654 = vmatpush1.msra.mxu0 0.0
    %4655 = vmatprep.subr.mxu0 0.0
    %4656 = vmatpush1.msra.mxu0 0.0
    %4657 = vmatprep.subr.mxu0 0.0
    %4658 = vmatpush1.msra.mxu0 0.0
    %4659 = vmatprep.subr.mxu0 0.0
    %4660 = vmatpush1.msra.mxu0 0.0
    %4661 = vmatprep.subr.mxu0 0.0
    %4662 = vmatpush1.msra.mxu0 0.0
    %4663 = vmatprep.subr.mxu0 0.0
    %4664 = vmatpush1.msra.mxu0 0.0
    %4665 = vmatprep.subr.mxu0 0.0
    %4666 = vmatpush1.msra.mxu0 0.0
    %4667 = vmatprep.subr.mxu0 0.0
    %4668 = vmatpush1.msra.mxu0 0.0
    %4669 = vmatprep.subr.mxu0 0.0
    %4670 = vmatpush1.msra.mxu0 0.0
    %4671 = vmatprep.subr.mxu0 0.0
    %4672 = vmatpush1.msra.mxu0 0.0
    %4673 = vmatprep.subr.mxu0 0.0
    %4674 = vmatpush1.msra.mxu0 0.0
    %4675 = vmatprep.subr.mxu0 0.0
    %4676 = vmatpush1.msra.mxu0 0.0
    %4677 = vmatprep.subr.mxu0 0.0
    %4678 = vmatpush1.msra.mxu0 0.0
    %4679 = vmatprep.subr.mxu0 0.0
    %4680 = vmatpush1.msra.mxu0 0.0
    %4681 = vmatprep.subr.mxu0 0.0
    %4682 = vmatpush1.msra.mxu0 0.0
    %4683 = vmatprep.mubr.f32.mxu0 0.0
    %4684 = vmatmul.mubr.f32.gmra.mrb[0].mxu0 %v3824
    %v4685 = vpop.f32.mrb[0].mxu0
    %v4686 = vadd.f32 %v4617, %v4685
    %v4687 = vpop.f32.mrb[0].mxu0
    %4688 = vmatprep.mubr.f32.mxu0 0.0
    %4689 = vmatmul.mubr.f32.gmra.mrb[0].mxu0 %v3827
    %v4690 = vpop.f32.mrb[0].mxu0
    %v4691 = vadd.f32 %v4617, %v4690
    %v4692 = vpop.f32.mrb[0].mxu0
    %4693 = vmatprep.mubr.f32.mxu0 0.0
    %4694 = vmatmul.mubr.f32.gmra.mrb[0].mxu0 %v3830
    %v4695 = vpop.f32.mrb[0].mxu0
    %v4696 = vadd.f32 %v4617, %v4695
    %v4697 = vpop.f32.mrb[0].mxu0
    %4698 = vmatprep.mubr.f32.mxu0 0.0
    %4699 = vmatmul.mubr.f32.gmra.mrb[0].mxu0 %v3833
    %v4700 = vpop.f32.mrb[0].mxu0
    %v4701 = vadd.f32 %v4617, %v4700
    %v4702 = vpop.f32.mrb[0].mxu0
    %4703 = vdwg.mxu0
    %s4704 = scalar_lea.vmem %s3, 672
    %v4705 = vld [vmem:[%s4704] sm:$0xff]
    %v4706 = vld [vmem:[%s4704 + $0x8] sm:$0xff]
    %v4707 = vld [vmem:[%s4704 + $0x10] sm:$0xff]
    %v4708 = vld [vmem:[%s4704 + $0x18] sm:$0xff]
    %s4709 = scalar_lea.vmem %s4, 21
    %v4710 = vld [vmem:[%s4709] sm:$0x1]
    %v4712 = vlaneseq
    %v4713 = vshrl.u32 %v4712, 7
    %v4714 = vsub.s32 0, %v4713
    %v4715 = vrot.slane %v4710, %v4714
    %4717 = vmatprep.subr.mxu0 0.0
    %4718 = vmatpush1.msra.mxu0 %v4705
    %4719 = vmatprep.subr.mxu0 0.0
    %4720 = vmatpush1.msra.mxu0 %v4706
    %4721 = vmatprep.subr.mxu0 0.0
    %4722 = vmatpush1.msra.mxu0 %v4707
    %4723 = vmatprep.subr.mxu0 0.0
    %4724 = vmatpush1.msra.mxu0 %v4708
    %4725 = vmatprep.subr.mxu0 0.0
    %4726 = vmatpush1.msra.mxu0 0.0
    %4727 = vmatprep.subr.mxu0 0.0
    %4728 = vmatpush1.msra.mxu0 0.0
    %4729 = vmatprep.subr.mxu0 0.0
    %4730 = vmatpush1.msra.mxu0 0.0
    %4731 = vmatprep.subr.mxu0 0.0
    %4732 = vmatpush1.msra.mxu0 0.0
    %4733 = vmatprep.subr.mxu0 0.0
    %4734 = vmatpush1.msra.mxu0 0.0
    %4735 = vmatprep.subr.mxu0 0.0
    %4736 = vmatpush1.msra.mxu0 0.0
    %4737 = vmatprep.subr.mxu0 0.0
    %4738 = vmatpush1.msra.mxu0 0.0
    %4739 = vmatprep.subr.mxu0 0.0
    %4740 = vmatpush1.msra.mxu0 0.0
    %4741 = vmatprep.subr.mxu0 0.0
    %4742 = vmatpush1.msra.mxu0 0.0
    %4743 = vmatprep.subr.mxu0 0.0
    %4744 = vmatpush1.msra.mxu0 0.0
    %4745 = vmatprep.subr.mxu0 0.0
    %4746 = vmatpush1.msra.mxu0 0.0
    %4747 = vmatprep.subr.mxu0 0.0
    %4748 = vmatpush1.msra.mxu0 0.0
    %4749 = vmatprep.subr.mxu0 0.0
    %4750 = vmatpush1.msra.mxu0 0.0
    %4751 = vmatprep.subr.mxu0 0.0
    %4752 = vmatpush1.msra.mxu0 0.0
    %4753 = vmatprep.subr.mxu0 0.0
    %4754 = vmatpush1.msra.mxu0 0.0
    %4755 = vmatprep.subr.mxu0 0.0
    %4756 = vmatpush1.msra.mxu0 0.0
    %4757 = vmatprep.subr.mxu0 0.0
    %4758 = vmatpush1.msra.mxu0 0.0
    %4759 = vmatprep.subr.mxu0 0.0
    %4760 = vmatpush1.msra.mxu0 0.0
    %4761 = vmatprep.subr.mxu0 0.0
    %4762 = vmatpush1.msra.mxu0 0.0
    %4763 = vmatprep.subr.mxu0 0.0
    %4764 = vmatpush1.msra.mxu0 0.0
    %4765 = vmatprep.subr.mxu0 0.0
    %4766 = vmatpush1.msra.mxu0 0.0
    %4767 = vmatprep.subr.mxu0 0.0
    %4768 = vmatpush1.msra.mxu0 0.0
    %4769 = vmatprep.subr.mxu0 0.0
    %4770 = vmatpush1.msra.mxu0 0.0
    %4771 = vmatprep.subr.mxu0 0.0
    %4772 = vmatpush1.msra.mxu0 0.0
    %4773 = vmatprep.subr.mxu0 0.0
    %4774 = vmatpush1.msra.mxu0 0.0
    %4775 = vmatprep.subr.mxu0 0.0
    %4776 = vmatpush1.msra.mxu0 0.0
    %4777 = vmatprep.subr.mxu0 0.0
    %4778 = vmatpush1.msra.mxu0 0.0
    %4779 = vmatprep.subr.mxu0 0.0
    %4780 = vmatpush1.msra.mxu0 0.0
    %4781 = vmatprep.mubr.f32.mxu0 0.0
    %4782 = vmatmul.mubr.f32.gmra.mrb[0].mxu0 %v3824
    %v4783 = vpop.f32.mrb[0].mxu0
    %v4784 = vadd.f32 %v4715, %v4783
    %v4785 = vpop.f32.mrb[0].mxu0
    %4786 = vmatprep.mubr.f32.mxu0 0.0
    %4787 = vmatmul.mubr.f32.gmra.mrb[0].mxu0 %v3827
    %v4788 = vpop.f32.mrb[0].mxu0
    %v4789 = vadd.f32 %v4715, %v4788
    %v4790 = vpop.f32.mrb[0].mxu0
    %4791 = vmatprep.mubr.f32.mxu0 0.0
    %4792 = vmatmul.mubr.f32.gmra.mrb[0].mxu0 %v3830
    %v4793 = vpop.f32.mrb[0].mxu0
    %v4794 = vadd.f32 %v4715, %v4793
    %v4795 = vpop.f32.mrb[0].mxu0
    %4796 = vmatprep.mubr.f32.mxu0 0.0
    %4797 = vmatmul.mubr.f32.gmra.mrb[0].mxu0 %v3833
    %v4798 = vpop.f32.mrb[0].mxu0
    %v4799 = vadd.f32 %v4715, %v4798
    %v4800 = vpop.f32.mrb[0].mxu0
    %4801 = vdwg.mxu0
    %s4802 = scalar_lea.vmem %s3, 704
    %v4803 = vld [vmem:[%s4802] sm:$0xff]
    %v4804 = vld [vmem:[%s4802 + $0x8] sm:$0xff]
    %v4805 = vld [vmem:[%s4802 + $0x10] sm:$0xff]
    %v4806 = vld [vmem:[%s4802 + $0x18] sm:$0xff]
    %s4807 = scalar_lea.vmem %s4, 22
    %v4808 = vld [vmem:[%s4807] sm:$0x1]
    %v4810 = vlaneseq
    %v4811 = vshrl.u32 %v4810, 7
    %v4812 = vsub.s32 0, %v4811
    %v4813 = vrot.slane %v4808, %v4812
    %4815 = vmatprep.subr.mxu0 0.0
    %4816 = vmatpush1.msra.mxu0 %v4803
    %4817 = vmatprep.subr.mxu0 0.0
    %4818 = vmatpush1.msra.mxu0 %v4804
    %4819 = vmatprep.subr.mxu0 0.0
    %4820 = vmatpush1.msra.mxu0 %v4805
    %4821 = vmatprep.subr.mxu0 0.0
    %4822 = vmatpush1.msra.mxu0 %v4806
    %4823 = vmatprep.subr.mxu0 0.0
    %4824 = vmatpush1.msra.mxu0 0.0
    %4825 = vmatprep.subr.mxu0 0.0
    %4826 = vmatpush1.msra.mxu0 0.0
    %4827 = vmatprep.subr.mxu0 0.0
    %4828 = vmatpush1.msra.mxu0 0.0
    %4829 = vmatprep.subr.mxu0 0.0
    %4830 = vmatpush1.msra.mxu0 0.0
    %4831 = vmatprep.subr.mxu0 0.0
    %4832 = vmatpush1.msra.mxu0 0.0
    %4833 = vmatprep.subr.mxu0 0.0
    %4834 = vmatpush1.msra.mxu0 0.0
    %4835 = vmatprep.subr.mxu0 0.0
    %4836 = vmatpush1.msra.mxu0 0.0
    %4837 = vmatprep.subr.mxu0 0.0
    %4838 = vmatpush1.msra.mxu0 0.0
    %4839 = vmatprep.subr.mxu0 0.0
    %4840 = vmatpush1.msra.mxu0 0.0
    %4841 = vmatprep.subr.mxu0 0.0
    %4842 = vmatpush1.msra.mxu0 0.0
    %4843 = vmatprep.subr.mxu0 0.0
    %4844 = vmatpush1.msra.mxu0 0.0
    %4845 = vmatprep.subr.mxu0 0.0
    %4846 = vmatpush1.msra.mxu0 0.0
    %4847 = vmatprep.subr.mxu0 0.0
    %4848 = vmatpush1.msra.mxu0 0.0
    %4849 = vmatprep.subr.mxu0 0.0
    %4850 = vmatpush1.msra.mxu0 0.0
    %4851 = vmatprep.subr.mxu0 0.0
    %4852 = vmatpush1.msra.mxu0 0.0
    %4853 = vmatprep.subr.mxu0 0.0
    %4854 = vmatpush1.msra.mxu0 0.0
    %4855 = vmatprep.subr.mxu0 0.0
    %4856 = vmatpush1.msra.mxu0 0.0
    %4857 = vmatprep.subr.mxu0 0.0
    %4858 = vmatpush1.msra.mxu0 0.0
    %4859 = vmatprep.subr.mxu0 0.0
    %4860 = vmatpush1.msra.mxu0 0.0
    %4861 = vmatprep.subr.mxu0 0.0
    %4862 = vmatpush1.msra.mxu0 0.0
    %4863 = vmatprep.subr.mxu0 0.0
    %4864 = vmatpush1.msra.mxu0 0.0
    %4865 = vmatprep.subr.mxu0 0.0
    %4866 = vmatpush1.msra.mxu0 0.0
    %4867 = vmatprep.subr.mxu0 0.0
    %4868 = vmatpush1.msra.mxu0 0.0
    %4869 = vmatprep.subr.mxu0 0.0
    %4870 = vmatpush1.msra.mxu0 0.0
    %4871 = vmatprep.subr.mxu0 0.0
    %4872 = vmatpush1.msra.mxu0 0.0
    %4873 = vmatprep.subr.mxu0 0.0
    %4874 = vmatpush1.msra.mxu0 0.0
    %4875 = vmatprep.subr.mxu0 0.0
    %4876 = vmatpush1.msra.mxu0 0.0
    %4877 = vmatprep.subr.mxu0 0.0
    %4878 = vmatpush1.msra.mxu0 0.0
    %4879 = vmatprep.mubr.f32.mxu0 0.0
    %4880 = vmatmul.mubr.f32.gmra.mrb[0].mxu0 %v3824
    %v4881 = vpop.f32.mrb[0].mxu0
    %v4882 = vadd.f32 %v4813, %v4881
    %v4883 = vpop.f32.mrb[0].mxu0
    %4884 = vmatprep.mubr.f32.mxu0 0.0
    %4885 = vmatmul.mubr.f32.gmra.mrb[0].mxu0 %v3827
    %v4886 = vpop.f32.mrb[0].mxu0
    %v4887 = vadd.f32 %v4813, %v4886
    %v4888 = vpop.f32.mrb[0].mxu0
    %4889 = vmatprep.mubr.f32.mxu0 0.0
    %4890 = vmatmul.mubr.f32.gmra.mrb[0].mxu0 %v3830
    %v4891 = vpop.f32.mrb[0].mxu0
    %v4892 = vadd.f32 %v4813, %v4891
    %v4893 = vpop.f32.mrb[0].mxu0
    %4894 = vmatprep.mubr.f32.mxu0 0.0
    %4895 = vmatmul.mubr.f32.gmra.mrb[0].mxu0 %v3833
    %v4896 = vpop.f32.mrb[0].mxu0
    %v4897 = vadd.f32 %v4813, %v4896
    %v4898 = vpop.f32.mrb[0].mxu0
    %4899 = vdwg.mxu0
    %s4900 = scalar_lea.vmem %s3, 736
    %v4901 = vld [vmem:[%s4900] sm:$0xff]
    %v4902 = vld [vmem:[%s4900 + $0x8] sm:$0xff]
    %v4903 = vld [vmem:[%s4900 + $0x10] sm:$0xff]
    %v4904 = vld [vmem:[%s4900 + $0x18] sm:$0xff]
    %s4905 = scalar_lea.vmem %s4, 23
    %v4906 = vld [vmem:[%s4905] sm:$0x1]
    %v4908 = vlaneseq
    %v4909 = vshrl.u32 %v4908, 7
    %v4910 = vsub.s32 0, %v4909
    %v4911 = vrot.slane %v4906, %v4910
    %4913 = vmatprep.subr.mxu0 0.0
    %4914 = vmatpush1.msra.mxu0 %v4901
    %4915 = vmatprep.subr.mxu0 0.0
    %4916 = vmatpush1.msra.mxu0 %v4902
    %4917 = vmatprep.subr.mxu0 0.0
    %4918 = vmatpush1.msra.mxu0 %v4903
    %4919 = vmatprep.subr.mxu0 0.0
    %4920 = vmatpush1.msra.mxu0 %v4904
    %4921 = vmatprep.subr.mxu0 0.0
    %4922 = vmatpush1.msra.mxu0 0.0
    %4923 = vmatprep.subr.mxu0 0.0
    %4924 = vmatpush1.msra.mxu0 0.0
    %4925 = vmatprep.subr.mxu0 0.0
    %4926 = vmatpush1.msra.mxu0 0.0
    %4927 = vmatprep.subr.mxu0 0.0
    %4928 = vmatpush1.msra.mxu0 0.0
    %4929 = vmatprep.subr.mxu0 0.0
    %4930 = vmatpush1.msra.mxu0 0.0
    %4931 = vmatprep.subr.mxu0 0.0
    %4932 = vmatpush1.msra.mxu0 0.0
    %4933 = vmatprep.subr.mxu0 0.0
    %4934 = vmatpush1.msra.mxu0 0.0
    %4935 = vmatprep.subr.mxu0 0.0
    %4936 = vmatpush1.msra.mxu0 0.0
    %4937 = vmatprep.subr.mxu0 0.0
    %4938 = vmatpush1.msra.mxu0 0.0
    %4939 = vmatprep.subr.mxu0 0.0
    %4940 = vmatpush1.msra.mxu0 0.0
    %4941 = vmatprep.subr.mxu0 0.0
    %4942 = vmatpush1.msra.mxu0 0.0
    %4943 = vmatprep.subr.mxu0 0.0
    %4944 = vmatpush1.msra.mxu0 0.0
    %4945 = vmatprep.subr.mxu0 0.0
    %4946 = vmatpush1.msra.mxu0 0.0
    %4947 = vmatprep.subr.mxu0 0.0
    %4948 = vmatpush1.msra.mxu0 0.0
    %4949 = vmatprep.subr.mxu0 0.0
    %4950 = vmatpush1.msra.mxu0 0.0
    %4951 = vmatprep.subr.mxu0 0.0
    %4952 = vmatpush1.msra.mxu0 0.0
    %4953 = vmatprep.subr.mxu0 0.0
    %4954 = vmatpush1.msra.mxu0 0.0
    %4955 = vmatprep.subr.mxu0 0.0
    %4956 = vmatpush1.msra.mxu0 0.0
    %4957 = vmatprep.subr.mxu0 0.0
    %4958 = vmatpush1.msra.mxu0 0.0
    %4959 = vmatprep.subr.mxu0 0.0
    %4960 = vmatpush1.msra.mxu0 0.0
    %4961 = vmatprep.subr.mxu0 0.0
    %4962 = vmatpush1.msra.mxu0 0.0
    %4963 = vmatprep.subr.mxu0 0.0
    %4964 = vmatpush1.msra.mxu0 0.0
    %4965 = vmatprep.subr.mxu0 0.0
    %4966 = vmatpush1.msra.mxu0 0.0
    %4967 = vmatprep.subr.mxu0 0.0
    %4968 = vmatpush1.msra.mxu0 0.0
    %4969 = vmatprep.subr.mxu0 0.0
    %4970 = vmatpush1.msra.mxu0 0.0
    %4971 = vmatprep.subr.mxu0 0.0
    %4972 = vmatpush1.msra.mxu0 0.0
    %4973 = vmatprep.subr.mxu0 0.0
    %4974 = vmatpush1.msra.mxu0 0.0
    %4975 = vmatprep.subr.mxu0 0.0
    %4976 = vmatpush1.msra.mxu0 0.0
    %4977 = vmatprep.mubr.f32.mxu0 0.0
    %4978 = vmatmul.mubr.f32.gmra.mrb[0].mxu0 %v3824
    %v4979 = vpop.f32.mrb[0].mxu0
    %v4980 = vadd.f32 %v4911, %v4979
    %v4981 = vpop.f32.mrb[0].mxu0
    %4982 = vmatprep.mubr.f32.mxu0 0.0
    %4983 = vmatmul.mubr.f32.gmra.mrb[0].mxu0 %v3827
    %v4984 = vpop.f32.mrb[0].mxu0
    %v4985 = vadd.f32 %v4911, %v4984
    %v4986 = vpop.f32.mrb[0].mxu0
    %4987 = vmatprep.mubr.f32.mxu0 0.0
    %4988 = vmatmul.mubr.f32.gmra.mrb[0].mxu0 %v3830
    %v4989 = vpop.f32.mrb[0].mxu0
    %v4990 = vadd.f32 %v4911, %v4989
    %v4991 = vpop.f32.mrb[0].mxu0
    %4992 = vmatprep.mubr.f32.mxu0 0.0
    %4993 = vmatmul.mubr.f32.gmra.mrb[0].mxu0 %v3833
    %v4994 = vpop.f32.mrb[0].mxu0
    %v4995 = vadd.f32 %v4911, %v4994
    %v4996 = vpop.f32.mrb[0].mxu0
    %4997 = vdwg.mxu0
    %v4999 = vsel %vm1456, %v3902, 0
    %v5002 = vsel %vm1456, %v3907, 0
    %v5005 = vsel %vm1456, %v4294, 0
    %v5008 = vsel %vm1456, %v4299, 0
    %5010 = vmatprep.subr.mxu0 0.0
    %5011 = vmatpush1.xpose.msra.mxu0 %v5005
    %5012 = vmatprep.subr.mxu0 0.0
    %5013 = vmatpush1.xpose.msra.mxu0 %v5008
    %5014 = vmatprep.subr.mxu0 0.0
    %5015 = vmatpush1.xpose.msra.mxu0 0.0
    %5016 = vmatprep.subr.mxu0 0.0
    %5017 = vmatpush1.xpose.msra.mxu0 0.0
    %5018 = vmatprep.subr.mxu0 0.0
    %5019 = vmatpush1.xpose.msra.mxu0 0.0
    %5020 = vmatprep.subr.mxu0 0.0
    %5021 = vmatpush1.xpose.msra.mxu0 0.0
    %5022 = vmatprep.subr.mxu0 0.0
    %5023 = vmatpush1.xpose.msra.mxu0 0.0
    %5024 = vmatprep.subr.mxu0 0.0
    %5025 = vmatpush1.xpose.msra.mxu0 0.0
    %5026 = vmatprep.subr.mxu0 0.0
    %5027 = vmatpush1.xpose.msra.mxu0 0.0
    %5028 = vmatprep.subr.mxu0 0.0
    %5029 = vmatpush1.xpose.msra.mxu0 0.0
    %5030 = vmatprep.subr.mxu0 0.0
    %5031 = vmatpush1.xpose.msra.mxu0 0.0
    %5032 = vmatprep.subr.mxu0 0.0
    %5033 = vmatpush1.xpose.msra.mxu0 0.0
    %5034 = vmatprep.subr.mxu0 0.0
    %5035 = vmatpush1.xpose.msra.mxu0 0.0
    %5036 = vmatprep.subr.mxu0 0.0
    %5037 = vmatpush1.xpose.msra.mxu0 0.0
    %5038 = vmatprep.subr.mxu0 0.0
    %5039 = vmatpush1.xpose.msra.mxu0 0.0
    %5040 = vmatprep.subr.mxu0 0.0
    %5041 = vmatpush1.xpose.msra.mxu0 0.0
    %5042 = vmatprep.subr.mxu0 0.0
    %5043 = vmatpush1.xpose.msra.mxu0 0.0
    %5044 = vmatprep.subr.mxu0 0.0
    %5045 = vmatpush1.xpose.msra.mxu0 0.0
    %5046 = vmatprep.subr.mxu0 0.0
    %5047 = vmatpush1.xpose.msra.mxu0 0.0
    %5048 = vmatprep.subr.mxu0 0.0
    %5049 = vmatpush1.xpose.msra.mxu0 0.0
    %5050 = vmatprep.subr.mxu0 0.0
    %5051 = vmatpush1.xpose.msra.mxu0 0.0
    %5052 = vmatprep.subr.mxu0 0.0
    %5053 = vmatpush1.xpose.msra.mxu0 0.0
    %5054 = vmatprep.subr.mxu0 0.0
    %5055 = vmatpush1.xpose.msra.mxu0 0.0
    %5056 = vmatprep.subr.mxu0 0.0
    %5057 = vmatpush1.xpose.msra.mxu0 0.0
    %5058 = vmatprep.subr.mxu0 0.0
    %5059 = vmatpush1.xpose.msra.mxu0 0.0
    %5060 = vmatprep.subr.mxu0 0.0
    %5061 = vmatpush1.xpose.msra.mxu0 0.0
    %5062 = vmatprep.subr.mxu0 0.0
    %5063 = vmatpush1.xpose.msra.mxu0 0.0
    %5064 = vmatprep.subr.mxu0 0.0
    %5065 = vmatpush1.xpose.msra.mxu0 0.0
    %5066 = vmatprep.subr.mxu0 0.0
    %5067 = vmatpush1.xpose.msra.mxu0 0.0
    %5068 = vmatprep.subr.mxu0 0.0
    %5069 = vmatpush1.xpose.msra.mxu0 0.0
    %5070 = vmatprep.subr.mxu0 0.0
    %5071 = vmatpush1.xpose.msra.mxu0 0.0
    %5072 = vmatprep.subr.mxu0 0.0
    %5073 = vmatpush1.xpose.msra.mxu0 0.0
    %5074 = vmatprep.mubr.f32.mxu0 0.0
    %5075 = vmatmul.mubr.f32.gmra.mrb[0].mxu0 %v4999
    %v5076 = vpop.f32.mrb[0].mxu0
    %v5077 = vadd.f32 0.0, %v5076
    %v5078 = vpop.f32.mrb[0].mxu0
    %5079 = vmatprep.mubr.f32.mxu0 0.0
    %5080 = vmatmul.mubr.f32.gmra.mrb[0].mxu0 %v5002
    %v5081 = vpop.f32.mrb[0].mxu0
    %v5082 = vadd.f32 0.0, %v5081
    %v5083 = vpop.f32.mrb[0].mxu0
    %5084 = vdwg.mxu0
    %v5086 = vsel %vm1456, %v3912, 0
    %v5089 = vsel %vm1456, %v3917, 0
    %v5092 = vsel %vm1456, %v4304, 0
    %v5095 = vsel %vm1456, %v4309, 0
    %5097 = vmatprep.subr.mxu0 0.0
    %5098 = vmatpush1.xpose.msra.mxu0 %v5092
    %5099 = vmatprep.subr.mxu0 0.0
    %5100 = vmatpush1.xpose.msra.mxu0 %v5095
    %5101 = vmatprep.subr.mxu0 0.0
    %5102 = vmatpush1.xpose.msra.mxu0 0.0
    %5103 = vmatprep.subr.mxu0 0.0
    %5104 = vmatpush1.xpose.msra.mxu0 0.0
    %5105 = vmatprep.subr.mxu0 0.0
    %5106 = vmatpush1.xpose.msra.mxu0 0.0
    %5107 = vmatprep.subr.mxu0 0.0
    %5108 = vmatpush1.xpose.msra.mxu0 0.0
    %5109 = vmatprep.subr.mxu0 0.0
    %5110 = vmatpush1.xpose.msra.mxu0 0.0
    %5111 = vmatprep.subr.mxu0 0.0
    %5112 = vmatpush1.xpose.msra.mxu0 0.0
    %5113 = vmatprep.subr.mxu0 0.0
    %5114 = vmatpush1.xpose.msra.mxu0 0.0
    %5115 = vmatprep.subr.mxu0 0.0
    %5116 = vmatpush1.xpose.msra.mxu0 0.0
    %5117 = vmatprep.subr.mxu0 0.0
    %5118 = vmatpush1.xpose.msra.mxu0 0.0
    %5119 = vmatprep.subr.mxu0 0.0
    %5120 = vmatpush1.xpose.msra.mxu0 0.0
    %5121 = vmatprep.subr.mxu0 0.0
    %5122 = vmatpush1.xpose.msra.mxu0 0.0
    %5123 = vmatprep.subr.mxu0 0.0
    %5124 = vmatpush1.xpose.msra.mxu0 0.0
    %5125 = vmatprep.subr.mxu0 0.0
    %5126 = vmatpush1.xpose.msra.mxu0 0.0
    %5127 = vmatprep.subr.mxu0 0.0
    %5128 = vmatpush1.xpose.msra.mxu0 0.0
    %5129 = vmatprep.subr.mxu0 0.0
    %5130 = vmatpush1.xpose.msra.mxu0 0.0
    %5131 = vmatprep.subr.mxu0 0.0
    %5132 = vmatpush1.xpose.msra.mxu0 0.0
    %5133 = vmatprep.subr.mxu0 0.0
    %5134 = vmatpush1.xpose.msra.mxu0 0.0
    %5135 = vmatprep.subr.mxu0 0.0
    %5136 = vmatpush1.xpose.msra.mxu0 0.0
    %5137 = vmatprep.subr.mxu0 0.0
    %5138 = vmatpush1.xpose.msra.mxu0 0.0
    %5139 = vmatprep.subr.mxu0 0.0
    %5140 = vmatpush1.xpose.msra.mxu0 0.0
    %5141 = vmatprep.subr.mxu0 0.0
    %5142 = vmatpush1.xpose.msra.mxu0 0.0
    %5143 = vmatprep.subr.mxu0 0.0
    %5144 = vmatpush1.xpose.msra.mxu0 0.0
    %5145 = vmatprep.subr.mxu0 0.0
    %5146 = vmatpush1.xpose.msra.mxu0 0.0
    %5147 = vmatprep.subr.mxu0 0.0
    %5148 = vmatpush1.xpose.msra.mxu0 0.0
    %5149 = vmatprep.subr.mxu0 0.0
    %5150 = vmatpush1.xpose.msra.mxu0 0.0
    %5151 = vmatprep.subr.mxu0 0.0
    %5152 = vmatpush1.xpose.msra.mxu0 0.0
    %5153 = vmatprep.subr.mxu0 0.0
    %5154 = vmatpush1.xpose.msra.mxu0 0.0
    %5155 = vmatprep.subr.mxu0 0.0
    %5156 = vmatpush1.xpose.msra.mxu0 0.0
    %5157 = vmatprep.subr.mxu0 0.0
    %5158 = vmatpush1.xpose.msra.mxu0 0.0
    %5159 = vmatprep.subr.mxu0 0.0
    %5160 = vmatpush1.xpose.msra.mxu0 0.0
    %5161 = vmatprep.mubr.f32.mxu0 0.0
    %5162 = vmatmul.mubr.f32.gmra.mrb[0].mxu0 %v5086
    %v5163 = vpop.f32.mrb[0].mxu0
    %v5164 = vadd.f32 0.0, %v5163
    %v5165 = vpop.f32.mrb[0].mxu0
    %5166 = vmatprep.mubr.f32.mxu0 0.0
    %5167 = vmatmul.mubr.f32.gmra.mrb[0].mxu0 %v5089
    %v5168 = vpop.f32.mrb[0].mxu0
    %v5169 = vadd.f32 0.0, %v5168
    %v5170 = vpop.f32.mrb[0].mxu0
    %5171 = vdwg.mxu0
    %v5173 = vsel %vm1456, %v4000, 0
    %v5176 = vsel %vm1456, %v4005, 0
    %v5179 = vsel %vm1456, %v4392, 0
    %v5182 = vsel %vm1456, %v4397, 0
    %5184 = vmatprep.subr.mxu0 0.0
    %5185 = vmatpush1.xpose.msra.mxu0 %v5179
    %5186 = vmatprep.subr.mxu0 0.0
    %5187 = vmatpush1.xpose.msra.mxu0 %v5182
    %5188 = vmatprep.subr.mxu0 0.0
    %5189 = vmatpush1.xpose.msra.mxu0 0.0
    %5190 = vmatprep.subr.mxu0 0.0
    %5191 = vmatpush1.xpose.msra.mxu0 0.0
    %5192 = vmatprep.subr.mxu0 0.0
    %5193 = vmatpush1.xpose.msra.mxu0 0.0
    %5194 = vmatprep.subr.mxu0 0.0
    %5195 = vmatpush1.xpose.msra.mxu0 0.0
    %5196 = vmatprep.subr.mxu0 0.0
    %5197 = vmatpush1.xpose.msra.mxu0 0.0
    %5198 = vmatprep.subr.mxu0 0.0
    %5199 = vmatpush1.xpose.msra.mxu0 0.0
    %5200 = vmatprep.subr.mxu0 0.0
    %5201 = vmatpush1.xpose.msra.mxu0 0.0
    %5202 = vmatprep.subr.mxu0 0.0
    %5203 = vmatpush1.xpose.msra.mxu0 0.0
    %5204 = vmatprep.subr.mxu0 0.0
    %5205 = vmatpush1.xpose.msra.mxu0 0.0
    %5206 = vmatprep.subr.mxu0 0.0
    %5207 = vmatpush1.xpose.msra.mxu0 0.0
    %5208 = vmatprep.subr.mxu0 0.0
    %5209 = vmatpush1.xpose.msra.mxu0 0.0
    %5210 = vmatprep.subr.mxu0 0.0
    %5211 = vmatpush1.xpose.msra.mxu0 0.0
    %5212 = vmatprep.subr.mxu0 0.0
    %5213 = vmatpush1.xpose.msra.mxu0 0.0
    %5214 = vmatprep.subr.mxu0 0.0
    %5215 = vmatpush1.xpose.msra.mxu0 0.0
    %5216 = vmatprep.subr.mxu0 0.0
    %5217 = vmatpush1.xpose.msra.mxu0 0.0
    %5218 = vmatprep.subr.mxu0 0.0
    %5219 = vmatpush1.xpose.msra.mxu0 0.0
    %5220 = vmatprep.subr.mxu0 0.0
    %5221 = vmatpush1.xpose.msra.mxu0 0.0
    %5222 = vmatprep.subr.mxu0 0.0
    %5223 = vmatpush1.xpose.msra.mxu0 0.0
    %5224 = vmatprep.subr.mxu0 0.0
    %5225 = vmatpush1.xpose.msra.mxu0 0.0
    %5226 = vmatprep.subr.mxu0 0.0
    %5227 = vmatpush1.xpose.msra.mxu0 0.0
    %5228 = vmatprep.subr.mxu0 0.0
    %5229 = vmatpush1.xpose.msra.mxu0 0.0
    %5230 = vmatprep.subr.mxu0 0.0
    %5231 = vmatpush1.xpose.msra.mxu0 0.0
    %5232 = vmatprep.subr.mxu0 0.0
    %5233 = vmatpush1.xpose.msra.mxu0 0.0
    %5234 = vmatprep.subr.mxu0 0.0
    %5235 = vmatpush1.xpose.msra.mxu0 0.0
    %5236 = vmatprep.subr.mxu0 0.0
    %5237 = vmatpush1.xpose.msra.mxu0 0.0
    %5238 = vmatprep.subr.mxu0 0.0
    %5239 = vmatpush1.xpose.msra.mxu0 0.0
    %5240 = vmatprep.subr.mxu0 0.0
    %5241 = vmatpush1.xpose.msra.mxu0 0.0
    %5242 = vmatprep.subr.mxu0 0.0
    %5243 = vmatpush1.xpose.msra.mxu0 0.0
    %5244 = vmatprep.subr.mxu0 0.0
    %5245 = vmatpush1.xpose.msra.mxu0 0.0
    %5246 = vmatprep.subr.mxu0 0.0
    %5247 = vmatpush1.xpose.msra.mxu0 0.0
    %5248 = vmatprep.mubr.f32.mxu0 0.0
    %5249 = vmatmul.mubr.f32.gmra.mrb[0].mxu0 %v5173
    %v5250 = vpop.f32.mrb[0].mxu0
    %v5251 = vadd.f32 0.0, %v5250
    %v5252 = vpop.f32.mrb[0].mxu0
    %5253 = vmatprep.mubr.f32.mxu0 0.0
    %5254 = vmatmul.mubr.f32.gmra.mrb[0].mxu0 %v5176
    %v5255 = vpop.f32.mrb[0].mxu0
    %v5256 = vadd.f32 0.0, %v5255
    %v5257 = vpop.f32.mrb[0].mxu0
    %5258 = vdwg.mxu0
    %v5260 = vsel %vm1456, %v4010, 0
    %v5263 = vsel %vm1456, %v4015, 0
    %v5266 = vsel %vm1456, %v4402, 0
    %v5269 = vsel %vm1456, %v4407, 0
    %5271 = vmatprep.subr.mxu0 0.0
    %5272 = vmatpush1.xpose.msra.mxu0 %v5266
    %5273 = vmatprep.subr.mxu0 0.0
    %5274 = vmatpush1.xpose.msra.mxu0 %v5269
    %5275 = vmatprep.subr.mxu0 0.0
    %5276 = vmatpush1.xpose.msra.mxu0 0.0
    %5277 = vmatprep.subr.mxu0 0.0
    %5278 = vmatpush1.xpose.msra.mxu0 0.0
    %5279 = vmatprep.subr.mxu0 0.0
    %5280 = vmatpush1.xpose.msra.mxu0 0.0
    %5281 = vmatprep.subr.mxu0 0.0
    %5282 = vmatpush1.xpose.msra.mxu0 0.0
    %5283 = vmatprep.subr.mxu0 0.0
    %5284 = vmatpush1.xpose.msra.mxu0 0.0
    %5285 = vmatprep.subr.mxu0 0.0
    %5286 = vmatpush1.xpose.msra.mxu0 0.0
    %5287 = vmatprep.subr.mxu0 0.0
    %5288 = vmatpush1.xpose.msra.mxu0 0.0
    %5289 = vmatprep.subr.mxu0 0.0
    %5290 = vmatpush1.xpose.msra.mxu0 0.0
    %5291 = vmatprep.subr.mxu0 0.0
    %5292 = vmatpush1.xpose.msra.mxu0 0.0
    %5293 = vmatprep.subr.mxu0 0.0
    %5294 = vmatpush1.xpose.msra.mxu0 0.0
    %5295 = vmatprep.subr.mxu0 0.0
    %5296 = vmatpush1.xpose.msra.mxu0 0.0
    %5297 = vmatprep.subr.mxu0 0.0
    %5298 = vmatpush1.xpose.msra.mxu0 0.0
    %5299 = vmatprep.subr.mxu0 0.0
    %5300 = vmatpush1.xpose.msra.mxu0 0.0
    %5301 = vmatprep.subr.mxu0 0.0
    %5302 = vmatpush1.xpose.msra.mxu0 0.0
    %5303 = vmatprep.subr.mxu0 0.0
    %5304 = vmatpush1.xpose.msra.mxu0 0.0
    %5305 = vmatprep.subr.mxu0 0.0
    %5306 = vmatpush1.xpose.msra.mxu0 0.0
    %5307 = vmatprep.subr.mxu0 0.0
    %5308 = vmatpush1.xpose.msra.mxu0 0.0
    %5309 = vmatprep.subr.mxu0 0.0
    %5310 = vmatpush1.xpose.msra.mxu0 0.0
    %5311 = vmatprep.subr.mxu0 0.0
    %5312 = vmatpush1.xpose.msra.mxu0 0.0
    %5313 = vmatprep.subr.mxu0 0.0
    %5314 = vmatpush1.xpose.msra.mxu0 0.0
    %5315 = vmatprep.subr.mxu0 0.0
    %5316 = vmatpush1.xpose.msra.mxu0 0.0
    %5317 = vmatprep.subr.mxu0 0.0
    %5318 = vmatpush1.xpose.msra.mxu0 0.0
    %5319 = vmatprep.subr.mxu0 0.0
    %5320 = vmatpush1.xpose.msra.mxu0 0.0
    %5321 = vmatprep.subr.mxu0 0.0
    %5322 = vmatpush1.xpose.msra.mxu0 0.0
    %5323 = vmatprep.subr.mxu0 0.0
    %5324 = vmatpush1.xpose.msra.mxu0 0.0
    %5325 = vmatprep.subr.mxu0 0.0
    %5326 = vmatpush1.xpose.msra.mxu0 0.0
    %5327 = vmatprep.subr.mxu0 0.0
    %5328 = vmatpush1.xpose.msra.mxu0 0.0
    %5329 = vmatprep.subr.mxu0 0.0
    %5330 = vmatpush1.xpose.msra.mxu0 0.0
    %5331 = vmatprep.subr.mxu0 0.0
    %5332 = vmatpush1.xpose.msra.mxu0 0.0
    %5333 = vmatprep.subr.mxu0 0.0
    %5334 = vmatpush1.xpose.msra.mxu0 0.0
    %5335 = vmatprep.mubr.f32.mxu0 0.0
    %5336 = vmatmul.mubr.f32.gmra.mrb[0].mxu0 %v5260
    %v5337 = vpop.f32.mrb[0].mxu0
    %v5338 = vadd.f32 0.0, %v5337
    %v5339 = vpop.f32.mrb[0].mxu0
    %5340 = vmatprep.mubr.f32.mxu0 0.0
    %5341 = vmatmul.mubr.f32.gmra.mrb[0].mxu0 %v5263
    %v5342 = vpop.f32.mrb[0].mxu0
    %v5343 = vadd.f32 0.0, %v5342
    %v5344 = vpop.f32.mrb[0].mxu0
    %5345 = vdwg.mxu0
    %v5347 = vsel %vm1456, %v4098, 0
    %v5350 = vsel %vm1456, %v4103, 0
    %v5353 = vsel %vm1456, %v4490, 0
    %v5356 = vsel %vm1456, %v4495, 0
    %5358 = vmatprep.subr.mxu0 0.0
    %5359 = vmatpush1.xpose.msra.mxu0 %v5353
    %5360 = vmatprep.subr.mxu0 0.0
    %5361 = vmatpush1.xpose.msra.mxu0 %v5356
    %5362 = vmatprep.subr.mxu0 0.0
    %5363 = vmatpush1.xpose.msra.mxu0 0.0
    %5364 = vmatprep.subr.mxu0 0.0
    %5365 = vmatpush1.xpose.msra.mxu0 0.0
    %5366 = vmatprep.subr.mxu0 0.0
    %5367 = vmatpush1.xpose.msra.mxu0 0.0
    %5368 = vmatprep.subr.mxu0 0.0
    %5369 = vmatpush1.xpose.msra.mxu0 0.0
    %5370 = vmatprep.subr.mxu0 0.0
    %5371 = vmatpush1.xpose.msra.mxu0 0.0
    %5372 = vmatprep.subr.mxu0 0.0
    %5373 = vmatpush1.xpose.msra.mxu0 0.0
    %5374 = vmatprep.subr.mxu0 0.0
    %5375 = vmatpush1.xpose.msra.mxu0 0.0
    %5376 = vmatprep.subr.mxu0 0.0
    %5377 = vmatpush1.xpose.msra.mxu0 0.0
    %5378 = vmatprep.subr.mxu0 0.0
    %5379 = vmatpush1.xpose.msra.mxu0 0.0
    %5380 = vmatprep.subr.mxu0 0.0
    %5381 = vmatpush1.xpose.msra.mxu0 0.0
    %5382 = vmatprep.subr.mxu0 0.0
    %5383 = vmatpush1.xpose.msra.mxu0 0.0
    %5384 = vmatprep.subr.mxu0 0.0
    %5385 = vmatpush1.xpose.msra.mxu0 0.0
    %5386 = vmatprep.subr.mxu0 0.0
    %5387 = vmatpush1.xpose.msra.mxu0 0.0
    %5388 = vmatprep.subr.mxu0 0.0
    %5389 = vmatpush1.xpose.msra.mxu0 0.0
    %5390 = vmatprep.subr.mxu0 0.0
    %5391 = vmatpush1.xpose.msra.mxu0 0.0
    %5392 = vmatprep.subr.mxu0 0.0
    %5393 = vmatpush1.xpose.msra.mxu0 0.0
    %5394 = vmatprep.subr.mxu0 0.0
    %5395 = vmatpush1.xpose.msra.mxu0 0.0
    %5396 = vmatprep.subr.mxu0 0.0
    %5397 = vmatpush1.xpose.msra.mxu0 0.0
    %5398 = vmatprep.subr.mxu0 0.0
    %5399 = vmatpush1.xpose.msra.mxu0 0.0
    %5400 = vmatprep.subr.mxu0 0.0
    %5401 = vmatpush1.xpose.msra.mxu0 0.0
    %5402 = vmatprep.subr.mxu0 0.0
    %5403 = vmatpush1.xpose.msra.mxu0 0.0
    %5404 = vmatprep.subr.mxu0 0.0
    %5405 = vmatpush1.xpose.msra.mxu0 0.0
    %5406 = vmatprep.subr.mxu0 0.0
    %5407 = vmatpush1.xpose.msra.mxu0 0.0
    %5408 = vmatprep.subr.mxu0 0.0
    %5409 = vmatpush1.xpose.msra.mxu0 0.0
    %5410 = vmatprep.subr.mxu0 0.0
    %5411 = vmatpush1.xpose.msra.mxu0 0.0
    %5412 = vmatprep.subr.mxu0 0.0
    %5413 = vmatpush1.xpose.msra.mxu0 0.0
    %5414 = vmatprep.subr.mxu0 0.0
    %5415 = vmatpush1.xpose.msra.mxu0 0.0
    %5416 = vmatprep.subr.mxu0 0.0
    %5417 = vmatpush1.xpose.msra.mxu0 0.0
    %5418 = vmatprep.subr.mxu0 0.0
    %5419 = vmatpush1.xpose.msra.mxu0 0.0
    %5420 = vmatprep.subr.mxu0 0.0
    %5421 = vmatpush1.xpose.msra.mxu0 0.0
    %5422 = vmatprep.mubr.f32.mxu0 0.0
    %5423 = vmatmul.mubr.f32.gmra.mrb[0].mxu0 %v5347
    %v5424 = vpop.f32.mrb[0].mxu0
    %v5425 = vadd.f32 0.0, %v5424
    %v5426 = vpop.f32.mrb[0].mxu0
    %5427 = vmatprep.mubr.f32.mxu0 0.0
    %5428 = vmatmul.mubr.f32.gmra.mrb[0].mxu0 %v5350
    %v5429 = vpop.f32.mrb[0].mxu0
    %v5430 = vadd.f32 0.0, %v5429
    %v5431 = vpop.f32.mrb[0].mxu0
    %5432 = vdwg.mxu0
    %v5434 = vsel %vm1456, %v4108, 0
    %v5437 = vsel %vm1456, %v4113, 0
    %v5440 = vsel %vm1456, %v4500, 0
    %v5443 = vsel %vm1456, %v4505, 0
    %5445 = vmatprep.subr.mxu0 0.0
    %5446 = vmatpush1.xpose.msra.mxu0 %v5440
    %5447 = vmatprep.subr.mxu0 0.0
    %5448 = vmatpush1.xpose.msra.mxu0 %v5443
    %5449 = vmatprep.subr.mxu0 0.0
    %5450 = vmatpush1.xpose.msra.mxu0 0.0
    %5451 = vmatprep.subr.mxu0 0.0
    %5452 = vmatpush1.xpose.msra.mxu0 0.0
    %5453 = vmatprep.subr.mxu0 0.0
    %5454 = vmatpush1.xpose.msra.mxu0 0.0
    %5455 = vmatprep.subr.mxu0 0.0
    %5456 = vmatpush1.xpose.msra.mxu0 0.0
    %5457 = vmatprep.subr.mxu0 0.0
    %5458 = vmatpush1.xpose.msra.mxu0 0.0
    %5459 = vmatprep.subr.mxu0 0.0
    %5460 = vmatpush1.xpose.msra.mxu0 0.0
    %5461 = vmatprep.subr.mxu0 0.0
    %5462 = vmatpush1.xpose.msra.mxu0 0.0
    %5463 = vmatprep.subr.mxu0 0.0
    %5464 = vmatpush1.xpose.msra.mxu0 0.0
    %5465 = vmatprep.subr.mxu0 0.0
    %5466 = vmatpush1.xpose.msra.mxu0 0.0
    %5467 = vmatprep.subr.mxu0 0.0
    %5468 = vmatpush1.xpose.msra.mxu0 0.0
    %5469 = vmatprep.subr.mxu0 0.0
    %5470 = vmatpush1.xpose.msra.mxu0 0.0
    %5471 = vmatprep.subr.mxu0 0.0
    %5472 = vmatpush1.xpose.msra.mxu0 0.0
    %5473 = vmatprep.subr.mxu0 0.0
    %5474 = vmatpush1.xpose.msra.mxu0 0.0
    %5475 = vmatprep.subr.mxu0 0.0
    %5476 = vmatpush1.xpose.msra.mxu0 0.0
    %5477 = vmatprep.subr.mxu0 0.0
    %5478 = vmatpush1.xpose.msra.mxu0 0.0
    %5479 = vmatprep.subr.mxu0 0.0
    %5480 = vmatpush1.xpose.msra.mxu0 0.0
    %5481 = vmatprep.subr.mxu0 0.0
    %5482 = vmatpush1.xpose.msra.mxu0 0.0
    %5483 = vmatprep.subr.mxu0 0.0
    %5484 = vmatpush1.xpose.msra.mxu0 0.0
    %5485 = vmatprep.subr.mxu0 0.0
    %5486 = vmatpush1.xpose.msra.mxu0 0.0
    %5487 = vmatprep.subr.mxu0 0.0
    %5488 = vmatpush1.xpose.msra.mxu0 0.0
    %5489 = vmatprep.subr.mxu0 0.0
    %5490 = vmatpush1.xpose.msra.mxu0 0.0
    %5491 = vmatprep.subr.mxu0 0.0
    %5492 = vmatpush1.xpose.msra.mxu0 0.0
    %5493 = vmatprep.subr.mxu0 0.0
    %5494 = vmatpush1.xpose.msra.mxu0 0.0
    %5495 = vmatprep.subr.mxu0 0.0
    %5496 = vmatpush1.xpose.msra.mxu0 0.0
    %5497 = vmatprep.subr.mxu0 0.0
    %5498 = vmatpush1.xpose.msra.mxu0 0.0
    %5499 = vmatprep.subr.mxu0 0.0
    %5500 = vmatpush1.xpose.msra.mxu0 0.0
    %5501 = vmatprep.subr.mxu0 0.0
    %5502 = vmatpush1.xpose.msra.mxu0 0.0
    %5503 = vmatprep.subr.mxu0 0.0
    %5504 = vmatpush1.xpose.msra.mxu0 0.0
    %5505 = vmatprep.subr.mxu0 0.0
    %5506 = vmatpush1.xpose.msra.mxu0 0.0
    %5507 = vmatprep.subr.mxu0 0.0
    %5508 = vmatpush1.xpose.msra.mxu0 0.0
    %5509 = vmatprep.mubr.f32.mxu0 0.0
    %5510 = vmatmul.mubr.f32.gmra.mrb[0].mxu0 %v5434
    %v5511 = vpop.f32.mrb[0].mxu0
    %v5512 = vadd.f32 0.0, %v5511
    %v5513 = vpop.f32.mrb[0].mxu0
    %5514 = vmatprep.mubr.f32.mxu0 0.0
    %5515 = vmatmul.mubr.f32.gmra.mrb[0].mxu0 %v5437
    %v5516 = vpop.f32.mrb[0].mxu0
    %v5517 = vadd.f32 0.0, %v5516
    %v5518 = vpop.f32.mrb[0].mxu0
    %5519 = vdwg.mxu0
    %v5521 = vsel %vm1456, %v4196, 0
    %v5524 = vsel %vm1456, %v4201, 0
    %v5527 = vsel %vm1456, %v4588, 0
    %v5530 = vsel %vm1456, %v4593, 0
    %5532 = vmatprep.subr.mxu0 0.0
    %5533 = vmatpush1.xpose.msra.mxu0 %v5527
    %5534 = vmatprep.subr.mxu0 0.0
    %5535 = vmatpush1.xpose.msra.mxu0 %v5530
    %5536 = vmatprep.subr.mxu0 0.0
    %5537 = vmatpush1.xpose.msra.mxu0 0.0
    %5538 = vmatprep.subr.mxu0 0.0
    %5539 = vmatpush1.xpose.msra.mxu0 0.0
    %5540 = vmatprep.subr.mxu0 0.0
    %5541 = vmatpush1.xpose.msra.mxu0 0.0
    %5542 = vmatprep.subr.mxu0 0.0
    %5543 = vmatpush1.xpose.msra.mxu0 0.0
    %5544 = vmatprep.subr.mxu0 0.0
    %5545 = vmatpush1.xpose.msra.mxu0 0.0
    %5546 = vmatprep.subr.mxu0 0.0
    %5547 = vmatpush1.xpose.msra.mxu0 0.0
    %5548 = vmatprep.subr.mxu0 0.0
    %5549 = vmatpush1.xpose.msra.mxu0 0.0
    %5550 = vmatprep.subr.mxu0 0.0
    %5551 = vmatpush1.xpose.msra.mxu0 0.0
    %5552 = vmatprep.subr.mxu0 0.0
    %5553 = vmatpush1.xpose.msra.mxu0 0.0
    %5554 = vmatprep.subr.mxu0 0.0
    %5555 = vmatpush1.xpose.msra.mxu0 0.0
    %5556 = vmatprep.subr.mxu0 0.0
    %5557 = vmatpush1.xpose.msra.mxu0 0.0
    %5558 = vmatprep.subr.mxu0 0.0
    %5559 = vmatpush1.xpose.msra.mxu0 0.0
    %5560 = vmatprep.subr.mxu0 0.0
    %5561 = vmatpush1.xpose.msra.mxu0 0.0
    %5562 = vmatprep.subr.mxu0 0.0
    %5563 = vmatpush1.xpose.msra.mxu0 0.0
    %5564 = vmatprep.subr.mxu0 0.0
    %5565 = vmatpush1.xpose.msra.mxu0 0.0
    %5566 = vmatprep.subr.mxu0 0.0
    %5567 = vmatpush1.xpose.msra.mxu0 0.0
    %5568 = vmatprep.subr.mxu0 0.0
    %5569 = vmatpush1.xpose.msra.mxu0 0.0
    %5570 = vmatprep.subr.mxu0 0.0
    %5571 = vmatpush1.xpose.msra.mxu0 0.0
    %5572 = vmatprep.subr.mxu0 0.0
    %5573 = vmatpush1.xpose.msra.mxu0 0.0
    %5574 = vmatprep.subr.mxu0 0.0
    %5575 = vmatpush1.xpose.msra.mxu0 0.0
    %5576 = vmatprep.subr.mxu0 0.0
    %5577 = vmatpush1.xpose.msra.mxu0 0.0
    %5578 = vmatprep.subr.mxu0 0.0
    %5579 = vmatpush1.xpose.msra.mxu0 0.0
    %5580 = vmatprep.subr.mxu0 0.0
    %5581 = vmatpush1.xpose.msra.mxu0 0.0
    %5582 = vmatprep.subr.mxu0 0.0
    %5583 = vmatpush1.xpose.msra.mxu0 0.0
    %5584 = vmatprep.subr.mxu0 0.0
    %5585 = vmatpush1.xpose.msra.mxu0 0.0
    %5586 = vmatprep.subr.mxu0 0.0
    %5587 = vmatpush1.xpose.msra.mxu0 0.0
    %5588 = vmatprep.subr.mxu0 0.0
    %5589 = vmatpush1.xpose.msra.mxu0 0.0
    %5590 = vmatprep.subr.mxu0 0.0
    %5591 = vmatpush1.xpose.msra.mxu0 0.0
    %5592 = vmatprep.subr.mxu0 0.0
    %5593 = vmatpush1.xpose.msra.mxu0 0.0
    %5594 = vmatprep.subr.mxu0 0.0
    %5595 = vmatpush1.xpose.msra.mxu0 0.0
    %5596 = vmatprep.mubr.f32.mxu0 0.0
    %5597 = vmatmul.mubr.f32.gmra.mrb[0].mxu0 %v5521
    %v5598 = vpop.f32.mrb[0].mxu0
    %v5599 = vadd.f32 0.0, %v5598
    %v5600 = vpop.f32.mrb[0].mxu0
    %5601 = vmatprep.mubr.f32.mxu0 0.0
    %5602 = vmatmul.mubr.f32.gmra.mrb[0].mxu0 %v5524
    %v5603 = vpop.f32.mrb[0].mxu0
    %v5604 = vadd.f32 0.0, %v5603
    %v5605 = vpop.f32.mrb[0].mxu0
    %5606 = vdwg.mxu0
    %v5608 = vsel %vm1456, %v4206, 0
    %v5611 = vsel %vm1456, %v4211, 0
    %v5614 = vsel %vm1456, %v4598, 0
    %v5617 = vsel %vm1456, %v4603, 0
    %5619 = vmatprep.subr.mxu0 0.0
    %5620 = vmatpush1.xpose.msra.mxu0 %v5614
    %5621 = vmatprep.subr.mxu0 0.0
    %5622 = vmatpush1.xpose.msra.mxu0 %v5617
    %5623 = vmatprep.subr.mxu0 0.0
    %5624 = vmatpush1.xpose.msra.mxu0 0.0
    %5625 = vmatprep.subr.mxu0 0.0
    %5626 = vmatpush1.xpose.msra.mxu0 0.0
    %5627 = vmatprep.subr.mxu0 0.0
    %5628 = vmatpush1.xpose.msra.mxu0 0.0
    %5629 = vmatprep.subr.mxu0 0.0
    %5630 = vmatpush1.xpose.msra.mxu0 0.0
    %5631 = vmatprep.subr.mxu0 0.0
    %5632 = vmatpush1.xpose.msra.mxu0 0.0
    %5633 = vmatprep.subr.mxu0 0.0
    %5634 = vmatpush1.xpose.msra.mxu0 0.0
    %5635 = vmatprep.subr.mxu0 0.0
    %5636 = vmatpush1.xpose.msra.mxu0 0.0
    %5637 = vmatprep.subr.mxu0 0.0
    %5638 = vmatpush1.xpose.msra.mxu0 0.0
    %5639 = vmatprep.subr.mxu0 0.0
    %5640 = vmatpush1.xpose.msra.mxu0 0.0
    %5641 = vmatprep.subr.mxu0 0.0
    %5642 = vmatpush1.xpose.msra.mxu0 0.0
    %5643 = vmatprep.subr.mxu0 0.0
    %5644 = vmatpush1.xpose.msra.mxu0 0.0
    %5645 = vmatprep.subr.mxu0 0.0
    %5646 = vmatpush1.xpose.msra.mxu0 0.0
    %5647 = vmatprep.subr.mxu0 0.0
    %5648 = vmatpush1.xpose.msra.mxu0 0.0
    %5649 = vmatprep.subr.mxu0 0.0
    %5650 = vmatpush1.xpose.msra.mxu0 0.0
    %5651 = vmatprep.subr.mxu0 0.0
    %5652 = vmatpush1.xpose.msra.mxu0 0.0
    %5653 = vmatprep.subr.mxu0 0.0
    %5654 = vmatpush1.xpose.msra.mxu0 0.0
    %5655 = vmatprep.subr.mxu0 0.0
    %5656 = vmatpush1.xpose.msra.mxu0 0.0
    %5657 = vmatprep.subr.mxu0 0.0
    %5658 = vmatpush1.xpose.msra.mxu0 0.0
    %5659 = vmatprep.subr.mxu0 0.0
    %5660 = vmatpush1.xpose.msra.mxu0 0.0
    %5661 = vmatprep.subr.mxu0 0.0
    %5662 = vmatpush1.xpose.msra.mxu0 0.0
    %5663 = vmatprep.subr.mxu0 0.0
    %5664 = vmatpush1.xpose.msra.mxu0 0.0
    %5665 = vmatprep.subr.mxu0 0.0
    %5666 = vmatpush1.xpose.msra.mxu0 0.0
    %5667 = vmatprep.subr.mxu0 0.0
    %5668 = vmatpush1.xpose.msra.mxu0 0.0
    %5669 = vmatprep.subr.mxu0 0.0
    %5670 = vmatpush1.xpose.msra.mxu0 0.0
    %5671 = vmatprep.subr.mxu0 0.0
    %5672 = vmatpush1.xpose.msra.mxu0 0.0
    %5673 = vmatprep.subr.mxu0 0.0
    %5674 = vmatpush1.xpose.msra.mxu0 0.0
    %5675 = vmatprep.subr.mxu0 0.0
    %5676 = vmatpush1.xpose.msra.mxu0 0.0
    %5677 = vmatprep.subr.mxu0 0.0
    %5678 = vmatpush1.xpose.msra.mxu0 0.0
    %5679 = vmatprep.subr.mxu0 0.0
    %5680 = vmatpush1.xpose.msra.mxu0 0.0
    %5681 = vmatprep.subr.mxu0 0.0
    %5682 = vmatpush1.xpose.msra.mxu0 0.0
    %5683 = vmatprep.mubr.f32.mxu0 0.0
    %5684 = vmatmul.mubr.f32.gmra.mrb[0].mxu0 %v5608
    %v5685 = vpop.f32.mrb[0].mxu0
    %v5686 = vadd.f32 0.0, %v5685
    %v5687 = vpop.f32.mrb[0].mxu0
    %5688 = vmatprep.mubr.f32.mxu0 0.0
    %5689 = vmatmul.mubr.f32.gmra.mrb[0].mxu0 %v5611
    %v5690 = vpop.f32.mrb[0].mxu0
    %v5691 = vadd.f32 0.0, %v5690
    %v5692 = vpop.f32.mrb[0].mxu0
    %5693 = vdwg.mxu0
    %v5694 = vmul.f32 %v5077, 0.35355338
    %v5695 = vmul.f32 %v5082, 0.35355338
    %v5696 = vmul.f32 %v5164, 0.35355338
    %v5697 = vmul.f32 %v5169, 0.35355338
    %v5698 = vmul.f32 %v5251, 0.35355338
    %v5699 = vmul.f32 %v5256, 0.35355338
    %v5700 = vmul.f32 %v5338, 0.35355338
    %v5701 = vmul.f32 %v5343, 0.35355338
    %v5702 = vmul.f32 %v5425, 0.35355338
    %v5703 = vmul.f32 %v5430, 0.35355338
    %v5704 = vmul.f32 %v5512, 0.35355338
    %v5705 = vmul.f32 %v5517, 0.35355338
    %v5706 = vmul.f32 %v5599, 0.35355338
    %v5707 = vmul.f32 %v5604, 0.35355338
    %v5708 = vmul.f32 %v5686, 0.35355338
    %v5709 = vmul.f32 %v5691, 0.35355338
    %v5710 = vsel %vm2169, %v5694, -inf
    %5711 = vmax.xlane.f32.xlu0 %v5710
    %v5712 = vpop.xlane.xlu0 %5711
    %v5713 = vsel %vm2169, %v5695, -inf
    %5714 = vmax.xlane.f32.xlu0 %v5713
    %v5715 = vpop.xlane.xlu0 %5714
    %v5716 = vsel %vm2169, %v5696, -inf
    %5717 = vmax.xlane.f32.xlu0 %v5716
    %v5718 = vpop.xlane.xlu0 %5717
    %v5719 = vsel %vm2169, %v5697, -inf
    %5720 = vmax.xlane.f32.xlu0 %v5719
    %v5721 = vpop.xlane.xlu0 %5720
    %v5722 = vsel %vm2169, %v5698, -inf
    %5723 = vmax.xlane.f32.xlu0 %v5722
    %v5724 = vpop.xlane.xlu0 %5723
    %v5725 = vsel %vm2169, %v5699, -inf
    %5726 = vmax.xlane.f32.xlu0 %v5725
    %v5727 = vpop.xlane.xlu0 %5726
    %v5728 = vsel %vm2169, %v5700, -inf
    %5729 = vmax.xlane.f32.xlu0 %v5728
    %v5730 = vpop.xlane.xlu0 %5729
    %v5731 = vsel %vm2169, %v5701, -inf
    %5732 = vmax.xlane.f32.xlu0 %v5731
    %v5733 = vpop.xlane.xlu0 %5732
    %v5734 = vsel %vm2169, %v5702, -inf
    %5735 = vmax.xlane.f32.xlu0 %v5734
    %v5736 = vpop.xlane.xlu0 %5735
    %v5737 = vsel %vm2169, %v5703, -inf
    %5738 = vmax.xlane.f32.xlu0 %v5737
    %v5739 = vpop.xlane.xlu0 %5738
    %v5740 = vsel %vm2169, %v5704, -inf
    %5741 = vmax.xlane.f32.xlu0 %v5740
    %v5742 = vpop.xlane.xlu0 %5741
    %v5743 = vsel %vm2169, %v5705, -inf
    %5744 = vmax.xlane.f32.xlu0 %v5743
    %v5745 = vpop.xlane.xlu0 %5744
    %v5746 = vsel %vm2169, %v5706, -inf
    %5747 = vmax.xlane.f32.xlu0 %v5746
    %v5748 = vpop.xlane.xlu0 %5747
    %v5749 = vsel %vm2169, %v5707, -inf
    %5750 = vmax.xlane.f32.xlu0 %v5749
    %v5751 = vpop.xlane.xlu0 %5750
    %v5752 = vsel %vm2169, %v5708, -inf
    %5753 = vmax.xlane.f32.xlu0 %v5752
    %v5754 = vpop.xlane.xlu0 %5753
    %v5755 = vsel %vm2169, %v5709, -inf
    %5756 = vmax.xlane.f32.xlu0 %v5755
    %v5757 = vpop.xlane.xlu0 %5756
    %v5758 = vsub.f32 %v5694, %v5712
    %v5759 = vsub.f32 %v5695, %v5715
    %v5760 = vsub.f32 %v5696, %v5718
    %v5761 = vsub.f32 %v5697, %v5721
    %v5762 = vsub.f32 %v5698, %v5724
    %v5763 = vsub.f32 %v5699, %v5727
    %v5764 = vsub.f32 %v5700, %v5730
    %v5765 = vsub.f32 %v5701, %v5733
    %v5766 = vsub.f32 %v5702, %v5736
    %v5767 = vsub.f32 %v5703, %v5739
    %v5768 = vsub.f32 %v5704, %v5742
    %v5769 = vsub.f32 %v5705, %v5745
    %v5770 = vsub.f32 %v5706, %v5748
    %v5771 = vsub.f32 %v5707, %v5751
    %v5772 = vsub.f32 %v5708, %v5754
    %v5773 = vsub.f32 %v5709, %v5757
    %v5774 = vmul.f32 %v5758, 1.442695
    %v5775 = vpow.pop %v5774
    %v5776 = vmul.f32 %v5759, 1.442695
    %v5777 = vpow.pop %v5776
    %v5778 = vmul.f32 %v5760, 1.442695
    %v5779 = vpow.pop %v5778
    %v5780 = vmul.f32 %v5761, 1.442695
    %v5781 = vpow.pop %v5780
    %v5782 = vmul.f32 %v5762, 1.442695
    %v5783 = vpow.pop %v5782
    %v5784 = vmul.f32 %v5763, 1.442695
    %v5785 = vpow.pop %v5784
    %v5786 = vmul.f32 %v5764, 1.442695
    %v5787 = vpow.pop %v5786
    %v5788 = vmul.f32 %v5765, 1.442695
    %v5789 = vpow.pop %v5788
    %v5790 = vmul.f32 %v5766, 1.442695
    %v5791 = vpow.pop %v5790
    %v5792 = vmul.f32 %v5767, 1.442695
    %v5793 = vpow.pop %v5792
    %v5794 = vmul.f32 %v5768, 1.442695
    %v5795 = vpow.pop %v5794
    %v5796 = vmul.f32 %v5769, 1.442695
    %v5797 = vpow.pop %v5796
    %v5798 = vmul.f32 %v5770, 1.442695
    %v5799 = vpow.pop %v5798
    %v5800 = vmul.f32 %v5771, 1.442695
    %v5801 = vpow.pop %v5800
    %v5802 = vmul.f32 %v5772, 1.442695
    %v5803 = vpow.pop %v5802
    %v5804 = vmul.f32 %v5773, 1.442695
    %v5805 = vpow.pop %v5804
    %v5806 = vsel %vm2169, %v5775, 0.0
    %5807 = vadd.xlane.f32.xlu0 %v5806
    %v5808 = vpop.xlane.xlu0 %5807
    %v5809 = vsel %vm2169, %v5777, 0.0
    %5810 = vadd.xlane.f32.xlu0 %v5809
    %v5811 = vpop.xlane.xlu0 %5810
    %v5812 = vsel %vm2169, %v5779, 0.0
    %5813 = vadd.xlane.f32.xlu0 %v5812
    %v5814 = vpop.xlane.xlu0 %5813
    %v5815 = vsel %vm2169, %v5781, 0.0
    %5816 = vadd.xlane.f32.xlu0 %v5815
    %v5817 = vpop.xlane.xlu0 %5816
    %v5818 = vsel %vm2169, %v5783, 0.0
    %5819 = vadd.xlane.f32.xlu0 %v5818
    %v5820 = vpop.xlane.xlu0 %5819
    %v5821 = vsel %vm2169, %v5785, 0.0
    %5822 = vadd.xlane.f32.xlu0 %v5821
    %v5823 = vpop.xlane.xlu0 %5822
    %v5824 = vsel %vm2169, %v5787, 0.0
    %5825 = vadd.xlane.f32.xlu0 %v5824
    %v5826 = vpop.xlane.xlu0 %5825
    %v5827 = vsel %vm2169, %v5789, 0.0
    %5828 = vadd.xlane.f32.xlu0 %v5827
    %v5829 = vpop.xlane.xlu0 %5828
    %v5830 = vsel %vm2169, %v5791, 0.0
    %5831 = vadd.xlane.f32.xlu0 %v5830
    %v5832 = vpop.xlane.xlu0 %5831
    %v5833 = vsel %vm2169, %v5793, 0.0
    %5834 = vadd.xlane.f32.xlu0 %v5833
    %v5835 = vpop.xlane.xlu0 %5834
    %v5836 = vsel %vm2169, %v5795, 0.0
    %5837 = vadd.xlane.f32.xlu0 %v5836
    %v5838 = vpop.xlane.xlu0 %5837
    %v5839 = vsel %vm2169, %v5797, 0.0
    %5840 = vadd.xlane.f32.xlu0 %v5839
    %v5841 = vpop.xlane.xlu0 %5840
    %v5842 = vsel %vm2169, %v5799, 0.0
    %5843 = vadd.xlane.f32.xlu0 %v5842
    %v5844 = vpop.xlane.xlu0 %5843
    %v5845 = vsel %vm2169, %v5801, 0.0
    %5846 = vadd.xlane.f32.xlu0 %v5845
    %v5847 = vpop.xlane.xlu0 %5846
    %v5848 = vsel %vm2169, %v5803, 0.0
    %5849 = vadd.xlane.f32.xlu0 %v5848
    %v5850 = vpop.xlane.xlu0 %5849
    %v5851 = vsel %vm2169, %v5805, 0.0
    %5852 = vadd.xlane.f32.xlu0 %v5851
    %v5853 = vpop.xlane.xlu0 %5852
    %v5854 = vrcp.pop %v5808
    %v5855 = vrcp.pop %v5811
    %v5856 = vrcp.pop %v5814
    %v5857 = vrcp.pop %v5817
    %v5858 = vrcp.pop %v5820
    %v5859 = vrcp.pop %v5823
    %v5860 = vrcp.pop %v5826
    %v5861 = vrcp.pop %v5829
    %v5862 = vrcp.pop %v5832
    %v5863 = vrcp.pop %v5835
    %v5864 = vrcp.pop %v5838
    %v5865 = vrcp.pop %v5841
    %v5866 = vrcp.pop %v5844
    %v5867 = vrcp.pop %v5847
    %v5868 = vrcp.pop %v5850
    %v5869 = vrcp.pop %v5853
    %v5870 = vmul.f32 %v5775, %v5854
    %v5871 = vmul.f32 %v5777, %v5855
    %v5872 = vmul.f32 %v5779, %v5856
    %v5873 = vmul.f32 %v5781, %v5857
    %v5874 = vmul.f32 %v5783, %v5858
    %v5875 = vmul.f32 %v5785, %v5859
    %v5876 = vmul.f32 %v5787, %v5860
    %v5877 = vmul.f32 %v5789, %v5861
    %v5878 = vmul.f32 %v5791, %v5862
    %v5879 = vmul.f32 %v5793, %v5863
    %v5880 = vmul.f32 %v5795, %v5864
    %v5881 = vmul.f32 %v5797, %v5865
    %v5882 = vmul.f32 %v5799, %v5866
    %v5883 = vmul.f32 %v5801, %v5867
    %v5884 = vmul.f32 %v5803, %v5868
    %v5885 = vmul.f32 %v5805, %v5869
    %v5887 = vsel %vm2169, %v5870, 0
    %v5890 = vsel %vm2169, %v5871, 0
    %5892 = vmatprep.subr.mxu0 0.0
    %5893 = vmatpush1.msra.mxu0 %v4686
    %5894 = vmatprep.subr.mxu0 0.0
    %5895 = vmatpush1.msra.mxu0 %v4691
    %5896 = vmatprep.subr.mxu0 0.0
    %5897 = vmatpush1.msra.mxu0 0.0
    %5898 = vmatprep.subr.mxu0 0.0
    %5899 = vmatpush1.msra.mxu0 0.0
    %5900 = vmatprep.subr.mxu0 0.0
    %5901 = vmatpush1.msra.mxu0 0.0
    %5902 = vmatprep.subr.mxu0 0.0
    %5903 = vmatpush1.msra.mxu0 0.0
    %5904 = vmatprep.subr.mxu0 0.0
    %5905 = vmatpush1.msra.mxu0 0.0
    %5906 = vmatprep.subr.mxu0 0.0
    %5907 = vmatpush1.msra.mxu0 0.0
    %5908 = vmatprep.subr.mxu0 0.0
    %5909 = vmatpush1.msra.mxu0 0.0
    %5910 = vmatprep.subr.mxu0 0.0
    %5911 = vmatpush1.msra.mxu0 0.0
    %5912 = vmatprep.subr.mxu0 0.0
    %5913 = vmatpush1.msra.mxu0 0.0
    %5914 = vmatprep.subr.mxu0 0.0
    %5915 = vmatpush1.msra.mxu0 0.0
    %5916 = vmatprep.subr.mxu0 0.0
    %5917 = vmatpush1.msra.mxu0 0.0
    %5918 = vmatprep.subr.mxu0 0.0
    %5919 = vmatpush1.msra.mxu0 0.0
    %5920 = vmatprep.subr.mxu0 0.0
    %5921 = vmatpush1.msra.mxu0 0.0
    %5922 = vmatprep.subr.mxu0 0.0
    %5923 = vmatpush1.msra.mxu0 0.0
    %5924 = vmatprep.subr.mxu0 0.0
    %5925 = vmatpush1.msra.mxu0 0.0
    %5926 = vmatprep.subr.mxu0 0.0
    %5927 = vmatpush1.msra.mxu0 0.0
    %5928 = vmatprep.subr.mxu0 0.0
    %5929 = vmatpush1.msra.mxu0 0.0
    %5930 = vmatprep.subr.mxu0 0.0
    %5931 = vmatpush1.msra.mxu0 0.0
    %5932 = vmatprep.subr.mxu0 0.0
    %5933 = vmatpush1.msra.mxu0 0.0
    %5934 = vmatprep.subr.mxu0 0.0
    %5935 = vmatpush1.msra.mxu0 0.0
    %5936 = vmatprep.subr.mxu0 0.0
    %5937 = vmatpush1.msra.mxu0 0.0
    %5938 = vmatprep.subr.mxu0 0.0
    %5939 = vmatpush1.msra.mxu0 0.0
    %5940 = vmatprep.subr.mxu0 0.0
    %5941 = vmatpush1.msra.mxu0 0.0
    %5942 = vmatprep.subr.mxu0 0.0
    %5943 = vmatpush1.msra.mxu0 0.0
    %5944 = vmatprep.subr.mxu0 0.0
    %5945 = vmatpush1.msra.mxu0 0.0
    %5946 = vmatprep.subr.mxu0 0.0
    %5947 = vmatpush1.msra.mxu0 0.0
    %5948 = vmatprep.subr.mxu0 0.0
    %5949 = vmatpush1.msra.mxu0 0.0
    %5950 = vmatprep.subr.mxu0 0.0
    %5951 = vmatpush1.msra.mxu0 0.0
    %5952 = vmatprep.subr.mxu0 0.0
    %5953 = vmatpush1.msra.mxu0 0.0
    %5954 = vmatprep.subr.mxu0 0.0
    %5955 = vmatpush1.msra.mxu0 0.0
    %5956 = vmatprep.mubr.f32.mxu0 0.0
    %5957 = vmatmul.mubr.f32.gmra.mrb[0].mxu0 %v5887
    %v5958 = vpop.f32.mrb[0].mxu0
    %v5959 = vadd.f32 0.0, %v5958
    %v5960 = vpop.f32.mrb[0].mxu0
    %5961 = vmatprep.mubr.f32.mxu0 0.0
    %5962 = vmatmul.mubr.f32.gmra.mrb[0].mxu0 %v5890
    %v5963 = vpop.f32.mrb[0].mxu0
    %v5964 = vadd.f32 0.0, %v5963
    %v5965 = vpop.f32.mrb[0].mxu0
    %5966 = vdwg.mxu0
    %v5968 = vsel %vm2169, %v5872, 0
    %v5971 = vsel %vm2169, %v5873, 0
    %5973 = vmatprep.subr.mxu0 0.0
    %5974 = vmatpush1.msra.mxu0 %v4696
    %5975 = vmatprep.subr.mxu0 0.0
    %5976 = vmatpush1.msra.mxu0 %v4701
    %5977 = vmatprep.subr.mxu0 0.0
    %5978 = vmatpush1.msra.mxu0 0.0
    %5979 = vmatprep.subr.mxu0 0.0
    %5980 = vmatpush1.msra.mxu0 0.0
    %5981 = vmatprep.subr.mxu0 0.0
    %5982 = vmatpush1.msra.mxu0 0.0
    %5983 = vmatprep.subr.mxu0 0.0
    %5984 = vmatpush1.msra.mxu0 0.0
    %5985 = vmatprep.subr.mxu0 0.0
    %5986 = vmatpush1.msra.mxu0 0.0
    %5987 = vmatprep.subr.mxu0 0.0
    %5988 = vmatpush1.msra.mxu0 0.0
    %5989 = vmatprep.subr.mxu0 0.0
    %5990 = vmatpush1.msra.mxu0 0.0
    %5991 = vmatprep.subr.mxu0 0.0
    %5992 = vmatpush1.msra.mxu0 0.0
    %5993 = vmatprep.subr.mxu0 0.0
    %5994 = vmatpush1.msra.mxu0 0.0
    %5995 = vmatprep.subr.mxu0 0.0
    %5996 = vmatpush1.msra.mxu0 0.0
    %5997 = vmatprep.subr.mxu0 0.0
    %5998 = vmatpush1.msra.mxu0 0.0
    %5999 = vmatprep.subr.mxu0 0.0
    %6000 = vmatpush1.msra.mxu0 0.0
    %6001 = vmatprep.subr.mxu0 0.0
    %6002 = vmatpush1.msra.mxu0 0.0
    %6003 = vmatprep.subr.mxu0 0.0
    %6004 = vmatpush1.msra.mxu0 0.0
    %6005 = vmatprep.subr.mxu0 0.0
    %6006 = vmatpush1.msra.mxu0 0.0
    %6007 = vmatprep.subr.mxu0 0.0
    %6008 = vmatpush1.msra.mxu0 0.0
    %6009 = vmatprep.subr.mxu0 0.0
    %6010 = vmatpush1.msra.mxu0 0.0
    %6011 = vmatprep.subr.mxu0 0.0
    %6012 = vmatpush1.msra.mxu0 0.0
    %6013 = vmatprep.subr.mxu0 0.0
    %6014 = vmatpush1.msra.mxu0 0.0
    %6015 = vmatprep.subr.mxu0 0.0
    %6016 = vmatpush1.msra.mxu0 0.0
    %6017 = vmatprep.subr.mxu0 0.0
    %6018 = vmatpush1.msra.mxu0 0.0
    %6019 = vmatprep.subr.mxu0 0.0
    %6020 = vmatpush1.msra.mxu0 0.0
    %6021 = vmatprep.subr.mxu0 0.0
    %6022 = vmatpush1.msra.mxu0 0.0
    %6023 = vmatprep.subr.mxu0 0.0
    %6024 = vmatpush1.msra.mxu0 0.0
    %6025 = vmatprep.subr.mxu0 0.0
    %6026 = vmatpush1.msra.mxu0 0.0
    %6027 = vmatprep.subr.mxu0 0.0
    %6028 = vmatpush1.msra.mxu0 0.0
    %6029 = vmatprep.subr.mxu0 0.0
    %6030 = vmatpush1.msra.mxu0 0.0
    %6031 = vmatprep.subr.mxu0 0.0
    %6032 = vmatpush1.msra.mxu0 0.0
    %6033 = vmatprep.subr.mxu0 0.0
    %6034 = vmatpush1.msra.mxu0 0.0
    %6035 = vmatprep.subr.mxu0 0.0
    %6036 = vmatpush1.msra.mxu0 0.0
    %6037 = vmatprep.mubr.f32.mxu0 0.0
    %6038 = vmatmul.mubr.f32.gmra.mrb[0].mxu0 %v5968
    %v6039 = vpop.f32.mrb[0].mxu0
    %v6040 = vadd.f32 0.0, %v6039
    %v6041 = vpop.f32.mrb[0].mxu0
    %6042 = vmatprep.mubr.f32.mxu0 0.0
    %6043 = vmatmul.mubr.f32.gmra.mrb[0].mxu0 %v5971
    %v6044 = vpop.f32.mrb[0].mxu0
    %v6045 = vadd.f32 0.0, %v6044
    %v6046 = vpop.f32.mrb[0].mxu0
    %6047 = vdwg.mxu0
    %v6049 = vsel %vm2169, %v5874, 0
    %v6052 = vsel %vm2169, %v5875, 0
    %6054 = vmatprep.subr.mxu0 0.0
    %6055 = vmatpush1.msra.mxu0 %v4784
    %6056 = vmatprep.subr.mxu0 0.0
    %6057 = vmatpush1.msra.mxu0 %v4789
    %6058 = vmatprep.subr.mxu0 0.0
    %6059 = vmatpush1.msra.mxu0 0.0
    %6060 = vmatprep.subr.mxu0 0.0
    %6061 = vmatpush1.msra.mxu0 0.0
    %6062 = vmatprep.subr.mxu0 0.0
    %6063 = vmatpush1.msra.mxu0 0.0
    %6064 = vmatprep.subr.mxu0 0.0
    %6065 = vmatpush1.msra.mxu0 0.0
    %6066 = vmatprep.subr.mxu0 0.0
    %6067 = vmatpush1.msra.mxu0 0.0
    %6068 = vmatprep.subr.mxu0 0.0
    %6069 = vmatpush1.msra.mxu0 0.0
    %6070 = vmatprep.subr.mxu0 0.0
    %6071 = vmatpush1.msra.mxu0 0.0
    %6072 = vmatprep.subr.mxu0 0.0
    %6073 = vmatpush1.msra.mxu0 0.0
    %6074 = vmatprep.subr.mxu0 0.0
    %6075 = vmatpush1.msra.mxu0 0.0
    %6076 = vmatprep.subr.mxu0 0.0
    %6077 = vmatpush1.msra.mxu0 0.0
    %6078 = vmatprep.subr.mxu0 0.0
    %6079 = vmatpush1.msra.mxu0 0.0
    %6080 = vmatprep.subr.mxu0 0.0
    %6081 = vmatpush1.msra.mxu0 0.0
    %6082 = vmatprep.subr.mxu0 0.0
    %6083 = vmatpush1.msra.mxu0 0.0
    %6084 = vmatprep.subr.mxu0 0.0
    %6085 = vmatpush1.msra.mxu0 0.0
    %6086 = vmatprep.subr.mxu0 0.0
    %6087 = vmatpush1.msra.mxu0 0.0
    %6088 = vmatprep.subr.mxu0 0.0
    %6089 = vmatpush1.msra.mxu0 0.0
    %6090 = vmatprep.subr.mxu0 0.0
    %6091 = vmatpush1.msra.mxu0 0.0
    %6092 = vmatprep.subr.mxu0 0.0
    %6093 = vmatpush1.msra.mxu0 0.0
    %6094 = vmatprep.subr.mxu0 0.0
    %6095 = vmatpush1.msra.mxu0 0.0
    %6096 = vmatprep.subr.mxu0 0.0
    %6097 = vmatpush1.msra.mxu0 0.0
    %6098 = vmatprep.subr.mxu0 0.0
    %6099 = vmatpush1.msra.mxu0 0.0
    %6100 = vmatprep.subr.mxu0 0.0
    %6101 = vmatpush1.msra.mxu0 0.0
    %6102 = vmatprep.subr.mxu0 0.0
    %6103 = vmatpush1.msra.mxu0 0.0
    %6104 = vmatprep.subr.mxu0 0.0
    %6105 = vmatpush1.msra.mxu0 0.0
    %6106 = vmatprep.subr.mxu0 0.0
    %6107 = vmatpush1.msra.mxu0 0.0
    %6108 = vmatprep.subr.mxu0 0.0
    %6109 = vmatpush1.msra.mxu0 0.0
    %6110 = vmatprep.subr.mxu0 0.0
    %6111 = vmatpush1.msra.mxu0 0.0
    %6112 = vmatprep.subr.mxu0 0.0
    %6113 = vmatpush1.msra.mxu0 0.0
    %6114 = vmatprep.subr.mxu0 0.0
    %6115 = vmatpush1.msra.mxu0 0.0
    %6116 = vmatprep.subr.mxu0 0.0
    %6117 = vmatpush1.msra.mxu0 0.0
    %6118 = vmatprep.mubr.f32.mxu0 0.0
    %6119 = vmatmul.mubr.f32.gmra.mrb[0].mxu0 %v6049
    %v6120 = vpop.f32.mrb[0].mxu0
    %v6121 = vadd.f32 0.0, %v6120
    %v6122 = vpop.f32.mrb[0].mxu0
    %6123 = vmatprep.mubr.f32.mxu0 0.0
    %6124 = vmatmul.mubr.f32.gmra.mrb[0].mxu0 %v6052
    %v6125 = vpop.f32.mrb[0].mxu0
    %v6126 = vadd.f32 0.0, %v6125
    %v6127 = vpop.f32.mrb[0].mxu0
    %6128 = vdwg.mxu0
    %v6130 = vsel %vm2169, %v5876, 0
    %v6133 = vsel %vm2169, %v5877, 0
    %6135 = vmatprep.subr.mxu0 0.0
    %6136 = vmatpush1.msra.mxu0 %v4794
    %6137 = vmatprep.subr.mxu0 0.0
    %6138 = vmatpush1.msra.mxu0 %v4799
    %6139 = vmatprep.subr.mxu0 0.0
    %6140 = vmatpush1.msra.mxu0 0.0
    %6141 = vmatprep.subr.mxu0 0.0
    %6142 = vmatpush1.msra.mxu0 0.0
    %6143 = vmatprep.subr.mxu0 0.0
    %6144 = vmatpush1.msra.mxu0 0.0
    %6145 = vmatprep.subr.mxu0 0.0
    %6146 = vmatpush1.msra.mxu0 0.0
    %6147 = vmatprep.subr.mxu0 0.0
    %6148 = vmatpush1.msra.mxu0 0.0
    %6149 = vmatprep.subr.mxu0 0.0
    %6150 = vmatpush1.msra.mxu0 0.0
    %6151 = vmatprep.subr.mxu0 0.0
    %6152 = vmatpush1.msra.mxu0 0.0
    %6153 = vmatprep.subr.mxu0 0.0
    %6154 = vmatpush1.msra.mxu0 0.0
    %6155 = vmatprep.subr.mxu0 0.0
    %6156 = vmatpush1.msra.mxu0 0.0
    %6157 = vmatprep.subr.mxu0 0.0
    %6158 = vmatpush1.msra.mxu0 0.0
    %6159 = vmatprep.subr.mxu0 0.0
    %6160 = vmatpush1.msra.mxu0 0.0
    %6161 = vmatprep.subr.mxu0 0.0
    %6162 = vmatpush1.msra.mxu0 0.0
    %6163 = vmatprep.subr.mxu0 0.0
    %6164 = vmatpush1.msra.mxu0 0.0
    %6165 = vmatprep.subr.mxu0 0.0
    %6166 = vmatpush1.msra.mxu0 0.0
    %6167 = vmatprep.subr.mxu0 0.0
    %6168 = vmatpush1.msra.mxu0 0.0
    %6169 = vmatprep.subr.mxu0 0.0
    %6170 = vmatpush1.msra.mxu0 0.0
    %6171 = vmatprep.subr.mxu0 0.0
    %6172 = vmatpush1.msra.mxu0 0.0
    %6173 = vmatprep.subr.mxu0 0.0
    %6174 = vmatpush1.msra.mxu0 0.0
    %6175 = vmatprep.subr.mxu0 0.0
    %6176 = vmatpush1.msra.mxu0 0.0
    %6177 = vmatprep.subr.mxu0 0.0
    %6178 = vmatpush1.msra.mxu0 0.0
    %6179 = vmatprep.subr.mxu0 0.0
    %6180 = vmatpush1.msra.mxu0 0.0
    %6181 = vmatprep.subr.mxu0 0.0
    %6182 = vmatpush1.msra.mxu0 0.0
    %6183 = vmatprep.subr.mxu0 0.0
    %6184 = vmatpush1.msra.mxu0 0.0
    %6185 = vmatprep.subr.mxu0 0.0
    %6186 = vmatpush1.msra.mxu0 0.0
    %6187 = vmatprep.subr.mxu0 0.0
    %6188 = vmatpush1.msra.mxu0 0.0
    %6189 = vmatprep.subr.mxu0 0.0
    %6190 = vmatpush1.msra.mxu0 0.0
    %6191 = vmatprep.subr.mxu0 0.0
    %6192 = vmatpush1.msra.mxu0 0.0
    %6193 = vmatprep.subr.mxu0 0.0
    %6194 = vmatpush1.msra.mxu0 0.0
    %6195 = vmatprep.subr.mxu0 0.0
    %6196 = vmatpush1.msra.mxu0 0.0
    %6197 = vmatprep.subr.mxu0 0.0
    %6198 = vmatpush1.msra.mxu0 0.0
    %6199 = vmatprep.mubr.f32.mxu0 0.0
    %6200 = vmatmul.mubr.f32.gmra.mrb[0].mxu0 %v6130
    %v6201 = vpop.f32.mrb[0].mxu0
    %v6202 = vadd.f32 0.0, %v6201
    %v6203 = vpop.f32.mrb[0].mxu0
    %6204 = vmatprep.mubr.f32.mxu0 0.0
    %6205 = vmatmul.mubr.f32.gmra.mrb[0].mxu0 %v6133
    %v6206 = vpop.f32.mrb[0].mxu0
    %v6207 = vadd.f32 0.0, %v6206
    %v6208 = vpop.f32.mrb[0].mxu0
    %6209 = vdwg.mxu0
    %v6211 = vsel %vm2169, %v5878, 0
    %v6214 = vsel %vm2169, %v5879, 0
    %6216 = vmatprep.subr.mxu0 0.0
    %6217 = vmatpush1.msra.mxu0 %v4882
    %6218 = vmatprep.subr.mxu0 0.0
    %6219 = vmatpush1.msra.mxu0 %v4887
    %6220 = vmatprep.subr.mxu0 0.0
    %6221 = vmatpush1.msra.mxu0 0.0
    %6222 = vmatprep.subr.mxu0 0.0
    %6223 = vmatpush1.msra.mxu0 0.0
    %6224 = vmatprep.subr.mxu0 0.0
    %6225 = vmatpush1.msra.mxu0 0.0
    %6226 = vmatprep.subr.mxu0 0.0
    %6227 = vmatpush1.msra.mxu0 0.0
    %6228 = vmatprep.subr.mxu0 0.0
    %6229 = vmatpush1.msra.mxu0 0.0
    %6230 = vmatprep.subr.mxu0 0.0
    %6231 = vmatpush1.msra.mxu0 0.0
    %6232 = vmatprep.subr.mxu0 0.0
    %6233 = vmatpush1.msra.mxu0 0.0
    %6234 = vmatprep.subr.mxu0 0.0
    %6235 = vmatpush1.msra.mxu0 0.0
    %6236 = vmatprep.subr.mxu0 0.0
    %6237 = vmatpush1.msra.mxu0 0.0
    %6238 = vmatprep.subr.mxu0 0.0
    %6239 = vmatpush1.msra.mxu0 0.0
    %6240 = vmatprep.subr.mxu0 0.0
    %6241 = vmatpush1.msra.mxu0 0.0
    %6242 = vmatprep.subr.mxu0 0.0
    %6243 = vmatpush1.msra.mxu0 0.0
    %6244 = vmatprep.subr.mxu0 0.0
    %6245 = vmatpush1.msra.mxu0 0.0
    %6246 = vmatprep.subr.mxu0 0.0
    %6247 = vmatpush1.msra.mxu0 0.0
    %6248 = vmatprep.subr.mxu0 0.0
    %6249 = vmatpush1.msra.mxu0 0.0
    %6250 = vmatprep.subr.mxu0 0.0
    %6251 = vmatpush1.msra.mxu0 0.0
    %6252 = vmatprep.subr.mxu0 0.0
    %6253 = vmatpush1.msra.mxu0 0.0
    %6254 = vmatprep.subr.mxu0 0.0
    %6255 = vmatpush1.msra.mxu0 0.0
    %6256 = vmatprep.subr.mxu0 0.0
    %6257 = vmatpush1.msra.mxu0 0.0
    %6258 = vmatprep.subr.mxu0 0.0
    %6259 = vmatpush1.msra.mxu0 0.0
    %6260 = vmatprep.subr.mxu0 0.0
    %6261 = vmatpush1.msra.mxu0 0.0
    %6262 = vmatprep.subr.mxu0 0.0
    %6263 = vmatpush1.msra.mxu0 0.0
    %6264 = vmatprep.subr.mxu0 0.0
    %6265 = vmatpush1.msra.mxu0 0.0
    %6266 = vmatprep.subr.mxu0 0.0
    %6267 = vmatpush1.msra.mxu0 0.0
    %6268 = vmatprep.subr.mxu0 0.0
    %6269 = vmatpush1.msra.mxu0 0.0
    %6270 = vmatprep.subr.mxu0 0.0
    %6271 = vmatpush1.msra.mxu0 0.0
    %6272 = vmatprep.subr.mxu0 0.0
    %6273 = vmatpush1.msra.mxu0 0.0
    %6274 = vmatprep.subr.mxu0 0.0
    %6275 = vmatpush1.msra.mxu0 0.0
    %6276 = vmatprep.subr.mxu0 0.0
    %6277 = vmatpush1.msra.mxu0 0.0
    %6278 = vmatprep.subr.mxu0 0.0
    %6279 = vmatpush1.msra.mxu0 0.0
    %6280 = vmatprep.mubr.f32.mxu0 0.0
    %6281 = vmatmul.mubr.f32.gmra.mrb[0].mxu0 %v6211
    %v6282 = vpop.f32.mrb[0].mxu0
    %v6283 = vadd.f32 0.0, %v6282
    %v6284 = vpop.f32.mrb[0].mxu0
    %6285 = vmatprep.mubr.f32.mxu0 0.0
    %6286 = vmatmul.mubr.f32.gmra.mrb[0].mxu0 %v6214
    %v6287 = vpop.f32.mrb[0].mxu0
    %v6288 = vadd.f32 0.0, %v6287
    %v6289 = vpop.f32.mrb[0].mxu0
    %6290 = vdwg.mxu0
    %v6292 = vsel %vm2169, %v5880, 0
    %v6295 = vsel %vm2169, %v5881, 0
    %6297 = vmatprep.subr.mxu0 0.0
    %6298 = vmatpush1.msra.mxu0 %v4892
    %6299 = vmatprep.subr.mxu0 0.0
    %6300 = vmatpush1.msra.mxu0 %v4897
    %6301 = vmatprep.subr.mxu0 0.0
    %6302 = vmatpush1.msra.mxu0 0.0
    %6303 = vmatprep.subr.mxu0 0.0
    %6304 = vmatpush1.msra.mxu0 0.0
    %6305 = vmatprep.subr.mxu0 0.0
    %6306 = vmatpush1.msra.mxu0 0.0
    %6307 = vmatprep.subr.mxu0 0.0
    %6308 = vmatpush1.msra.mxu0 0.0
    %6309 = vmatprep.subr.mxu0 0.0
    %6310 = vmatpush1.msra.mxu0 0.0
    %6311 = vmatprep.subr.mxu0 0.0
    %6312 = vmatpush1.msra.mxu0 0.0
    %6313 = vmatprep.subr.mxu0 0.0
    %6314 = vmatpush1.msra.mxu0 0.0
    %6315 = vmatprep.subr.mxu0 0.0
    %6316 = vmatpush1.msra.mxu0 0.0
    %6317 = vmatprep.subr.mxu0 0.0
    %6318 = vmatpush1.msra.mxu0 0.0
    %6319 = vmatprep.subr.mxu0 0.0
    %6320 = vmatpush1.msra.mxu0 0.0
    %6321 = vmatprep.subr.mxu0 0.0
    %6322 = vmatpush1.msra.mxu0 0.0
    %6323 = vmatprep.subr.mxu0 0.0
    %6324 = vmatpush1.msra.mxu0 0.0
    %6325 = vmatprep.subr.mxu0 0.0
    %6326 = vmatpush1.msra.mxu0 0.0
    %6327 = vmatprep.subr.mxu0 0.0
    %6328 = vmatpush1.msra.mxu0 0.0
    %6329 = vmatprep.subr.mxu0 0.0
    %6330 = vmatpush1.msra.mxu0 0.0
    %6331 = vmatprep.subr.mxu0 0.0
    %6332 = vmatpush1.msra.mxu0 0.0
    %6333 = vmatprep.subr.mxu0 0.0
    %6334 = vmatpush1.msra.mxu0 0.0
    %6335 = vmatprep.subr.mxu0 0.0
    %6336 = vmatpush1.msra.mxu0 0.0
    %6337 = vmatprep.subr.mxu0 0.0
    %6338 = vmatpush1.msra.mxu0 0.0
    %6339 = vmatprep.subr.mxu0 0.0
    %6340 = vmatpush1.msra.mxu0 0.0
    %6341 = vmatprep.subr.mxu0 0.0
    %6342 = vmatpush1.msra.mxu0 0.0
    %6343 = vmatprep.subr.mxu0 0.0
    %6344 = vmatpush1.msra.mxu0 0.0
    %6345 = vmatprep.subr.mxu0 0.0
    %6346 = vmatpush1.msra.mxu0 0.0
    %6347 = vmatprep.subr.mxu0 0.0
    %6348 = vmatpush1.msra.mxu0 0.0
    %6349 = vmatprep.subr.mxu0 0.0
    %6350 = vmatpush1.msra.mxu0 0.0
    %6351 = vmatprep.subr.mxu0 0.0
    %6352 = vmatpush1.msra.mxu0 0.0
    %6353 = vmatprep.subr.mxu0 0.0
    %6354 = vmatpush1.msra.mxu0 0.0
    %6355 = vmatprep.subr.mxu0 0.0
    %6356 = vmatpush1.msra.mxu0 0.0
    %6357 = vmatprep.subr.mxu0 0.0
    %6358 = vmatpush1.msra.mxu0 0.0
    %6359 = vmatprep.subr.mxu0 0.0
    %6360 = vmatpush1.msra.mxu0 0.0
    %6361 = vmatprep.mubr.f32.mxu0 0.0
    %6362 = vmatmul.mubr.f32.gmra.mrb[0].mxu0 %v6292
    %v6363 = vpop.f32.mrb[0].mxu0
    %v6364 = vadd.f32 0.0, %v6363
    %v6365 = vpop.f32.mrb[0].mxu0
    %6366 = vmatprep.mubr.f32.mxu0 0.0
    %6367 = vmatmul.mubr.f32.gmra.mrb[0].mxu0 %v6295
    %v6368 = vpop.f32.mrb[0].mxu0
    %v6369 = vadd.f32 0.0, %v6368
    %v6370 = vpop.f32.mrb[0].mxu0
    %6371 = vdwg.mxu0
    %v6373 = vsel %vm2169, %v5882, 0
    %v6376 = vsel %vm2169, %v5883, 0
    %6378 = vmatprep.subr.mxu0 0.0
    %6379 = vmatpush1.msra.mxu0 %v4980
    %6380 = vmatprep.subr.mxu0 0.0
    %6381 = vmatpush1.msra.mxu0 %v4985
    %6382 = vmatprep.subr.mxu0 0.0
    %6383 = vmatpush1.msra.mxu0 0.0
    %6384 = vmatprep.subr.mxu0 0.0
    %6385 = vmatpush1.msra.mxu0 0.0
    %6386 = vmatprep.subr.mxu0 0.0
    %6387 = vmatpush1.msra.mxu0 0.0
    %6388 = vmatprep.subr.mxu0 0.0
    %6389 = vmatpush1.msra.mxu0 0.0
    %6390 = vmatprep.subr.mxu0 0.0
    %6391 = vmatpush1.msra.mxu0 0.0
    %6392 = vmatprep.subr.mxu0 0.0
    %6393 = vmatpush1.msra.mxu0 0.0
    %6394 = vmatprep.subr.mxu0 0.0
    %6395 = vmatpush1.msra.mxu0 0.0
    %6396 = vmatprep.subr.mxu0 0.0
    %6397 = vmatpush1.msra.mxu0 0.0
    %6398 = vmatprep.subr.mxu0 0.0
    %6399 = vmatpush1.msra.mxu0 0.0
    %6400 = vmatprep.subr.mxu0 0.0
    %6401 = vmatpush1.msra.mxu0 0.0
    %6402 = vmatprep.subr.mxu0 0.0
    %6403 = vmatpush1.msra.mxu0 0.0
    %6404 = vmatprep.subr.mxu0 0.0
    %6405 = vmatpush1.msra.mxu0 0.0
    %6406 = vmatprep.subr.mxu0 0.0
    %6407 = vmatpush1.msra.mxu0 0.0
    %6408 = vmatprep.subr.mxu0 0.0
    %6409 = vmatpush1.msra.mxu0 0.0
    %6410 = vmatprep.subr.mxu0 0.0
    %6411 = vmatpush1.msra.mxu0 0.0
    %6412 = vmatprep.subr.mxu0 0.0
    %6413 = vmatpush1.msra.mxu0 0.0
    %6414 = vmatprep.subr.mxu0 0.0
    %6415 = vmatpush1.msra.mxu0 0.0
    %6416 = vmatprep.subr.mxu0 0.0
    %6417 = vmatpush1.msra.mxu0 0.0
    %6418 = vmatprep.subr.mxu0 0.0
    %6419 = vmatpush1.msra.mxu0 0.0
    %6420 = vmatprep.subr.mxu0 0.0
    %6421 = vmatpush1.msra.mxu0 0.0
    %6422 = vmatprep.subr.mxu0 0.0
    %6423 = vmatpush1.msra.mxu0 0.0
    %6424 = vmatprep.subr.mxu0 0.0
    %6425 = vmatpush1.msra.mxu0 0.0
    %6426 = vmatprep.subr.mxu0 0.0
    %6427 = vmatpush1.msra.mxu0 0.0
    %6428 = vmatprep.subr.mxu0 0.0
    %6429 = vmatpush1.msra.mxu0 0.0
    %6430 = vmatprep.subr.mxu0 0.0
    %6431 = vmatpush1.msra.mxu0 0.0
    %6432 = vmatprep.subr.mxu0 0.0
    %6433 = vmatpush1.msra.mxu0 0.0
    %6434 = vmatprep.subr.mxu0 0.0
    %6435 = vmatpush1.msra.mxu0 0.0
    %6436 = vmatprep.subr.mxu0 0.0
    %6437 = vmatpush1.msra.mxu0 0.0
    %6438 = vmatprep.subr.mxu0 0.0
    %6439 = vmatpush1.msra.mxu0 0.0
    %6440 = vmatprep.subr.mxu0 0.0
    %6441 = vmatpush1.msra.mxu0 0.0
    %6442 = vmatprep.mubr.f32.mxu0 0.0
    %6443 = vmatmul.mubr.f32.gmra.mrb[0].mxu0 %v6373
    %v6444 = vpop.f32.mrb[0].mxu0
    %v6445 = vadd.f32 0.0, %v6444
    %v6446 = vpop.f32.mrb[0].mxu0
    %6447 = vmatprep.mubr.f32.mxu0 0.0
    %6448 = vmatmul.mubr.f32.gmra.mrb[0].mxu0 %v6376
    %v6449 = vpop.f32.mrb[0].mxu0
    %v6450 = vadd.f32 0.0, %v6449
    %v6451 = vpop.f32.mrb[0].mxu0
    %6452 = vdwg.mxu0
    %v6454 = vsel %vm2169, %v5884, 0
    %v6457 = vsel %vm2169, %v5885, 0
    %6459 = vmatprep.subr.mxu0 0.0
    %6460 = vmatpush1.msra.mxu0 %v4990
    %6461 = vmatprep.subr.mxu0 0.0
    %6462 = vmatpush1.msra.mxu0 %v4995
    %6463 = vmatprep.subr.mxu0 0.0
    %6464 = vmatpush1.msra.mxu0 0.0
    %6465 = vmatprep.subr.mxu0 0.0
    %6466 = vmatpush1.msra.mxu0 0.0
    %6467 = vmatprep.subr.mxu0 0.0
    %6468 = vmatpush1.msra.mxu0 0.0
    %6469 = vmatprep.subr.mxu0 0.0
    %6470 = vmatpush1.msra.mxu0 0.0
    %6471 = vmatprep.subr.mxu0 0.0
    %6472 = vmatpush1.msra.mxu0 0.0
    %6473 = vmatprep.subr.mxu0 0.0
    %6474 = vmatpush1.msra.mxu0 0.0
    %6475 = vmatprep.subr.mxu0 0.0
    %6476 = vmatpush1.msra.mxu0 0.0
    %6477 = vmatprep.subr.mxu0 0.0
    %6478 = vmatpush1.msra.mxu0 0.0
    %6479 = vmatprep.subr.mxu0 0.0
    %6480 = vmatpush1.msra.mxu0 0.0
    %6481 = vmatprep.subr.mxu0 0.0
    %6482 = vmatpush1.msra.mxu0 0.0
    %6483 = vmatprep.subr.mxu0 0.0
    %6484 = vmatpush1.msra.mxu0 0.0
    %6485 = vmatprep.subr.mxu0 0.0
    %6486 = vmatpush1.msra.mxu0 0.0
    %6487 = vmatprep.subr.mxu0 0.0
    %6488 = vmatpush1.msra.mxu0 0.0
    %6489 = vmatprep.subr.mxu0 0.0
    %6490 = vmatpush1.msra.mxu0 0.0
    %6491 = vmatprep.subr.mxu0 0.0
    %6492 = vmatpush1.msra.mxu0 0.0
    %6493 = vmatprep.subr.mxu0 0.0
    %6494 = vmatpush1.msra.mxu0 0.0
    %6495 = vmatprep.subr.mxu0 0.0
    %6496 = vmatpush1.msra.mxu0 0.0
    %6497 = vmatprep.subr.mxu0 0.0
    %6498 = vmatpush1.msra.mxu0 0.0
    %6499 = vmatprep.subr.mxu0 0.0
    %6500 = vmatpush1.msra.mxu0 0.0
    %6501 = vmatprep.subr.mxu0 0.0
    %6502 = vmatpush1.msra.mxu0 0.0
    %6503 = vmatprep.subr.mxu0 0.0
    %6504 = vmatpush1.msra.mxu0 0.0
    %6505 = vmatprep.subr.mxu0 0.0
    %6506 = vmatpush1.msra.mxu0 0.0
    %6507 = vmatprep.subr.mxu0 0.0
    %6508 = vmatpush1.msra.mxu0 0.0
    %6509 = vmatprep.subr.mxu0 0.0
    %6510 = vmatpush1.msra.mxu0 0.0
    %6511 = vmatprep.subr.mxu0 0.0
    %6512 = vmatpush1.msra.mxu0 0.0
    %6513 = vmatprep.subr.mxu0 0.0
    %6514 = vmatpush1.msra.mxu0 0.0
    %6515 = vmatprep.subr.mxu0 0.0
    %6516 = vmatpush1.msra.mxu0 0.0
    %6517 = vmatprep.subr.mxu0 0.0
    %6518 = vmatpush1.msra.mxu0 0.0
    %6519 = vmatprep.subr.mxu0 0.0
    %6520 = vmatpush1.msra.mxu0 0.0
    %6521 = vmatprep.subr.mxu0 0.0
    %6522 = vmatpush1.msra.mxu0 0.0
    %6523 = vmatprep.mubr.f32.mxu0 0.0
    %6524 = vmatmul.mubr.f32.gmra.mrb[0].mxu0 %v6454
    %v6525 = vpop.f32.mrb[0].mxu0
    %v6526 = vadd.f32 0.0, %v6525
    %v6527 = vpop.f32.mrb[0].mxu0
    %6528 = vmatprep.mubr.f32.mxu0 0.0
    %6529 = vmatmul.mubr.f32.gmra.mrb[0].mxu0 %v6457
    %v6530 = vpop.f32.mrb[0].mxu0
    %v6531 = vadd.f32 0.0, %v6530
    %v6532 = vpop.f32.mrb[0].mxu0
    %6533 = vdwg.mxu0
    %s6534 = scalar_lea.vmem %s5, 32
    %v6535 = vld [vmem:[%s6534] sm:$0xff]
    %s6536 = scalar_lea.vmem %s5, 40
    %v6537 = vld [vmem:[%s6536] sm:$0xff]
    %v6539 = vsel %vm1456, %v6121, 0
    %v6542 = vsel %vm1456, %v6126, 0
    %v6545 = vsel %vm1456, %v6202, 0
    %v6548 = vsel %vm1456, %v6207, 0
    %6550 = vmatprep.subr.mxu0 0.0
    %6551 = vmatpush1.msra.mxu0 %v6537
    %6552 = vmatprep.subr.mxu0 0.0
    %6553 = vmatpush1.msra.mxu0 0.0
    %6554 = vmatprep.subr.mxu0 0.0
    %6555 = vmatpush1.msra.mxu0 0.0
    %6556 = vmatprep.subr.mxu0 0.0
    %6557 = vmatpush1.msra.mxu0 0.0
    %6558 = vmatprep.subr.mxu0 0.0
    %6559 = vmatpush1.msra.mxu0 0.0
    %6560 = vmatprep.subr.mxu0 0.0
    %6561 = vmatpush1.msra.mxu0 0.0
    %6562 = vmatprep.subr.mxu0 0.0
    %6563 = vmatpush1.msra.mxu0 0.0
    %6564 = vmatprep.subr.mxu0 0.0
    %6565 = vmatpush1.msra.mxu0 0.0
    %6566 = vmatprep.subr.mxu0 0.0
    %6567 = vmatpush1.msra.mxu0 0.0
    %6568 = vmatprep.subr.mxu0 0.0
    %6569 = vmatpush1.msra.mxu0 0.0
    %6570 = vmatprep.subr.mxu0 0.0
    %6571 = vmatpush1.msra.mxu0 0.0
    %6572 = vmatprep.subr.mxu0 0.0
    %6573 = vmatpush1.msra.mxu0 0.0
    %6574 = vmatprep.subr.mxu0 0.0
    %6575 = vmatpush1.msra.mxu0 0.0
    %6576 = vmatprep.subr.mxu0 0.0
    %6577 = vmatpush1.msra.mxu0 0.0
    %6578 = vmatprep.subr.mxu0 0.0
    %6579 = vmatpush1.msra.mxu0 0.0
    %6580 = vmatprep.subr.mxu0 0.0
    %6581 = vmatpush1.msra.mxu0 0.0
    %6582 = vmatprep.subr.mxu0 0.0
    %6583 = vmatpush1.msra.mxu0 0.0
    %6584 = vmatprep.subr.mxu0 0.0
    %6585 = vmatpush1.msra.mxu0 0.0
    %6586 = vmatprep.subr.mxu0 0.0
    %6587 = vmatpush1.msra.mxu0 0.0
    %6588 = vmatprep.subr.mxu0 0.0
    %6589 = vmatpush1.msra.mxu0 0.0
    %6590 = vmatprep.subr.mxu0 0.0
    %6591 = vmatpush1.msra.mxu0 0.0
    %6592 = vmatprep.subr.mxu0 0.0
    %6593 = vmatpush1.msra.mxu0 0.0
    %6594 = vmatprep.subr.mxu0 0.0
    %6595 = vmatpush1.msra.mxu0 0.0
    %6596 = vmatprep.subr.mxu0 0.0
    %6597 = vmatpush1.msra.mxu0 0.0
    %6598 = vmatprep.subr.mxu0 0.0
    %6599 = vmatpush1.msra.mxu0 0.0
    %6600 = vmatprep.subr.mxu0 0.0
    %6601 = vmatpush1.msra.mxu0 0.0
    %6602 = vmatprep.subr.mxu0 0.0
    %6603 = vmatpush1.msra.mxu0 0.0
    %6604 = vmatprep.subr.mxu0 0.0
    %6605 = vmatpush1.msra.mxu0 0.0
    %6606 = vmatprep.subr.mxu0 0.0
    %6607 = vmatpush1.msra.mxu0 0.0
    %6608 = vmatprep.subr.mxu0 0.0
    %6609 = vmatpush1.msra.mxu0 0.0
    %6610 = vmatprep.subr.mxu0 0.0
    %6611 = vmatpush1.msra.mxu0 0.0
    %6612 = vmatprep.subr.mxu0 0.0
    %6613 = vmatpush1.msra.mxu0 0.0
    %6614 = vmatprep.mubr.f32.mxu0 0.0
    %6615 = vmatmul.mubr.f32.gmra.mrb[0].mxu0 %v6539
    %v6616 = vpop.f32.mrb[0].mxu0
    %v6617 = vadd.f32 0.0, %v6616
    %v6618 = vpop.f32.mrb[0].mxu0
    %6619 = vmatprep.mubr.f32.mxu0 0.0
    %6620 = vmatmul.mubr.f32.gmra.mrb[0].mxu0 %v6542
    %v6621 = vpop.f32.mrb[0].mxu0
    %v6622 = vadd.f32 0.0, %v6621
    %v6623 = vpop.f32.mrb[0].mxu0
    %6624 = vmatprep.mubr.f32.mxu0 0.0
    %6625 = vmatmul.mubr.f32.gmra.mrb[0].mxu0 %v6545
    %v6626 = vpop.f32.mrb[0].mxu0
    %v6627 = vadd.f32 0.0, %v6626
    %v6628 = vpop.f32.mrb[0].mxu0
    %6629 = vmatprep.mubr.f32.mxu0 0.0
    %6630 = vmatmul.mubr.f32.gmra.mrb[0].mxu0 %v6548
    %v6631 = vpop.f32.mrb[0].mxu0
    %v6632 = vadd.f32 0.0, %v6631
    %v6633 = vpop.f32.mrb[0].mxu0
    %6634 = vdwg.mxu0
    %v6636 = vsel %vm1456, %v5959, 0
    %v6639 = vsel %vm1456, %v5964, 0
    %v6642 = vsel %vm1456, %v6040, 0
    %v6645 = vsel %vm1456, %v6045, 0
    %6647 = vmatprep.subr.mxu0 0.0
    %6648 = vmatpush1.msra.mxu0 %v6535
    %6649 = vmatprep.subr.mxu0 0.0
    %6650 = vmatpush1.msra.mxu0 0.0
    %6651 = vmatprep.subr.mxu0 0.0
    %6652 = vmatpush1.msra.mxu0 0.0
    %6653 = vmatprep.subr.mxu0 0.0
    %6654 = vmatpush1.msra.mxu0 0.0
    %6655 = vmatprep.subr.mxu0 0.0
    %6656 = vmatpush1.msra.mxu0 0.0
    %6657 = vmatprep.subr.mxu0 0.0
    %6658 = vmatpush1.msra.mxu0 0.0
    %6659 = vmatprep.subr.mxu0 0.0
    %6660 = vmatpush1.msra.mxu0 0.0
    %6661 = vmatprep.subr.mxu0 0.0
    %6662 = vmatpush1.msra.mxu0 0.0
    %6663 = vmatprep.subr.mxu0 0.0
    %6664 = vmatpush1.msra.mxu0 0.0
    %6665 = vmatprep.subr.mxu0 0.0
    %6666 = vmatpush1.msra.mxu0 0.0
    %6667 = vmatprep.subr.mxu0 0.0
    %6668 = vmatpush1.msra.mxu0 0.0
    %6669 = vmatprep.subr.mxu0 0.0
    %6670 = vmatpush1.msra.mxu0 0.0
    %6671 = vmatprep.subr.mxu0 0.0
    %6672 = vmatpush1.msra.mxu0 0.0
    %6673 = vmatprep.subr.mxu0 0.0
    %6674 = vmatpush1.msra.mxu0 0.0
    %6675 = vmatprep.subr.mxu0 0.0
    %6676 = vmatpush1.msra.mxu0 0.0
    %6677 = vmatprep.subr.mxu0 0.0
    %6678 = vmatpush1.msra.mxu0 0.0
    %6679 = vmatprep.subr.mxu0 0.0
    %6680 = vmatpush1.msra.mxu0 0.0
    %6681 = vmatprep.subr.mxu0 0.0
    %6682 = vmatpush1.msra.mxu0 0.0
    %6683 = vmatprep.subr.mxu0 0.0
    %6684 = vmatpush1.msra.mxu0 0.0
    %6685 = vmatprep.subr.mxu0 0.0
    %6686 = vmatpush1.msra.mxu0 0.0
    %6687 = vmatprep.subr.mxu0 0.0
    %6688 = vmatpush1.msra.mxu0 0.0
    %6689 = vmatprep.subr.mxu0 0.0
    %6690 = vmatpush1.msra.mxu0 0.0
    %6691 = vmatprep.subr.mxu0 0.0
    %6692 = vmatpush1.msra.mxu0 0.0
    %6693 = vmatprep.subr.mxu0 0.0
    %6694 = vmatpush1.msra.mxu0 0.0
    %6695 = vmatprep.subr.mxu0 0.0
    %6696 = vmatpush1.msra.mxu0 0.0
    %6697 = vmatprep.subr.mxu0 0.0
    %6698 = vmatpush1.msra.mxu0 0.0
    %6699 = vmatprep.subr.mxu0 0.0
    %6700 = vmatpush1.msra.mxu0 0.0
    %6701 = vmatprep.subr.mxu0 0.0
    %6702 = vmatpush1.msra.mxu0 0.0
    %6703 = vmatprep.subr.mxu0 0.0
    %6704 = vmatpush1.msra.mxu0 0.0
    %6705 = vmatprep.subr.mxu0 0.0
    %6706 = vmatpush1.msra.mxu0 0.0
    %6707 = vmatprep.subr.mxu0 0.0
    %6708 = vmatpush1.msra.mxu0 0.0
    %6709 = vmatprep.subr.mxu0 0.0
    %6710 = vmatpush1.msra.mxu0 0.0
    %6711 = vmatprep.mubr.f32.mxu0 0.0
    %6712 = vmatmul.mubr.f32.gmra.mrb[0].mxu0 %v6636
    %v6713 = vpop.f32.mrb[0].mxu0
    %v6714 = vadd.f32 %v6617, %v6713
    %v6715 = vpop.f32.mrb[0].mxu0
    %6716 = vmatprep.mubr.f32.mxu0 0.0
    %6717 = vmatmul.mubr.f32.gmra.mrb[0].mxu0 %v6639
    %v6718 = vpop.f32.mrb[0].mxu0
    %v6719 = vadd.f32 %v6622, %v6718
    %v6720 = vpop.f32.mrb[0].mxu0
    %6721 = vmatprep.mubr.f32.mxu0 0.0
    %6722 = vmatmul.mubr.f32.gmra.mrb[0].mxu0 %v6642
    %v6723 = vpop.f32.mrb[0].mxu0
    %v6724 = vadd.f32 %v6627, %v6723
    %v6725 = vpop.f32.mrb[0].mxu0
    %6726 = vmatprep.mubr.f32.mxu0 0.0
    %6727 = vmatmul.mubr.f32.gmra.mrb[0].mxu0 %v6645
    %v6728 = vpop.f32.mrb[0].mxu0
    %v6729 = vadd.f32 %v6632, %v6728
    %v6730 = vpop.f32.mrb[0].mxu0
    %6731 = vdwg.mxu0
    %s6732 = scalar_lea.vmem %s5, 48
    %v6733 = vld [vmem:[%s6732] sm:$0xff]
    %v6735 = vsel %vm1456, %v6283, 0
    %v6738 = vsel %vm1456, %v6288, 0
    %v6741 = vsel %vm1456, %v6364, 0
    %v6744 = vsel %vm1456, %v6369, 0
    %6746 = vmatprep.subr.mxu0 0.0
    %6747 = vmatpush1.msra.mxu0 %v6733
    %6748 = vmatprep.subr.mxu0 0.0
    %6749 = vmatpush1.msra.mxu0 0.0
    %6750 = vmatprep.subr.mxu0 0.0
    %6751 = vmatpush1.msra.mxu0 0.0
    %6752 = vmatprep.subr.mxu0 0.0
    %6753 = vmatpush1.msra.mxu0 0.0
    %6754 = vmatprep.subr.mxu0 0.0
    %6755 = vmatpush1.msra.mxu0 0.0
    %6756 = vmatprep.subr.mxu0 0.0
    %6757 = vmatpush1.msra.mxu0 0.0
    %6758 = vmatprep.subr.mxu0 0.0
    %6759 = vmatpush1.msra.mxu0 0.0
    %6760 = vmatprep.subr.mxu0 0.0
    %6761 = vmatpush1.msra.mxu0 0.0
    %6762 = vmatprep.subr.mxu0 0.0
    %6763 = vmatpush1.msra.mxu0 0.0
    %6764 = vmatprep.subr.mxu0 0.0
    %6765 = vmatpush1.msra.mxu0 0.0
    %6766 = vmatprep.subr.mxu0 0.0
    %6767 = vmatpush1.msra.mxu0 0.0
    %6768 = vmatprep.subr.mxu0 0.0
    %6769 = vmatpush1.msra.mxu0 0.0
    %6770 = vmatprep.subr.mxu0 0.0
    %6771 = vmatpush1.msra.mxu0 0.0
    %6772 = vmatprep.subr.mxu0 0.0
    %6773 = vmatpush1.msra.mxu0 0.0
    %6774 = vmatprep.subr.mxu0 0.0
    %6775 = vmatpush1.msra.mxu0 0.0
    %6776 = vmatprep.subr.mxu0 0.0
    %6777 = vmatpush1.msra.mxu0 0.0
    %6778 = vmatprep.subr.mxu0 0.0
    %6779 = vmatpush1.msra.mxu0 0.0
    %6780 = vmatprep.subr.mxu0 0.0
    %6781 = vmatpush1.msra.mxu0 0.0
    %6782 = vmatprep.subr.mxu0 0.0
    %6783 = vmatpush1.msra.mxu0 0.0
    %6784 = vmatprep.subr.mxu0 0.0
    %6785 = vmatpush1.msra.mxu0 0.0
    %6786 = vmatprep.subr.mxu0 0.0
    %6787 = vmatpush1.msra.mxu0 0.0
    %6788 = vmatprep.subr.mxu0 0.0
    %6789 = vmatpush1.msra.mxu0 0.0
    %6790 = vmatprep.subr.mxu0 0.0
    %6791 = vmatpush1.msra.mxu0 0.0
    %6792 = vmatprep.subr.mxu0 0.0
    %6793 = vmatpush1.msra.mxu0 0.0
    %6794 = vmatprep.subr.mxu0 0.0
    %6795 = vmatpush1.msra.mxu0 0.0
    %6796 = vmatprep.subr.mxu0 0.0
    %6797 = vmatpush1.msra.mxu0 0.0
    %6798 = vmatprep.subr.mxu0 0.0
    %6799 = vmatpush1.msra.mxu0 0.0
    %6800 = vmatprep.subr.mxu0 0.0
    %6801 = vmatpush1.msra.mxu0 0.0
    %6802 = vmatprep.subr.mxu0 0.0
    %6803 = vmatpush1.msra.mxu0 0.0
    %6804 = vmatprep.subr.mxu0 0.0
    %6805 = vmatpush1.msra.mxu0 0.0
    %6806 = vmatprep.subr.mxu0 0.0
    %6807 = vmatpush1.msra.mxu0 0.0
    %6808 = vmatprep.subr.mxu0 0.0
    %6809 = vmatpush1.msra.mxu0 0.0
    %6810 = vmatprep.mubr.f32.mxu0 0.0
    %6811 = vmatmul.mubr.f32.gmra.mrb[0].mxu0 %v6735
    %v6812 = vpop.f32.mrb[0].mxu0
    %v6813 = vadd.f32 0.0, %v6812
    %v6814 = vpop.f32.mrb[0].mxu0
    %6815 = vmatprep.mubr.f32.mxu0 0.0
    %6816 = vmatmul.mubr.f32.gmra.mrb[0].mxu0 %v6738
    %v6817 = vpop.f32.mrb[0].mxu0
    %v6818 = vadd.f32 0.0, %v6817
    %v6819 = vpop.f32.mrb[0].mxu0
    %6820 = vmatprep.mubr.f32.mxu0 0.0
    %6821 = vmatmul.mubr.f32.gmra.mrb[0].mxu0 %v6741
    %v6822 = vpop.f32.mrb[0].mxu0
    %v6823 = vadd.f32 0.0, %v6822
    %v6824 = vpop.f32.mrb[0].mxu0
    %6825 = vmatprep.mubr.f32.mxu0 0.0
    %6826 = vmatmul.mubr.f32.gmra.mrb[0].mxu0 %v6744
    %v6827 = vpop.f32.mrb[0].mxu0
    %v6828 = vadd.f32 0.0, %v6827
    %v6829 = vpop.f32.mrb[0].mxu0
    %6830 = vdwg.mxu0
    %v6831 = vadd.f32 %v6714, %v6813
    %v6832 = vadd.f32 %v6719, %v6818
    %v6833 = vadd.f32 %v6724, %v6823
    %v6834 = vadd.f32 %v6729, %v6828
    %s6835 = scalar_lea.vmem %s5, 56
    %v6836 = vld [vmem:[%s6835] sm:$0xff]
    %v6838 = vsel %vm1456, %v6445, 0
    %v6841 = vsel %vm1456, %v6450, 0
    %v6844 = vsel %vm1456, %v6526, 0
    %v6847 = vsel %vm1456, %v6531, 0
    %6849 = vmatprep.subr.mxu0 0.0
    %6850 = vmatpush1.msra.mxu0 %v6836
    %6851 = vmatprep.subr.mxu0 0.0
    %6852 = vmatpush1.msra.mxu0 0.0
    %6853 = vmatprep.subr.mxu0 0.0
    %6854 = vmatpush1.msra.mxu0 0.0
    %6855 = vmatprep.subr.mxu0 0.0
    %6856 = vmatpush1.msra.mxu0 0.0
    %6857 = vmatprep.subr.mxu0 0.0
    %6858 = vmatpush1.msra.mxu0 0.0
    %6859 = vmatprep.subr.mxu0 0.0
    %6860 = vmatpush1.msra.mxu0 0.0
    %6861 = vmatprep.subr.mxu0 0.0
    %6862 = vmatpush1.msra.mxu0 0.0
    %6863 = vmatprep.subr.mxu0 0.0
    %6864 = vmatpush1.msra.mxu0 0.0
    %6865 = vmatprep.subr.mxu0 0.0
    %6866 = vmatpush1.msra.mxu0 0.0
    %6867 = vmatprep.subr.mxu0 0.0
    %6868 = vmatpush1.msra.mxu0 0.0
    %6869 = vmatprep.subr.mxu0 0.0
    %6870 = vmatpush1.msra.mxu0 0.0
    %6871 = vmatprep.subr.mxu0 0.0
    %6872 = vmatpush1.msra.mxu0 0.0
    %6873 = vmatprep.subr.mxu0 0.0
    %6874 = vmatpush1.msra.mxu0 0.0
    %6875 = vmatprep.subr.mxu0 0.0
    %6876 = vmatpush1.msra.mxu0 0.0
    %6877 = vmatprep.subr.mxu0 0.0
    %6878 = vmatpush1.msra.mxu0 0.0
    %6879 = vmatprep.subr.mxu0 0.0
    %6880 = vmatpush1.msra.mxu0 0.0
    %6881 = vmatprep.subr.mxu0 0.0
    %6882 = vmatpush1.msra.mxu0 0.0
    %6883 = vmatprep.subr.mxu0 0.0
    %6884 = vmatpush1.msra.mxu0 0.0
    %6885 = vmatprep.subr.mxu0 0.0
    %6886 = vmatpush1.msra.mxu0 0.0
    %6887 = vmatprep.subr.mxu0 0.0
    %6888 = vmatpush1.msra.mxu0 0.0
    %6889 = vmatprep.subr.mxu0 0.0
    %6890 = vmatpush1.msra.mxu0 0.0
    %6891 = vmatprep.subr.mxu0 0.0
    %6892 = vmatpush1.msra.mxu0 0.0
    %6893 = vmatprep.subr.mxu0 0.0
    %6894 = vmatpush1.msra.mxu0 0.0
    %6895 = vmatprep.subr.mxu0 0.0
    %6896 = vmatpush1.msra.mxu0 0.0
    %6897 = vmatprep.subr.mxu0 0.0
    %6898 = vmatpush1.msra.mxu0 0.0
    %6899 = vmatprep.subr.mxu0 0.0
    %6900 = vmatpush1.msra.mxu0 0.0
    %6901 = vmatprep.subr.mxu0 0.0
    %6902 = vmatpush1.msra.mxu0 0.0
    %6903 = vmatprep.subr.mxu0 0.0
    %6904 = vmatpush1.msra.mxu0 0.0
    %6905 = vmatprep.subr.mxu0 0.0
    %6906 = vmatpush1.msra.mxu0 0.0
    %6907 = vmatprep.subr.mxu0 0.0
    %6908 = vmatpush1.msra.mxu0 0.0
    %6909 = vmatprep.subr.mxu0 0.0
    %6910 = vmatpush1.msra.mxu0 0.0
    %6911 = vmatprep.subr.mxu0 0.0
    %6912 = vmatpush1.msra.mxu0 0.0
    %6913 = vmatprep.mubr.f32.mxu0 0.0
    %6914 = vmatmul.mubr.f32.gmra.mrb[0].mxu0 %v6838
    %v6915 = vpop.f32.mrb[0].mxu0
    %v6916 = vadd.f32 0.0, %v6915
    %v6917 = vpop.f32.mrb[0].mxu0
    %6918 = vmatprep.mubr.f32.mxu0 0.0
    %6919 = vmatmul.mubr.f32.gmra.mrb[0].mxu0 %v6841
    %v6920 = vpop.f32.mrb[0].mxu0
    %v6921 = vadd.f32 0.0, %v6920
    %v6922 = vpop.f32.mrb[0].mxu0
    %6923 = vmatprep.mubr.f32.mxu0 0.0
    %6924 = vmatmul.mubr.f32.gmra.mrb[0].mxu0 %v6844
    %v6925 = vpop.f32.mrb[0].mxu0
    %v6926 = vadd.f32 0.0, %v6925
    %v6927 = vpop.f32.mrb[0].mxu0
    %6928 = vmatprep.mubr.f32.mxu0 0.0
    %6929 = vmatmul.mubr.f32.gmra.mrb[0].mxu0 %v6847
    %v6930 = vpop.f32.mrb[0].mxu0
    %v6931 = vadd.f32 0.0, %v6930
    %v6932 = vpop.f32.mrb[0].mxu0
    %6933 = vdwg.mxu0
    %v6934 = vadd.f32 %v6831, %v6916
    %v6935 = vadd.f32 %v6832, %v6921
    %v6936 = vadd.f32 %v6833, %v6926
    %v6937 = vadd.f32 %v6834, %v6931
    %s6938 = scalar_lea.vmem %s9, 6
    %v6939 = vld [vmem:[%s6938] sm:$0x1]
    %v6941 = vlaneseq
    %v6942 = vshrl.u32 %v6941, 7
    %v6943 = vsub.s32 0, %v6942
    %v6944 = vrot.slane %v6939, %v6943
    %v6946 = vadd.f32 %v6934, %v6944
    %v6947 = vadd.f32 %v6935, %v6944
    %v6948 = vadd.f32 %v6936, %v6944
    %v6949 = vadd.f32 %v6937, %v6944
    %v6950 = vadd.f32 %v3806, %v6946
    %v6951 = vadd.f32 %v3807, %v6947
    %v6952 = vadd.f32 %v3808, %v6948
    %v6953 = vadd.f32 %v3809, %v6949
    %s6954 = scalar_lea.vmem %s9, 8
    %v6955 = vld [vmem:[%s6954] sm:$0x1]
    %s6956 = scalar_lea.vmem %s9, 9
    %v6957 = vld [vmem:[%s6956] sm:$0x1]
    %v6958 = vsel %vm196, %v6950, 0.0
    %6959 = vadd.xlane.f32.xlu0 %v6958
    %v6960 = vpop.xlane.xlu0 %6959
    %v6961 = vsel %vm196, %v6951, 0.0
    %6962 = vadd.xlane.f32.xlu0 %v6961
    %v6963 = vpop.xlane.xlu0 %6962
    %v6964 = vsel %vm196, %v6952, 0.0
    %6965 = vadd.xlane.f32.xlu0 %v6964
    %v6966 = vpop.xlane.xlu0 %6965
    %v6967 = vsel %vm196, %v6953, 0.0
    %6968 = vadd.xlane.f32.xlu0 %v6967
    %v6969 = vpop.xlane.xlu0 %6968
    %v6970 = vmul.f32 %v6960, %v209
    %v6971 = vmul.f32 %v6963, %v209
    %v6972 = vmul.f32 %v6966, %v209
    %v6973 = vmul.f32 %v6969, %v209
    %v6974 = vsub.f32 %v6950, %v6970
    %v6975 = vsub.f32 %v6951, %v6971
    %v6976 = vsub.f32 %v6952, %v6972
    %v6977 = vsub.f32 %v6953, %v6973
    %v6978 = vmul.f32 %v6974, %v6974
    %v6979 = vmul.f32 %v6975, %v6975
    %v6980 = vmul.f32 %v6976, %v6976
    %v6981 = vmul.f32 %v6977, %v6977
    %v6982 = vsel %vm196, %v6978, 0.0
    %6983 = vadd.xlane.f32.xlu0 %v6982
    %v6984 = vpop.xlane.xlu0 %6983
    %v6985 = vsel %vm196, %v6979, 0.0
    %6986 = vadd.xlane.f32.xlu0 %v6985
    %v6987 = vpop.xlane.xlu0 %6986
    %v6988 = vsel %vm196, %v6980, 0.0
    %6989 = vadd.xlane.f32.xlu0 %v6988
    %v6990 = vpop.xlane.xlu0 %6989
    %v6991 = vsel %vm196, %v6981, 0.0
    %6992 = vadd.xlane.f32.xlu0 %v6991
    %v6993 = vpop.xlane.xlu0 %6992
    %v6994 = vmul.f32 %v6984, %v209
    %v6995 = vmul.f32 %v6987, %v209
    %v6996 = vmul.f32 %v6990, %v209
    %v6997 = vmul.f32 %v6993, %v209
    %v6998 = vadd.f32 %v6994, 1e-05
    %v6999 = vadd.f32 %v6995, 1e-05
    %v7000 = vadd.f32 %v6996, 1e-05
    %v7001 = vadd.f32 %v6997, 1e-05
    %v7002 = vrsqrt.pop %v6998
    %v7003 = vrsqrt.pop %v6999
    %v7004 = vrsqrt.pop %v7000
    %v7005 = vrsqrt.pop %v7001
    %v7006 = vmul.f32 %v6974, %v7002
    %v7007 = vmul.f32 %v6975, %v7003
    %v7008 = vmul.f32 %v6976, %v7004
    %v7009 = vmul.f32 %v6977, %v7005
    %v7011 = vlaneseq
    %v7012 = vshrl.u32 %v7011, 7
    %v7013 = vsub.s32 0, %v7012
    %v7014 = vrot.slane %v6955, %v7013
    %v7016 = vmul.f32 %v7006, %v7014
    %v7017 = vmul.f32 %v7007, %v7014
    %v7018 = vmul.f32 %v7008, %v7014
    %v7019 = vmul.f32 %v7009, %v7014
    %v7021 = vlaneseq
    %v7022 = vshrl.u32 %v7021, 7
    %v7023 = vsub.s32 0, %v7022
    %v7024 = vrot.slane %v6957, %v7023
    %v7026 = vadd.f32 %v7016, %v7024
    %v7027 = vadd.f32 %v7017, %v7024
    %v7028 = vadd.f32 %v7018, %v7024
    %v7029 = vadd.f32 %v7019, %v7024
    %s7030 = scalar_lea.vmem %s6, 32
    %v7031 = vld [vmem:[%s7030] sm:$0xff]
    %v7032 = vld [vmem:[%s7030 + $0x8] sm:$0xff]
    %v7033 = vld [vmem:[%s7030 + $0x10] sm:$0xff]
    %v7034 = vld [vmem:[%s7030 + $0x18] sm:$0xff]
    %s7035 = scalar_lea.vmem %s7, 1
    %v7036 = vld [vmem:[%s7035] sm:$0x1]
    %v7038 = vlaneseq
    %v7039 = vshrl.u32 %v7038, 7
    %v7040 = vsub.s32 0, %v7039
    %v7041 = vrot.slane %v7036, %v7040
    %v7044 = vsel %vm196, %v7026, 0
    %v7047 = vsel %vm196, %v7027, 0
    %v7050 = vsel %vm196, %v7028, 0
    %v7053 = vsel %vm196, %v7029, 0
    %7055 = vmatprep.subr.mxu0 0.0
    %7056 = vmatpush1.msra.mxu0 %v7031
    %7057 = vmatprep.subr.mxu0 0.0
    %7058 = vmatpush1.msra.mxu0 %v7032
    %7059 = vmatprep.subr.mxu0 0.0
    %7060 = vmatpush1.msra.mxu0 %v7033
    %7061 = vmatprep.subr.mxu0 0.0
    %7062 = vmatpush1.msra.mxu0 %v7034
    %7063 = vmatprep.subr.mxu0 0.0
    %7064 = vmatpush1.msra.mxu0 0.0
    %7065 = vmatprep.subr.mxu0 0.0
    %7066 = vmatpush1.msra.mxu0 0.0
    %7067 = vmatprep.subr.mxu0 0.0
    %7068 = vmatpush1.msra.mxu0 0.0
    %7069 = vmatprep.subr.mxu0 0.0
    %7070 = vmatpush1.msra.mxu0 0.0
    %7071 = vmatprep.subr.mxu0 0.0
    %7072 = vmatpush1.msra.mxu0 0.0
    %7073 = vmatprep.subr.mxu0 0.0
    %7074 = vmatpush1.msra.mxu0 0.0
    %7075 = vmatprep.subr.mxu0 0.0
    %7076 = vmatpush1.msra.mxu0 0.0
    %7077 = vmatprep.subr.mxu0 0.0
    %7078 = vmatpush1.msra.mxu0 0.0
    %7079 = vmatprep.subr.mxu0 0.0
    %7080 = vmatpush1.msra.mxu0 0.0
    %7081 = vmatprep.subr.mxu0 0.0
    %7082 = vmatpush1.msra.mxu0 0.0
    %7083 = vmatprep.subr.mxu0 0.0
    %7084 = vmatpush1.msra.mxu0 0.0
    %7085 = vmatprep.subr.mxu0 0.0
    %7086 = vmatpush1.msra.mxu0 0.0
    %7087 = vmatprep.subr.mxu0 0.0
    %7088 = vmatpush1.msra.mxu0 0.0
    %7089 = vmatprep.subr.mxu0 0.0
    %7090 = vmatpush1.msra.mxu0 0.0
    %7091 = vmatprep.subr.mxu0 0.0
    %7092 = vmatpush1.msra.mxu0 0.0
    %7093 = vmatprep.subr.mxu0 0.0
    %7094 = vmatpush1.msra.mxu0 0.0
    %7095 = vmatprep.subr.mxu0 0.0
    %7096 = vmatpush1.msra.mxu0 0.0
    %7097 = vmatprep.subr.mxu0 0.0
    %7098 = vmatpush1.msra.mxu0 0.0
    %7099 = vmatprep.subr.mxu0 0.0
    %7100 = vmatpush1.msra.mxu0 0.0
    %7101 = vmatprep.subr.mxu0 0.0
    %7102 = vmatpush1.msra.mxu0 0.0
    %7103 = vmatprep.subr.mxu0 0.0
    %7104 = vmatpush1.msra.mxu0 0.0
    %7105 = vmatprep.subr.mxu0 0.0
    %7106 = vmatpush1.msra.mxu0 0.0
    %7107 = vmatprep.subr.mxu0 0.0
    %7108 = vmatpush1.msra.mxu0 0.0
    %7109 = vmatprep.subr.mxu0 0.0
    %7110 = vmatpush1.msra.mxu0 0.0
    %7111 = vmatprep.subr.mxu0 0.0
    %7112 = vmatpush1.msra.mxu0 0.0
    %7113 = vmatprep.subr.mxu0 0.0
    %7114 = vmatpush1.msra.mxu0 0.0
    %7115 = vmatprep.subr.mxu0 0.0
    %7116 = vmatpush1.msra.mxu0 0.0
    %7117 = vmatprep.subr.mxu0 0.0
    %7118 = vmatpush1.msra.mxu0 0.0
    %7119 = vmatprep.mubr.f32.mxu0 0.0
    %7120 = vmatmul.mubr.f32.gmra.mrb[0].mxu0 %v7044
    %v7121 = vpop.f32.mrb[0].mxu0
    %v7122 = vadd.f32 %v7041, %v7121
    %v7123 = vpop.f32.mrb[0].mxu0
    %7124 = vmatprep.mubr.f32.mxu0 0.0
    %7125 = vmatmul.mubr.f32.gmra.mrb[0].mxu0 %v7047
    %v7126 = vpop.f32.mrb[0].mxu0
    %v7127 = vadd.f32 %v7041, %v7126
    %v7128 = vpop.f32.mrb[0].mxu0
    %7129 = vmatprep.mubr.f32.mxu0 0.0
    %7130 = vmatmul.mubr.f32.gmra.mrb[0].mxu0 %v7050
    %v7131 = vpop.f32.mrb[0].mxu0
    %v7132 = vadd.f32 %v7041, %v7131
    %v7133 = vpop.f32.mrb[0].mxu0
    %7134 = vmatprep.mubr.f32.mxu0 0.0
    %7135 = vmatmul.mubr.f32.gmra.mrb[0].mxu0 %v7053
    %v7136 = vpop.f32.mrb[0].mxu0
    %v7137 = vadd.f32 %v7041, %v7136
    %v7138 = vpop.f32.mrb[0].mxu0
    %7139 = vdwg.mxu0
    %v7140 = vmul.f32 %v7122, 0.5
    %v7141 = vmul.f32 %v7127, 0.5
    %v7142 = vmul.f32 %v7132, 0.5
    %v7143 = vmul.f32 %v7137, 0.5
    %v7144 = vmul.f32 %v7122, 0.70710677
    %v7145 = vmul.f32 %v7127, 0.70710677
    %v7146 = vmul.f32 %v7132, 0.70710677
    %v7147 = vmul.f32 %v7137, 0.70710677
    %v7148 = verf.f32.pop %v7144
    %v7149 = verf.f32.pop %v7145
    %v7150 = verf.f32.pop %v7146
    %v7151 = verf.f32.pop %v7147
    %v7152 = vadd.f32 %v7148, 1.0
    %v7153 = vadd.f32 %v7149, 1.0
    %v7154 = vadd.f32 %v7150, 1.0
    %v7155 = vadd.f32 %v7151, 1.0
    %v7156 = vmul.f32 %v7140, %v7152
    %v7157 = vmul.f32 %v7141, %v7153
    %v7158 = vmul.f32 %v7142, %v7154
    %v7159 = vmul.f32 %v7143, %v7155
    %s7160 = scalar_lea.vmem %s8, 64
    %v7161 = vld [vmem:[%s7160] sm:$0xff]
    %v7162 = vld [vmem:[%s7160 + $0x8] sm:$0xff]
    %v7163 = vld [vmem:[%s7160 + $0x10] sm:$0xff]
    %v7164 = vld [vmem:[%s7160 + $0x18] sm:$0xff]
    %v7165 = vld [vmem:[%s7160 + $0x20] sm:$0xff]
    %v7166 = vld [vmem:[%s7160 + $0x28] sm:$0xff]
    %v7167 = vld [vmem:[%s7160 + $0x30] sm:$0xff]
    %v7168 = vld [vmem:[%s7160 + $0x38] sm:$0xff]
    %s7169 = scalar_lea.vmem %s9, 7
    %v7170 = vld [vmem:[%s7169] sm:$0x1]
    %v7172 = vlaneseq
    %v7173 = vshrl.u32 %v7172, 7
    %v7174 = vsub.s32 0, %v7173
    %v7175 = vrot.slane %v7170, %v7174
    %v7178 = vsel %vm3632, %v7156, 0
    %v7181 = vsel %vm3632, %v7157, 0
    %v7184 = vsel %vm3632, %v7158, 0
    %v7187 = vsel %vm3632, %v7159, 0
    %7189 = vmatprep.subr.mxu0 0.0
    %7190 = vmatpush1.msra.mxu0 %v7161
    %7191 = vmatprep.subr.mxu0 0.0
    %7192 = vmatpush1.msra.mxu0 %v7162
    %7193 = vmatprep.subr.mxu0 0.0
    %7194 = vmatpush1.msra.mxu0 %v7163
    %7195 = vmatprep.subr.mxu0 0.0
    %7196 = vmatpush1.msra.mxu0 %v7164
    %7197 = vmatprep.subr.mxu0 0.0
    %7198 = vmatpush1.msra.mxu0 %v7165
    %7199 = vmatprep.subr.mxu0 0.0
    %7200 = vmatpush1.msra.mxu0 %v7166
    %7201 = vmatprep.subr.mxu0 0.0
    %7202 = vmatpush1.msra.mxu0 %v7167
    %7203 = vmatprep.subr.mxu0 0.0
    %7204 = vmatpush1.msra.mxu0 %v7168
    %7205 = vmatprep.subr.mxu0 0.0
    %7206 = vmatpush1.msra.mxu0 0.0
    %7207 = vmatprep.subr.mxu0 0.0
    %7208 = vmatpush1.msra.mxu0 0.0
    %7209 = vmatprep.subr.mxu0 0.0
    %7210 = vmatpush1.msra.mxu0 0.0
    %7211 = vmatprep.subr.mxu0 0.0
    %7212 = vmatpush1.msra.mxu0 0.0
    %7213 = vmatprep.subr.mxu0 0.0
    %7214 = vmatpush1.msra.mxu0 0.0
    %7215 = vmatprep.subr.mxu0 0.0
    %7216 = vmatpush1.msra.mxu0 0.0
    %7217 = vmatprep.subr.mxu0 0.0
    %7218 = vmatpush1.msra.mxu0 0.0
    %7219 = vmatprep.subr.mxu0 0.0
    %7220 = vmatpush1.msra.mxu0 0.0
    %7221 = vmatprep.subr.mxu0 0.0
    %7222 = vmatpush1.msra.mxu0 0.0
    %7223 = vmatprep.subr.mxu0 0.0
    %7224 = vmatpush1.msra.mxu0 0.0
    %7225 = vmatprep.subr.mxu0 0.0
    %7226 = vmatpush1.msra.mxu0 0.0
    %7227 = vmatprep.subr.mxu0 0.0
    %7228 = vmatpush1.msra.mxu0 0.0
    %7229 = vmatprep.subr.mxu0 0.0
    %7230 = vmatpush1.msra.mxu0 0.0
    %7231 = vmatprep.subr.mxu0 0.0
    %7232 = vmatpush1.msra.mxu0 0.0
    %7233 = vmatprep.subr.mxu0 0.0
    %7234 = vmatpush1.msra.mxu0 0.0
    %7235 = vmatprep.subr.mxu0 0.0
    %7236 = vmatpush1.msra.mxu0 0.0
    %7237 = vmatprep.subr.mxu0 0.0
    %7238 = vmatpush1.msra.mxu0 0.0
    %7239 = vmatprep.subr.mxu0 0.0
    %7240 = vmatpush1.msra.mxu0 0.0
    %7241 = vmatprep.subr.mxu0 0.0
    %7242 = vmatpush1.msra.mxu0 0.0
    %7243 = vmatprep.subr.mxu0 0.0
    %7244 = vmatpush1.msra.mxu0 0.0
    %7245 = vmatprep.subr.mxu0 0.0
    %7246 = vmatpush1.msra.mxu0 0.0
    %7247 = vmatprep.subr.mxu0 0.0
    %7248 = vmatpush1.msra.mxu0 0.0
    %7249 = vmatprep.subr.mxu0 0.0
    %7250 = vmatpush1.msra.mxu0 0.0
    %7251 = vmatprep.subr.mxu0 0.0
    %7252 = vmatpush1.msra.mxu0 0.0
    %7253 = vmatprep.mubr.f32.mxu0 0.0
    %7254 = vmatmul.mubr.f32.gmra.mrb[0].mxu0 %v7178
    %v7255 = vpop.f32.mrb[0].mxu0
    %v7256 = vadd.f32 %v7175, %v7255
    %v7257 = vpop.f32.mrb[0].mxu0
    %7258 = vmatprep.mubr.f32.mxu0 0.0
    %7259 = vmatmul.mubr.f32.gmra.mrb[0].mxu0 %v7181
    %v7260 = vpop.f32.mrb[0].mxu0
    %v7261 = vadd.f32 %v7175, %v7260
    %v7262 = vpop.f32.mrb[0].mxu0
    %7263 = vmatprep.mubr.f32.mxu0 0.0
    %7264 = vmatmul.mubr.f32.gmra.mrb[0].mxu0 %v7184
    %v7265 = vpop.f32.mrb[0].mxu0
    %v7266 = vadd.f32 %v7175, %v7265
    %v7267 = vpop.f32.mrb[0].mxu0
    %7268 = vmatprep.mubr.f32.mxu0 0.0
    %7269 = vmatmul.mubr.f32.gmra.mrb[0].mxu0 %v7187
    %v7270 = vpop.f32.mrb[0].mxu0
    %v7271 = vadd.f32 %v7175, %v7270
    %v7272 = vpop.f32.mrb[0].mxu0
    %7273 = vdwg.mxu0
    %v7274 = vadd.f32 %v7026, %v7256
    %v7275 = vadd.f32 %v7027, %v7261
    %v7276 = vadd.f32 %v7028, %v7266
    %v7277 = vadd.f32 %v7029, %v7271
    %s7278 = scalar_lea.vmem %s9, 10
    %v7279 = vld [vmem:[%s7278] sm:$0x1]
    %s7280 = scalar_lea.vmem %s9, 11
    %v7281 = vld [vmem:[%s7280] sm:$0x1]
    %v7282 = vsel %vm196, %v7274, 0.0
    %7283 = vadd.xlane.f32.xlu0 %v7282
    %v7284 = vpop.xlane.xlu0 %7283
    %v7285 = vsel %vm196, %v7275, 0.0
    %7286 = vadd.xlane.f32.xlu0 %v7285
    %v7287 = vpop.xlane.xlu0 %7286
    %v7288 = vsel %vm196, %v7276, 0.0
    %7289 = vadd.xlane.f32.xlu0 %v7288
    %v7290 = vpop.xlane.xlu0 %7289
    %v7291 = vsel %vm196, %v7277, 0.0
    %7292 = vadd.xlane.f32.xlu0 %v7291
    %v7293 = vpop.xlane.xlu0 %7292
    %v7294 = vmul.f32 %v7284, %v209
    %v7295 = vmul.f32 %v7287, %v209
    %v7296 = vmul.f32 %v7290, %v209
    %v7297 = vmul.f32 %v7293, %v209
    %v7298 = vsub.f32 %v7274, %v7294
    %v7299 = vsub.f32 %v7275, %v7295
    %v7300 = vsub.f32 %v7276, %v7296
    %v7301 = vsub.f32 %v7277, %v7297
    %v7302 = vmul.f32 %v7298, %v7298
    %v7303 = vmul.f32 %v7299, %v7299
    %v7304 = vmul.f32 %v7300, %v7300
    %v7305 = vmul.f32 %v7301, %v7301
    %v7306 = vsel %vm196, %v7302, 0.0
    %7307 = vadd.xlane.f32.xlu0 %v7306
    %v7308 = vpop.xlane.xlu0 %7307
    %v7309 = vsel %vm196, %v7303, 0.0
    %7310 = vadd.xlane.f32.xlu0 %v7309
    %v7311 = vpop.xlane.xlu0 %7310
    %v7312 = vsel %vm196, %v7304, 0.0
    %7313 = vadd.xlane.f32.xlu0 %v7312
    %v7314 = vpop.xlane.xlu0 %7313
    %v7315 = vsel %vm196, %v7305, 0.0
    %7316 = vadd.xlane.f32.xlu0 %v7315
    %v7317 = vpop.xlane.xlu0 %7316
    %v7318 = vmul.f32 %v7308, %v209
    %v7319 = vmul.f32 %v7311, %v209
    %v7320 = vmul.f32 %v7314, %v209
    %v7321 = vmul.f32 %v7317, %v209
    %v7322 = vadd.f32 %v7318, 1e-05
    %v7323 = vadd.f32 %v7319, 1e-05
    %v7324 = vadd.f32 %v7320, 1e-05
    %v7325 = vadd.f32 %v7321, 1e-05
    %v7326 = vrsqrt.pop %v7322
    %v7327 = vrsqrt.pop %v7323
    %v7328 = vrsqrt.pop %v7324
    %v7329 = vrsqrt.pop %v7325
    %v7330 = vmul.f32 %v7298, %v7326
    %v7331 = vmul.f32 %v7299, %v7327
    %v7332 = vmul.f32 %v7300, %v7328
    %v7333 = vmul.f32 %v7301, %v7329
    %v7335 = vlaneseq
    %v7336 = vshrl.u32 %v7335, 7
    %v7337 = vsub.s32 0, %v7336
    %v7338 = vrot.slane %v7279, %v7337
    %v7340 = vmul.f32 %v7330, %v7338
    %v7341 = vmul.f32 %v7331, %v7338
    %v7342 = vmul.f32 %v7332, %v7338
    %v7343 = vmul.f32 %v7333, %v7338
    %v7345 = vlaneseq
    %v7346 = vshrl.u32 %v7345, 7
    %v7347 = vsub.s32 0, %v7346
    %v7348 = vrot.slane %v7281, %v7347
    %v7350 = vadd.f32 %v7340, %v7348
    %v7351 = vadd.f32 %v7341, %v7348
    %v7352 = vadd.f32 %v7342, %v7348
    %v7353 = vadd.f32 %v7343, %v7348
    %7354 = vst.msk [vmem:[#allocation2] sm:$0xff] %vm196, %v7350
    %7355 = vst.msk [vmem:[#allocation2 + $0x8] sm:$0xff] %vm196, %v7351
    %7356 = vst.msk [vmem:[#allocation2 + $0x10] sm:$0xff] %vm196, %v7352
    %7357 = vst.msk [vmem:[#allocation2 + $0x18] sm:$0xff] %vm196, %v7353
    // Predicated region
    $region42: #{encoder_forward.1} parent=1 // pred_check
      _
    $region43: #{encoder_forward.1} parent=1 // pred_check_branch
      %7359 = sbr.rel (0) target = $region45
    $region44: #{encoder_forward.1} parent=1 // pred_region
      %s7361 = ssub.s32 512, 512
      %7362 = vsyncadd [#allocation3], %s7361
      %s7363 = sshll.u32 [#allocation2], 4
      %s7364 = int_to_ptr.vmem [resolvable:$true] %s7363
      %7369 = dma.vmem_to_hbm [thread:$0]  %s7364, 512, %s10, [#allocation3], 128, 128, 8
    $region45: #{encoder_forward.1} parent=1 // pred_fallthru
      _
    // Predicated region
    $region46: #{encoder_forward.1} parent=1 // pred_check
      _
    $region47: #{encoder_forward.1} parent=1 // pred_check_branch
      %7371 = sbr.rel (0) target = $region49
    $region48: #{encoder_forward.1} parent=1 // pred_region
      %7372 = dma.done [#allocation3], 512
    $region49: #{encoder_forward.1} parent=1 // pred_fallthru
      _
    %7373 = vsyncpa [#allocation3], 1

</llo_original>
